<compile_context>
chip_gen: v6e
topology: v6e:2x2x1
jax: 0.10.0
libtpu: 0.0.40
codegen_flags: <defaults>
</compile_context>

<pallas_src>
import math
import functools

import jax
import jax.numpy as jnp
from jax.experimental import pallas as pl
from jax.experimental.pallas import tpu as pltpu


def mfa_kernel(num_bands, w,
               x_ref,
               wq_ref, bq_ref, cwq_ref, cbq_ref,
               wk_ref, bk_ref, cwk_ref, cbk_ref,
               wv_ref, bv_ref, cwv_ref, cbv_ref,
               wo_ref, bo_ref, ert_ref,
               o_ref):
    x = x_ref[...]                              # (M, c) = (B_blk * w, c)
    m, c = x.shape
    n_batch = m // w
    d = c // num_bands

    # Frame index within each length-w segment.  The depthwise conv must not
    # wrap around (padding=1 => zero neighbours at frame 0 and w-1) and must
    # not leak across the batch elements stacked in this block.
    frame = jax.lax.broadcasted_iota(jnp.int32, (m, c), 0) % w
    not_first = frame != 0
    not_last = frame != (w - 1)

    def proj_dwconv(w_t, bias, cw, cb):
        # Linear: y = x @ W^T + b   (W passed pre-transposed; scale pre-folded
        # into the Q weights on the host).
        y = jnp.dot(x, w_t, preferred_element_type=jnp.float32) + bias
        # Depthwise Conv1d(k=3, padding=1, groups=c) along the frame axis:
        # frame shifts via XLU roll + boundary masking (no concat copies).
        y_prev = jnp.where(not_first, pltpu.roll(y, 1, axis=0), 0.0)       # y[t-1]
        y_next = jnp.where(not_last, pltpu.roll(y, m - 1, axis=0), 0.0)    # y[t+1]
        return cw[0:1, :] * y_prev + cw[1:2, :] * y + cw[2:3, :] * y_next + cb

    q = proj_dwconv(wq_ref[...], bq_ref[...], cwq_ref[...], cbq_ref[...])  # (M, c)
    k = proj_dwconv(wk_ref[...], bk_ref[...], cwk_ref[...], cbk_ref[...])
    v = proj_dwconv(wv_ref[...], bv_ref[...], cwv_ref[...], cbv_ref[...])

    wo_t = wo_ref[...]                          # (c, c)
    bo = bo_ref[...]                            # (1, c)
    er_t = ert_ref[...]                         # (w, d)  == er.T

    # Per batch element, per band attention; output projection fused per band
    # into an f32 accumulator (no band concatenation).
    for bi in range(n_batch):                   # static unroll (small B_blk)
        r0 = bi * w
        qb = q[r0:r0 + w, :]
        kb = k[r0:r0 + w, :]
        vb = v[r0:r0 + w, :]
        o_acc = jnp.zeros((w, c), jnp.float32)
        for h in range(num_bands):              # static unroll (small num_bands)
            c0 = h * d
            qh = qb[:, c0:c0 + d]               # (w, d)
            kh = kb[:, c0:c0 + d]
            vh = vb[:, c0:c0 + d]
            # q @ k^T (contract per-band feature dim).
            s = jax.lax.dot_general(qh, kh, (((1,), (1,)), ((), ())),
                                    preferred_element_type=jnp.float32)    # (w, w)
            # relative-position term: p[i, j] = sum_d q[j, d] * er[d, i]
            # == er_t @ q^T  (no transpose needed, single MXU matmul).
            p = jax.lax.dot_general(er_t, qh, (((1,), (1,)), ((), ())),
                                    preferred_element_type=jnp.float32)    # (w, w)
            logits = s + p                       # 1/sqrt(c) already folded into q
            mx = jnp.max(logits, axis=-1, keepdims=True)
            e = jnp.exp(logits - mx)
            a = e * pl.reciprocal(jnp.sum(e, axis=-1, keepdims=True), approx=True)
            av = jnp.dot(a, vh, preferred_element_type=jnp.float32)        # (w, d)
            o_acc = o_acc + jnp.dot(av, wo_t[c0:c0 + d, :],
                                    preferred_element_type=jnp.float32)    # (w, c)
        o_ref[r0:r0 + w, :] = (o_acc + bo).astype(o_ref.dtype)


def _pick_batch_block(b, w, c, target_rows=256, vmem_budget_bytes=6 * 1024 * 1024):
    """Largest divisor of b such that the (B_blk*w, c) working set stays small
    while B_blk*w reaches ~target_rows (fills MXU sublanes, amortises per-step
    overhead).  Budget kept conservative so it also fits v7x's smaller VMEM."""
    best = 1
    for cand in range(1, b + 1):
        if b % cand != 0:
            continue
        rows = cand * w
        # ~10 live f32 (rows, c) slabs: x, q, k, v, conv shifts, accumulator, headroom.
        if rows * c * 4 * 10 > vmem_budget_bytes:
            break
        best = cand
        if rows >= target_rows:
            break
    return best


def multiband_frame_attention(x, params, num_bands, batch_block=None):
    b, w, c = x.shape
    (wq, bq, cwq, cbq,
     wk, bk, cwk, cbk,
     wv, bv, cwv, cbv,
     wo, bo, er) = params

    assert c % num_bands == 0, "bins must be divisible by num_bands"
    d = c // num_bands
    assert er.shape == (d, w), "relative-position term requires w == cropsize"
    assert w % 8 == 0, "frame count should be a multiple of 8 (sublane tiling)"

    if batch_block is None:
        batch_block = _pick_batch_block(b, w, c)
    assert b % batch_block == 0
    m_blk = batch_block * w

    # Host-side glue: pre-transpose Linear weights, reshape biases to (1, c),
    # conv weights (c, 3) -> (3, c), fold the 1/sqrt(c) logit scale into the
    # Q-path affine parameters (wq, bq, cbq), pre-transpose er to (w, d).
    scale = 1.0 / math.sqrt(c)
    x2d = x.reshape(b * w, c)
    args = (
        x2d,
        wq.T * scale, (bq * scale).reshape(1, c), cwq.T, (cbq * scale).reshape(1, c),
        wk.T, bk.reshape(1, c), cwk.T, cbk.reshape(1, c),
        wv.T, bv.reshape(1, c), cwv.T, cbv.reshape(1, c),
        wo.T, bo.reshape(1, c),
        er.T,                                   # (w, d)
    )

    def invariant_spec(a):                      # grid-invariant weights / biases
        zeros = (0,) * a.ndim
        return pl.BlockSpec(a.shape, lambda i, _z=zeros: _z)

    in_specs = ([pl.BlockSpec((m_blk, c), lambda i: (i, 0))]
                + [invariant_spec(a) for a in args[1:]])

    out2d = pl.pallas_call(
        functools.partial(mfa_kernel, num_bands, w),
        grid=(b // batch_block,),
        in_specs=in_specs,
        out_specs=pl.BlockSpec((m_blk, c), lambda i: (i, 0)),
        out_shape=jax.ShapeDtypeStruct((b * w, c), jnp.float32),
        compiler_params=pltpu.CompilerParams(
            # batch blocks are fully independent -> shard across TensorCores (v7x).
            dimension_semantics=("parallel",)),
    )(*args)
    return out2d.reshape(b, w, c)


def ref_forward(x, params, num_bands):
    """Pure-JAX mirror of the PyTorch forward (for verification)."""
    b, w, c = x.shape
    d = c // num_bands
    (wq, bq, cwq, cbq,
     wk, bk, cwk, cbk,
     wv, bv, cwv, cbv,
     wo, bo, er) = params

    def proj_conv(x, W, bias, cw, cb):
        y = x @ W.T + bias
        yp = jnp.pad(y, ((0, 0), (1, 1), (0, 0)))
        return (cw[None, None, :, 0] * yp[:, :-2]
                + cw[None, None, :, 1] * yp[:, 1:-1]
                + cw[None, None, :, 2] * yp[:, 2:]) + cb

    q = proj_conv(x, wq, bq, cwq, cbq).reshape(b, w, num_bands, d).transpose(0, 2, 1, 3)
    k = proj_conv(x, wk, bk, cwk, cbk).reshape(b, w, num_bands, d).transpose(0, 2, 3, 1)
    v = proj_conv(x, wv, bv, cwv, cbv).reshape(b, w, num_bands, d).transpose(0, 2, 1, 3)

    p = jnp.pad(jnp.einsum('bhwd,dc->bhwc', q, er),
                ((0, 0), (0, 0), (0, 0), (1, 0)))
    p = jnp.transpose(p, (0, 1, 3, 2))[:, :, 1:, :]
    qk = (jnp.einsum('bhwd,bhdk->bhwk', q, k) + p) / math.sqrt(c)
    a = jax.nn.softmax(qk, axis=-1)
    a = jnp.einsum('bhwk,bhkd->bhwd', a, v).transpose(0, 2, 1, 3).reshape(b, w, c)
    return a @ wo.T + bo


if __name__ == "__main__":
    # Small but TPU-friendly shapes: lane-dense c (multiple of 128), w a
    # multiple of 8; the relative-position add requires w == cropsize.
    num_bands, bins, cropsize = 4, 128, 32
    b, w, c = 4, cropsize, bins

    key = jax.random.PRNGKey(0)
    keys = jax.random.split(key, 16)

    def wmat(k):  # Linear weight (out, in)
        return 0.1 * jax.random.normal(k, (bins, bins), jnp.float32)

    def bvec(k):  # Linear / conv bias
        return 0.1 * jax.random.normal(k, (bins,), jnp.float32)

    def cmat(k):  # depthwise Conv1d weight (c, 1, 3) squeezed to (c, 3)
        return 0.2 * jax.random.normal(k, (bins, 3), jnp.float32)

    params = (wmat(keys[0]),  bvec(keys[1]),  cmat(keys[2]),  bvec(keys[3]),   # q
              wmat(keys[4]),  bvec(keys[5]),  cmat(keys[6]),  bvec(keys[7]),   # k
              wmat(keys[8]),  bvec(keys[9]),  cmat(keys[10]), bvec(keys[11]),  # v
              wmat(keys[12]), bvec(keys[13]),                                  # o
              jax.random.normal(keys[14], (bins // num_bands, cropsize), jnp.float32))  # er

    x = jax.random.normal(keys[15], (b, w, c), jnp.float32)

    out = multiband_frame_attention(x, params, num_bands)
    out = jax.block_until_ready(out)
    ref = ref_forward(x, params, num_bands)

    assert out.shape == (b, w, c)
    err = float(jnp.max(jnp.abs(out - ref)))
    # f32 matmuls; the only approximation is the EUP reciprocal in the softmax.
    if err > 2e-2:
        raise SystemExit(f"mismatch: max abs err {err}")
    print("KERNEL_OK")
</pallas_src>

<mosaic_0001>
module attributes {stable_mosaic.version = 11 : i64} {
  func.func @mfa_kernel(%arg0: i32, %arg1: memref<128x128xf32, #tpu.memory_space<vmem>>, %arg2: memref<128x128xf32, #tpu.memory_space<vmem>>, %arg3: memref<1x128xf32, #tpu.memory_space<vmem>>, %arg4: memref<3x128xf32, #tpu.memory_space<vmem>>, %arg5: memref<1x128xf32, #tpu.memory_space<vmem>>, %arg6: memref<128x128xf32, #tpu.memory_space<vmem>>, %arg7: memref<1x128xf32, #tpu.memory_space<vmem>>, %arg8: memref<3x128xf32, #tpu.memory_space<vmem>>, %arg9: memref<1x128xf32, #tpu.memory_space<vmem>>, %arg10: memref<128x128xf32, #tpu.memory_space<vmem>>, %arg11: memref<1x128xf32, #tpu.memory_space<vmem>>, %arg12: memref<3x128xf32, #tpu.memory_space<vmem>>, %arg13: memref<1x128xf32, #tpu.memory_space<vmem>>, %arg14: memref<128x128xf32, #tpu.memory_space<vmem>>, %arg15: memref<1x128xf32, #tpu.memory_space<vmem>>, %arg16: memref<32x32xf32, #tpu.memory_space<vmem>>, %arg17: memref<128x128xf32, #tpu.memory_space<vmem>>) attributes {dimension_semantics = [#tpu.dimension_semantics<parallel>], iteration_bounds = array<i64: 1>, scalar_prefetch = 0 : i64, scratch_operands = 0 : i64, tpu.core_type = #tpu.core_type<tc>, window_params = [{transform_indices = @transform_0, window_bounds = array<i64: 128, 128>}, {pipeline_mode = #tpu.pipeline_mode<synchronous>, transform_indices = @transform_1, window_bounds = array<i64: 128, 128>}, {pipeline_mode = #tpu.pipeline_mode<synchronous>, transform_indices = @transform_2, window_bounds = array<i64: 1, 128>}, {pipeline_mode = #tpu.pipeline_mode<synchronous>, transform_indices = @transform_3, window_bounds = array<i64: 3, 128>}, {pipeline_mode = #tpu.pipeline_mode<synchronous>, transform_indices = @transform_4, window_bounds = array<i64: 1, 128>}, {pipeline_mode = #tpu.pipeline_mode<synchronous>, transform_indices = @transform_5, window_bounds = array<i64: 128, 128>}, {pipeline_mode = #tpu.pipeline_mode<synchronous>, transform_indices = @transform_6, window_bounds = array<i64: 1, 128>}, {pipeline_mode = #tpu.pipeline_mode<synchronous>, transform_indices = @transform_7, window_bounds = array<i64: 3, 128>}, {pipeline_mode = #tpu.pipeline_mode<synchronous>, transform_indices = @transform_8, window_bounds = array<i64: 1, 128>}, {pipeline_mode = #tpu.pipeline_mode<synchronous>, transform_indices = @transform_9, window_bounds = array<i64: 128, 128>}, {pipeline_mode = #tpu.pipeline_mode<synchronous>, transform_indices = @transform_10, window_bounds = array<i64: 1, 128>}, {pipeline_mode = #tpu.pipeline_mode<synchronous>, transform_indices = @transform_11, window_bounds = array<i64: 3, 128>}, {pipeline_mode = #tpu.pipeline_mode<synchronous>, transform_indices = @transform_12, window_bounds = array<i64: 1, 128>}, {pipeline_mode = #tpu.pipeline_mode<synchronous>, transform_indices = @transform_13, window_bounds = array<i64: 128, 128>}, {pipeline_mode = #tpu.pipeline_mode<synchronous>, transform_indices = @transform_14, window_bounds = array<i64: 1, 128>}, {pipeline_mode = #tpu.pipeline_mode<synchronous>, transform_indices = @transform_15, window_bounds = array<i64: 32, 32>}, {transform_indices = @transform_16, window_bounds = array<i64: 128, 128>}]} {
    %c0 = arith.constant 0 : index
    %c0_0 = arith.constant 0 : index
    %0 = vector.load %arg1[%c0, %c0_0] : memref<128x128xf32, #tpu.memory_space<vmem>>, vector<128x128xf32>
    %1 = tpu.iota {dimensions = array<i32: 0>} : vector<128x128xi32>
    %c32_i32 = arith.constant 32 : i32
    %c0_i32 = arith.constant 0 : i32
    %2 = arith.cmpi eq, %c32_i32, %c0_i32 : i32
    %c1_i32 = arith.constant 1 : i32
    %3 = arith.select %2, %c1_i32, %c32_i32 : i32
    %4 = vector.broadcast %3 : i32 to vector<128x128xi32>
    %5 = arith.remsi %1, %4 : vector<128x128xi32>
    %c0_i32_1 = arith.constant 0 : i32
    %6 = vector.broadcast %c0_i32_1 : i32 to vector<128x128xi32>
    %7 = arith.cmpi ne, %5, %6 : vector<128x128xi32>
    %c0_i32_2 = arith.constant 0 : i32
    %8 = vector.broadcast %c0_i32_2 : i32 to vector<128x128xi32>
    %9 = arith.cmpi slt, %5, %8 : vector<128x128xi32>
    %c0_i32_3 = arith.constant 0 : i32
    %10 = arith.cmpi slt, %3, %c0_i32_3 : i32
    %11 = vector.broadcast %10 : i1 to vector<128x128xi1>
    %12 = vector.broadcast %11 : vector<128x128xi1> to vector<128x128xi1>
    %13 = arith.xori %9, %12 : vector<128x128xi1>
    %14 = arith.andi %13, %7 : vector<128x128xi1>
    %15 = vector.broadcast %3 : i32 to vector<128x128xi32>
    %16 = arith.addi %5, %15 : vector<128x128xi32>
    %17 = arith.select %14, %16, %5 : vector<128x128xi1>, vector<128x128xi32>
    %c0_i32_4 = arith.constant 0 : i32
    %18 = vector.broadcast %c0_i32_4 : i32 to vector<128x128xi32>
    %19 = arith.cmpi ne, %17, %18 : vector<128x128xi32>
    %c31_i32 = arith.constant 31 : i32
    %20 = vector.broadcast %c31_i32 : i32 to vector<128x128xi32>
    %21 = arith.cmpi ne, %17, %20 : vector<128x128xi32>
    %c0_5 = arith.constant 0 : index
    %c0_6 = arith.constant 0 : index
    %22 = vector.load %arg2[%c0_5, %c0_6] : memref<128x128xf32, #tpu.memory_space<vmem>>, vector<128x128xf32>
    %c0_7 = arith.constant 0 : index
    %c0_8 = arith.constant 0 : index
    %23 = vector.load %arg3[%c0_7, %c0_8] : memref<1x128xf32, #tpu.memory_space<vmem>>, vector<1x128xf32>
    %c0_9 = arith.constant 0 : index
    %c0_10 = arith.constant 0 : index
    %24 = vector.load %arg4[%c0_9, %c0_10] : memref<3x128xf32, #tpu.memory_space<vmem>>, vector<3x128xf32>
    %c0_11 = arith.constant 0 : index
    %c0_12 = arith.constant 0 : index
    %25 = vector.load %arg5[%c0_11, %c0_12] : memref<1x128xf32, #tpu.memory_space<vmem>>, vector<1x128xf32>
    %cst = arith.constant dense<0.000000e+00> : vector<128x128xf32>
    %26 = tpu.matmul %0, %22, %cst {dimension_numbers = #tpu.dot_dimension_numbers<[1], [0], [0], [1], [0, 0, 1, 1], [], []>} : vector<128x128xf32>, vector<128x128xf32>, vector<128x128xf32> -> vector<128x128xf32>
    %27 = vector.broadcast %23 : vector<1x128xf32> to vector<128x128xf32>
    %28 = arith.addf %26, %27 : vector<128x128xf32>
    %c1_i32_13 = arith.constant 1 : i32
    %29 = tpu.dynamic_rotate %28 by %c1_i32_13 dim 0 : vector<128x128xf32>, i32 -> vector<128x128xf32>
    %cst_14 = arith.constant 0.000000e+00 : f32
    %30 = vector.broadcast %cst_14 : f32 to vector<128x128xf32>
    %31 = arith.select %19, %29, %30 : vector<128x128xi1>, vector<128x128xf32>
    %c127_i32 = arith.constant 127 : i32
    %32 = tpu.dynamic_rotate %28 by %c127_i32 dim 0 : vector<128x128xf32>, i32 -> vector<128x128xf32>
    %cst_15 = arith.constant 0.000000e+00 : f32
    %33 = vector.broadcast %cst_15 : f32 to vector<128x128xf32>
    %34 = arith.select %21, %32, %33 : vector<128x128xi1>, vector<128x128xf32>
    %35 = vector.extract_strided_slice %24 {offsets = [0, 0], sizes = [1, 128], strides = [1, 1]} : vector<3x128xf32> to vector<1x128xf32>
    %36 = vector.broadcast %35 : vector<1x128xf32> to vector<128x128xf32>
    %37 = arith.mulf %36, %31 : vector<128x128xf32>
    %38 = vector.extract_strided_slice %24 {offsets = [1, 0], sizes = [1, 128], strides = [1, 1]} : vector<3x128xf32> to vector<1x128xf32>
    %39 = vector.broadcast %38 : vector<1x128xf32> to vector<128x128xf32>
    %40 = arith.mulf %39, %28 : vector<128x128xf32>
    %41 = arith.addf %37, %40 : vector<128x128xf32>
    %42 = vector.extract_strided_slice %24 {offsets = [2, 0], sizes = [1, 128], strides = [1, 1]} : vector<3x128xf32> to vector<1x128xf32>
    %43 = vector.broadcast %42 : vector<1x128xf32> to vector<128x128xf32>
    %44 = arith.mulf %43, %34 : vector<128x128xf32>
    %45 = arith.addf %41, %44 : vector<128x128xf32>
    %46 = vector.broadcast %25 : vector<1x128xf32> to vector<128x128xf32>
    %47 = arith.addf %45, %46 : vector<128x128xf32>
    %c0_16 = arith.constant 0 : index
    %c0_17 = arith.constant 0 : index
    %48 = vector.load %arg6[%c0_16, %c0_17] : memref<128x128xf32, #tpu.memory_space<vmem>>, vector<128x128xf32>
    %c0_18 = arith.constant 0 : index
    %c0_19 = arith.constant 0 : index
    %49 = vector.load %arg7[%c0_18, %c0_19] : memref<1x128xf32, #tpu.memory_space<vmem>>, vector<1x128xf32>
    %c0_20 = arith.constant 0 : index
    %c0_21 = arith.constant 0 : index
    %50 = vector.load %arg8[%c0_20, %c0_21] : memref<3x128xf32, #tpu.memory_space<vmem>>, vector<3x128xf32>
    %c0_22 = arith.constant 0 : index
    %c0_23 = arith.constant 0 : index
    %51 = vector.load %arg9[%c0_22, %c0_23] : memref<1x128xf32, #tpu.memory_space<vmem>>, vector<1x128xf32>
    %cst_24 = arith.constant dense<0.000000e+00> : vector<128x128xf32>
    %52 = tpu.matmul %0, %48, %cst_24 {dimension_numbers = #tpu.dot_dimension_numbers<[1], [0], [0], [1], [0, 0, 1, 1], [], []>} : vector<128x128xf32>, vector<128x128xf32>, vector<128x128xf32> -> vector<128x128xf32>
    %53 = vector.broadcast %49 : vector<1x128xf32> to vector<128x128xf32>
    %54 = arith.addf %52, %53 : vector<128x128xf32>
    %c1_i32_25 = arith.constant 1 : i32
    %55 = tpu.dynamic_rotate %54 by %c1_i32_25 dim 0 : vector<128x128xf32>, i32 -> vector<128x128xf32>
    %cst_26 = arith.constant 0.000000e+00 : f32
    %56 = vector.broadcast %cst_26 : f32 to vector<128x128xf32>
    %57 = arith.select %19, %55, %56 : vector<128x128xi1>, vector<128x128xf32>
    %c127_i32_27 = arith.constant 127 : i32
    %58 = tpu.dynamic_rotate %54 by %c127_i32_27 dim 0 : vector<128x128xf32>, i32 -> vector<128x128xf32>
    %cst_28 = arith.constant 0.000000e+00 : f32
    %59 = vector.broadcast %cst_28 : f32 to vector<128x128xf32>
    %60 = arith.select %21, %58, %59 : vector<128x128xi1>, vector<128x128xf32>
    %61 = vector.extract_strided_slice %50 {offsets = [0, 0], sizes = [1, 128], strides = [1, 1]} : vector<3x128xf32> to vector<1x128xf32>
    %62 = vector.broadcast %61 : vector<1x128xf32> to vector<128x128xf32>
    %63 = arith.mulf %62, %57 : vector<128x128xf32>
    %64 = vector.extract_strided_slice %50 {offsets = [1, 0], sizes = [1, 128], strides = [1, 1]} : vector<3x128xf32> to vector<1x128xf32>
    %65 = vector.broadcast %64 : vector<1x128xf32> to vector<128x128xf32>
    %66 = arith.mulf %65, %54 : vector<128x128xf32>
    %67 = arith.addf %63, %66 : vector<128x128xf32>
    %68 = vector.extract_strided_slice %50 {offsets = [2, 0], sizes = [1, 128], strides = [1, 1]} : vector<3x128xf32> to vector<1x128xf32>
    %69 = vector.broadcast %68 : vector<1x128xf32> to vector<128x128xf32>
    %70 = arith.mulf %69, %60 : vector<128x128xf32>
    %71 = arith.addf %67, %70 : vector<128x128xf32>
    %72 = vector.broadcast %51 : vector<1x128xf32> to vector<128x128xf32>
    %73 = arith.addf %71, %72 : vector<128x128xf32>
    %c0_29 = arith.constant 0 : index
    %c0_30 = arith.constant 0 : index
    %74 = vector.load %arg10[%c0_29, %c0_30] : memref<128x128xf32, #tpu.memory_space<vmem>>, vector<128x128xf32>
    %c0_31 = arith.constant 0 : index
    %c0_32 = arith.constant 0 : index
    %75 = vector.load %arg11[%c0_31, %c0_32] : memref<1x128xf32, #tpu.memory_space<vmem>>, vector<1x128xf32>
    %c0_33 = arith.constant 0 : index
    %c0_34 = arith.constant 0 : index
    %76 = vector.load %arg12[%c0_33, %c0_34] : memref<3x128xf32, #tpu.memory_space<vmem>>, vector<3x128xf32>
    %c0_35 = arith.constant 0 : index
    %c0_36 = arith.constant 0 : index
    %77 = vector.load %arg13[%c0_35, %c0_36] : memref<1x128xf32, #tpu.memory_space<vmem>>, vector<1x128xf32>
    %cst_37 = arith.constant dense<0.000000e+00> : vector<128x128xf32>
    %78 = tpu.matmul %0, %74, %cst_37 {dimension_numbers = #tpu.dot_dimension_numbers<[1], [0], [0], [1], [0, 0, 1, 1], [], []>} : vector<128x128xf32>, vector<128x128xf32>, vector<128x128xf32> -> vector<128x128xf32>
    %79 = vector.broadcast %75 : vector<1x128xf32> to vector<128x128xf32>
    %80 = arith.addf %78, %79 : vector<128x128xf32>
    %c1_i32_38 = arith.constant 1 : i32
    %81 = tpu.dynamic_rotate %80 by %c1_i32_38 dim 0 : vector<128x128xf32>, i32 -> vector<128x128xf32>
    %cst_39 = arith.constant 0.000000e+00 : f32
    %82 = vector.broadcast %cst_39 : f32 to vector<128x128xf32>
    %83 = arith.select %19, %81, %82 : vector<128x128xi1>, vector<128x128xf32>
    %c127_i32_40 = arith.constant 127 : i32
    %84 = tpu.dynamic_rotate %80 by %c127_i32_40 dim 0 : vector<128x128xf32>, i32 -> vector<128x128xf32>
    %cst_41 = arith.constant 0.000000e+00 : f32
    %85 = vector.broadcast %cst_41 : f32 to vector<128x128xf32>
    %86 = arith.select %21, %84, %85 : vector<128x128xi1>, vector<128x128xf32>
    %87 = vector.extract_strided_slice %76 {offsets = [0, 0], sizes = [1, 128], strides = [1, 1]} : vector<3x128xf32> to vector<1x128xf32>
    %88 = vector.broadcast %87 : vector<1x128xf32> to vector<128x128xf32>
    %89 = arith.mulf %88, %83 : vector<128x128xf32>
    %90 = vector.extract_strided_slice %76 {offsets = [1, 0], sizes = [1, 128], strides = [1, 1]} : vector<3x128xf32> to vector<1x128xf32>
    %91 = vector.broadcast %90 : vector<1x128xf32> to vector<128x128xf32>
    %92 = arith.mulf %91, %80 : vector<128x128xf32>
    %93 = arith.addf %89, %92 : vector<128x128xf32>
    %94 = vector.extract_strided_slice %76 {offsets = [2, 0], sizes = [1, 128], strides = [1, 1]} : vector<3x128xf32> to vector<1x128xf32>
    %95 = vector.broadcast %94 : vector<1x128xf32> to vector<128x128xf32>
    %96 = arith.mulf %95, %86 : vector<128x128xf32>
    %97 = arith.addf %93, %96 : vector<128x128xf32>
    %98 = vector.broadcast %77 : vector<1x128xf32> to vector<128x128xf32>
    %99 = arith.addf %97, %98 : vector<128x128xf32>
    %c0_42 = arith.constant 0 : index
    %c0_43 = arith.constant 0 : index
    %100 = vector.load %arg14[%c0_42, %c0_43] : memref<128x128xf32, #tpu.memory_space<vmem>>, vector<128x128xf32>
    %c0_44 = arith.constant 0 : index
    %c0_45 = arith.constant 0 : index
    %101 = vector.load %arg15[%c0_44, %c0_45] : memref<1x128xf32, #tpu.memory_space<vmem>>, vector<1x128xf32>
    %c0_46 = arith.constant 0 : index
    %c0_47 = arith.constant 0 : index
    %102 = vector.load %arg16[%c0_46, %c0_47] : memref<32x32xf32, #tpu.memory_space<vmem>>, vector<32x32xf32>
    %103 = vector.extract_strided_slice %47 {offsets = [0, 0], sizes = [32, 128], strides = [1, 1]} : vector<128x128xf32> to vector<32x128xf32>
    %104 = vector.extract_strided_slice %73 {offsets = [0, 0], sizes = [32, 128], strides = [1, 1]} : vector<128x128xf32> to vector<32x128xf32>
    %105 = vector.extract_strided_slice %99 {offsets = [0, 0], sizes = [32, 128], strides = [1, 1]} : vector<128x128xf32> to vector<32x128xf32>
    %cst_48 = arith.constant 0.000000e+00 : f32
    %106 = vector.broadcast %cst_48 : f32 to vector<32x128xf32>
    %107 = vector.extract_strided_slice %103 {offsets = [0, 0], sizes = [32, 32], strides = [1, 1]} : vector<32x128xf32> to vector<32x32xf32>
    %108 = vector.extract_strided_slice %104 {offsets = [0, 0], sizes = [32, 32], strides = [1, 1]} : vector<32x128xf32> to vector<32x32xf32>
    %109 = vector.extract_strided_slice %105 {offsets = [0, 0], sizes = [32, 32], strides = [1, 1]} : vector<32x128xf32> to vector<32x32xf32>
    %cst_49 = arith.constant dense<0.000000e+00> : vector<32x32xf32>
    %110 = tpu.matmul %107, %108, %cst_49 {dimension_numbers = #tpu.dot_dimension_numbers<[1], [1], [0], [0], [0, 0, 1, 0], [], []>} : vector<32x32xf32>, vector<32x32xf32>, vector<32x32xf32> -> vector<32x32xf32>
    %cst_50 = arith.constant dense<0.000000e+00> : vector<32x32xf32>
    %111 = tpu.matmul %102, %107, %cst_50 {dimension_numbers = #tpu.dot_dimension_numbers<[1], [1], [0], [0], [0, 0, 1, 0], [], []>} : vector<32x32xf32>, vector<32x32xf32>, vector<32x32xf32> -> vector<32x32xf32>
    %112 = arith.addf %110, %111 : vector<32x32xf32>
    %cst_51 = arith.constant dense<0xFF800000> : vector<32xf32>
    %113 = vector.multi_reduction <maximumf>, %112, %cst_51 [1] : vector<32x32xf32> to vector<32xf32>
    %114 = vector.shape_cast %113 : vector<32xf32> to vector<32x1xf32>
    %115 = vector.broadcast %114 : vector<32x1xf32> to vector<32x32xf32>
    %116 = arith.subf %112, %115 : vector<32x32xf32>
    %117 = math.exp %116 : vector<32x32xf32>
    %cst_52 = arith.constant dense<0.000000e+00> : vector<32xf32>
    %118 = vector.multi_reduction <add>, %117, %cst_52 [1] : vector<32x32xf32> to vector<32xf32>
    %119 = vector.shape_cast %118 : vector<32xf32> to vector<32x1xf32>
    %120 = tpu.reciprocal %119 {approx = true} : vector<32x1xf32> -> vector<32x1xf32>
    %121 = vector.broadcast %120 : vector<32x1xf32> to vector<32x32xf32>
    %122 = arith.mulf %117, %121 : vector<32x32xf32>
    %cst_53 = arith.constant dense<0.000000e+00> : vector<32x32xf32>
    %123 = tpu.matmul %122, %109, %cst_53 {dimension_numbers = #tpu.dot_dimension_numbers<[1], [0], [0], [1], [0, 0, 1, 1], [], []>} : vector<32x32xf32>, vector<32x32xf32>, vector<32x32xf32> -> vector<32x32xf32>
    %124 = vector.extract_strided_slice %100 {offsets = [0, 0], sizes = [32, 128], strides = [1, 1]} : vector<128x128xf32> to vector<32x128xf32>
    %cst_54 = arith.constant dense<0.000000e+00> : vector<32x128xf32>
    %125 = tpu.matmul %123, %124, %cst_54 {dimension_numbers = #tpu.dot_dimension_numbers<[1], [0], [0], [1], [0, 0, 1, 1], [], []>} : vector<32x32xf32>, vector<32x128xf32>, vector<32x128xf32> -> vector<32x128xf32>
    %126 = arith.addf %106, %125 : vector<32x128xf32>
    %127 = vector.extract_strided_slice %103 {offsets = [0, 32], sizes = [32, 32], strides = [1, 1]} : vector<32x128xf32> to vector<32x32xf32>
    %128 = vector.extract_strided_slice %104 {offsets = [0, 32], sizes = [32, 32], strides = [1, 1]} : vector<32x128xf32> to vector<32x32xf32>
    %129 = vector.extract_strided_slice %105 {offsets = [0, 32], sizes = [32, 32], strides = [1, 1]} : vector<32x128xf32> to vector<32x32xf32>
    %cst_55 = arith.constant dense<0.000000e+00> : vector<32x32xf32>
    %130 = tpu.matmul %127, %128, %cst_55 {dimension_numbers = #tpu.dot_dimension_numbers<[1], [1], [0], [0], [0, 0, 1, 0], [], []>} : vector<32x32xf32>, vector<32x32xf32>, vector<32x32xf32> -> vector<32x32xf32>
    %cst_56 = arith.constant dense<0.000000e+00> : vector<32x32xf32>
    %131 = tpu.matmul %102, %127, %cst_56 {dimension_numbers = #tpu.dot_dimension_numbers<[1], [1], [0], [0], [0, 0, 1, 0], [], []>} : vector<32x32xf32>, vector<32x32xf32>, vector<32x32xf32> -> vector<32x32xf32>
    %132 = arith.addf %130, %131 : vector<32x32xf32>
    %cst_57 = arith.constant dense<0xFF800000> : vector<32xf32>
    %133 = vector.multi_reduction <maximumf>, %132, %cst_57 [1] : vector<32x32xf32> to vector<32xf32>
    %134 = vector.shape_cast %133 : vector<32xf32> to vector<32x1xf32>
    %135 = vector.broadcast %134 : vector<32x1xf32> to vector<32x32xf32>
    %136 = arith.subf %132, %135 : vector<32x32xf32>
    %137 = math.exp %136 : vector<32x32xf32>
    %cst_58 = arith.constant dense<0.000000e+00> : vector<32xf32>
    %138 = vector.multi_reduction <add>, %137, %cst_58 [1] : vector<32x32xf32> to vector<32xf32>
    %139 = vector.shape_cast %138 : vector<32xf32> to vector<32x1xf32>
    %140 = tpu.reciprocal %139 {approx = true} : vector<32x1xf32> -> vector<32x1xf32>
    %141 = vector.broadcast %140 : vector<32x1xf32> to vector<32x32xf32>
    %142 = arith.mulf %137, %141 : vector<32x32xf32>
    %cst_59 = arith.constant dense<0.000000e+00> : vector<32x32xf32>
    %143 = tpu.matmul %142, %129, %cst_59 {dimension_numbers = #tpu.dot_dimension_numbers<[1], [0], [0], [1], [0, 0, 1, 1], [], []>} : vector<32x32xf32>, vector<32x32xf32>, vector<32x32xf32> -> vector<32x32xf32>
    %144 = vector.extract_strided_slice %100 {offsets = [32, 0], sizes = [32, 128], strides = [1, 1]} : vector<128x128xf32> to vector<32x128xf32>
    %cst_60 = arith.constant dense<0.000000e+00> : vector<32x128xf32>
    %145 = tpu.matmul %143, %144, %cst_60 {dimension_numbers = #tpu.dot_dimension_numbers<[1], [0], [0], [1], [0, 0, 1, 1], [], []>} : vector<32x32xf32>, vector<32x128xf32>, vector<32x128xf32> -> vector<32x128xf32>
    %146 = arith.addf %126, %145 : vector<32x128xf32>
    %147 = vector.extract_strided_slice %103 {offsets = [0, 64], sizes = [32, 32], strides = [1, 1]} : vector<32x128xf32> to vector<32x32xf32>
    %148 = vector.extract_strided_slice %104 {offsets = [0, 64], sizes = [32, 32], strides = [1, 1]} : vector<32x128xf32> to vector<32x32xf32>
    %149 = vector.extract_strided_slice %105 {offsets = [0, 64], sizes = [32, 32], strides = [1, 1]} : vector<32x128xf32> to vector<32x32xf32>
    %cst_61 = arith.constant dense<0.000000e+00> : vector<32x32xf32>
    %150 = tpu.matmul %147, %148, %cst_61 {dimension_numbers = #tpu.dot_dimension_numbers<[1], [1], [0], [0], [0, 0, 1, 0], [], []>} : vector<32x32xf32>, vector<32x32xf32>, vector<32x32xf32> -> vector<32x32xf32>
    %cst_62 = arith.constant dense<0.000000e+00> : vector<32x32xf32>
    %151 = tpu.matmul %102, %147, %cst_62 {dimension_numbers = #tpu.dot_dimension_numbers<[1], [1], [0], [0], [0, 0, 1, 0], [], []>} : vector<32x32xf32>, vector<32x32xf32>, vector<32x32xf32> -> vector<32x32xf32>
    %152 = arith.addf %150, %151 : vector<32x32xf32>
    %cst_63 = arith.constant dense<0xFF800000> : vector<32xf32>
    %153 = vector.multi_reduction <maximumf>, %152, %cst_63 [1] : vector<32x32xf32> to vector<32xf32>
    %154 = vector.shape_cast %153 : vector<32xf32> to vector<32x1xf32>
    %155 = vector.broadcast %154 : vector<32x1xf32> to vector<32x32xf32>
    %156 = arith.subf %152, %155 : vector<32x32xf32>
    %157 = math.exp %156 : vector<32x32xf32>
    %cst_64 = arith.constant dense<0.000000e+00> : vector<32xf32>
    %158 = vector.multi_reduction <add>, %157, %cst_64 [1] : vector<32x32xf32> to vector<32xf32>
    %159 = vector.shape_cast %158 : vector<32xf32> to vector<32x1xf32>
    %160 = tpu.reciprocal %159 {approx = true} : vector<32x1xf32> -> vector<32x1xf32>
    %161 = vector.broadcast %160 : vector<32x1xf32> to vector<32x32xf32>
    %162 = arith.mulf %157, %161 : vector<32x32xf32>
    %cst_65 = arith.constant dense<0.000000e+00> : vector<32x32xf32>
    %163 = tpu.matmul %162, %149, %cst_65 {dimension_numbers = #tpu.dot_dimension_numbers<[1], [0], [0], [1], [0, 0, 1, 1], [], []>} : vector<32x32xf32>, vector<32x32xf32>, vector<32x32xf32> -> vector<32x32xf32>
    %164 = vector.extract_strided_slice %100 {offsets = [64, 0], sizes = [32, 128], strides = [1, 1]} : vector<128x128xf32> to vector<32x128xf32>
    %cst_66 = arith.constant dense<0.000000e+00> : vector<32x128xf32>
    %165 = tpu.matmul %163, %164, %cst_66 {dimension_numbers = #tpu.dot_dimension_numbers<[1], [0], [0], [1], [0, 0, 1, 1], [], []>} : vector<32x32xf32>, vector<32x128xf32>, vector<32x128xf32> -> vector<32x128xf32>
    %166 = arith.addf %146, %165 : vector<32x128xf32>
    %167 = vector.extract_strided_slice %103 {offsets = [0, 96], sizes = [32, 32], strides = [1, 1]} : vector<32x128xf32> to vector<32x32xf32>
    %168 = vector.extract_strided_slice %104 {offsets = [0, 96], sizes = [32, 32], strides = [1, 1]} : vector<32x128xf32> to vector<32x32xf32>
    %169 = vector.extract_strided_slice %105 {offsets = [0, 96], sizes = [32, 32], strides = [1, 1]} : vector<32x128xf32> to vector<32x32xf32>
    %cst_67 = arith.constant dense<0.000000e+00> : vector<32x32xf32>
    %170 = tpu.matmul %167, %168, %cst_67 {dimension_numbers = #tpu.dot_dimension_numbers<[1], [1], [0], [0], [0, 0, 1, 0], [], []>} : vector<32x32xf32>, vector<32x32xf32>, vector<32x32xf32> -> vector<32x32xf32>
    %cst_68 = arith.constant dense<0.000000e+00> : vector<32x32xf32>
    %171 = tpu.matmul %102, %167, %cst_68 {dimension_numbers = #tpu.dot_dimension_numbers<[1], [1], [0], [0], [0, 0, 1, 0], [], []>} : vector<32x32xf32>, vector<32x32xf32>, vector<32x32xf32> -> vector<32x32xf32>
    %172 = arith.addf %170, %171 : vector<32x32xf32>
    %cst_69 = arith.constant dense<0xFF800000> : vector<32xf32>
    %173 = vector.multi_reduction <maximumf>, %172, %cst_69 [1] : vector<32x32xf32> to vector<32xf32>
    %174 = vector.shape_cast %173 : vector<32xf32> to vector<32x1xf32>
    %175 = vector.broadcast %174 : vector<32x1xf32> to vector<32x32xf32>
    %176 = arith.subf %172, %175 : vector<32x32xf32>
    %177 = math.exp %176 : vector<32x32xf32>
    %cst_70 = arith.constant dense<0.000000e+00> : vector<32xf32>
    %178 = vector.multi_reduction <add>, %177, %cst_70 [1] : vector<32x32xf32> to vector<32xf32>
    %179 = vector.shape_cast %178 : vector<32xf32> to vector<32x1xf32>
    %180 = tpu.reciprocal %179 {approx = true} : vector<32x1xf32> -> vector<32x1xf32>
    %181 = vector.broadcast %180 : vector<32x1xf32> to vector<32x32xf32>
    %182 = arith.mulf %177, %181 : vector<32x32xf32>
    %cst_71 = arith.constant dense<0.000000e+00> : vector<32x32xf32>
    %183 = tpu.matmul %182, %169, %cst_71 {dimension_numbers = #tpu.dot_dimension_numbers<[1], [0], [0], [1], [0, 0, 1, 1], [], []>} : vector<32x32xf32>, vector<32x32xf32>, vector<32x32xf32> -> vector<32x32xf32>
    %184 = vector.extract_strided_slice %100 {offsets = [96, 0], sizes = [32, 128], strides = [1, 1]} : vector<128x128xf32> to vector<32x128xf32>
    %cst_72 = arith.constant dense<0.000000e+00> : vector<32x128xf32>
    %185 = tpu.matmul %183, %184, %cst_72 {dimension_numbers = #tpu.dot_dimension_numbers<[1], [0], [0], [1], [0, 0, 1, 1], [], []>} : vector<32x32xf32>, vector<32x128xf32>, vector<32x128xf32> -> vector<32x128xf32>
    %186 = arith.addf %166, %185 : vector<32x128xf32>
    %187 = vector.broadcast %101 : vector<1x128xf32> to vector<32x128xf32>
    %188 = arith.addf %186, %187 : vector<32x128xf32>
    %c0_73 = arith.constant 0 : index
    %c0_74 = arith.constant 0 : index
    %189 = vector.load %arg17[%c0_73, %c0_74] : memref<128x128xf32, #tpu.memory_space<vmem>>, vector<32x128xf32>
    tpu.vector_store %arg17[%c0_73, %c0_74], %188 {strides = array<i32>} : memref<128x128xf32, #tpu.memory_space<vmem>>, vector<32x128xf32>,
    %190 = vector.extract_strided_slice %47 {offsets = [32, 0], sizes = [32, 128], strides = [1, 1]} : vector<128x128xf32> to vector<32x128xf32>
    %191 = vector.extract_strided_slice %73 {offsets = [32, 0], sizes = [32, 128], strides = [1, 1]} : vector<128x128xf32> to vector<32x128xf32>
    %192 = vector.extract_strided_slice %99 {offsets = [32, 0], sizes = [32, 128], strides = [1, 1]} : vector<128x128xf32> to vector<32x128xf32>
    %cst_75 = arith.constant 0.000000e+00 : f32
    %193 = vector.broadcast %cst_75 : f32 to vector<32x128xf32>
    %194 = vector.extract_strided_slice %190 {offsets = [0, 0], sizes = [32, 32], strides = [1, 1]} : vector<32x128xf32> to vector<32x32xf32>
    %195 = vector.extract_strided_slice %191 {offsets = [0, 0], sizes = [32, 32], strides = [1, 1]} : vector<32x128xf32> to vector<32x32xf32>
    %196 = vector.extract_strided_slice %192 {offsets = [0, 0], sizes = [32, 32], strides = [1, 1]} : vector<32x128xf32> to vector<32x32xf32>
    %cst_76 = arith.constant dense<0.000000e+00> : vector<32x32xf32>
    %197 = tpu.matmul %194, %195, %cst_76 {dimension_numbers = #tpu.dot_dimension_numbers<[1], [1], [0], [0], [0, 0, 1, 0], [], []>} : vector<32x32xf32>, vector<32x32xf32>, vector<32x32xf32> -> vector<32x32xf32>
    %cst_77 = arith.constant dense<0.000000e+00> : vector<32x32xf32>
    %198 = tpu.matmul %102, %194, %cst_77 {dimension_numbers = #tpu.dot_dimension_numbers<[1], [1], [0], [0], [0, 0, 1, 0], [], []>} : vector<32x32xf32>, vector<32x32xf32>, vector<32x32xf32> -> vector<32x32xf32>
    %199 = arith.addf %197, %198 : vector<32x32xf32>
    %cst_78 = arith.constant dense<0xFF800000> : vector<32xf32>
    %200 = vector.multi_reduction <maximumf>, %199, %cst_78 [1] : vector<32x32xf32> to vector<32xf32>
    %201 = vector.shape_cast %200 : vector<32xf32> to vector<32x1xf32>
    %202 = vector.broadcast %201 : vector<32x1xf32> to vector<32x32xf32>
    %203 = arith.subf %199, %202 : vector<32x32xf32>
    %204 = math.exp %203 : vector<32x32xf32>
    %cst_79 = arith.constant dense<0.000000e+00> : vector<32xf32>
    %205 = vector.multi_reduction <add>, %204, %cst_79 [1] : vector<32x32xf32> to vector<32xf32>
    %206 = vector.shape_cast %205 : vector<32xf32> to vector<32x1xf32>
    %207 = tpu.reciprocal %206 {approx = true} : vector<32x1xf32> -> vector<32x1xf32>
    %208 = vector.broadcast %207 : vector<32x1xf32> to vector<32x32xf32>
    %209 = arith.mulf %204, %208 : vector<32x32xf32>
    %cst_80 = arith.constant dense<0.000000e+00> : vector<32x32xf32>
    %210 = tpu.matmul %209, %196, %cst_80 {dimension_numbers = #tpu.dot_dimension_numbers<[1], [0], [0], [1], [0, 0, 1, 1], [], []>} : vector<32x32xf32>, vector<32x32xf32>, vector<32x32xf32> -> vector<32x32xf32>
    %211 = vector.extract_strided_slice %100 {offsets = [0, 0], sizes = [32, 128], strides = [1, 1]} : vector<128x128xf32> to vector<32x128xf32>
    %cst_81 = arith.constant dense<0.000000e+00> : vector<32x128xf32>
    %212 = tpu.matmul %210, %211, %cst_81 {dimension_numbers = #tpu.dot_dimension_numbers<[1], [0], [0], [1], [0, 0, 1, 1], [], []>} : vector<32x32xf32>, vector<32x128xf32>, vector<32x128xf32> -> vector<32x128xf32>
    %213 = arith.addf %193, %212 : vector<32x128xf32>
    %214 = vector.extract_strided_slice %190 {offsets = [0, 32], sizes = [32, 32], strides = [1, 1]} : vector<32x128xf32> to vector<32x32xf32>
    %215 = vector.extract_strided_slice %191 {offsets = [0, 32], sizes = [32, 32], strides = [1, 1]} : vector<32x128xf32> to vector<32x32xf32>
    %216 = vector.extract_strided_slice %192 {offsets = [0, 32], sizes = [32, 32], strides = [1, 1]} : vector<32x128xf32> to vector<32x32xf32>
    %cst_82 = arith.constant dense<0.000000e+00> : vector<32x32xf32>
    %217 = tpu.matmul %214, %215, %cst_82 {dimension_numbers = #tpu.dot_dimension_numbers<[1], [1], [0], [0], [0, 0, 1, 0], [], []>} : vector<32x32xf32>, vector<32x32xf32>, vector<32x32xf32> -> vector<32x32xf32>
    %cst_83 = arith.constant dense<0.000000e+00> : vector<32x32xf32>
    %218 = tpu.matmul %102, %214, %cst_83 {dimension_numbers = #tpu.dot_dimension_numbers<[1], [1], [0], [0], [0, 0, 1, 0], [], []>} : vector<32x32xf32>, vector<32x32xf32>, vector<32x32xf32> -> vector<32x32xf32>
    %219 = arith.addf %217, %218 : vector<32x32xf32>
    %cst_84 = arith.constant dense<0xFF800000> : vector<32xf32>
    %220 = vector.multi_reduction <maximumf>, %219, %cst_84 [1] : vector<32x32xf32> to vector<32xf32>
    %221 = vector.shape_cast %220 : vector<32xf32> to vector<32x1xf32>
    %222 = vector.broadcast %221 : vector<32x1xf32> to vector<32x32xf32>
    %223 = arith.subf %219, %222 : vector<32x32xf32>
    %224 = math.exp %223 : vector<32x32xf32>
    %cst_85 = arith.constant dense<0.000000e+00> : vector<32xf32>
    %225 = vector.multi_reduction <add>, %224, %cst_85 [1] : vector<32x32xf32> to vector<32xf32>
    %226 = vector.shape_cast %225 : vector<32xf32> to vector<32x1xf32>
    %227 = tpu.reciprocal %226 {approx = true} : vector<32x1xf32> -> vector<32x1xf32>
    %228 = vector.broadcast %227 : vector<32x1xf32> to vector<32x32xf32>
    %229 = arith.mulf %224, %228 : vector<32x32xf32>
    %cst_86 = arith.constant dense<0.000000e+00> : vector<32x32xf32>
    %230 = tpu.matmul %229, %216, %cst_86 {dimension_numbers = #tpu.dot_dimension_numbers<[1], [0], [0], [1], [0, 0, 1, 1], [], []>} : vector<32x32xf32>, vector<32x32xf32>, vector<32x32xf32> -> vector<32x32xf32>
    %231 = vector.extract_strided_slice %100 {offsets = [32, 0], sizes = [32, 128], strides = [1, 1]} : vector<128x128xf32> to vector<32x128xf32>
    %cst_87 = arith.constant dense<0.000000e+00> : vector<32x128xf32>
    %232 = tpu.matmul %230, %231, %cst_87 {dimension_numbers = #tpu.dot_dimension_numbers<[1], [0], [0], [1], [0, 0, 1, 1], [], []>} : vector<32x32xf32>, vector<32x128xf32>, vector<32x128xf32> -> vector<32x128xf32>
    %233 = arith.addf %213, %232 : vector<32x128xf32>
    %234 = vector.extract_strided_slice %190 {offsets = [0, 64], sizes = [32, 32], strides = [1, 1]} : vector<32x128xf32> to vector<32x32xf32>
    %235 = vector.extract_strided_slice %191 {offsets = [0, 64], sizes = [32, 32], strides = [1, 1]} : vector<32x128xf32> to vector<32x32xf32>
    %236 = vector.extract_strided_slice %192 {offsets = [0, 64], sizes = [32, 32], strides = [1, 1]} : vector<32x128xf32> to vector<32x32xf32>
    %cst_88 = arith.constant dense<0.000000e+00> : vector<32x32xf32>
    %237 = tpu.matmul %234, %235, %cst_88 {dimension_numbers = #tpu.dot_dimension_numbers<[1], [1], [0], [0], [0, 0, 1, 0], [], []>} : vector<32x32xf32>, vector<32x32xf32>, vector<32x32xf32> -> vector<32x32xf32>
    %cst_89 = arith.constant dense<0.000000e+00> : vector<32x32xf32>
    %238 = tpu.matmul %102, %234, %cst_89 {dimension_numbers = #tpu.dot_dimension_numbers<[1], [1], [0], [0], [0, 0, 1, 0], [], []>} : vector<32x32xf32>, vector<32x32xf32>, vector<32x32xf32> -> vector<32x32xf32>
    %239 = arith.addf %237, %238 : vector<32x32xf32>
    %cst_90 = arith.constant dense<0xFF800000> : vector<32xf32>
    %240 = vector.multi_reduction <maximumf>, %239, %cst_90 [1] : vector<32x32xf32> to vector<32xf32>
    %241 = vector.shape_cast %240 : vector<32xf32> to vector<32x1xf32>
    %242 = vector.broadcast %241 : vector<32x1xf32> to vector<32x32xf32>
    %243 = arith.subf %239, %242 : vector<32x32xf32>
    %244 = math.exp %243 : vector<32x32xf32>
    %cst_91 = arith.constant dense<0.000000e+00> : vector<32xf32>
    %245 = vector.multi_reduction <add>, %244, %cst_91 [1] : vector<32x32xf32> to vector<32xf32>
    %246 = vector.shape_cast %245 : vector<32xf32> to vector<32x1xf32>
    %247 = tpu.reciprocal %246 {approx = true} : vector<32x1xf32> -> vector<32x1xf32>
    %248 = vector.broadcast %247 : vector<32x1xf32> to vector<32x32xf32>
    %249 = arith.mulf %244, %248 : vector<32x32xf32>
    %cst_92 = arith.constant dense<0.000000e+00> : vector<32x32xf32>
    %250 = tpu.matmul %249, %236, %cst_92 {dimension_numbers = #tpu.dot_dimension_numbers<[1], [0], [0], [1], [0, 0, 1, 1], [], []>} : vector<32x32xf32>, vector<32x32xf32>, vector<32x32xf32> -> vector<32x32xf32>
    %251 = vector.extract_strided_slice %100 {offsets = [64, 0], sizes = [32, 128], strides = [1, 1]} : vector<128x128xf32> to vector<32x128xf32>
    %cst_93 = arith.constant dense<0.000000e+00> : vector<32x128xf32>
    %252 = tpu.matmul %250, %251, %cst_93 {dimension_numbers = #tpu.dot_dimension_numbers<[1], [0], [0], [1], [0, 0, 1, 1], [], []>} : vector<32x32xf32>, vector<32x128xf32>, vector<32x128xf32> -> vector<32x128xf32>
    %253 = arith.addf %233, %252 : vector<32x128xf32>
    %254 = vector.extract_strided_slice %190 {offsets = [0, 96], sizes = [32, 32], strides = [1, 1]} : vector<32x128xf32> to vector<32x32xf32>
    %255 = vector.extract_strided_slice %191 {offsets = [0, 96], sizes = [32, 32], strides = [1, 1]} : vector<32x128xf32> to vector<32x32xf32>
    %256 = vector.extract_strided_slice %192 {offsets = [0, 96], sizes = [32, 32], strides = [1, 1]} : vector<32x128xf32> to vector<32x32xf32>
    %cst_94 = arith.constant dense<0.000000e+00> : vector<32x32xf32>
    %257 = tpu.matmul %254, %255, %cst_94 {dimension_numbers = #tpu.dot_dimension_numbers<[1], [1], [0], [0], [0, 0, 1, 0], [], []>} : vector<32x32xf32>, vector<32x32xf32>, vector<32x32xf32> -> vector<32x32xf32>
    %cst_95 = arith.constant dense<0.000000e+00> : vector<32x32xf32>
    %258 = tpu.matmul %102, %254, %cst_95 {dimension_numbers = #tpu.dot_dimension_numbers<[1], [1], [0], [0], [0, 0, 1, 0], [], []>} : vector<32x32xf32>, vector<32x32xf32>, vector<32x32xf32> -> vector<32x32xf32>
    %259 = arith.addf %257, %258 : vector<32x32xf32>
    %cst_96 = arith.constant dense<0xFF800000> : vector<32xf32>
    %260 = vector.multi_reduction <maximumf>, %259, %cst_96 [1] : vector<32x32xf32> to vector<32xf32>
    %261 = vector.shape_cast %260 : vector<32xf32> to vector<32x1xf32>
    %262 = vector.broadcast %261 : vector<32x1xf32> to vector<32x32xf32>
    %263 = arith.subf %259, %262 : vector<32x32xf32>
    %264 = math.exp %263 : vector<32x32xf32>
    %cst_97 = arith.constant dense<0.000000e+00> : vector<32xf32>
    %265 = vector.multi_reduction <add>, %264, %cst_97 [1] : vector<32x32xf32> to vector<32xf32>
    %266 = vector.shape_cast %265 : vector<32xf32> to vector<32x1xf32>
    %267 = tpu.reciprocal %266 {approx = true} : vector<32x1xf32> -> vector<32x1xf32>
    %268 = vector.broadcast %267 : vector<32x1xf32> to vector<32x32xf32>
    %269 = arith.mulf %264, %268 : vector<32x32xf32>
    %cst_98 = arith.constant dense<0.000000e+00> : vector<32x32xf32>
    %270 = tpu.matmul %269, %256, %cst_98 {dimension_numbers = #tpu.dot_dimension_numbers<[1], [0], [0], [1], [0, 0, 1, 1], [], []>} : vector<32x32xf32>, vector<32x32xf32>, vector<32x32xf32> -> vector<32x32xf32>
    %271 = vector.extract_strided_slice %100 {offsets = [96, 0], sizes = [32, 128], strides = [1, 1]} : vector<128x128xf32> to vector<32x128xf32>
    %cst_99 = arith.constant dense<0.000000e+00> : vector<32x128xf32>
    %272 = tpu.matmul %270, %271, %cst_99 {dimension_numbers = #tpu.dot_dimension_numbers<[1], [0], [0], [1], [0, 0, 1, 1], [], []>} : vector<32x32xf32>, vector<32x128xf32>, vector<32x128xf32> -> vector<32x128xf32>
    %273 = arith.addf %253, %272 : vector<32x128xf32>
    %274 = vector.broadcast %101 : vector<1x128xf32> to vector<32x128xf32>
    %275 = arith.addf %273, %274 : vector<32x128xf32>
    %c32 = arith.constant 32 : index
    %c0_100 = arith.constant 0 : index
    %276 = vector.load %arg17[%c32, %c0_100] : memref<128x128xf32, #tpu.memory_space<vmem>>, vector<32x128xf32>
    tpu.vector_store %arg17[%c32, %c0_100], %275 {strides = array<i32>} : memref<128x128xf32, #tpu.memory_space<vmem>>, vector<32x128xf32>,
    %277 = vector.extract_strided_slice %47 {offsets = [64, 0], sizes = [32, 128], strides = [1, 1]} : vector<128x128xf32> to vector<32x128xf32>
    %278 = vector.extract_strided_slice %73 {offsets = [64, 0], sizes = [32, 128], strides = [1, 1]} : vector<128x128xf32> to vector<32x128xf32>
    %279 = vector.extract_strided_slice %99 {offsets = [64, 0], sizes = [32, 128], strides = [1, 1]} : vector<128x128xf32> to vector<32x128xf32>
    %cst_101 = arith.constant 0.000000e+00 : f32
    %280 = vector.broadcast %cst_101 : f32 to vector<32x128xf32>
    %281 = vector.extract_strided_slice %277 {offsets = [0, 0], sizes = [32, 32], strides = [1, 1]} : vector<32x128xf32> to vector<32x32xf32>
    %282 = vector.extract_strided_slice %278 {offsets = [0, 0], sizes = [32, 32], strides = [1, 1]} : vector<32x128xf32> to vector<32x32xf32>
    %283 = vector.extract_strided_slice %279 {offsets = [0, 0], sizes = [32, 32], strides = [1, 1]} : vector<32x128xf32> to vector<32x32xf32>
    %cst_102 = arith.constant dense<0.000000e+00> : vector<32x32xf32>
    %284 = tpu.matmul %281, %282, %cst_102 {dimension_numbers = #tpu.dot_dimension_numbers<[1], [1], [0], [0], [0, 0, 1, 0], [], []>} : vector<32x32xf32>, vector<32x32xf32>, vector<32x32xf32> -> vector<32x32xf32>
    %cst_103 = arith.constant dense<0.000000e+00> : vector<32x32xf32>
    %285 = tpu.matmul %102, %281, %cst_103 {dimension_numbers = #tpu.dot_dimension_numbers<[1], [1], [0], [0], [0, 0, 1, 0], [], []>} : vector<32x32xf32>, vector<32x32xf32>, vector<32x32xf32> -> vector<32x32xf32>
    %286 = arith.addf %284, %285 : vector<32x32xf32>
    %cst_104 = arith.constant dense<0xFF800000> : vector<32xf32>
    %287 = vector.multi_reduction <maximumf>, %286, %cst_104 [1] : vector<32x32xf32> to vector<32xf32>
    %288 = vector.shape_cast %287 : vector<32xf32> to vector<32x1xf32>
    %289 = vector.broadcast %288 : vector<32x1xf32> to vector<32x32xf32>
    %290 = arith.subf %286, %289 : vector<32x32xf32>
    %291 = math.exp %290 : vector<32x32xf32>
    %cst_105 = arith.constant dense<0.000000e+00> : vector<32xf32>
    %292 = vector.multi_reduction <add>, %291, %cst_105 [1] : vector<32x32xf32> to vector<32xf32>
    %293 = vector.shape_cast %292 : vector<32xf32> to vector<32x1xf32>
    %294 = tpu.reciprocal %293 {approx = true} : vector<32x1xf32> -> vector<32x1xf32>
    %295 = vector.broadcast %294 : vector<32x1xf32> to vector<32x32xf32>
    %296 = arith.mulf %291, %295 : vector<32x32xf32>
    %cst_106 = arith.constant dense<0.000000e+00> : vector<32x32xf32>
    %297 = tpu.matmul %296, %283, %cst_106 {dimension_numbers = #tpu.dot_dimension_numbers<[1], [0], [0], [1], [0, 0, 1, 1], [], []>} : vector<32x32xf32>, vector<32x32xf32>, vector<32x32xf32> -> vector<32x32xf32>
    %298 = vector.extract_strided_slice %100 {offsets = [0, 0], sizes = [32, 128], strides = [1, 1]} : vector<128x128xf32> to vector<32x128xf32>
    %cst_107 = arith.constant dense<0.000000e+00> : vector<32x128xf32>
    %299 = tpu.matmul %297, %298, %cst_107 {dimension_numbers = #tpu.dot_dimension_numbers<[1], [0], [0], [1], [0, 0, 1, 1], [], []>} : vector<32x32xf32>, vector<32x128xf32>, vector<32x128xf32> -> vector<32x128xf32>
    %300 = arith.addf %280, %299 : vector<32x128xf32>
    %301 = vector.extract_strided_slice %277 {offsets = [0, 32], sizes = [32, 32], strides = [1, 1]} : vector<32x128xf32> to vector<32x32xf32>
    %302 = vector.extract_strided_slice %278 {offsets = [0, 32], sizes = [32, 32], strides = [1, 1]} : vector<32x128xf32> to vector<32x32xf32>
    %303 = vector.extract_strided_slice %279 {offsets = [0, 32], sizes = [32, 32], strides = [1, 1]} : vector<32x128xf32> to vector<32x32xf32>
    %cst_108 = arith.constant dense<0.000000e+00> : vector<32x32xf32>
    %304 = tpu.matmul %301, %302, %cst_108 {dimension_numbers = #tpu.dot_dimension_numbers<[1], [1], [0], [0], [0, 0, 1, 0], [], []>} : vector<32x32xf32>, vector<32x32xf32>, vector<32x32xf32> -> vector<32x32xf32>
    %cst_109 = arith.constant dense<0.000000e+00> : vector<32x32xf32>
    %305 = tpu.matmul %102, %301, %cst_109 {dimension_numbers = #tpu.dot_dimension_numbers<[1], [1], [0], [0], [0, 0, 1, 0], [], []>} : vector<32x32xf32>, vector<32x32xf32>, vector<32x32xf32> -> vector<32x32xf32>
    %306 = arith.addf %304, %305 : vector<32x32xf32>
    %cst_110 = arith.constant dense<0xFF800000> : vector<32xf32>
    %307 = vector.multi_reduction <maximumf>, %306, %cst_110 [1] : vector<32x32xf32> to vector<32xf32>
    %308 = vector.shape_cast %307 : vector<32xf32> to vector<32x1xf32>
    %309 = vector.broadcast %308 : vector<32x1xf32> to vector<32x32xf32>
    %310 = arith.subf %306, %309 : vector<32x32xf32>
    %311 = math.exp %310 : vector<32x32xf32>
    %cst_111 = arith.constant dense<0.000000e+00> : vector<32xf32>
    %312 = vector.multi_reduction <add>, %311, %cst_111 [1] : vector<32x32xf32> to vector<32xf32>
    %313 = vector.shape_cast %312 : vector<32xf32> to vector<32x1xf32>
    %314 = tpu.reciprocal %313 {approx = true} : vector<32x1xf32> -> vector<32x1xf32>
    %315 = vector.broadcast %314 : vector<32x1xf32> to vector<32x32xf32>
    %316 = arith.mulf %311, %315 : vector<32x32xf32>
    %cst_112 = arith.constant dense<0.000000e+00> : vector<32x32xf32>
    %317 = tpu.matmul %316, %303, %cst_112 {dimension_numbers = #tpu.dot_dimension_numbers<[1], [0], [0], [1], [0, 0, 1, 1], [], []>} : vector<32x32xf32>, vector<32x32xf32>, vector<32x32xf32> -> vector<32x32xf32>
    %318 = vector.extract_strided_slice %100 {offsets = [32, 0], sizes = [32, 128], strides = [1, 1]} : vector<128x128xf32> to vector<32x128xf32>
    %cst_113 = arith.constant dense<0.000000e+00> : vector<32x128xf32>
    %319 = tpu.matmul %317, %318, %cst_113 {dimension_numbers = #tpu.dot_dimension_numbers<[1], [0], [0], [1], [0, 0, 1, 1], [], []>} : vector<32x32xf32>, vector<32x128xf32>, vector<32x128xf32> -> vector<32x128xf32>
    %320 = arith.addf %300, %319 : vector<32x128xf32>
    %321 = vector.extract_strided_slice %277 {offsets = [0, 64], sizes = [32, 32], strides = [1, 1]} : vector<32x128xf32> to vector<32x32xf32>
    %322 = vector.extract_strided_slice %278 {offsets = [0, 64], sizes = [32, 32], strides = [1, 1]} : vector<32x128xf32> to vector<32x32xf32>
    %323 = vector.extract_strided_slice %279 {offsets = [0, 64], sizes = [32, 32], strides = [1, 1]} : vector<32x128xf32> to vector<32x32xf32>
    %cst_114 = arith.constant dense<0.000000e+00> : vector<32x32xf32>
    %324 = tpu.matmul %321, %322, %cst_114 {dimension_numbers = #tpu.dot_dimension_numbers<[1], [1], [0], [0], [0, 0, 1, 0], [], []>} : vector<32x32xf32>, vector<32x32xf32>, vector<32x32xf32> -> vector<32x32xf32>
    %cst_115 = arith.constant dense<0.000000e+00> : vector<32x32xf32>
    %325 = tpu.matmul %102, %321, %cst_115 {dimension_numbers = #tpu.dot_dimension_numbers<[1], [1], [0], [0], [0, 0, 1, 0], [], []>} : vector<32x32xf32>, vector<32x32xf32>, vector<32x32xf32> -> vector<32x32xf32>
    %326 = arith.addf %324, %325 : vector<32x32xf32>
    %cst_116 = arith.constant dense<0xFF800000> : vector<32xf32>
    %327 = vector.multi_reduction <maximumf>, %326, %cst_116 [1] : vector<32x32xf32> to vector<32xf32>
    %328 = vector.shape_cast %327 : vector<32xf32> to vector<32x1xf32>
    %329 = vector.broadcast %328 : vector<32x1xf32> to vector<32x32xf32>
    %330 = arith.subf %326, %329 : vector<32x32xf32>
    %331 = math.exp %330 : vector<32x32xf32>
    %cst_117 = arith.constant dense<0.000000e+00> : vector<32xf32>
    %332 = vector.multi_reduction <add>, %331, %cst_117 [1] : vector<32x32xf32> to vector<32xf32>
    %333 = vector.shape_cast %332 : vector<32xf32> to vector<32x1xf32>
    %334 = tpu.reciprocal %333 {approx = true} : vector<32x1xf32> -> vector<32x1xf32>
    %335 = vector.broadcast %334 : vector<32x1xf32> to vector<32x32xf32>
    %336 = arith.mulf %331, %335 : vector<32x32xf32>
    %cst_118 = arith.constant dense<0.000000e+00> : vector<32x32xf32>
    %337 = tpu.matmul %336, %323, %cst_118 {dimension_numbers = #tpu.dot_dimension_numbers<[1], [0], [0], [1], [0, 0, 1, 1], [], []>} : vector<32x32xf32>, vector<32x32xf32>, vector<32x32xf32> -> vector<32x32xf32>
    %338 = vector.extract_strided_slice %100 {offsets = [64, 0], sizes = [32, 128], strides = [1, 1]} : vector<128x128xf32> to vector<32x128xf32>
    %cst_119 = arith.constant dense<0.000000e+00> : vector<32x128xf32>
    %339 = tpu.matmul %337, %338, %cst_119 {dimension_numbers = #tpu.dot_dimension_numbers<[1], [0], [0], [1], [0, 0, 1, 1], [], []>} : vector<32x32xf32>, vector<32x128xf32>, vector<32x128xf32> -> vector<32x128xf32>
    %340 = arith.addf %320, %339 : vector<32x128xf32>
    %341 = vector.extract_strided_slice %277 {offsets = [0, 96], sizes = [32, 32], strides = [1, 1]} : vector<32x128xf32> to vector<32x32xf32>
    %342 = vector.extract_strided_slice %278 {offsets = [0, 96], sizes = [32, 32], strides = [1, 1]} : vector<32x128xf32> to vector<32x32xf32>
    %343 = vector.extract_strided_slice %279 {offsets = [0, 96], sizes = [32, 32], strides = [1, 1]} : vector<32x128xf32> to vector<32x32xf32>
    %cst_120 = arith.constant dense<0.000000e+00> : vector<32x32xf32>
    %344 = tpu.matmul %341, %342, %cst_120 {dimension_numbers = #tpu.dot_dimension_numbers<[1], [1], [0], [0], [0, 0, 1, 0], [], []>} : vector<32x32xf32>, vector<32x32xf32>, vector<32x32xf32> -> vector<32x32xf32>
    %cst_121 = arith.constant dense<0.000000e+00> : vector<32x32xf32>
    %345 = tpu.matmul %102, %341, %cst_121 {dimension_numbers = #tpu.dot_dimension_numbers<[1], [1], [0], [0], [0, 0, 1, 0], [], []>} : vector<32x32xf32>, vector<32x32xf32>, vector<32x32xf32> -> vector<32x32xf32>
    %346 = arith.addf %344, %345 : vector<32x32xf32>
    %cst_122 = arith.constant dense<0xFF800000> : vector<32xf32>
    %347 = vector.multi_reduction <maximumf>, %346, %cst_122 [1] : vector<32x32xf32> to vector<32xf32>
    %348 = vector.shape_cast %347 : vector<32xf32> to vector<32x1xf32>
    %349 = vector.broadcast %348 : vector<32x1xf32> to vector<32x32xf32>
    %350 = arith.subf %346, %349 : vector<32x32xf32>
    %351 = math.exp %350 : vector<32x32xf32>
    %cst_123 = arith.constant dense<0.000000e+00> : vector<32xf32>
    %352 = vector.multi_reduction <add>, %351, %cst_123 [1] : vector<32x32xf32> to vector<32xf32>
    %353 = vector.shape_cast %352 : vector<32xf32> to vector<32x1xf32>
    %354 = tpu.reciprocal %353 {approx = true} : vector<32x1xf32> -> vector<32x1xf32>
    %355 = vector.broadcast %354 : vector<32x1xf32> to vector<32x32xf32>
    %356 = arith.mulf %351, %355 : vector<32x32xf32>
    %cst_124 = arith.constant dense<0.000000e+00> : vector<32x32xf32>
    %357 = tpu.matmul %356, %343, %cst_124 {dimension_numbers = #tpu.dot_dimension_numbers<[1], [0], [0], [1], [0, 0, 1, 1], [], []>} : vector<32x32xf32>, vector<32x32xf32>, vector<32x32xf32> -> vector<32x32xf32>
    %358 = vector.extract_strided_slice %100 {offsets = [96, 0], sizes = [32, 128], strides = [1, 1]} : vector<128x128xf32> to vector<32x128xf32>
    %cst_125 = arith.constant dense<0.000000e+00> : vector<32x128xf32>
    %359 = tpu.matmul %357, %358, %cst_125 {dimension_numbers = #tpu.dot_dimension_numbers<[1], [0], [0], [1], [0, 0, 1, 1], [], []>} : vector<32x32xf32>, vector<32x128xf32>, vector<32x128xf32> -> vector<32x128xf32>
    %360 = arith.addf %340, %359 : vector<32x128xf32>
    %361 = vector.broadcast %101 : vector<1x128xf32> to vector<32x128xf32>
    %362 = arith.addf %360, %361 : vector<32x128xf32>
    %c64 = arith.constant 64 : index
    %c0_126 = arith.constant 0 : index
    %363 = vector.load %arg17[%c64, %c0_126] : memref<128x128xf32, #tpu.memory_space<vmem>>, vector<32x128xf32>
    tpu.vector_store %arg17[%c64, %c0_126], %362 {strides = array<i32>} : memref<128x128xf32, #tpu.memory_space<vmem>>, vector<32x128xf32>,
    %364 = vector.extract_strided_slice %47 {offsets = [96, 0], sizes = [32, 128], strides = [1, 1]} : vector<128x128xf32> to vector<32x128xf32>
    %365 = vector.extract_strided_slice %73 {offsets = [96, 0], sizes = [32, 128], strides = [1, 1]} : vector<128x128xf32> to vector<32x128xf32>
    %366 = vector.extract_strided_slice %99 {offsets = [96, 0], sizes = [32, 128], strides = [1, 1]} : vector<128x128xf32> to vector<32x128xf32>
    %cst_127 = arith.constant 0.000000e+00 : f32
    %367 = vector.broadcast %cst_127 : f32 to vector<32x128xf32>
    %368 = vector.extract_strided_slice %364 {offsets = [0, 0], sizes = [32, 32], strides = [1, 1]} : vector<32x128xf32> to vector<32x32xf32>
    %369 = vector.extract_strided_slice %365 {offsets = [0, 0], sizes = [32, 32], strides = [1, 1]} : vector<32x128xf32> to vector<32x32xf32>
    %370 = vector.extract_strided_slice %366 {offsets = [0, 0], sizes = [32, 32], strides = [1, 1]} : vector<32x128xf32> to vector<32x32xf32>
    %cst_128 = arith.constant dense<0.000000e+00> : vector<32x32xf32>
    %371 = tpu.matmul %368, %369, %cst_128 {dimension_numbers = #tpu.dot_dimension_numbers<[1], [1], [0], [0], [0, 0, 1, 0], [], []>} : vector<32x32xf32>, vector<32x32xf32>, vector<32x32xf32> -> vector<32x32xf32>
    %cst_129 = arith.constant dense<0.000000e+00> : vector<32x32xf32>
    %372 = tpu.matmul %102, %368, %cst_129 {dimension_numbers = #tpu.dot_dimension_numbers<[1], [1], [0], [0], [0, 0, 1, 0], [], []>} : vector<32x32xf32>, vector<32x32xf32>, vector<32x32xf32> -> vector<32x32xf32>
    %373 = arith.addf %371, %372 : vector<32x32xf32>
    %cst_130 = arith.constant dense<0xFF800000> : vector<32xf32>
    %374 = vector.multi_reduction <maximumf>, %373, %cst_130 [1] : vector<32x32xf32> to vector<32xf32>
    %375 = vector.shape_cast %374 : vector<32xf32> to vector<32x1xf32>
    %376 = vector.broadcast %375 : vector<32x1xf32> to vector<32x32xf32>
    %377 = arith.subf %373, %376 : vector<32x32xf32>
    %378 = math.exp %377 : vector<32x32xf32>
    %cst_131 = arith.constant dense<0.000000e+00> : vector<32xf32>
    %379 = vector.multi_reduction <add>, %378, %cst_131 [1] : vector<32x32xf32> to vector<32xf32>
    %380 = vector.shape_cast %379 : vector<32xf32> to vector<32x1xf32>
    %381 = tpu.reciprocal %380 {approx = true} : vector<32x1xf32> -> vector<32x1xf32>
    %382 = vector.broadcast %381 : vector<32x1xf32> to vector<32x32xf32>
    %383 = arith.mulf %378, %382 : vector<32x32xf32>
    %cst_132 = arith.constant dense<0.000000e+00> : vector<32x32xf32>
    %384 = tpu.matmul %383, %370, %cst_132 {dimension_numbers = #tpu.dot_dimension_numbers<[1], [0], [0], [1], [0, 0, 1, 1], [], []>} : vector<32x32xf32>, vector<32x32xf32>, vector<32x32xf32> -> vector<32x32xf32>
    %385 = vector.extract_strided_slice %100 {offsets = [0, 0], sizes = [32, 128], strides = [1, 1]} : vector<128x128xf32> to vector<32x128xf32>
    %cst_133 = arith.constant dense<0.000000e+00> : vector<32x128xf32>
    %386 = tpu.matmul %384, %385, %cst_133 {dimension_numbers = #tpu.dot_dimension_numbers<[1], [0], [0], [1], [0, 0, 1, 1], [], []>} : vector<32x32xf32>, vector<32x128xf32>, vector<32x128xf32> -> vector<32x128xf32>
    %387 = arith.addf %367, %386 : vector<32x128xf32>
    %388 = vector.extract_strided_slice %364 {offsets = [0, 32], sizes = [32, 32], strides = [1, 1]} : vector<32x128xf32> to vector<32x32xf32>
    %389 = vector.extract_strided_slice %365 {offsets = [0, 32], sizes = [32, 32], strides = [1, 1]} : vector<32x128xf32> to vector<32x32xf32>
    %390 = vector.extract_strided_slice %366 {offsets = [0, 32], sizes = [32, 32], strides = [1, 1]} : vector<32x128xf32> to vector<32x32xf32>
    %cst_134 = arith.constant dense<0.000000e+00> : vector<32x32xf32>
    %391 = tpu.matmul %388, %389, %cst_134 {dimension_numbers = #tpu.dot_dimension_numbers<[1], [1], [0], [0], [0, 0, 1, 0], [], []>} : vector<32x32xf32>, vector<32x32xf32>, vector<32x32xf32> -> vector<32x32xf32>
    %cst_135 = arith.constant dense<0.000000e+00> : vector<32x32xf32>
    %392 = tpu.matmul %102, %388, %cst_135 {dimension_numbers = #tpu.dot_dimension_numbers<[1], [1], [0], [0], [0, 0, 1, 0], [], []>} : vector<32x32xf32>, vector<32x32xf32>, vector<32x32xf32> -> vector<32x32xf32>
    %393 = arith.addf %391, %392 : vector<32x32xf32>
    %cst_136 = arith.constant dense<0xFF800000> : vector<32xf32>
    %394 = vector.multi_reduction <maximumf>, %393, %cst_136 [1] : vector<32x32xf32> to vector<32xf32>
    %395 = vector.shape_cast %394 : vector<32xf32> to vector<32x1xf32>
    %396 = vector.broadcast %395 : vector<32x1xf32> to vector<32x32xf32>
    %397 = arith.subf %393, %396 : vector<32x32xf32>
    %398 = math.exp %397 : vector<32x32xf32>
    %cst_137 = arith.constant dense<0.000000e+00> : vector<32xf32>
    %399 = vector.multi_reduction <add>, %398, %cst_137 [1] : vector<32x32xf32> to vector<32xf32>
    %400 = vector.shape_cast %399 : vector<32xf32> to vector<32x1xf32>
    %401 = tpu.reciprocal %400 {approx = true} : vector<32x1xf32> -> vector<32x1xf32>
    %402 = vector.broadcast %401 : vector<32x1xf32> to vector<32x32xf32>
    %403 = arith.mulf %398, %402 : vector<32x32xf32>
    %cst_138 = arith.constant dense<0.000000e+00> : vector<32x32xf32>
    %404 = tpu.matmul %403, %390, %cst_138 {dimension_numbers = #tpu.dot_dimension_numbers<[1], [0], [0], [1], [0, 0, 1, 1], [], []>} : vector<32x32xf32>, vector<32x32xf32>, vector<32x32xf32> -> vector<32x32xf32>
    %405 = vector.extract_strided_slice %100 {offsets = [32, 0], sizes = [32, 128], strides = [1, 1]} : vector<128x128xf32> to vector<32x128xf32>
    %cst_139 = arith.constant dense<0.000000e+00> : vector<32x128xf32>
    %406 = tpu.matmul %404, %405, %cst_139 {dimension_numbers = #tpu.dot_dimension_numbers<[1], [0], [0], [1], [0, 0, 1, 1], [], []>} : vector<32x32xf32>, vector<32x128xf32>, vector<32x128xf32> -> vector<32x128xf32>
    %407 = arith.addf %387, %406 : vector<32x128xf32>
    %408 = vector.extract_strided_slice %364 {offsets = [0, 64], sizes = [32, 32], strides = [1, 1]} : vector<32x128xf32> to vector<32x32xf32>
    %409 = vector.extract_strided_slice %365 {offsets = [0, 64], sizes = [32, 32], strides = [1, 1]} : vector<32x128xf32> to vector<32x32xf32>
    %410 = vector.extract_strided_slice %366 {offsets = [0, 64], sizes = [32, 32], strides = [1, 1]} : vector<32x128xf32> to vector<32x32xf32>
    %cst_140 = arith.constant dense<0.000000e+00> : vector<32x32xf32>
    %411 = tpu.matmul %408, %409, %cst_140 {dimension_numbers = #tpu.dot_dimension_numbers<[1], [1], [0], [0], [0, 0, 1, 0], [], []>} : vector<32x32xf32>, vector<32x32xf32>, vector<32x32xf32> -> vector<32x32xf32>
    %cst_141 = arith.constant dense<0.000000e+00> : vector<32x32xf32>
    %412 = tpu.matmul %102, %408, %cst_141 {dimension_numbers = #tpu.dot_dimension_numbers<[1], [1], [0], [0], [0, 0, 1, 0], [], []>} : vector<32x32xf32>, vector<32x32xf32>, vector<32x32xf32> -> vector<32x32xf32>
    %413 = arith.addf %411, %412 : vector<32x32xf32>
    %cst_142 = arith.constant dense<0xFF800000> : vector<32xf32>
    %414 = vector.multi_reduction <maximumf>, %413, %cst_142 [1] : vector<32x32xf32> to vector<32xf32>
    %415 = vector.shape_cast %414 : vector<32xf32> to vector<32x1xf32>
    %416 = vector.broadcast %415 : vector<32x1xf32> to vector<32x32xf32>
    %417 = arith.subf %413, %416 : vector<32x32xf32>
    %418 = math.exp %417 : vector<32x32xf32>
    %cst_143 = arith.constant dense<0.000000e+00> : vector<32xf32>
    %419 = vector.multi_reduction <add>, %418, %cst_143 [1] : vector<32x32xf32> to vector<32xf32>
    %420 = vector.shape_cast %419 : vector<32xf32> to vector<32x1xf32>
    %421 = tpu.reciprocal %420 {approx = true} : vector<32x1xf32> -> vector<32x1xf32>
    %422 = vector.broadcast %421 : vector<32x1xf32> to vector<32x32xf32>
    %423 = arith.mulf %418, %422 : vector<32x32xf32>
    %cst_144 = arith.constant dense<0.000000e+00> : vector<32x32xf32>
    %424 = tpu.matmul %423, %410, %cst_144 {dimension_numbers = #tpu.dot_dimension_numbers<[1], [0], [0], [1], [0, 0, 1, 1], [], []>} : vector<32x32xf32>, vector<32x32xf32>, vector<32x32xf32> -> vector<32x32xf32>
    %425 = vector.extract_strided_slice %100 {offsets = [64, 0], sizes = [32, 128], strides = [1, 1]} : vector<128x128xf32> to vector<32x128xf32>
    %cst_145 = arith.constant dense<0.000000e+00> : vector<32x128xf32>
    %426 = tpu.matmul %424, %425, %cst_145 {dimension_numbers = #tpu.dot_dimension_numbers<[1], [0], [0], [1], [0, 0, 1, 1], [], []>} : vector<32x32xf32>, vector<32x128xf32>, vector<32x128xf32> -> vector<32x128xf32>
    %427 = arith.addf %407, %426 : vector<32x128xf32>
    %428 = vector.extract_strided_slice %364 {offsets = [0, 96], sizes = [32, 32], strides = [1, 1]} : vector<32x128xf32> to vector<32x32xf32>
    %429 = vector.extract_strided_slice %365 {offsets = [0, 96], sizes = [32, 32], strides = [1, 1]} : vector<32x128xf32> to vector<32x32xf32>
    %430 = vector.extract_strided_slice %366 {offsets = [0, 96], sizes = [32, 32], strides = [1, 1]} : vector<32x128xf32> to vector<32x32xf32>
    %cst_146 = arith.constant dense<0.000000e+00> : vector<32x32xf32>
    %431 = tpu.matmul %428, %429, %cst_146 {dimension_numbers = #tpu.dot_dimension_numbers<[1], [1], [0], [0], [0, 0, 1, 0], [], []>} : vector<32x32xf32>, vector<32x32xf32>, vector<32x32xf32> -> vector<32x32xf32>
    %cst_147 = arith.constant dense<0.000000e+00> : vector<32x32xf32>
    %432 = tpu.matmul %102, %428, %cst_147 {dimension_numbers = #tpu.dot_dimension_numbers<[1], [1], [0], [0], [0, 0, 1, 0], [], []>} : vector<32x32xf32>, vector<32x32xf32>, vector<32x32xf32> -> vector<32x32xf32>
    %433 = arith.addf %431, %432 : vector<32x32xf32>
    %cst_148 = arith.constant dense<0xFF800000> : vector<32xf32>
    %434 = vector.multi_reduction <maximumf>, %433, %cst_148 [1] : vector<32x32xf32> to vector<32xf32>
    %435 = vector.shape_cast %434 : vector<32xf32> to vector<32x1xf32>
    %436 = vector.broadcast %435 : vector<32x1xf32> to vector<32x32xf32>
    %437 = arith.subf %433, %436 : vector<32x32xf32>
    %438 = math.exp %437 : vector<32x32xf32>
    %cst_149 = arith.constant dense<0.000000e+00> : vector<32xf32>
    %439 = vector.multi_reduction <add>, %438, %cst_149 [1] : vector<32x32xf32> to vector<32xf32>
    %440 = vector.shape_cast %439 : vector<32xf32> to vector<32x1xf32>
    %441 = tpu.reciprocal %440 {approx = true} : vector<32x1xf32> -> vector<32x1xf32>
    %442 = vector.broadcast %441 : vector<32x1xf32> to vector<32x32xf32>
    %443 = arith.mulf %438, %442 : vector<32x32xf32>
    %cst_150 = arith.constant dense<0.000000e+00> : vector<32x32xf32>
    %444 = tpu.matmul %443, %430, %cst_150 {dimension_numbers = #tpu.dot_dimension_numbers<[1], [0], [0], [1], [0, 0, 1, 1], [], []>} : vector<32x32xf32>, vector<32x32xf32>, vector<32x32xf32> -> vector<32x32xf32>
    %445 = vector.extract_strided_slice %100 {offsets = [96, 0], sizes = [32, 128], strides = [1, 1]} : vector<128x128xf32> to vector<32x128xf32>
    %cst_151 = arith.constant dense<0.000000e+00> : vector<32x128xf32>
    %446 = tpu.matmul %444, %445, %cst_151 {dimension_numbers = #tpu.dot_dimension_numbers<[1], [0], [0], [1], [0, 0, 1, 1], [], []>} : vector<32x32xf32>, vector<32x128xf32>, vector<32x128xf32> -> vector<32x128xf32>
    %447 = arith.addf %427, %446 : vector<32x128xf32>
    %448 = vector.broadcast %101 : vector<1x128xf32> to vector<32x128xf32>
    %449 = arith.addf %447, %448 : vector<32x128xf32>
    %c96 = arith.constant 96 : index
    %c0_152 = arith.constant 0 : index
    %450 = vector.load %arg17[%c96, %c0_152] : memref<128x128xf32, #tpu.memory_space<vmem>>, vector<32x128xf32>
    tpu.vector_store %arg17[%c96, %c0_152], %449 {strides = array<i32>} : memref<128x128xf32, #tpu.memory_space<vmem>>, vector<32x128xf32>,
    return
  }
  func.func @transform_0(%arg0: i32) -> (i32, i32) {
    %c0_i32 = arith.constant 0 : i32
    %c0_i32_0 = arith.constant 0 : i32
    return %arg0, %c0_i32 : i32, i32
  }
  func.func @transform_1(%arg0: i32) -> (i32, i32) {
    %c0_i32 = arith.constant 0 : i32
    %c0_i32_0 = arith.constant 0 : i32
    %c0_i32_1 = arith.constant 0 : i32
    return %c0_i32, %c0_i32_0 : i32, i32
  }
  func.func @transform_2(%arg0: i32) -> (i32, i32) {
    %c0_i32 = arith.constant 0 : i32
    %c0_i32_0 = arith.constant 0 : i32
    %c0_i32_1 = arith.constant 0 : i32
    return %c0_i32, %c0_i32_0 : i32, i32
  }
  func.func @transform_3(%arg0: i32) -> (i32, i32) {
    %c0_i32 = arith.constant 0 : i32
    %c0_i32_0 = arith.constant 0 : i32
    %c0_i32_1 = arith.constant 0 : i32
    return %c0_i32, %c0_i32_0 : i32, i32
  }
  func.func @transform_4(%arg0: i32) -> (i32, i32) {
    %c0_i32 = arith.constant 0 : i32
    %c0_i32_0 = arith.constant 0 : i32
    %c0_i32_1 = arith.constant 0 : i32
    return %c0_i32, %c0_i32_0 : i32, i32
  }
  func.func @transform_5(%arg0: i32) -> (i32, i32) {
    %c0_i32 = arith.constant 0 : i32
    %c0_i32_0 = arith.constant 0 : i32
    %c0_i32_1 = arith.constant 0 : i32
    return %c0_i32, %c0_i32_0 : i32, i32
  }
  func.func @transform_6(%arg0: i32) -> (i32, i32) {
    %c0_i32 = arith.constant 0 : i32
    %c0_i32_0 = arith.constant 0 : i32
    %c0_i32_1 = arith.constant 0 : i32
    return %c0_i32, %c0_i32_0 : i32, i32
  }
  func.func @transform_7(%arg0: i32) -> (i32, i32) {
    %c0_i32 = arith.constant 0 : i32
    %c0_i32_0 = arith.constant 0 : i32
    %c0_i32_1 = arith.constant 0 : i32
    return %c0_i32, %c0_i32_0 : i32, i32
  }
  func.func @transform_8(%arg0: i32) -> (i32, i32) {
    %c0_i32 = arith.constant 0 : i32
    %c0_i32_0 = arith.constant 0 : i32
    %c0_i32_1 = arith.constant 0 : i32
    return %c0_i32, %c0_i32_0 : i32, i32
  }
  func.func @transform_9(%arg0: i32) -> (i32, i32) {
    %c0_i32 = arith.constant 0 : i32
    %c0_i32_0 = arith.constant 0 : i32
    %c0_i32_1 = arith.constant 0 : i32
    return %c0_i32, %c0_i32_0 : i32, i32
  }
  func.func @transform_10(%arg0: i32) -> (i32, i32) {
    %c0_i32 = arith.constant 0 : i32
    %c0_i32_0 = arith.constant 0 : i32
    %c0_i32_1 = arith.constant 0 : i32
    return %c0_i32, %c0_i32_0 : i32, i32
  }
  func.func @transform_11(%arg0: i32) -> (i32, i32) {
    %c0_i32 = arith.constant 0 : i32
    %c0_i32_0 = arith.constant 0 : i32
    %c0_i32_1 = arith.constant 0 : i32
    return %c0_i32, %c0_i32_0 : i32, i32
  }
  func.func @transform_12(%arg0: i32) -> (i32, i32) {
    %c0_i32 = arith.constant 0 : i32
    %c0_i32_0 = arith.constant 0 : i32
    %c0_i32_1 = arith.constant 0 : i32
    return %c0_i32, %c0_i32_0 : i32, i32
  }
  func.func @transform_13(%arg0: i32) -> (i32, i32) {
    %c0_i32 = arith.constant 0 : i32
    %c0_i32_0 = arith.constant 0 : i32
    %c0_i32_1 = arith.constant 0 : i32
    return %c0_i32, %c0_i32_0 : i32, i32
  }
  func.func @transform_14(%arg0: i32) -> (i32, i32) {
    %c0_i32 = arith.constant 0 : i32
    %c0_i32_0 = arith.constant 0 : i32
    %c0_i32_1 = arith.constant 0 : i32
    return %c0_i32, %c0_i32_0 : i32, i32
  }
  func.func @transform_15(%arg0: i32) -> (i32, i32) {
    %c0_i32 = arith.constant 0 : i32
    %c0_i32_0 = arith.constant 0 : i32
    %c0_i32_1 = arith.constant 0 : i32
    return %c0_i32, %c0_i32_0 : i32, i32
  }
  func.func @transform_16(%arg0: i32) -> (i32, i32) {
    %c0_i32 = arith.constant 0 : i32
    %c0_i32_0 = arith.constant 0 : i32
    return %arg0, %c0_i32 : i32, i32
  }
}

</mosaic_0001>

<llo_original>
// kernel: tpu_custom_call.1
$region0: #{tpu_custom_call.1}
  #allocation0 [shape = 'u32[]', space=smem, size = 0x4, offset = 0x4, fixed_abs, tag = 'smem constant byte address 0x4 - core index']
  #allocation1 [shape = 'u32[144,128]{1,0:T(1,128)}', space=vmem, size = 0x12000, scoped, tag = 'internal scratch']
  %s0 = inlined_call_operand.hbm [shape: f32[128,128], index: 0, kind: input, shape index: {}]
  %s1 = inlined_call_operand.hbm [shape: f32[128,128], index: 1, kind: input, shape index: {}]
  %s2 = inlined_call_operand.hbm [shape: f32[1,128], index: 2, kind: input, shape index: {}]
  %s3 = inlined_call_operand.vmem [shape: f32[3,128], index: 3, kind: input, shape index: {}]
  %s4 = inlined_call_operand.hbm [shape: f32[1,128], index: 4, kind: input, shape index: {}]
  %s5 = inlined_call_operand.hbm [shape: f32[128,128], index: 5, kind: input, shape index: {}]
  %s6 = inlined_call_operand.hbm [shape: f32[1,128], index: 6, kind: input, shape index: {}]
  %s7 = inlined_call_operand.vmem [shape: f32[3,128], index: 7, kind: input, shape index: {}]
  %s8 = inlined_call_operand.vmem [shape: f32[1,128], index: 8, kind: input, shape index: {}]
  %s9 = inlined_call_operand.hbm [shape: f32[128,128], index: 9, kind: input, shape index: {}]
  %s10 = inlined_call_operand.vmem [shape: f32[1,128], index: 10, kind: input, shape index: {}]
  %s11 = inlined_call_operand.vmem [shape: f32[3,128], index: 11, kind: input, shape index: {}]
  %s12 = inlined_call_operand.vmem [shape: f32[1,128], index: 12, kind: input, shape index: {}]
  %s13 = inlined_call_operand.hbm [shape: f32[128,128], index: 13, kind: input, shape index: {}]
  %s14 = inlined_call_operand.vmem [shape: f32[1,128], index: 14, kind: input, shape index: {}]
  %s15 = inlined_call_operand.hbm [shape: f32[32,32], index: 15, kind: input, shape index: {}]
  %s16 = inlined_call_operand.hbm [shape: f32[128,128], index: 16, kind: output, shape index: {}]
  %s17 = sld [smem:[#allocation0]]
  $region110: #{tpu_custom_call.1} parent=0
    _
  %s19 = ssub.s32 1, %s17
  %s20 = scalar_select 0, %s19, %s17
  $region1: #{tpu_custom_call.1} parent=0
    #allocation2 [shape = 'u8[65536]{0}', space=vmem, size = 0x10000, scoped, tag = 'input window, operand 0, single buffered']
    #allocation3 [shape = 's32[1]{0}', space=sflag, size = 0x4, scoped, tag = 'scoped memory for tpu_custom_call.1']
    #allocation4 [shape = 's32[1]{0}', space=sflag, size = 0x4, scoped, tag = 'scoped memory for tpu_custom_call.1']
    #allocation5 [shape = 'u8[65536]{0}', space=vmem, size = 0x10000, scoped, tag = 'input window, operand 1, single buffered']
    #allocation6 [shape = 's32[1]{0}', space=sflag, size = 0x4, scoped, tag = 'scoped memory for tpu_custom_call.1']
    #allocation7 [shape = 'u8[512]{0}', space=vmem, size = 0x400, scoped, tag = 'input window, operand 2, single buffered']
    #allocation8 [shape = 'u8[512]{0}', space=vmem, size = 0x400, scoped, tag = 'input window, operand 4, single buffered']
    #allocation9 [shape = 's32[1]{0}', space=sflag, size = 0x4, scoped, tag = 'scoped memory for tpu_custom_call.1']
    #allocation10 [shape = 'u8[65536]{0}', space=vmem, size = 0x10000, scoped, tag = 'input window, operand 5, single buffered']
    #allocation11 [shape = 'u8[512]{0}', space=vmem, size = 0x400, scoped, tag = 'input window, operand 6, single buffered']
    #allocation12 [shape = 's32[1]{0}', space=sflag, size = 0x4, scoped, tag = 'scoped memory for tpu_custom_call.1']
    #allocation13 [shape = 'u8[65536]{0}', space=vmem, size = 0x10000, scoped, tag = 'input window, operand 9, single buffered']
    #allocation14 [shape = 'u8[65536]{0}', space=vmem, size = 0x10000, scoped, tag = 'input window, operand 13, single buffered']
    #allocation15 [shape = 's32[1]{0}', space=sflag, size = 0x4, scoped, tag = 'scoped memory for tpu_custom_call.1']
    #allocation16 [shape = 'u8[16384]{0}', space=vmem, size = 0x4000, scoped, tag = 'input window, operand 15, single buffered']
    #allocation17 [shape = 'u8[65536]{0}', space=vmem, size = 0x10000, scoped, tag = 'output window, operand 0, single buffered']
    %21 = vsyncpa [#allocation3], 0
    %22 = vsyncpa [#allocation6], 0
    %23 = vsyncpa [#allocation9], 0
    %24 = vsyncpa [#allocation12], 0
    %25 = vsyncpa [#allocation15], 0
    %26 = vsyncpa [#allocation4], 0
    // Predicated region
    $region2: #{tpu_custom_call.1} parent=1 // pred_check
      _
    $region3: #{tpu_custom_call.1} parent=1 // pred_check_branch
      %28 = sbr.rel (0) target = $region5
    $region4: #{tpu_custom_call.1} parent=1 // pred_region
      %s30 = ssub.s32 2048, 2048
      %31 = vsyncadd [#allocation3], %s30
      %s32 = sshll.u32 [#allocation2], 4
      %s33 = int_to_ptr.vmem [resolvable:$true] %s32
      %38 = dma.hbm_to_vmem [thread:$0]  %s0, 2048, %s33, [#allocation3], 128, 128, 8
    $region5: #{tpu_custom_call.1} parent=1 // pred_fallthru
      _
    // Predicated region
    $region6: #{tpu_custom_call.1} parent=1 // pred_check
      _
    $region7: #{tpu_custom_call.1} parent=1 // pred_check_branch
      %40 = sbr.rel (0) target = $region9
    $region8: #{tpu_custom_call.1} parent=1 // pred_region
      %s42 = ssub.s32 2048, 2048
      %43 = vsyncadd [#allocation6], %s42
      %s44 = sshll.u32 [#allocation5], 4
      %s45 = int_to_ptr.vmem [resolvable:$true] %s44
      %50 = dma.hbm_to_vmem [thread:$0]  %s1, 2048, %s45, [#allocation6], 128, 128, 8
    $region9: #{tpu_custom_call.1} parent=1 // pred_fallthru
      _
    // Predicated region
    $region10: #{tpu_custom_call.1} parent=1 // pred_check
      _
    $region11: #{tpu_custom_call.1} parent=1 // pred_check_branch
      %52 = sbr.rel (0) target = $region13
    $region12: #{tpu_custom_call.1} parent=1 // pred_region
      %s54 = ssub.s32 16, 16
      %55 = vsyncadd [#allocation6], %s54
      %s57 = sshll.u32 [#allocation7], 4
      %s58 = int_to_ptr.vmem [resolvable:$true] %s57
      %60 = dma.hbm_to_vmem [thread:$0]  %s2, 16, %s58, [#allocation6]
    $region13: #{tpu_custom_call.1} parent=1 // pred_fallthru
      _
    // Predicated region
    $region14: #{tpu_custom_call.1} parent=1 // pred_check
      _
    $region15: #{tpu_custom_call.1} parent=1 // pred_check_branch
      %62 = sbr.rel (0) target = $region17
    $region16: #{tpu_custom_call.1} parent=1 // pred_region
      _
    $region17: #{tpu_custom_call.1} parent=1 // pred_fallthru
      _
    // Predicated region
    $region18: #{tpu_custom_call.1} parent=1 // pred_check
      _
    $region19: #{tpu_custom_call.1} parent=1 // pred_check_branch
      %64 = sbr.rel (0) target = $region21
    $region20: #{tpu_custom_call.1} parent=1 // pred_region
      %s66 = ssub.s32 16, 16
      %67 = vsyncadd [#allocation9], %s66
      %s69 = sshll.u32 [#allocation8], 4
      %s70 = int_to_ptr.vmem [resolvable:$true] %s69
      %72 = dma.hbm_to_vmem [thread:$0]  %s4, 16, %s70, [#allocation9]
    $region21: #{tpu_custom_call.1} parent=1 // pred_fallthru
      _
    // Predicated region
    $region22: #{tpu_custom_call.1} parent=1 // pred_check
      _
    $region23: #{tpu_custom_call.1} parent=1 // pred_check_branch
      %74 = sbr.rel (0) target = $region25
    $region24: #{tpu_custom_call.1} parent=1 // pred_region
      %s76 = ssub.s32 2048, 2048
      %77 = vsyncadd [#allocation9], %s76
      %s78 = sshll.u32 [#allocation10], 4
      %s79 = int_to_ptr.vmem [resolvable:$true] %s78
      %84 = dma.hbm_to_vmem [thread:$0]  %s5, 2048, %s79, [#allocation9], 128, 128, 8
    $region25: #{tpu_custom_call.1} parent=1 // pred_fallthru
      _
    // Predicated region
    $region26: #{tpu_custom_call.1} parent=1 // pred_check
      _
    $region27: #{tpu_custom_call.1} parent=1 // pred_check_branch
      %86 = sbr.rel (0) target = $region29
    $region28: #{tpu_custom_call.1} parent=1 // pred_region
      %s88 = ssub.s32 16, 16
      %89 = vsyncadd [#allocation12], %s88
      %s91 = sshll.u32 [#allocation11], 4
      %s92 = int_to_ptr.vmem [resolvable:$true] %s91
      %94 = dma.hbm_to_vmem [thread:$0]  %s6, 16, %s92, [#allocation12]
    $region29: #{tpu_custom_call.1} parent=1 // pred_fallthru
      _
    // Predicated region
    $region30: #{tpu_custom_call.1} parent=1 // pred_check
      _
    $region31: #{tpu_custom_call.1} parent=1 // pred_check_branch
      %96 = sbr.rel (0) target = $region33
    $region32: #{tpu_custom_call.1} parent=1 // pred_region
      _
    $region33: #{tpu_custom_call.1} parent=1 // pred_fallthru
      _
    // Predicated region
    $region34: #{tpu_custom_call.1} parent=1 // pred_check
      _
    $region35: #{tpu_custom_call.1} parent=1 // pred_check_branch
      %98 = sbr.rel (0) target = $region37
    $region36: #{tpu_custom_call.1} parent=1 // pred_region
      _
    $region37: #{tpu_custom_call.1} parent=1 // pred_fallthru
      _
    // Predicated region
    $region38: #{tpu_custom_call.1} parent=1 // pred_check
      _
    $region39: #{tpu_custom_call.1} parent=1 // pred_check_branch
      %100 = sbr.rel (0) target = $region41
    $region40: #{tpu_custom_call.1} parent=1 // pred_region
      %s102 = ssub.s32 2048, 2048
      %103 = vsyncadd [#allocation12], %s102
      %s104 = sshll.u32 [#allocation13], 4
      %s105 = int_to_ptr.vmem [resolvable:$true] %s104
      %110 = dma.hbm_to_vmem [thread:$0]  %s9, 2048, %s105, [#allocation12], 128, 128, 8
    $region41: #{tpu_custom_call.1} parent=1 // pred_fallthru
      _
    // Predicated region
    $region42: #{tpu_custom_call.1} parent=1 // pred_check
      _
    $region43: #{tpu_custom_call.1} parent=1 // pred_check_branch
      %112 = sbr.rel (0) target = $region45
    $region44: #{tpu_custom_call.1} parent=1 // pred_region
      _
    $region45: #{tpu_custom_call.1} parent=1 // pred_fallthru
      _
    // Predicated region
    $region46: #{tpu_custom_call.1} parent=1 // pred_check
      _
    $region47: #{tpu_custom_call.1} parent=1 // pred_check_branch
      %114 = sbr.rel (0) target = $region49
    $region48: #{tpu_custom_call.1} parent=1 // pred_region
      _
    $region49: #{tpu_custom_call.1} parent=1 // pred_fallthru
      _
    // Predicated region
    $region50: #{tpu_custom_call.1} parent=1 // pred_check
      _
    $region51: #{tpu_custom_call.1} parent=1 // pred_check_branch
      %116 = sbr.rel (0) target = $region53
    $region52: #{tpu_custom_call.1} parent=1 // pred_region
      _
    $region53: #{tpu_custom_call.1} parent=1 // pred_fallthru
      _
    // Predicated region
    $region54: #{tpu_custom_call.1} parent=1 // pred_check
      _
    $region55: #{tpu_custom_call.1} parent=1 // pred_check_branch
      %118 = sbr.rel (0) target = $region57
    $region56: #{tpu_custom_call.1} parent=1 // pred_region
      %s120 = ssub.s32 2048, 2048
      %121 = vsyncadd [#allocation15], %s120
      %s122 = sshll.u32 [#allocation14], 4
      %s123 = int_to_ptr.vmem [resolvable:$true] %s122
      %128 = dma.hbm_to_vmem [thread:$0]  %s13, 2048, %s123, [#allocation15], 128, 128, 8
    $region57: #{tpu_custom_call.1} parent=1 // pred_fallthru
      _
    // Predicated region
    $region58: #{tpu_custom_call.1} parent=1 // pred_check
      _
    $region59: #{tpu_custom_call.1} parent=1 // pred_check_branch
      %130 = sbr.rel (0) target = $region61
    $region60: #{tpu_custom_call.1} parent=1 // pred_region
      _
    $region61: #{tpu_custom_call.1} parent=1 // pred_fallthru
      _
    // Predicated region
    $region62: #{tpu_custom_call.1} parent=1 // pred_check
      _
    $region63: #{tpu_custom_call.1} parent=1 // pred_check_branch
      %132 = sbr.rel (0) target = $region65
    $region64: #{tpu_custom_call.1} parent=1 // pred_region
      %s134 = ssub.s32 512, 512
      %135 = vsyncadd [#allocation15], %s134
      %s136 = sshll.u32 [#allocation16], 4
      %s137 = int_to_ptr.vmem [resolvable:$true] %s136
      %142 = dma.hbm_to_vmem [thread:$0]  %s15, 512, %s137, [#allocation15], 128, 128, 8
    $region65: #{tpu_custom_call.1} parent=1 // pred_fallthru
      _
    // Predicated region
    $region66: #{tpu_custom_call.1} parent=1 // pred_check
      _
    $region67: #{tpu_custom_call.1} parent=1 // pred_check_branch
      %144 = sbr.rel (0) target = $region69
    $region68: #{tpu_custom_call.1} parent=1 // pred_region
      %145 = dma.done [#allocation3], 2048
    $region69: #{tpu_custom_call.1} parent=1 // pred_fallthru
      _
    // Predicated region
    $region70: #{tpu_custom_call.1} parent=1 // pred_check
      _
    $region71: #{tpu_custom_call.1} parent=1 // pred_check_branch
      %147 = sbr.rel (0) target = $region73
    $region72: #{tpu_custom_call.1} parent=1 // pred_region
      %148 = dma.done [#allocation6], 2048
    $region73: #{tpu_custom_call.1} parent=1 // pred_fallthru
      _
    // Predicated region
    $region74: #{tpu_custom_call.1} parent=1 // pred_check
      _
    $region75: #{tpu_custom_call.1} parent=1 // pred_check_branch
      %150 = sbr.rel (0) target = $region77
    $region76: #{tpu_custom_call.1} parent=1 // pred_region
      %151 = dma.done [#allocation6], 16
    $region77: #{tpu_custom_call.1} parent=1 // pred_fallthru
      _
    // Predicated region
    $region78: #{tpu_custom_call.1} parent=1 // pred_check
      _
    $region79: #{tpu_custom_call.1} parent=1 // pred_check_branch
      %153 = sbr.rel (0) target = $region81
    $region80: #{tpu_custom_call.1} parent=1 // pred_region
      %154 = dma.done [#allocation9], 16
    $region81: #{tpu_custom_call.1} parent=1 // pred_fallthru
      _
    // Predicated region
    $region82: #{tpu_custom_call.1} parent=1 // pred_check
      _
    $region83: #{tpu_custom_call.1} parent=1 // pred_check_branch
      %156 = sbr.rel (0) target = $region85
    $region84: #{tpu_custom_call.1} parent=1 // pred_region
      %157 = dma.done [#allocation9], 2048
    $region85: #{tpu_custom_call.1} parent=1 // pred_fallthru
      _
    // Predicated region
    $region86: #{tpu_custom_call.1} parent=1 // pred_check
      _
    $region87: #{tpu_custom_call.1} parent=1 // pred_check_branch
      %159 = sbr.rel (0) target = $region89
    $region88: #{tpu_custom_call.1} parent=1 // pred_region
      %160 = dma.done [#allocation12], 16
    $region89: #{tpu_custom_call.1} parent=1 // pred_fallthru
      _
    // Predicated region
    $region90: #{tpu_custom_call.1} parent=1 // pred_check
      _
    $region91: #{tpu_custom_call.1} parent=1 // pred_check_branch
      %162 = sbr.rel (0) target = $region93
    $region92: #{tpu_custom_call.1} parent=1 // pred_region
      %163 = dma.done [#allocation12], 2048
    $region93: #{tpu_custom_call.1} parent=1 // pred_fallthru
      _
    // Predicated region
    $region94: #{tpu_custom_call.1} parent=1 // pred_check
      _
    $region95: #{tpu_custom_call.1} parent=1 // pred_check_branch
      %165 = sbr.rel (0) target = $region97
    $region96: #{tpu_custom_call.1} parent=1 // pred_region
      %166 = dma.done [#allocation15], 2048
    $region97: #{tpu_custom_call.1} parent=1 // pred_fallthru
      _
    // Predicated region
    $region98: #{tpu_custom_call.1} parent=1 // pred_check
      _
    $region99: #{tpu_custom_call.1} parent=1 // pred_check_branch
      %168 = sbr.rel (0) target = $region101
    $region100: #{tpu_custom_call.1} parent=1 // pred_region
      %169 = dma.done [#allocation15], 512
    $region101: #{tpu_custom_call.1} parent=1 // pred_fallthru
      _
    %v170 = vld [vmem:[#allocation2] sm:$0xff]
    %v171 = vld [vmem:[#allocation2 + $0x8] sm:$0xff]
    %v172 = vld [vmem:[#allocation2 + $0x10] sm:$0xff]
    %v173 = vld [vmem:[#allocation2 + $0x18] sm:$0xff]
    %v174 = vld [vmem:[#allocation2 + $0x20] sm:$0xff]
    %v175 = vld [vmem:[#allocation2 + $0x28] sm:$0xff]
    %v176 = vld [vmem:[#allocation2 + $0x30] sm:$0xff]
    %v177 = vld [vmem:[#allocation2 + $0x38] sm:$0xff]
    %v178 = vld [vmem:[#allocation2 + $0x40] sm:$0xff]
    %v179 = vld [vmem:[#allocation2 + $0x48] sm:$0xff]
    %v180 = vld [vmem:[#allocation2 + $0x50] sm:$0xff]
    %v181 = vld [vmem:[#allocation2 + $0x58] sm:$0xff]
    %v182 = vld [vmem:[#allocation2 + $0x60] sm:$0xff]
    %v183 = vld [vmem:[#allocation2 + $0x68] sm:$0xff]
    %v184 = vld [vmem:[#allocation2 + $0x70] sm:$0xff]
    %v185 = vld [vmem:[#allocation2 + $0x78] sm:$0xff]
    %v186 = vlaneseq
    %v187 = vshrl.u32 %v186, 7
    %v188 = vadd.s32 %v187, 8
    %v189 = vadd.s32 %v187, 16
    %v190 = vadd.s32 %v187, 24
    %v191 = vadd.s32 %v187, 32
    %v192 = vadd.s32 %v187, 40
    %v193 = vadd.s32 %v187, 48
    %v194 = vadd.s32 %v187, 56
    %v195 = vadd.s32 %v187, 64
    %v196 = vadd.s32 %v187, 72
    %v197 = vadd.s32 %v187, 80
    %v198 = vadd.s32 %v187, 88
    %v199 = vadd.s32 %v187, 96
    %v200 = vadd.s32 %v187, 104
    %v201 = vadd.s32 %v187, 112
    %v202 = vadd.s32 %v187, 120
    %vm203 = vcmp.lt.s32.totalorder %v187, 0
    %v204 = vsub.s32 0, %v187
    %v205 = vsel %vm203, %v204, %v187
    %v206 = vshrl.u32 %v205, 5
    %v207 = vand.u32 %v205, 31
    %v208 = vsub.s32 0, %v207
    %v209 = vsel %vm203, %v208, %v207
    %vm210 = vcmp.lt.s32.totalorder %v188, 0
    %v211 = vsub.s32 0, %v188
    %v212 = vsel %vm210, %v211, %v188
    %v213 = vshrl.u32 %v212, 5
    %v214 = vand.u32 %v212, 31
    %v215 = vsub.s32 0, %v214
    %v216 = vsel %vm210, %v215, %v214
    %vm217 = vcmp.lt.s32.totalorder %v189, 0
    %v218 = vsub.s32 0, %v189
    %v219 = vsel %vm217, %v218, %v189
    %v220 = vshrl.u32 %v219, 5
    %v221 = vand.u32 %v219, 31
    %v222 = vsub.s32 0, %v221
    %v223 = vsel %vm217, %v222, %v221
    %vm224 = vcmp.lt.s32.totalorder %v190, 0
    %v225 = vsub.s32 0, %v190
    %v226 = vsel %vm224, %v225, %v190
    %v227 = vshrl.u32 %v226, 5
    %v228 = vand.u32 %v226, 31
    %v229 = vsub.s32 0, %v228
    %v230 = vsel %vm224, %v229, %v228
    %vm231 = vcmp.lt.s32.totalorder %v191, 0
    %v232 = vsub.s32 0, %v191
    %v233 = vsel %vm231, %v232, %v191
    %v234 = vshrl.u32 %v233, 5
    %v235 = vand.u32 %v233, 31
    %v236 = vsub.s32 0, %v235
    %v237 = vsel %vm231, %v236, %v235
    %vm238 = vcmp.lt.s32.totalorder %v192, 0
    %v239 = vsub.s32 0, %v192
    %v240 = vsel %vm238, %v239, %v192
    %v241 = vshrl.u32 %v240, 5
    %v242 = vand.u32 %v240, 31
    %v243 = vsub.s32 0, %v242
    %v244 = vsel %vm238, %v243, %v242
    %vm245 = vcmp.lt.s32.totalorder %v193, 0
    %v246 = vsub.s32 0, %v193
    %v247 = vsel %vm245, %v246, %v193
    %v248 = vshrl.u32 %v247, 5
    %v249 = vand.u32 %v247, 31
    %v250 = vsub.s32 0, %v249
    %v251 = vsel %vm245, %v250, %v249
    %vm252 = vcmp.lt.s32.totalorder %v194, 0
    %v253 = vsub.s32 0, %v194
    %v254 = vsel %vm252, %v253, %v194
    %v255 = vshrl.u32 %v254, 5
    %v256 = vand.u32 %v254, 31
    %v257 = vsub.s32 0, %v256
    %v258 = vsel %vm252, %v257, %v256
    %vm259 = vcmp.lt.s32.totalorder %v195, 0
    %v260 = vsub.s32 0, %v195
    %v261 = vsel %vm259, %v260, %v195
    %v262 = vshrl.u32 %v261, 5
    %v263 = vand.u32 %v261, 31
    %v264 = vsub.s32 0, %v263
    %v265 = vsel %vm259, %v264, %v263
    %vm266 = vcmp.lt.s32.totalorder %v196, 0
    %v267 = vsub.s32 0, %v196
    %v268 = vsel %vm266, %v267, %v196
    %v269 = vshrl.u32 %v268, 5
    %v270 = vand.u32 %v268, 31
    %v271 = vsub.s32 0, %v270
    %v272 = vsel %vm266, %v271, %v270
    %vm273 = vcmp.lt.s32.totalorder %v197, 0
    %v274 = vsub.s32 0, %v197
    %v275 = vsel %vm273, %v274, %v197
    %v276 = vshrl.u32 %v275, 5
    %v277 = vand.u32 %v275, 31
    %v278 = vsub.s32 0, %v277
    %v279 = vsel %vm273, %v278, %v277
    %vm280 = vcmp.lt.s32.totalorder %v198, 0
    %v281 = vsub.s32 0, %v198
    %v282 = vsel %vm280, %v281, %v198
    %v283 = vshrl.u32 %v282, 5
    %v284 = vand.u32 %v282, 31
    %v285 = vsub.s32 0, %v284
    %v286 = vsel %vm280, %v285, %v284
    %vm287 = vcmp.lt.s32.totalorder %v199, 0
    %v288 = vsub.s32 0, %v199
    %v289 = vsel %vm287, %v288, %v199
    %v290 = vshrl.u32 %v289, 5
    %v291 = vand.u32 %v289, 31
    %v292 = vsub.s32 0, %v291
    %v293 = vsel %vm287, %v292, %v291
    %vm294 = vcmp.lt.s32.totalorder %v200, 0
    %v295 = vsub.s32 0, %v200
    %v296 = vsel %vm294, %v295, %v200
    %v297 = vshrl.u32 %v296, 5
    %v298 = vand.u32 %v296, 31
    %v299 = vsub.s32 0, %v298
    %v300 = vsel %vm294, %v299, %v298
    %vm301 = vcmp.lt.s32.totalorder %v201, 0
    %v302 = vsub.s32 0, %v201
    %v303 = vsel %vm301, %v302, %v201
    %v304 = vshrl.u32 %v303, 5
    %v305 = vand.u32 %v303, 31
    %v306 = vsub.s32 0, %v305
    %v307 = vsel %vm301, %v306, %v305
    %vm308 = vcmp.lt.s32.totalorder %v202, 0
    %v309 = vsub.s32 0, %v202
    %v310 = vsel %vm308, %v309, %v202
    %v311 = vshrl.u32 %v310, 5
    %v312 = vand.u32 %v310, 31
    %v313 = vsub.s32 0, %v312
    %v314 = vsel %vm308, %v313, %v312
    %vm315 = vcmp.ne.s32.totalorder %v209, 0
    %vm316 = vcmp.ne.s32.totalorder %v216, 0
    %vm317 = vcmp.ne.s32.totalorder %v223, 0
    %vm318 = vcmp.ne.s32.totalorder %v230, 0
    %vm319 = vcmp.ne.s32.totalorder %v237, 0
    %vm320 = vcmp.ne.s32.totalorder %v244, 0
    %vm321 = vcmp.ne.s32.totalorder %v251, 0
    %vm322 = vcmp.ne.s32.totalorder %v258, 0
    %vm323 = vcmp.ne.s32.totalorder %v265, 0
    %vm324 = vcmp.ne.s32.totalorder %v272, 0
    %vm325 = vcmp.ne.s32.totalorder %v279, 0
    %vm326 = vcmp.ne.s32.totalorder %v286, 0
    %vm327 = vcmp.ne.s32.totalorder %v293, 0
    %vm328 = vcmp.ne.s32.totalorder %v300, 0
    %vm329 = vcmp.ne.s32.totalorder %v307, 0
    %vm330 = vcmp.ne.s32.totalorder %v314, 0
    %vm331 = vcmp.lt.s32.totalorder %v209, 0
    %vm332 = vcmp.lt.s32.totalorder %v216, 0
    %vm333 = vcmp.lt.s32.totalorder %v223, 0
    %vm334 = vcmp.lt.s32.totalorder %v230, 0
    %vm335 = vcmp.lt.s32.totalorder %v237, 0
    %vm336 = vcmp.lt.s32.totalorder %v244, 0
    %vm337 = vcmp.lt.s32.totalorder %v251, 0
    %vm338 = vcmp.lt.s32.totalorder %v258, 0
    %vm339 = vcmp.lt.s32.totalorder %v265, 0
    %vm340 = vcmp.lt.s32.totalorder %v272, 0
    %vm341 = vcmp.lt.s32.totalorder %v279, 0
    %vm342 = vcmp.lt.s32.totalorder %v286, 0
    %vm343 = vcmp.lt.s32.totalorder %v293, 0
    %vm344 = vcmp.lt.s32.totalorder %v300, 0
    %vm345 = vcmp.lt.s32.totalorder %v307, 0
    %vm346 = vcmp.lt.s32.totalorder %v314, 0
    %vm347 = vmand %vm331, %vm315
    %vm348 = vmand %vm332, %vm316
    %vm349 = vmand %vm333, %vm317
    %vm350 = vmand %vm334, %vm318
    %vm351 = vmand %vm335, %vm319
    %vm352 = vmand %vm336, %vm320
    %vm353 = vmand %vm337, %vm321
    %vm354 = vmand %vm338, %vm322
    %vm355 = vmand %vm339, %vm323
    %vm356 = vmand %vm340, %vm324
    %vm357 = vmand %vm341, %vm325
    %vm358 = vmand %vm342, %vm326
    %vm359 = vmand %vm343, %vm327
    %vm360 = vmand %vm344, %vm328
    %vm361 = vmand %vm345, %vm329
    %vm362 = vmand %vm346, %vm330
    %v363 = vadd.s32 %v209, 32
    %v364 = vadd.s32 %v216, 32
    %v365 = vadd.s32 %v223, 32
    %v366 = vadd.s32 %v230, 32
    %v367 = vadd.s32 %v237, 32
    %v368 = vadd.s32 %v244, 32
    %v369 = vadd.s32 %v251, 32
    %v370 = vadd.s32 %v258, 32
    %v371 = vadd.s32 %v265, 32
    %v372 = vadd.s32 %v272, 32
    %v373 = vadd.s32 %v279, 32
    %v374 = vadd.s32 %v286, 32
    %v375 = vadd.s32 %v293, 32
    %v376 = vadd.s32 %v300, 32
    %v377 = vadd.s32 %v307, 32
    %v378 = vadd.s32 %v314, 32
    %v379 = vsel %vm347, %v363, %v209
    %v380 = vsel %vm348, %v364, %v216
    %v381 = vsel %vm349, %v365, %v223
    %v382 = vsel %vm350, %v366, %v230
    %v383 = vsel %vm351, %v367, %v237
    %v384 = vsel %vm352, %v368, %v244
    %v385 = vsel %vm353, %v369, %v251
    %v386 = vsel %vm354, %v370, %v258
    %v387 = vsel %vm355, %v371, %v265
    %v388 = vsel %vm356, %v372, %v272
    %v389 = vsel %vm357, %v373, %v279
    %v390 = vsel %vm358, %v374, %v286
    %v391 = vsel %vm359, %v375, %v293
    %v392 = vsel %vm360, %v376, %v300
    %v393 = vsel %vm361, %v377, %v307
    %v394 = vsel %vm362, %v378, %v314
    %vm395 = vcmp.ne.s32.totalorder %v379, 0
    %vm396 = vcmp.ne.s32.totalorder %v380, 0
    %vm397 = vcmp.ne.s32.totalorder %v381, 0
    %vm398 = vcmp.ne.s32.totalorder %v382, 0
    %vm399 = vcmp.ne.s32.totalorder %v383, 0
    %vm400 = vcmp.ne.s32.totalorder %v384, 0
    %vm401 = vcmp.ne.s32.totalorder %v385, 0
    %vm402 = vcmp.ne.s32.totalorder %v386, 0
    %vm403 = vcmp.ne.s32.totalorder %v387, 0
    %vm404 = vcmp.ne.s32.totalorder %v388, 0
    %vm405 = vcmp.ne.s32.totalorder %v389, 0
    %vm406 = vcmp.ne.s32.totalorder %v390, 0
    %vm407 = vcmp.ne.s32.totalorder %v391, 0
    %vm408 = vcmp.ne.s32.totalorder %v392, 0
    %vm409 = vcmp.ne.s32.totalorder %v393, 0
    %vm410 = vcmp.ne.s32.totalorder %v394, 0
    %vm411 = vcmp.ne.s32.totalorder %v379, 31
    %vm412 = vcmp.ne.s32.totalorder %v380, 31
    %vm413 = vcmp.ne.s32.totalorder %v381, 31
    %vm414 = vcmp.ne.s32.totalorder %v382, 31
    %vm415 = vcmp.ne.s32.totalorder %v383, 31
    %vm416 = vcmp.ne.s32.totalorder %v384, 31
    %vm417 = vcmp.ne.s32.totalorder %v385, 31
    %vm418 = vcmp.ne.s32.totalorder %v386, 31
    %vm419 = vcmp.ne.s32.totalorder %v387, 31
    %vm420 = vcmp.ne.s32.totalorder %v388, 31
    %vm421 = vcmp.ne.s32.totalorder %v389, 31
    %vm422 = vcmp.ne.s32.totalorder %v390, 31
    %vm423 = vcmp.ne.s32.totalorder %v391, 31
    %vm424 = vcmp.ne.s32.totalorder %v392, 31
    %vm425 = vcmp.ne.s32.totalorder %v393, 31
    %vm426 = vcmp.ne.s32.totalorder %v394, 31
    %v427 = vld [vmem:[#allocation5] sm:$0xff]
    %v428 = vld [vmem:[#allocation5 + $0x8] sm:$0xff]
    %v429 = vld [vmem:[#allocation5 + $0x10] sm:$0xff]
    %v430 = vld [vmem:[#allocation5 + $0x18] sm:$0xff]
    %v431 = vld [vmem:[#allocation5 + $0x20] sm:$0xff]
    %v432 = vld [vmem:[#allocation5 + $0x28] sm:$0xff]
    %v433 = vld [vmem:[#allocation5 + $0x30] sm:$0xff]
    %v434 = vld [vmem:[#allocation5 + $0x38] sm:$0xff]
    %v435 = vld [vmem:[#allocation5 + $0x40] sm:$0xff]
    %v436 = vld [vmem:[#allocation5 + $0x48] sm:$0xff]
    %v437 = vld [vmem:[#allocation5 + $0x50] sm:$0xff]
    %v438 = vld [vmem:[#allocation5 + $0x58] sm:$0xff]
    %v439 = vld [vmem:[#allocation5 + $0x60] sm:$0xff]
    %v440 = vld [vmem:[#allocation5 + $0x68] sm:$0xff]
    %v441 = vld [vmem:[#allocation5 + $0x70] sm:$0xff]
    %v442 = vld [vmem:[#allocation5 + $0x78] sm:$0xff]
    %v443 = vld [vmem:[#allocation7] sm:$0x1]
    %v444 = vld [vmem:[%s3] sm:$0x7]
    %v445 = vld [vmem:[#allocation8] sm:$0x1]
    %v447 = vlaneseq
    %v448 = vshrl.u32 %v447, 7
    %v449 = vsub.s32 0, %v448
    %v450 = vrot.slane %v443, %v449
    %452 = vmatprep.subr.mxu0 0.0
    %453 = vmatpush1.msra.mxu0 %v442
    %454 = vmatprep.subr.mxu0 0.0
    %455 = vmatpush1.msra.mxu0 %v441
    %456 = vmatprep.subr.mxu0 0.0
    %457 = vmatpush1.msra.mxu0 %v440
    %458 = vmatprep.subr.mxu0 0.0
    %459 = vmatpush1.msra.mxu0 %v439
    %460 = vmatprep.subr.mxu0 0.0
    %461 = vmatpush1.msra.mxu0 %v438
    %462 = vmatprep.subr.mxu0 0.0
    %463 = vmatpush1.msra.mxu0 %v437
    %464 = vmatprep.subr.mxu0 0.0
    %465 = vmatpush1.msra.mxu0 %v436
    %466 = vmatprep.subr.mxu0 0.0
    %467 = vmatpush1.msra.mxu0 %v435
    %468 = vmatprep.subr.mxu0 0.0
    %469 = vmatpush1.msra.mxu0 %v434
    %470 = vmatprep.subr.mxu0 0.0
    %471 = vmatpush1.msra.mxu0 %v433
    %472 = vmatprep.subr.mxu0 0.0
    %473 = vmatpush1.msra.mxu0 %v432
    %474 = vmatprep.subr.mxu0 0.0
    %475 = vmatpush1.msra.mxu0 %v431
    %476 = vmatprep.subr.mxu0 0.0
    %477 = vmatpush1.msra.mxu0 %v430
    %478 = vmatprep.subr.mxu0 0.0
    %479 = vmatpush1.msra.mxu0 %v429
    %480 = vmatprep.subr.mxu0 0.0
    %481 = vmatpush1.msra.mxu0 %v428
    %482 = vmatprep.subr.mxu0 0.0
    %483 = vmatpush1.msra.mxu0 %v427
    %484 = vmatprep.subr.mxu0 0.0
    %485 = vmatpush2.msra.mxu0 0.0
    %486 = vmatprep.subr.mxu0 0.0
    %487 = vmatpush2.msra.mxu0 0.0
    %488 = vmatprep.subr.mxu0 0.0
    %489 = vmatpush2.msra.mxu0 0.0
    %490 = vmatprep.subr.mxu0 0.0
    %491 = vmatpush2.msra.mxu0 0.0
    %492 = vmatprep.subr.mxu0 0.0
    %493 = vmatpush2.msra.mxu0 0.0
    %494 = vmatprep.subr.mxu0 0.0
    %495 = vmatpush2.msra.mxu0 0.0
    %496 = vmatprep.subr.mxu0 0.0
    %497 = vmatpush2.msra.mxu0 0.0
    %498 = vmatprep.subr.mxu0 0.0
    %499 = vmatpush2.msra.mxu0 0.0
    %500 = vmatprep.subr.mxu0 0.0
    %501 = vmatpush2.msra.mxu0 0.0
    %502 = vmatprep.subr.mxu0 0.0
    %503 = vmatpush2.msra.mxu0 0.0
    %504 = vmatprep.subr.mxu0 0.0
    %505 = vmatpush2.msra.mxu0 0.0
    %506 = vmatprep.subr.mxu0 0.0
    %507 = vmatpush2.msra.mxu0 0.0
    %508 = vmatprep.subr.mxu0 0.0
    %509 = vmatpush2.msra.mxu0 0.0
    %510 = vmatprep.subr.mxu0 0.0
    %511 = vmatpush2.msra.mxu0 0.0
    %512 = vmatprep.subr.mxu0 0.0
    %513 = vmatpush2.msra.mxu0 0.0
    %514 = vmatprep.subr.mxu0 0.0
    %515 = vmatpush2.msra.mxu0 0.0
    %516 = vmatprep.mubr.f32.mxu0 0.0
    %517 = vmatmul.mubr.f32.gmra.mxu0 %v170
    %v518 = vpop.f32.mrf.mxu0
    %v519 = vadd.f32 %v450, %v518
    %v520 = vpop.f32.mrf.mxu0
    %521 = vmatprep.mubr.f32.mxu0 0.0
    %522 = vmatmul.mubr.f32.gmra.mxu0 %v171
    %v523 = vpop.f32.mrf.mxu0
    %v524 = vadd.f32 %v450, %v523
    %v525 = vpop.f32.mrf.mxu0
    %526 = vmatprep.mubr.f32.mxu0 0.0
    %527 = vmatmul.mubr.f32.gmra.mxu0 %v172
    %v528 = vpop.f32.mrf.mxu0
    %v529 = vadd.f32 %v450, %v528
    %v530 = vpop.f32.mrf.mxu0
    %531 = vmatprep.mubr.f32.mxu0 0.0
    %532 = vmatmul.mubr.f32.gmra.mxu0 %v173
    %v533 = vpop.f32.mrf.mxu0
    %v534 = vadd.f32 %v450, %v533
    %v535 = vpop.f32.mrf.mxu0
    %536 = vmatprep.mubr.f32.mxu0 0.0
    %537 = vmatmul.mubr.f32.gmra.mxu0 %v174
    %v538 = vpop.f32.mrf.mxu0
    %v539 = vadd.f32 %v450, %v538
    %v540 = vpop.f32.mrf.mxu0
    %541 = vmatprep.mubr.f32.mxu0 0.0
    %542 = vmatmul.mubr.f32.gmra.mxu0 %v175
    %v543 = vpop.f32.mrf.mxu0
    %v544 = vadd.f32 %v450, %v543
    %v545 = vpop.f32.mrf.mxu0
    %546 = vmatprep.mubr.f32.mxu0 0.0
    %547 = vmatmul.mubr.f32.gmra.mxu0 %v176
    %v548 = vpop.f32.mrf.mxu0
    %v549 = vadd.f32 %v450, %v548
    %v550 = vpop.f32.mrf.mxu0
    %551 = vmatprep.mubr.f32.mxu0 0.0
    %552 = vmatmul.mubr.f32.gmra.mxu0 %v177
    %v553 = vpop.f32.mrf.mxu0
    %v554 = vadd.f32 %v450, %v553
    %v555 = vpop.f32.mrf.mxu0
    %556 = vmatprep.mubr.f32.mxu0 0.0
    %557 = vmatmul.mubr.f32.gmra.mxu0 %v178
    %v558 = vpop.f32.mrf.mxu0
    %v559 = vadd.f32 %v450, %v558
    %v560 = vpop.f32.mrf.mxu0
    %561 = vmatprep.mubr.f32.mxu0 0.0
    %562 = vmatmul.mubr.f32.gmra.mxu0 %v179
    %v563 = vpop.f32.mrf.mxu0
    %v564 = vadd.f32 %v450, %v563
    %v565 = vpop.f32.mrf.mxu0
    %566 = vmatprep.mubr.f32.mxu0 0.0
    %567 = vmatmul.mubr.f32.gmra.mxu0 %v180
    %v568 = vpop.f32.mrf.mxu0
    %v569 = vadd.f32 %v450, %v568
    %v570 = vpop.f32.mrf.mxu0
    %571 = vmatprep.mubr.f32.mxu0 0.0
    %572 = vmatmul.mubr.f32.gmra.mxu0 %v181
    %v573 = vpop.f32.mrf.mxu0
    %v574 = vadd.f32 %v450, %v573
    %v575 = vpop.f32.mrf.mxu0
    %576 = vmatprep.mubr.f32.mxu0 0.0
    %577 = vmatmul.mubr.f32.gmra.mxu0 %v182
    %v578 = vpop.f32.mrf.mxu0
    %v579 = vadd.f32 %v450, %v578
    %v580 = vpop.f32.mrf.mxu0
    %581 = vmatprep.mubr.f32.mxu0 0.0
    %582 = vmatmul.mubr.f32.gmra.mxu0 %v183
    %v583 = vpop.f32.mrf.mxu0
    %v584 = vadd.f32 %v450, %v583
    %v585 = vpop.f32.mrf.mxu0
    %586 = vmatprep.mubr.f32.mxu0 0.0
    %587 = vmatmul.mubr.f32.gmra.mxu0 %v184
    %v588 = vpop.f32.mrf.mxu0
    %v589 = vadd.f32 %v450, %v588
    %v590 = vpop.f32.mrf.mxu0
    %591 = vmatprep.mubr.f32.mxu0 0.0
    %592 = vmatmul.mubr.f32.gmra.mxu0 %v185
    %v593 = vpop.f32.mrf.mxu0
    %v594 = vadd.f32 %v450, %v593
    %v595 = vpop.f32.mrf.mxu0
    %596 = vdwg.mxu0
    %v597 = vrot.slane %v519, 7
    %v598 = vrot.slane %v524, 7
    %v599 = vrot.slane %v529, 7
    %v600 = vrot.slane %v534, 7
    %v601 = vrot.slane %v539, 7
    %v602 = vrot.slane %v544, 7
    %v603 = vrot.slane %v549, 7
    %v604 = vrot.slane %v554, 7
    %v605 = vrot.slane %v559, 7
    %v606 = vrot.slane %v564, 7
    %v607 = vrot.slane %v569, 7
    %v608 = vrot.slane %v574, 7
    %v609 = vrot.slane %v579, 7
    %v610 = vrot.slane %v584, 7
    %v611 = vrot.slane %v589, 7
    %v612 = vrot.slane %v594, 7
    %vm613 = vcmp.lt.s32.totalorder %v187, 1
    %v614 = vsel %vm613, %v611, %v612
    %v615 = vsel %vm613, %v610, %v611
    %v616 = vsel %vm613, %v609, %v610
    %v617 = vsel %vm613, %v608, %v609
    %v618 = vsel %vm613, %v607, %v608
    %v619 = vsel %vm613, %v606, %v607
    %v620 = vsel %vm613, %v605, %v606
    %v621 = vsel %vm613, %v604, %v605
    %v622 = vsel %vm613, %v603, %v604
    %v623 = vsel %vm613, %v602, %v603
    %v624 = vsel %vm613, %v601, %v602
    %v625 = vsel %vm613, %v600, %v601
    %v626 = vsel %vm613, %v599, %v600
    %v627 = vsel %vm613, %v598, %v599
    %v628 = vsel %vm613, %v597, %v598
    %v629 = vsel %vm613, %v612, %v597
    %v630 = vsel %vm395, %v629, 0.0
    %v631 = vsel %vm396, %v628, 0.0
    %v632 = vsel %vm397, %v627, 0.0
    %v633 = vsel %vm398, %v626, 0.0
    %v634 = vsel %vm399, %v625, 0.0
    %v635 = vsel %vm400, %v624, 0.0
    %v636 = vsel %vm401, %v623, 0.0
    %v637 = vsel %vm402, %v622, 0.0
    %v638 = vsel %vm403, %v621, 0.0
    %v639 = vsel %vm404, %v620, 0.0
    %v640 = vsel %vm405, %v619, 0.0
    %v641 = vsel %vm406, %v618, 0.0
    %v642 = vsel %vm407, %v617, 0.0
    %v643 = vsel %vm408, %v616, 0.0
    %v644 = vsel %vm409, %v615, 0.0
    %v645 = vsel %vm410, %v614, 0.0
    %v646 = vrot.slane %v519, 1
    %v647 = vrot.slane %v524, 1
    %v648 = vrot.slane %v529, 1
    %v649 = vrot.slane %v534, 1
    %v650 = vrot.slane %v539, 1
    %v651 = vrot.slane %v544, 1
    %v652 = vrot.slane %v549, 1
    %v653 = vrot.slane %v554, 1
    %v654 = vrot.slane %v559, 1
    %v655 = vrot.slane %v564, 1
    %v656 = vrot.slane %v569, 1
    %v657 = vrot.slane %v574, 1
    %v658 = vrot.slane %v579, 1
    %v659 = vrot.slane %v584, 1
    %v660 = vrot.slane %v589, 1
    %v661 = vrot.slane %v594, 1
    %vm662 = vcmp.lt.s32.totalorder %v187, 7
    %v663 = vsel %vm662, %v660, %v661
    %v664 = vsel %vm662, %v659, %v660
    %v665 = vsel %vm662, %v658, %v659
    %v666 = vsel %vm662, %v657, %v658
    %v667 = vsel %vm662, %v656, %v657
    %v668 = vsel %vm662, %v655, %v656
    %v669 = vsel %vm662, %v654, %v655
    %v670 = vsel %vm662, %v653, %v654
    %v671 = vsel %vm662, %v652, %v653
    %v672 = vsel %vm662, %v651, %v652
    %v673 = vsel %vm662, %v650, %v651
    %v674 = vsel %vm662, %v649, %v650
    %v675 = vsel %vm662, %v648, %v649
    %v676 = vsel %vm662, %v647, %v648
    %v677 = vsel %vm662, %v646, %v647
    %v678 = vsel %vm662, %v661, %v646
    %v679 = vsel %vm411, %v677, 0.0
    %v680 = vsel %vm412, %v676, 0.0
    %v681 = vsel %vm413, %v675, 0.0
    %v682 = vsel %vm414, %v674, 0.0
    %v683 = vsel %vm415, %v673, 0.0
    %v684 = vsel %vm416, %v672, 0.0
    %v685 = vsel %vm417, %v671, 0.0
    %v686 = vsel %vm418, %v670, 0.0
    %v687 = vsel %vm419, %v669, 0.0
    %v688 = vsel %vm420, %v668, 0.0
    %v689 = vsel %vm421, %v667, 0.0
    %v690 = vsel %vm422, %v666, 0.0
    %v691 = vsel %vm423, %v665, 0.0
    %v692 = vsel %vm424, %v664, 0.0
    %v693 = vsel %vm425, %v663, 0.0
    %v694 = vsel %vm426, %v678, 0.0
    %v695 = vlaneseq
    %v696 = vshrl.u32 %v695, 7
    %v697 = vsub.s32 0, %v696
    %v698 = vrot.slane %v444, %v697
    %v699 = vmul.f32 %v698, %v630
    %v700 = vmul.f32 %v698, %v631
    %v701 = vmul.f32 %v698, %v632
    %v702 = vmul.f32 %v698, %v633
    %v703 = vmul.f32 %v698, %v634
    %v704 = vmul.f32 %v698, %v635
    %v705 = vmul.f32 %v698, %v636
    %v706 = vmul.f32 %v698, %v637
    %v707 = vmul.f32 %v698, %v638
    %v708 = vmul.f32 %v698, %v639
    %v709 = vmul.f32 %v698, %v640
    %v710 = vmul.f32 %v698, %v641
    %v711 = vmul.f32 %v698, %v642
    %v712 = vmul.f32 %v698, %v643
    %v713 = vmul.f32 %v698, %v644
    %v714 = vmul.f32 %v698, %v645
    %v715 = vlaneseq
    %v716 = vshrl.u32 %v715, 7
    %v717 = vsub.s32 1, %v716
    %v718 = vrot.slane %v444, %v717
    %v719 = vmul.f32 %v718, %v519
    %v720 = vmul.f32 %v718, %v524
    %v721 = vmul.f32 %v718, %v529
    %v722 = vmul.f32 %v718, %v534
    %v723 = vmul.f32 %v718, %v539
    %v724 = vmul.f32 %v718, %v544
    %v725 = vmul.f32 %v718, %v549
    %v726 = vmul.f32 %v718, %v554
    %v727 = vmul.f32 %v718, %v559
    %v728 = vmul.f32 %v718, %v564
    %v729 = vmul.f32 %v718, %v569
    %v730 = vmul.f32 %v718, %v574
    %v731 = vmul.f32 %v718, %v579
    %v732 = vmul.f32 %v718, %v584
    %v733 = vmul.f32 %v718, %v589
    %v734 = vmul.f32 %v718, %v594
    %v735 = vadd.f32 %v699, %v719
    %v736 = vadd.f32 %v700, %v720
    %v737 = vadd.f32 %v701, %v721
    %v738 = vadd.f32 %v702, %v722
    %v739 = vadd.f32 %v703, %v723
    %v740 = vadd.f32 %v704, %v724
    %v741 = vadd.f32 %v705, %v725
    %v742 = vadd.f32 %v706, %v726
    %v743 = vadd.f32 %v707, %v727
    %v744 = vadd.f32 %v708, %v728
    %v745 = vadd.f32 %v709, %v729
    %v746 = vadd.f32 %v710, %v730
    %v747 = vadd.f32 %v711, %v731
    %v748 = vadd.f32 %v712, %v732
    %v749 = vadd.f32 %v713, %v733
    %v750 = vadd.f32 %v714, %v734
    %v751 = vlaneseq
    %v752 = vshrl.u32 %v751, 7
    %v753 = vsub.s32 2, %v752
    %v754 = vrot.slane %v444, %v753
    %v755 = vmul.f32 %v754, %v679
    %v756 = vmul.f32 %v754, %v680
    %v757 = vmul.f32 %v754, %v681
    %v758 = vmul.f32 %v754, %v682
    %v759 = vmul.f32 %v754, %v683
    %v760 = vmul.f32 %v754, %v684
    %v761 = vmul.f32 %v754, %v685
    %v762 = vmul.f32 %v754, %v686
    %v763 = vmul.f32 %v754, %v687
    %v764 = vmul.f32 %v754, %v688
    %v765 = vmul.f32 %v754, %v689
    %v766 = vmul.f32 %v754, %v690
    %v767 = vmul.f32 %v754, %v691
    %v768 = vmul.f32 %v754, %v692
    %v769 = vmul.f32 %v754, %v693
    %v770 = vmul.f32 %v754, %v694
    %v771 = vadd.f32 %v735, %v755
    %v772 = vadd.f32 %v736, %v756
    %v773 = vadd.f32 %v737, %v757
    %v774 = vadd.f32 %v738, %v758
    %v775 = vadd.f32 %v739, %v759
    %v776 = vadd.f32 %v740, %v760
    %v777 = vadd.f32 %v741, %v761
    %v778 = vadd.f32 %v742, %v762
    %v779 = vadd.f32 %v743, %v763
    %v780 = vadd.f32 %v744, %v764
    %v781 = vadd.f32 %v745, %v765
    %v782 = vadd.f32 %v746, %v766
    %v783 = vadd.f32 %v747, %v767
    %v784 = vadd.f32 %v748, %v768
    %v785 = vadd.f32 %v749, %v769
    %v786 = vadd.f32 %v750, %v770
    %v788 = vlaneseq
    %v789 = vshrl.u32 %v788, 7
    %v790 = vsub.s32 0, %v789
    %v791 = vrot.slane %v445, %v790
    %v793 = vadd.f32 %v771, %v791
    %v794 = vadd.f32 %v772, %v791
    %v795 = vadd.f32 %v773, %v791
    %v796 = vadd.f32 %v774, %v791
    %v797 = vadd.f32 %v775, %v791
    %v798 = vadd.f32 %v776, %v791
    %v799 = vadd.f32 %v777, %v791
    %v800 = vadd.f32 %v778, %v791
    %v801 = vadd.f32 %v779, %v791
    %v802 = vadd.f32 %v780, %v791
    %v803 = vadd.f32 %v781, %v791
    %v804 = vadd.f32 %v782, %v791
    %v805 = vadd.f32 %v783, %v791
    %v806 = vadd.f32 %v784, %v791
    %v807 = vadd.f32 %v785, %v791
    %v808 = vadd.f32 %v786, %v791
    %v809 = vld [vmem:[#allocation10] sm:$0xff]
    %v810 = vld [vmem:[#allocation10 + $0x8] sm:$0xff]
    %v811 = vld [vmem:[#allocation10 + $0x10] sm:$0xff]
    %v812 = vld [vmem:[#allocation10 + $0x18] sm:$0xff]
    %v813 = vld [vmem:[#allocation10 + $0x20] sm:$0xff]
    %v814 = vld [vmem:[#allocation10 + $0x28] sm:$0xff]
    %v815 = vld [vmem:[#allocation10 + $0x30] sm:$0xff]
    %v816 = vld [vmem:[#allocation10 + $0x38] sm:$0xff]
    %v817 = vld [vmem:[#allocation10 + $0x40] sm:$0xff]
    %v818 = vld [vmem:[#allocation10 + $0x48] sm:$0xff]
    %v819 = vld [vmem:[#allocation10 + $0x50] sm:$0xff]
    %v820 = vld [vmem:[#allocation10 + $0x58] sm:$0xff]
    %v821 = vld [vmem:[#allocation10 + $0x60] sm:$0xff]
    %v822 = vld [vmem:[#allocation10 + $0x68] sm:$0xff]
    %v823 = vld [vmem:[#allocation10 + $0x70] sm:$0xff]
    %v824 = vld [vmem:[#allocation10 + $0x78] sm:$0xff]
    %v825 = vld [vmem:[#allocation11] sm:$0x1]
    %v826 = vld [vmem:[%s7] sm:$0x7]
    %v827 = vld [vmem:[%s8] sm:$0x1]
    %v829 = vlaneseq
    %v830 = vshrl.u32 %v829, 7
    %v831 = vsub.s32 0, %v830
    %v832 = vrot.slane %v825, %v831
    %834 = vmatprep.subr.mxu0 0.0
    %835 = vmatpush1.msra.mxu0 %v824
    %836 = vmatprep.subr.mxu0 0.0
    %837 = vmatpush1.msra.mxu0 %v823
    %838 = vmatprep.subr.mxu0 0.0
    %839 = vmatpush1.msra.mxu0 %v822
    %840 = vmatprep.subr.mxu0 0.0
    %841 = vmatpush1.msra.mxu0 %v821
    %842 = vmatprep.subr.mxu0 0.0
    %843 = vmatpush1.msra.mxu0 %v820
    %844 = vmatprep.subr.mxu0 0.0
    %845 = vmatpush1.msra.mxu0 %v819
    %846 = vmatprep.subr.mxu0 0.0
    %847 = vmatpush1.msra.mxu0 %v818
    %848 = vmatprep.subr.mxu0 0.0
    %849 = vmatpush1.msra.mxu0 %v817
    %850 = vmatprep.subr.mxu0 0.0
    %851 = vmatpush1.msra.mxu0 %v816
    %852 = vmatprep.subr.mxu0 0.0
    %853 = vmatpush1.msra.mxu0 %v815
    %854 = vmatprep.subr.mxu0 0.0
    %855 = vmatpush1.msra.mxu0 %v814
    %856 = vmatprep.subr.mxu0 0.0
    %857 = vmatpush1.msra.mxu0 %v813
    %858 = vmatprep.subr.mxu0 0.0
    %859 = vmatpush1.msra.mxu0 %v812
    %860 = vmatprep.subr.mxu0 0.0
    %861 = vmatpush1.msra.mxu0 %v811
    %862 = vmatprep.subr.mxu0 0.0
    %863 = vmatpush1.msra.mxu0 %v810
    %864 = vmatprep.subr.mxu0 0.0
    %865 = vmatpush1.msra.mxu0 %v809
    %866 = vmatprep.subr.mxu0 0.0
    %867 = vmatpush2.msra.mxu0 0.0
    %868 = vmatprep.subr.mxu0 0.0
    %869 = vmatpush2.msra.mxu0 0.0
    %870 = vmatprep.subr.mxu0 0.0
    %871 = vmatpush2.msra.mxu0 0.0
    %872 = vmatprep.subr.mxu0 0.0
    %873 = vmatpush2.msra.mxu0 0.0
    %874 = vmatprep.subr.mxu0 0.0
    %875 = vmatpush2.msra.mxu0 0.0
    %876 = vmatprep.subr.mxu0 0.0
    %877 = vmatpush2.msra.mxu0 0.0
    %878 = vmatprep.subr.mxu0 0.0
    %879 = vmatpush2.msra.mxu0 0.0
    %880 = vmatprep.subr.mxu0 0.0
    %881 = vmatpush2.msra.mxu0 0.0
    %882 = vmatprep.subr.mxu0 0.0
    %883 = vmatpush2.msra.mxu0 0.0
    %884 = vmatprep.subr.mxu0 0.0
    %885 = vmatpush2.msra.mxu0 0.0
    %886 = vmatprep.subr.mxu0 0.0
    %887 = vmatpush2.msra.mxu0 0.0
    %888 = vmatprep.subr.mxu0 0.0
    %889 = vmatpush2.msra.mxu0 0.0
    %890 = vmatprep.subr.mxu0 0.0
    %891 = vmatpush2.msra.mxu0 0.0
    %892 = vmatprep.subr.mxu0 0.0
    %893 = vmatpush2.msra.mxu0 0.0
    %894 = vmatprep.subr.mxu0 0.0
    %895 = vmatpush2.msra.mxu0 0.0
    %896 = vmatprep.subr.mxu0 0.0
    %897 = vmatpush2.msra.mxu0 0.0
    %898 = vmatprep.mubr.f32.mxu0 0.0
    %899 = vmatmul.mubr.f32.gmra.mxu0 %v170
    %v900 = vpop.f32.mrf.mxu0
    %v901 = vadd.f32 %v832, %v900
    %v902 = vpop.f32.mrf.mxu0
    %903 = vmatprep.mubr.f32.mxu0 0.0
    %904 = vmatmul.mubr.f32.gmra.mxu0 %v171
    %v905 = vpop.f32.mrf.mxu0
    %v906 = vadd.f32 %v832, %v905
    %v907 = vpop.f32.mrf.mxu0
    %908 = vmatprep.mubr.f32.mxu0 0.0
    %909 = vmatmul.mubr.f32.gmra.mxu0 %v172
    %v910 = vpop.f32.mrf.mxu0
    %v911 = vadd.f32 %v832, %v910
    %v912 = vpop.f32.mrf.mxu0
    %913 = vmatprep.mubr.f32.mxu0 0.0
    %914 = vmatmul.mubr.f32.gmra.mxu0 %v173
    %v915 = vpop.f32.mrf.mxu0
    %v916 = vadd.f32 %v832, %v915
    %v917 = vpop.f32.mrf.mxu0
    %918 = vmatprep.mubr.f32.mxu0 0.0
    %919 = vmatmul.mubr.f32.gmra.mxu0 %v174
    %v920 = vpop.f32.mrf.mxu0
    %v921 = vadd.f32 %v832, %v920
    %v922 = vpop.f32.mrf.mxu0
    %923 = vmatprep.mubr.f32.mxu0 0.0
    %924 = vmatmul.mubr.f32.gmra.mxu0 %v175
    %v925 = vpop.f32.mrf.mxu0
    %v926 = vadd.f32 %v832, %v925
    %v927 = vpop.f32.mrf.mxu0
    %928 = vmatprep.mubr.f32.mxu0 0.0
    %929 = vmatmul.mubr.f32.gmra.mxu0 %v176
    %v930 = vpop.f32.mrf.mxu0
    %v931 = vadd.f32 %v832, %v930
    %v932 = vpop.f32.mrf.mxu0
    %933 = vmatprep.mubr.f32.mxu0 0.0
    %934 = vmatmul.mubr.f32.gmra.mxu0 %v177
    %v935 = vpop.f32.mrf.mxu0
    %v936 = vadd.f32 %v832, %v935
    %v937 = vpop.f32.mrf.mxu0
    %938 = vmatprep.mubr.f32.mxu0 0.0
    %939 = vmatmul.mubr.f32.gmra.mxu0 %v178
    %v940 = vpop.f32.mrf.mxu0
    %v941 = vadd.f32 %v832, %v940
    %v942 = vpop.f32.mrf.mxu0
    %943 = vmatprep.mubr.f32.mxu0 0.0
    %944 = vmatmul.mubr.f32.gmra.mxu0 %v179
    %v945 = vpop.f32.mrf.mxu0
    %v946 = vadd.f32 %v832, %v945
    %v947 = vpop.f32.mrf.mxu0
    %948 = vmatprep.mubr.f32.mxu0 0.0
    %949 = vmatmul.mubr.f32.gmra.mxu0 %v180
    %v950 = vpop.f32.mrf.mxu0
    %v951 = vadd.f32 %v832, %v950
    %v952 = vpop.f32.mrf.mxu0
    %953 = vmatprep.mubr.f32.mxu0 0.0
    %954 = vmatmul.mubr.f32.gmra.mxu0 %v181
    %v955 = vpop.f32.mrf.mxu0
    %v956 = vadd.f32 %v832, %v955
    %v957 = vpop.f32.mrf.mxu0
    %958 = vmatprep.mubr.f32.mxu0 0.0
    %959 = vmatmul.mubr.f32.gmra.mxu0 %v182
    %v960 = vpop.f32.mrf.mxu0
    %v961 = vadd.f32 %v832, %v960
    %v962 = vpop.f32.mrf.mxu0
    %963 = vmatprep.mubr.f32.mxu0 0.0
    %964 = vmatmul.mubr.f32.gmra.mxu0 %v183
    %v965 = vpop.f32.mrf.mxu0
    %v966 = vadd.f32 %v832, %v965
    %v967 = vpop.f32.mrf.mxu0
    %968 = vmatprep.mubr.f32.mxu0 0.0
    %969 = vmatmul.mubr.f32.gmra.mxu0 %v184
    %v970 = vpop.f32.mrf.mxu0
    %v971 = vadd.f32 %v832, %v970
    %v972 = vpop.f32.mrf.mxu0
    %973 = vmatprep.mubr.f32.mxu0 0.0
    %974 = vmatmul.mubr.f32.gmra.mxu0 %v185
    %v975 = vpop.f32.mrf.mxu0
    %v976 = vadd.f32 %v832, %v975
    %v977 = vpop.f32.mrf.mxu0
    %978 = vdwg.mxu0
    %v979 = vrot.slane %v901, 7
    %v980 = vrot.slane %v906, 7
    %v981 = vrot.slane %v911, 7
    %v982 = vrot.slane %v916, 7
    %v983 = vrot.slane %v921, 7
    %v984 = vrot.slane %v926, 7
    %v985 = vrot.slane %v931, 7
    %v986 = vrot.slane %v936, 7
    %v987 = vrot.slane %v941, 7
    %v988 = vrot.slane %v946, 7
    %v989 = vrot.slane %v951, 7
    %v990 = vrot.slane %v956, 7
    %v991 = vrot.slane %v961, 7
    %v992 = vrot.slane %v966, 7
    %v993 = vrot.slane %v971, 7
    %v994 = vrot.slane %v976, 7
    %v995 = vsel %vm613, %v993, %v994
    %v996 = vsel %vm613, %v992, %v993
    %v997 = vsel %vm613, %v991, %v992
    %v998 = vsel %vm613, %v990, %v991
    %v999 = vsel %vm613, %v989, %v990
    %v1000 = vsel %vm613, %v988, %v989
    %v1001 = vsel %vm613, %v987, %v988
    %v1002 = vsel %vm613, %v986, %v987
    %v1003 = vsel %vm613, %v985, %v986
    %v1004 = vsel %vm613, %v984, %v985
    %v1005 = vsel %vm613, %v983, %v984
    %v1006 = vsel %vm613, %v982, %v983
    %v1007 = vsel %vm613, %v981, %v982
    %v1008 = vsel %vm613, %v980, %v981
    %v1009 = vsel %vm613, %v979, %v980
    %v1010 = vsel %vm613, %v994, %v979
    %v1011 = vsel %vm395, %v1010, 0.0
    %v1012 = vsel %vm396, %v1009, 0.0
    %v1013 = vsel %vm397, %v1008, 0.0
    %v1014 = vsel %vm398, %v1007, 0.0
    %v1015 = vsel %vm399, %v1006, 0.0
    %v1016 = vsel %vm400, %v1005, 0.0
    %v1017 = vsel %vm401, %v1004, 0.0
    %v1018 = vsel %vm402, %v1003, 0.0
    %v1019 = vsel %vm403, %v1002, 0.0
    %v1020 = vsel %vm404, %v1001, 0.0
    %v1021 = vsel %vm405, %v1000, 0.0
    %v1022 = vsel %vm406, %v999, 0.0
    %v1023 = vsel %vm407, %v998, 0.0
    %v1024 = vsel %vm408, %v997, 0.0
    %v1025 = vsel %vm409, %v996, 0.0
    %v1026 = vsel %vm410, %v995, 0.0
    %v1027 = vrot.slane %v901, 1
    %v1028 = vrot.slane %v906, 1
    %v1029 = vrot.slane %v911, 1
    %v1030 = vrot.slane %v916, 1
    %v1031 = vrot.slane %v921, 1
    %v1032 = vrot.slane %v926, 1
    %v1033 = vrot.slane %v931, 1
    %v1034 = vrot.slane %v936, 1
    %v1035 = vrot.slane %v941, 1
    %v1036 = vrot.slane %v946, 1
    %v1037 = vrot.slane %v951, 1
    %v1038 = vrot.slane %v956, 1
    %v1039 = vrot.slane %v961, 1
    %v1040 = vrot.slane %v966, 1
    %v1041 = vrot.slane %v971, 1
    %v1042 = vrot.slane %v976, 1
    %v1043 = vsel %vm662, %v1041, %v1042
    %v1044 = vsel %vm662, %v1040, %v1041
    %v1045 = vsel %vm662, %v1039, %v1040
    %v1046 = vsel %vm662, %v1038, %v1039
    %v1047 = vsel %vm662, %v1037, %v1038
    %v1048 = vsel %vm662, %v1036, %v1037
    %v1049 = vsel %vm662, %v1035, %v1036
    %v1050 = vsel %vm662, %v1034, %v1035
    %v1051 = vsel %vm662, %v1033, %v1034
    %v1052 = vsel %vm662, %v1032, %v1033
    %v1053 = vsel %vm662, %v1031, %v1032
    %v1054 = vsel %vm662, %v1030, %v1031
    %v1055 = vsel %vm662, %v1029, %v1030
    %v1056 = vsel %vm662, %v1028, %v1029
    %v1057 = vsel %vm662, %v1027, %v1028
    %v1058 = vsel %vm662, %v1042, %v1027
    %v1059 = vsel %vm411, %v1057, 0.0
    %v1060 = vsel %vm412, %v1056, 0.0
    %v1061 = vsel %vm413, %v1055, 0.0
    %v1062 = vsel %vm414, %v1054, 0.0
    %v1063 = vsel %vm415, %v1053, 0.0
    %v1064 = vsel %vm416, %v1052, 0.0
    %v1065 = vsel %vm417, %v1051, 0.0
    %v1066 = vsel %vm418, %v1050, 0.0
    %v1067 = vsel %vm419, %v1049, 0.0
    %v1068 = vsel %vm420, %v1048, 0.0
    %v1069 = vsel %vm421, %v1047, 0.0
    %v1070 = vsel %vm422, %v1046, 0.0
    %v1071 = vsel %vm423, %v1045, 0.0
    %v1072 = vsel %vm424, %v1044, 0.0
    %v1073 = vsel %vm425, %v1043, 0.0
    %v1074 = vsel %vm426, %v1058, 0.0
    %v1075 = vlaneseq
    %v1076 = vshrl.u32 %v1075, 7
    %v1077 = vsub.s32 0, %v1076
    %v1078 = vrot.slane %v826, %v1077
    %v1079 = vmul.f32 %v1078, %v1011
    %v1080 = vmul.f32 %v1078, %v1012
    %v1081 = vmul.f32 %v1078, %v1013
    %v1082 = vmul.f32 %v1078, %v1014
    %v1083 = vmul.f32 %v1078, %v1015
    %v1084 = vmul.f32 %v1078, %v1016
    %v1085 = vmul.f32 %v1078, %v1017
    %v1086 = vmul.f32 %v1078, %v1018
    %v1087 = vmul.f32 %v1078, %v1019
    %v1088 = vmul.f32 %v1078, %v1020
    %v1089 = vmul.f32 %v1078, %v1021
    %v1090 = vmul.f32 %v1078, %v1022
    %v1091 = vmul.f32 %v1078, %v1023
    %v1092 = vmul.f32 %v1078, %v1024
    %v1093 = vmul.f32 %v1078, %v1025
    %v1094 = vmul.f32 %v1078, %v1026
    %v1095 = vlaneseq
    %v1096 = vshrl.u32 %v1095, 7
    %v1097 = vsub.s32 1, %v1096
    %v1098 = vrot.slane %v826, %v1097
    %v1099 = vmul.f32 %v1098, %v901
    %v1100 = vmul.f32 %v1098, %v906
    %v1101 = vmul.f32 %v1098, %v911
    %v1102 = vmul.f32 %v1098, %v916
    %v1103 = vmul.f32 %v1098, %v921
    %v1104 = vmul.f32 %v1098, %v926
    %v1105 = vmul.f32 %v1098, %v931
    %v1106 = vmul.f32 %v1098, %v936
    %v1107 = vmul.f32 %v1098, %v941
    %v1108 = vmul.f32 %v1098, %v946
    %v1109 = vmul.f32 %v1098, %v951
    %v1110 = vmul.f32 %v1098, %v956
    %v1111 = vmul.f32 %v1098, %v961
    %v1112 = vmul.f32 %v1098, %v966
    %v1113 = vmul.f32 %v1098, %v971
    %v1114 = vmul.f32 %v1098, %v976
    %v1115 = vadd.f32 %v1079, %v1099
    %v1116 = vadd.f32 %v1080, %v1100
    %v1117 = vadd.f32 %v1081, %v1101
    %v1118 = vadd.f32 %v1082, %v1102
    %v1119 = vadd.f32 %v1083, %v1103
    %v1120 = vadd.f32 %v1084, %v1104
    %v1121 = vadd.f32 %v1085, %v1105
    %v1122 = vadd.f32 %v1086, %v1106
    %v1123 = vadd.f32 %v1087, %v1107
    %v1124 = vadd.f32 %v1088, %v1108
    %v1125 = vadd.f32 %v1089, %v1109
    %v1126 = vadd.f32 %v1090, %v1110
    %v1127 = vadd.f32 %v1091, %v1111
    %v1128 = vadd.f32 %v1092, %v1112
    %v1129 = vadd.f32 %v1093, %v1113
    %v1130 = vadd.f32 %v1094, %v1114
    %v1131 = vlaneseq
    %v1132 = vshrl.u32 %v1131, 7
    %v1133 = vsub.s32 2, %v1132
    %v1134 = vrot.slane %v826, %v1133
    %v1135 = vmul.f32 %v1134, %v1059
    %v1136 = vmul.f32 %v1134, %v1060
    %v1137 = vmul.f32 %v1134, %v1061
    %v1138 = vmul.f32 %v1134, %v1062
    %v1139 = vmul.f32 %v1134, %v1063
    %v1140 = vmul.f32 %v1134, %v1064
    %v1141 = vmul.f32 %v1134, %v1065
    %v1142 = vmul.f32 %v1134, %v1066
    %v1143 = vmul.f32 %v1134, %v1067
    %v1144 = vmul.f32 %v1134, %v1068
    %v1145 = vmul.f32 %v1134, %v1069
    %v1146 = vmul.f32 %v1134, %v1070
    %v1147 = vmul.f32 %v1134, %v1071
    %v1148 = vmul.f32 %v1134, %v1072
    %v1149 = vmul.f32 %v1134, %v1073
    %v1150 = vmul.f32 %v1134, %v1074
    %v1151 = vadd.f32 %v1115, %v1135
    %v1152 = vadd.f32 %v1116, %v1136
    %v1153 = vadd.f32 %v1117, %v1137
    %v1154 = vadd.f32 %v1118, %v1138
    %v1155 = vadd.f32 %v1119, %v1139
    %v1156 = vadd.f32 %v1120, %v1140
    %v1157 = vadd.f32 %v1121, %v1141
    %v1158 = vadd.f32 %v1122, %v1142
    %v1159 = vadd.f32 %v1123, %v1143
    %v1160 = vadd.f32 %v1124, %v1144
    %v1161 = vadd.f32 %v1125, %v1145
    %v1162 = vadd.f32 %v1126, %v1146
    %v1163 = vadd.f32 %v1127, %v1147
    %v1164 = vadd.f32 %v1128, %v1148
    %v1165 = vadd.f32 %v1129, %v1149
    %v1166 = vadd.f32 %v1130, %v1150
    %v1168 = vlaneseq
    %v1169 = vshrl.u32 %v1168, 7
    %v1170 = vsub.s32 0, %v1169
    %v1171 = vrot.slane %v827, %v1170
    %v1173 = vadd.f32 %v1151, %v1171
    %v1174 = vadd.f32 %v1152, %v1171
    %v1175 = vadd.f32 %v1153, %v1171
    %v1176 = vadd.f32 %v1154, %v1171
    %v1177 = vadd.f32 %v1155, %v1171
    %v1178 = vadd.f32 %v1156, %v1171
    %v1179 = vadd.f32 %v1157, %v1171
    %v1180 = vadd.f32 %v1158, %v1171
    %v1181 = vadd.f32 %v1159, %v1171
    %v1182 = vadd.f32 %v1160, %v1171
    %v1183 = vadd.f32 %v1161, %v1171
    %v1184 = vadd.f32 %v1162, %v1171
    %v1185 = vadd.f32 %v1163, %v1171
    %v1186 = vadd.f32 %v1164, %v1171
    %v1187 = vadd.f32 %v1165, %v1171
    %v1188 = vadd.f32 %v1166, %v1171
    %v1189 = vld [vmem:[#allocation13] sm:$0xff]
    %v1190 = vld [vmem:[#allocation13 + $0x8] sm:$0xff]
    %v1191 = vld [vmem:[#allocation13 + $0x10] sm:$0xff]
    %v1192 = vld [vmem:[#allocation13 + $0x18] sm:$0xff]
    %v1193 = vld [vmem:[#allocation13 + $0x20] sm:$0xff]
    %v1194 = vld [vmem:[#allocation13 + $0x28] sm:$0xff]
    %v1195 = vld [vmem:[#allocation13 + $0x30] sm:$0xff]
    %v1196 = vld [vmem:[#allocation13 + $0x38] sm:$0xff]
    %v1197 = vld [vmem:[#allocation13 + $0x40] sm:$0xff]
    %v1198 = vld [vmem:[#allocation13 + $0x48] sm:$0xff]
    %v1199 = vld [vmem:[#allocation13 + $0x50] sm:$0xff]
    %v1200 = vld [vmem:[#allocation13 + $0x58] sm:$0xff]
    %v1201 = vld [vmem:[#allocation13 + $0x60] sm:$0xff]
    %v1202 = vld [vmem:[#allocation13 + $0x68] sm:$0xff]
    %v1203 = vld [vmem:[#allocation13 + $0x70] sm:$0xff]
    %v1204 = vld [vmem:[#allocation13 + $0x78] sm:$0xff]
    %v1205 = vld [vmem:[%s10] sm:$0x1]
    %v1206 = vld [vmem:[%s11] sm:$0x7]
    %v1207 = vld [vmem:[%s12] sm:$0x1]
    %v1209 = vlaneseq
    %v1210 = vshrl.u32 %v1209, 7
    %v1211 = vsub.s32 0, %v1210
    %v1212 = vrot.slane %v1205, %v1211
    %1214 = vmatprep.subr.mxu0 0.0
    %1215 = vmatpush1.msra.mxu0 %v1204
    %1216 = vmatprep.subr.mxu0 0.0
    %1217 = vmatpush1.msra.mxu0 %v1203
    %1218 = vmatprep.subr.mxu0 0.0
    %1219 = vmatpush1.msra.mxu0 %v1202
    %1220 = vmatprep.subr.mxu0 0.0
    %1221 = vmatpush1.msra.mxu0 %v1201
    %1222 = vmatprep.subr.mxu0 0.0
    %1223 = vmatpush1.msra.mxu0 %v1200
    %1224 = vmatprep.subr.mxu0 0.0
    %1225 = vmatpush1.msra.mxu0 %v1199
    %1226 = vmatprep.subr.mxu0 0.0
    %1227 = vmatpush1.msra.mxu0 %v1198
    %1228 = vmatprep.subr.mxu0 0.0
    %1229 = vmatpush1.msra.mxu0 %v1197
    %1230 = vmatprep.subr.mxu0 0.0
    %1231 = vmatpush1.msra.mxu0 %v1196
    %1232 = vmatprep.subr.mxu0 0.0
    %1233 = vmatpush1.msra.mxu0 %v1195
    %1234 = vmatprep.subr.mxu0 0.0
    %1235 = vmatpush1.msra.mxu0 %v1194
    %1236 = vmatprep.subr.mxu0 0.0
    %1237 = vmatpush1.msra.mxu0 %v1193
    %1238 = vmatprep.subr.mxu0 0.0
    %1239 = vmatpush1.msra.mxu0 %v1192
    %1240 = vmatprep.subr.mxu0 0.0
    %1241 = vmatpush1.msra.mxu0 %v1191
    %1242 = vmatprep.subr.mxu0 0.0
    %1243 = vmatpush1.msra.mxu0 %v1190
    %1244 = vmatprep.subr.mxu0 0.0
    %1245 = vmatpush1.msra.mxu0 %v1189
    %1246 = vmatprep.subr.mxu0 0.0
    %1247 = vmatpush2.msra.mxu0 0.0
    %1248 = vmatprep.subr.mxu0 0.0
    %1249 = vmatpush2.msra.mxu0 0.0
    %1250 = vmatprep.subr.mxu0 0.0
    %1251 = vmatpush2.msra.mxu0 0.0
    %1252 = vmatprep.subr.mxu0 0.0
    %1253 = vmatpush2.msra.mxu0 0.0
    %1254 = vmatprep.subr.mxu0 0.0
    %1255 = vmatpush2.msra.mxu0 0.0
    %1256 = vmatprep.subr.mxu0 0.0
    %1257 = vmatpush2.msra.mxu0 0.0
    %1258 = vmatprep.subr.mxu0 0.0
    %1259 = vmatpush2.msra.mxu0 0.0
    %1260 = vmatprep.subr.mxu0 0.0
    %1261 = vmatpush2.msra.mxu0 0.0
    %1262 = vmatprep.subr.mxu0 0.0
    %1263 = vmatpush2.msra.mxu0 0.0
    %1264 = vmatprep.subr.mxu0 0.0
    %1265 = vmatpush2.msra.mxu0 0.0
    %1266 = vmatprep.subr.mxu0 0.0
    %1267 = vmatpush2.msra.mxu0 0.0
    %1268 = vmatprep.subr.mxu0 0.0
    %1269 = vmatpush2.msra.mxu0 0.0
    %1270 = vmatprep.subr.mxu0 0.0
    %1271 = vmatpush2.msra.mxu0 0.0
    %1272 = vmatprep.subr.mxu0 0.0
    %1273 = vmatpush2.msra.mxu0 0.0
    %1274 = vmatprep.subr.mxu0 0.0
    %1275 = vmatpush2.msra.mxu0 0.0
    %1276 = vmatprep.subr.mxu0 0.0
    %1277 = vmatpush2.msra.mxu0 0.0
    %1278 = vmatprep.mubr.f32.mxu0 0.0
    %1279 = vmatmul.mubr.f32.gmra.mxu0 %v170
    %v1280 = vpop.f32.mrf.mxu0
    %v1281 = vadd.f32 %v1212, %v1280
    %v1282 = vpop.f32.mrf.mxu0
    %1283 = vmatprep.mubr.f32.mxu0 0.0
    %1284 = vmatmul.mubr.f32.gmra.mxu0 %v171
    %v1285 = vpop.f32.mrf.mxu0
    %v1286 = vadd.f32 %v1212, %v1285
    %v1287 = vpop.f32.mrf.mxu0
    %1288 = vmatprep.mubr.f32.mxu0 0.0
    %1289 = vmatmul.mubr.f32.gmra.mxu0 %v172
    %v1290 = vpop.f32.mrf.mxu0
    %v1291 = vadd.f32 %v1212, %v1290
    %v1292 = vpop.f32.mrf.mxu0
    %1293 = vmatprep.mubr.f32.mxu0 0.0
    %1294 = vmatmul.mubr.f32.gmra.mxu0 %v173
    %v1295 = vpop.f32.mrf.mxu0
    %v1296 = vadd.f32 %v1212, %v1295
    %v1297 = vpop.f32.mrf.mxu0
    %1298 = vmatprep.mubr.f32.mxu0 0.0
    %1299 = vmatmul.mubr.f32.gmra.mxu0 %v174
    %v1300 = vpop.f32.mrf.mxu0
    %v1301 = vadd.f32 %v1212, %v1300
    %v1302 = vpop.f32.mrf.mxu0
    %1303 = vmatprep.mubr.f32.mxu0 0.0
    %1304 = vmatmul.mubr.f32.gmra.mxu0 %v175
    %v1305 = vpop.f32.mrf.mxu0
    %v1306 = vadd.f32 %v1212, %v1305
    %v1307 = vpop.f32.mrf.mxu0
    %1308 = vmatprep.mubr.f32.mxu0 0.0
    %1309 = vmatmul.mubr.f32.gmra.mxu0 %v176
    %v1310 = vpop.f32.mrf.mxu0
    %v1311 = vadd.f32 %v1212, %v1310
    %v1312 = vpop.f32.mrf.mxu0
    %1313 = vmatprep.mubr.f32.mxu0 0.0
    %1314 = vmatmul.mubr.f32.gmra.mxu0 %v177
    %v1315 = vpop.f32.mrf.mxu0
    %v1316 = vadd.f32 %v1212, %v1315
    %v1317 = vpop.f32.mrf.mxu0
    %1318 = vmatprep.mubr.f32.mxu0 0.0
    %1319 = vmatmul.mubr.f32.gmra.mxu0 %v178
    %v1320 = vpop.f32.mrf.mxu0
    %v1321 = vadd.f32 %v1212, %v1320
    %v1322 = vpop.f32.mrf.mxu0
    %1323 = vmatprep.mubr.f32.mxu0 0.0
    %1324 = vmatmul.mubr.f32.gmra.mxu0 %v179
    %v1325 = vpop.f32.mrf.mxu0
    %v1326 = vadd.f32 %v1212, %v1325
    %v1327 = vpop.f32.mrf.mxu0
    %1328 = vmatprep.mubr.f32.mxu0 0.0
    %1329 = vmatmul.mubr.f32.gmra.mxu0 %v180
    %v1330 = vpop.f32.mrf.mxu0
    %v1331 = vadd.f32 %v1212, %v1330
    %v1332 = vpop.f32.mrf.mxu0
    %1333 = vmatprep.mubr.f32.mxu0 0.0
    %1334 = vmatmul.mubr.f32.gmra.mxu0 %v181
    %v1335 = vpop.f32.mrf.mxu0
    %v1336 = vadd.f32 %v1212, %v1335
    %v1337 = vpop.f32.mrf.mxu0
    %1338 = vmatprep.mubr.f32.mxu0 0.0
    %1339 = vmatmul.mubr.f32.gmra.mxu0 %v182
    %v1340 = vpop.f32.mrf.mxu0
    %v1341 = vadd.f32 %v1212, %v1340
    %v1342 = vpop.f32.mrf.mxu0
    %1343 = vmatprep.mubr.f32.mxu0 0.0
    %1344 = vmatmul.mubr.f32.gmra.mxu0 %v183
    %v1345 = vpop.f32.mrf.mxu0
    %v1346 = vadd.f32 %v1212, %v1345
    %v1347 = vpop.f32.mrf.mxu0
    %1348 = vmatprep.mubr.f32.mxu0 0.0
    %1349 = vmatmul.mubr.f32.gmra.mxu0 %v184
    %v1350 = vpop.f32.mrf.mxu0
    %v1351 = vadd.f32 %v1212, %v1350
    %v1352 = vpop.f32.mrf.mxu0
    %1353 = vmatprep.mubr.f32.mxu0 0.0
    %1354 = vmatmul.mubr.f32.gmra.mxu0 %v185
    %v1355 = vpop.f32.mrf.mxu0
    %v1356 = vadd.f32 %v1212, %v1355
    %v1357 = vpop.f32.mrf.mxu0
    %1358 = vdwg.mxu0
    %v1359 = vrot.slane %v1281, 7
    %v1360 = vrot.slane %v1286, 7
    %v1361 = vrot.slane %v1291, 7
    %v1362 = vrot.slane %v1296, 7
    %v1363 = vrot.slane %v1301, 7
    %v1364 = vrot.slane %v1306, 7
    %v1365 = vrot.slane %v1311, 7
    %v1366 = vrot.slane %v1316, 7
    %v1367 = vrot.slane %v1321, 7
    %v1368 = vrot.slane %v1326, 7
    %v1369 = vrot.slane %v1331, 7
    %v1370 = vrot.slane %v1336, 7
    %v1371 = vrot.slane %v1341, 7
    %v1372 = vrot.slane %v1346, 7
    %v1373 = vrot.slane %v1351, 7
    %v1374 = vrot.slane %v1356, 7
    %v1375 = vsel %vm613, %v1373, %v1374
    %v1376 = vsel %vm613, %v1372, %v1373
    %v1377 = vsel %vm613, %v1371, %v1372
    %v1378 = vsel %vm613, %v1370, %v1371
    %v1379 = vsel %vm613, %v1369, %v1370
    %v1380 = vsel %vm613, %v1368, %v1369
    %v1381 = vsel %vm613, %v1367, %v1368
    %v1382 = vsel %vm613, %v1366, %v1367
    %v1383 = vsel %vm613, %v1365, %v1366
    %v1384 = vsel %vm613, %v1364, %v1365
    %v1385 = vsel %vm613, %v1363, %v1364
    %v1386 = vsel %vm613, %v1362, %v1363
    %v1387 = vsel %vm613, %v1361, %v1362
    %v1388 = vsel %vm613, %v1360, %v1361
    %v1389 = vsel %vm613, %v1359, %v1360
    %v1390 = vsel %vm613, %v1374, %v1359
    %v1391 = vsel %vm395, %v1390, 0.0
    %v1392 = vsel %vm396, %v1389, 0.0
    %v1393 = vsel %vm397, %v1388, 0.0
    %v1394 = vsel %vm398, %v1387, 0.0
    %v1395 = vsel %vm399, %v1386, 0.0
    %v1396 = vsel %vm400, %v1385, 0.0
    %v1397 = vsel %vm401, %v1384, 0.0
    %v1398 = vsel %vm402, %v1383, 0.0
    %v1399 = vsel %vm403, %v1382, 0.0
    %v1400 = vsel %vm404, %v1381, 0.0
    %v1401 = vsel %vm405, %v1380, 0.0
    %v1402 = vsel %vm406, %v1379, 0.0
    %v1403 = vsel %vm407, %v1378, 0.0
    %v1404 = vsel %vm408, %v1377, 0.0
    %v1405 = vsel %vm409, %v1376, 0.0
    %v1406 = vsel %vm410, %v1375, 0.0
    %v1407 = vrot.slane %v1281, 1
    %v1408 = vrot.slane %v1286, 1
    %v1409 = vrot.slane %v1291, 1
    %v1410 = vrot.slane %v1296, 1
    %v1411 = vrot.slane %v1301, 1
    %v1412 = vrot.slane %v1306, 1
    %v1413 = vrot.slane %v1311, 1
    %v1414 = vrot.slane %v1316, 1
    %v1415 = vrot.slane %v1321, 1
    %v1416 = vrot.slane %v1326, 1
    %v1417 = vrot.slane %v1331, 1
    %v1418 = vrot.slane %v1336, 1
    %v1419 = vrot.slane %v1341, 1
    %v1420 = vrot.slane %v1346, 1
    %v1421 = vrot.slane %v1351, 1
    %v1422 = vrot.slane %v1356, 1
    %v1423 = vsel %vm662, %v1421, %v1422
    %v1424 = vsel %vm662, %v1420, %v1421
    %v1425 = vsel %vm662, %v1419, %v1420
    %v1426 = vsel %vm662, %v1418, %v1419
    %v1427 = vsel %vm662, %v1417, %v1418
    %v1428 = vsel %vm662, %v1416, %v1417
    %v1429 = vsel %vm662, %v1415, %v1416
    %v1430 = vsel %vm662, %v1414, %v1415
    %v1431 = vsel %vm662, %v1413, %v1414
    %v1432 = vsel %vm662, %v1412, %v1413
    %v1433 = vsel %vm662, %v1411, %v1412
    %v1434 = vsel %vm662, %v1410, %v1411
    %v1435 = vsel %vm662, %v1409, %v1410
    %v1436 = vsel %vm662, %v1408, %v1409
    %v1437 = vsel %vm662, %v1407, %v1408
    %v1438 = vsel %vm662, %v1422, %v1407
    %v1439 = vsel %vm411, %v1437, 0.0
    %v1440 = vsel %vm412, %v1436, 0.0
    %v1441 = vsel %vm413, %v1435, 0.0
    %v1442 = vsel %vm414, %v1434, 0.0
    %v1443 = vsel %vm415, %v1433, 0.0
    %v1444 = vsel %vm416, %v1432, 0.0
    %v1445 = vsel %vm417, %v1431, 0.0
    %v1446 = vsel %vm418, %v1430, 0.0
    %v1447 = vsel %vm419, %v1429, 0.0
    %v1448 = vsel %vm420, %v1428, 0.0
    %v1449 = vsel %vm421, %v1427, 0.0
    %v1450 = vsel %vm422, %v1426, 0.0
    %v1451 = vsel %vm423, %v1425, 0.0
    %v1452 = vsel %vm424, %v1424, 0.0
    %v1453 = vsel %vm425, %v1423, 0.0
    %v1454 = vsel %vm426, %v1438, 0.0
    %v1455 = vlaneseq
    %v1456 = vshrl.u32 %v1455, 7
    %v1457 = vsub.s32 0, %v1456
    %v1458 = vrot.slane %v1206, %v1457
    %v1459 = vmul.f32 %v1458, %v1391
    %v1460 = vmul.f32 %v1458, %v1392
    %v1461 = vmul.f32 %v1458, %v1393
    %v1462 = vmul.f32 %v1458, %v1394
    %v1463 = vmul.f32 %v1458, %v1395
    %v1464 = vmul.f32 %v1458, %v1396
    %v1465 = vmul.f32 %v1458, %v1397
    %v1466 = vmul.f32 %v1458, %v1398
    %v1467 = vmul.f32 %v1458, %v1399
    %v1468 = vmul.f32 %v1458, %v1400
    %v1469 = vmul.f32 %v1458, %v1401
    %v1470 = vmul.f32 %v1458, %v1402
    %v1471 = vmul.f32 %v1458, %v1403
    %v1472 = vmul.f32 %v1458, %v1404
    %v1473 = vmul.f32 %v1458, %v1405
    %v1474 = vmul.f32 %v1458, %v1406
    %v1475 = vlaneseq
    %v1476 = vshrl.u32 %v1475, 7
    %v1477 = vsub.s32 1, %v1476
    %v1478 = vrot.slane %v1206, %v1477
    %v1479 = vmul.f32 %v1478, %v1281
    %v1480 = vmul.f32 %v1478, %v1286
    %v1481 = vmul.f32 %v1478, %v1291
    %v1482 = vmul.f32 %v1478, %v1296
    %v1483 = vmul.f32 %v1478, %v1301
    %v1484 = vmul.f32 %v1478, %v1306
    %v1485 = vmul.f32 %v1478, %v1311
    %v1486 = vmul.f32 %v1478, %v1316
    %v1487 = vmul.f32 %v1478, %v1321
    %v1488 = vmul.f32 %v1478, %v1326
    %v1489 = vmul.f32 %v1478, %v1331
    %v1490 = vmul.f32 %v1478, %v1336
    %v1491 = vmul.f32 %v1478, %v1341
    %v1492 = vmul.f32 %v1478, %v1346
    %v1493 = vmul.f32 %v1478, %v1351
    %v1494 = vmul.f32 %v1478, %v1356
    %v1495 = vadd.f32 %v1459, %v1479
    %v1496 = vadd.f32 %v1460, %v1480
    %v1497 = vadd.f32 %v1461, %v1481
    %v1498 = vadd.f32 %v1462, %v1482
    %v1499 = vadd.f32 %v1463, %v1483
    %v1500 = vadd.f32 %v1464, %v1484
    %v1501 = vadd.f32 %v1465, %v1485
    %v1502 = vadd.f32 %v1466, %v1486
    %v1503 = vadd.f32 %v1467, %v1487
    %v1504 = vadd.f32 %v1468, %v1488
    %v1505 = vadd.f32 %v1469, %v1489
    %v1506 = vadd.f32 %v1470, %v1490
    %v1507 = vadd.f32 %v1471, %v1491
    %v1508 = vadd.f32 %v1472, %v1492
    %v1509 = vadd.f32 %v1473, %v1493
    %v1510 = vadd.f32 %v1474, %v1494
    %v1511 = vlaneseq
    %v1512 = vshrl.u32 %v1511, 7
    %v1513 = vsub.s32 2, %v1512
    %v1514 = vrot.slane %v1206, %v1513
    %v1515 = vmul.f32 %v1514, %v1439
    %v1516 = vmul.f32 %v1514, %v1440
    %v1517 = vmul.f32 %v1514, %v1441
    %v1518 = vmul.f32 %v1514, %v1442
    %v1519 = vmul.f32 %v1514, %v1443
    %v1520 = vmul.f32 %v1514, %v1444
    %v1521 = vmul.f32 %v1514, %v1445
    %v1522 = vmul.f32 %v1514, %v1446
    %v1523 = vmul.f32 %v1514, %v1447
    %v1524 = vmul.f32 %v1514, %v1448
    %v1525 = vmul.f32 %v1514, %v1449
    %v1526 = vmul.f32 %v1514, %v1450
    %v1527 = vmul.f32 %v1514, %v1451
    %v1528 = vmul.f32 %v1514, %v1452
    %v1529 = vmul.f32 %v1514, %v1453
    %v1530 = vmul.f32 %v1514, %v1454
    %v1531 = vadd.f32 %v1495, %v1515
    %v1532 = vadd.f32 %v1496, %v1516
    %v1533 = vadd.f32 %v1497, %v1517
    %v1534 = vadd.f32 %v1498, %v1518
    %v1535 = vadd.f32 %v1499, %v1519
    %v1536 = vadd.f32 %v1500, %v1520
    %v1537 = vadd.f32 %v1501, %v1521
    %v1538 = vadd.f32 %v1502, %v1522
    %v1539 = vadd.f32 %v1503, %v1523
    %v1540 = vadd.f32 %v1504, %v1524
    %v1541 = vadd.f32 %v1505, %v1525
    %v1542 = vadd.f32 %v1506, %v1526
    %v1543 = vadd.f32 %v1507, %v1527
    %v1544 = vadd.f32 %v1508, %v1528
    %v1545 = vadd.f32 %v1509, %v1529
    %v1546 = vadd.f32 %v1510, %v1530
    %v1548 = vlaneseq
    %v1549 = vshrl.u32 %v1548, 7
    %v1550 = vsub.s32 0, %v1549
    %v1551 = vrot.slane %v1207, %v1550
    %v1553 = vadd.f32 %v1531, %v1551
    %v1554 = vadd.f32 %v1532, %v1551
    %v1555 = vadd.f32 %v1533, %v1551
    %v1556 = vadd.f32 %v1534, %v1551
    %v1557 = vadd.f32 %v1535, %v1551
    %v1558 = vadd.f32 %v1536, %v1551
    %v1559 = vadd.f32 %v1537, %v1551
    %v1560 = vadd.f32 %v1538, %v1551
    %v1561 = vadd.f32 %v1539, %v1551
    %v1562 = vadd.f32 %v1540, %v1551
    %v1563 = vadd.f32 %v1541, %v1551
    %v1564 = vadd.f32 %v1542, %v1551
    %v1565 = vadd.f32 %v1543, %v1551
    %v1566 = vadd.f32 %v1544, %v1551
    %v1567 = vadd.f32 %v1545, %v1551
    %v1568 = vadd.f32 %v1546, %v1551
    %v1569 = vld [vmem:[#allocation14] sm:$0xff]
    %v1570 = vld [vmem:[#allocation14 + $0x8] sm:$0xff]
    %v1571 = vld [vmem:[#allocation14 + $0x10] sm:$0xff]
    %v1572 = vld [vmem:[#allocation14 + $0x18] sm:$0xff]
    %v1573 = vld [vmem:[#allocation14 + $0x20] sm:$0xff]
    %v1574 = vld [vmem:[#allocation14 + $0x28] sm:$0xff]
    %v1575 = vld [vmem:[#allocation14 + $0x30] sm:$0xff]
    %v1576 = vld [vmem:[#allocation14 + $0x38] sm:$0xff]
    %v1577 = vld [vmem:[#allocation14 + $0x40] sm:$0xff]
    %v1578 = vld [vmem:[#allocation14 + $0x48] sm:$0xff]
    %v1579 = vld [vmem:[#allocation14 + $0x50] sm:$0xff]
    %v1580 = vld [vmem:[#allocation14 + $0x58] sm:$0xff]
    %v1581 = vld [vmem:[#allocation14 + $0x60] sm:$0xff]
    %v1582 = vld [vmem:[#allocation14 + $0x68] sm:$0xff]
    %v1583 = vld [vmem:[#allocation14 + $0x70] sm:$0xff]
    %v1584 = vld [vmem:[#allocation14 + $0x78] sm:$0xff]
    %v1585 = vld [vmem:[%s14] sm:$0x1]
    %v1586 = vld [vmem:[#allocation16] sm:$0xff]
    %v1587 = vld [vmem:[#allocation16 + $0x8] sm:$0xff]
    %v1588 = vld [vmem:[#allocation16 + $0x10] sm:$0xff]
    %v1589 = vld [vmem:[#allocation16 + $0x18] sm:$0xff]
    %vm1590 = vcmask 261120
    %v1592 = vsel %vm1590, %v1586, 0
    %v1595 = vsel %vm1590, %v1587, 0
    %v1598 = vsel %vm1590, %v1588, 0
    %v1601 = vsel %vm1590, %v1589, 0
    %v1604 = vsel %vm1590, %v793, 0
    %v1607 = vsel %vm1590, %v794, 0
    %v1610 = vsel %vm1590, %v795, 0
    %v1613 = vsel %vm1590, %v796, 0
    %1615 = vmatprep.subr.mxu0 0.0
    %1616 = vmatpush1.xpose.msra.mxu0 0.0
    %1617 = vmatprep.subr.mxu0 0.0
    %1618 = vmatpush1.xpose.msra.mxu0 0.0
    %1619 = vmatprep.subr.mxu0 0.0
    %1620 = vmatpush1.xpose.msra.mxu0 0.0
    %1621 = vmatprep.subr.mxu0 0.0
    %1622 = vmatpush1.xpose.msra.mxu0 0.0
    %1623 = vmatprep.subr.mxu0 0.0
    %1624 = vmatpush1.xpose.msra.mxu0 0.0
    %1625 = vmatprep.subr.mxu0 0.0
    %1626 = vmatpush1.xpose.msra.mxu0 0.0
    %1627 = vmatprep.subr.mxu0 0.0
    %1628 = vmatpush1.xpose.msra.mxu0 0.0
    %1629 = vmatprep.subr.mxu0 0.0
    %1630 = vmatpush1.xpose.msra.mxu0 0.0
    %1631 = vmatprep.subr.mxu0 0.0
    %1632 = vmatpush1.xpose.msra.mxu0 0.0
    %1633 = vmatprep.subr.mxu0 0.0
    %1634 = vmatpush1.xpose.msra.mxu0 0.0
    %1635 = vmatprep.subr.mxu0 0.0
    %1636 = vmatpush1.xpose.msra.mxu0 0.0
    %1637 = vmatprep.subr.mxu0 0.0
    %1638 = vmatpush1.xpose.msra.mxu0 0.0
    %1639 = vmatprep.subr.mxu0 0.0
    %1640 = vmatpush1.xpose.msra.mxu0 %v1613
    %1641 = vmatprep.subr.mxu0 0.0
    %1642 = vmatpush1.xpose.msra.mxu0 %v1610
    %1643 = vmatprep.subr.mxu0 0.0
    %1644 = vmatpush1.xpose.msra.mxu0 %v1607
    %1645 = vmatprep.subr.mxu0 0.0
    %1646 = vmatpush1.xpose.msra.mxu0 %v1604
    %1647 = vmatprep.subr.mxu0 0.0
    %1648 = vmatpush2.xpose.msra.mxu0 0.0
    %1649 = vmatprep.subr.mxu0 0.0
    %1650 = vmatpush2.xpose.msra.mxu0 0.0
    %1651 = vmatprep.subr.mxu0 0.0
    %1652 = vmatpush2.xpose.msra.mxu0 0.0
    %1653 = vmatprep.subr.mxu0 0.0
    %1654 = vmatpush2.xpose.msra.mxu0 0.0
    %1655 = vmatprep.subr.mxu0 0.0
    %1656 = vmatpush2.xpose.msra.mxu0 0.0
    %1657 = vmatprep.subr.mxu0 0.0
    %1658 = vmatpush2.xpose.msra.mxu0 0.0
    %1659 = vmatprep.subr.mxu0 0.0
    %1660 = vmatpush2.xpose.msra.mxu0 0.0
    %1661 = vmatprep.subr.mxu0 0.0
    %1662 = vmatpush2.xpose.msra.mxu0 0.0
    %1663 = vmatprep.subr.mxu0 0.0
    %1664 = vmatpush2.xpose.msra.mxu0 0.0
    %1665 = vmatprep.subr.mxu0 0.0
    %1666 = vmatpush2.xpose.msra.mxu0 0.0
    %1667 = vmatprep.subr.mxu0 0.0
    %1668 = vmatpush2.xpose.msra.mxu0 0.0
    %1669 = vmatprep.subr.mxu0 0.0
    %1670 = vmatpush2.xpose.msra.mxu0 0.0
    %1671 = vmatprep.subr.mxu0 0.0
    %1672 = vmatpush2.xpose.msra.mxu0 0.0
    %1673 = vmatprep.subr.mxu0 0.0
    %1674 = vmatpush2.xpose.msra.mxu0 0.0
    %1675 = vmatprep.subr.mxu0 0.0
    %1676 = vmatpush2.xpose.msra.mxu0 0.0
    %1677 = vmatprep.subr.mxu0 0.0
    %1678 = vmatpush2.xpose.msra.mxu0 0.0
    %1679 = vmatprep.mubr.f32.mxu0 0.0
    %1680 = vmatmul.mubr.f32.gmra.mxu0 %v1592
    %v1681 = vpop.f32.mrf.mxu0
    %v1682 = vadd.f32 0.0, %v1681
    %v1683 = vpop.f32.mrf.mxu0
    %1684 = vmatprep.mubr.f32.mxu0 0.0
    %1685 = vmatmul.mubr.f32.gmra.mxu0 %v1595
    %v1686 = vpop.f32.mrf.mxu0
    %v1687 = vadd.f32 0.0, %v1686
    %v1688 = vpop.f32.mrf.mxu0
    %1689 = vmatprep.mubr.f32.mxu0 0.0
    %1690 = vmatmul.mubr.f32.gmra.mxu0 %v1598
    %v1691 = vpop.f32.mrf.mxu0
    %v1692 = vadd.f32 0.0, %v1691
    %v1693 = vpop.f32.mrf.mxu0
    %1694 = vmatprep.mubr.f32.mxu0 0.0
    %1695 = vmatmul.mubr.f32.gmra.mxu0 %v1601
    %v1696 = vpop.f32.mrf.mxu0
    %v1697 = vadd.f32 0.0, %v1696
    %v1698 = vpop.f32.mrf.mxu0
    %1699 = vdwg.mxu0
    %v1701 = vsel %vm1590, %v1173, 0
    %v1704 = vsel %vm1590, %v1174, 0
    %v1707 = vsel %vm1590, %v1175, 0
    %v1710 = vsel %vm1590, %v1176, 0
    %1712 = vmatprep.subr.mxu0 0.0
    %1713 = vmatpush1.xpose.msra.mxu0 0.0
    %1714 = vmatprep.subr.mxu0 0.0
    %1715 = vmatpush1.xpose.msra.mxu0 0.0
    %1716 = vmatprep.subr.mxu0 0.0
    %1717 = vmatpush1.xpose.msra.mxu0 0.0
    %1718 = vmatprep.subr.mxu0 0.0
    %1719 = vmatpush1.xpose.msra.mxu0 0.0
    %1720 = vmatprep.subr.mxu0 0.0
    %1721 = vmatpush1.xpose.msra.mxu0 0.0
    %1722 = vmatprep.subr.mxu0 0.0
    %1723 = vmatpush1.xpose.msra.mxu0 0.0
    %1724 = vmatprep.subr.mxu0 0.0
    %1725 = vmatpush1.xpose.msra.mxu0 0.0
    %1726 = vmatprep.subr.mxu0 0.0
    %1727 = vmatpush1.xpose.msra.mxu0 0.0
    %1728 = vmatprep.subr.mxu0 0.0
    %1729 = vmatpush1.xpose.msra.mxu0 0.0
    %1730 = vmatprep.subr.mxu0 0.0
    %1731 = vmatpush1.xpose.msra.mxu0 0.0
    %1732 = vmatprep.subr.mxu0 0.0
    %1733 = vmatpush1.xpose.msra.mxu0 0.0
    %1734 = vmatprep.subr.mxu0 0.0
    %1735 = vmatpush1.xpose.msra.mxu0 0.0
    %1736 = vmatprep.subr.mxu0 0.0
    %1737 = vmatpush1.xpose.msra.mxu0 %v1710
    %1738 = vmatprep.subr.mxu0 0.0
    %1739 = vmatpush1.xpose.msra.mxu0 %v1707
    %1740 = vmatprep.subr.mxu0 0.0
    %1741 = vmatpush1.xpose.msra.mxu0 %v1704
    %1742 = vmatprep.subr.mxu0 0.0
    %1743 = vmatpush1.xpose.msra.mxu0 %v1701
    %1744 = vmatprep.subr.mxu0 0.0
    %1745 = vmatpush2.xpose.msra.mxu0 0.0
    %1746 = vmatprep.subr.mxu0 0.0
    %1747 = vmatpush2.xpose.msra.mxu0 0.0
    %1748 = vmatprep.subr.mxu0 0.0
    %1749 = vmatpush2.xpose.msra.mxu0 0.0
    %1750 = vmatprep.subr.mxu0 0.0
    %1751 = vmatpush2.xpose.msra.mxu0 0.0
    %1752 = vmatprep.subr.mxu0 0.0
    %1753 = vmatpush2.xpose.msra.mxu0 0.0
    %1754 = vmatprep.subr.mxu0 0.0
    %1755 = vmatpush2.xpose.msra.mxu0 0.0
    %1756 = vmatprep.subr.mxu0 0.0
    %1757 = vmatpush2.xpose.msra.mxu0 0.0
    %1758 = vmatprep.subr.mxu0 0.0
    %1759 = vmatpush2.xpose.msra.mxu0 0.0
    %1760 = vmatprep.subr.mxu0 0.0
    %1761 = vmatpush2.xpose.msra.mxu0 0.0
    %1762 = vmatprep.subr.mxu0 0.0
    %1763 = vmatpush2.xpose.msra.mxu0 0.0
    %1764 = vmatprep.subr.mxu0 0.0
    %1765 = vmatpush2.xpose.msra.mxu0 0.0
    %1766 = vmatprep.subr.mxu0 0.0
    %1767 = vmatpush2.xpose.msra.mxu0 0.0
    %1768 = vmatprep.subr.mxu0 0.0
    %1769 = vmatpush2.xpose.msra.mxu0 0.0
    %1770 = vmatprep.subr.mxu0 0.0
    %1771 = vmatpush2.xpose.msra.mxu0 0.0
    %1772 = vmatprep.subr.mxu0 0.0
    %1773 = vmatpush2.xpose.msra.mxu0 0.0
    %1774 = vmatprep.subr.mxu0 0.0
    %1775 = vmatpush2.xpose.msra.mxu0 0.0
    %1776 = vmatprep.mubr.f32.mxu0 0.0
    %1777 = vmatmul.mubr.f32.gmra.mxu0 %v1604
    %v1778 = vpop.f32.mrf.mxu0
    %v1779 = vadd.f32 %v1682, %v1778
    %v1780 = vpop.f32.mrf.mxu0
    %1781 = vmatprep.mubr.f32.mxu0 0.0
    %1782 = vmatmul.mubr.f32.gmra.mxu0 %v1607
    %v1783 = vpop.f32.mrf.mxu0
    %v1784 = vadd.f32 %v1687, %v1783
    %v1785 = vpop.f32.mrf.mxu0
    %1786 = vmatprep.mubr.f32.mxu0 0.0
    %1787 = vmatmul.mubr.f32.gmra.mxu0 %v1610
    %v1788 = vpop.f32.mrf.mxu0
    %v1789 = vadd.f32 %v1692, %v1788
    %v1790 = vpop.f32.mrf.mxu0
    %1791 = vmatprep.mubr.f32.mxu0 0.0
    %1792 = vmatmul.mubr.f32.gmra.mxu0 %v1613
    %v1793 = vpop.f32.mrf.mxu0
    %v1794 = vadd.f32 %v1697, %v1793
    %v1795 = vpop.f32.mrf.mxu0
    %1796 = vdwg.mxu0
    %v1797 = vsel %vm1590, %v1779, -inf
    %1798 = vmax.xlane.f32.xlu0 %v1797
    %v1799 = vpop.xlane.xlu0 %1798
    %v1800 = vsel %vm1590, %v1784, -inf
    %1801 = vmax.xlane.f32.xlu0 %v1800
    %v1802 = vpop.xlane.xlu0 %1801
    %v1803 = vsel %vm1590, %v1789, -inf
    %1804 = vmax.xlane.f32.xlu0 %v1803
    %v1805 = vpop.xlane.xlu0 %1804
    %v1806 = vsel %vm1590, %v1794, -inf
    %1807 = vmax.xlane.f32.xlu0 %v1806
    %v1808 = vpop.xlane.xlu0 %1807
    %v1809 = vsub.f32 %v1779, %v1799
    %v1810 = vsub.f32 %v1784, %v1802
    %v1811 = vsub.f32 %v1789, %v1805
    %v1812 = vsub.f32 %v1794, %v1808
    %v1813 = vmul.f32 %v1809, 1.442695
    %v1814 = vpow.pop %v1813
    %v1815 = vmul.f32 %v1810, 1.442695
    %v1816 = vpow.pop %v1815
    %v1817 = vmul.f32 %v1811, 1.442695
    %v1818 = vpow.pop %v1817
    %v1819 = vmul.f32 %v1812, 1.442695
    %v1820 = vpow.pop %v1819
    %v1821 = vsel %vm1590, %v1814, 0.0
    %1822 = vadd.xlane.f32.xlu0 %v1821
    %v1823 = vpop.xlane.xlu0 %1822
    %v1824 = vsel %vm1590, %v1816, 0.0
    %1825 = vadd.xlane.f32.xlu0 %v1824
    %v1826 = vpop.xlane.xlu0 %1825
    %v1827 = vsel %vm1590, %v1818, 0.0
    %1828 = vadd.xlane.f32.xlu0 %v1827
    %v1829 = vpop.xlane.xlu0 %1828
    %v1830 = vsel %vm1590, %v1820, 0.0
    %1831 = vadd.xlane.f32.xlu0 %v1830
    %v1832 = vpop.xlane.xlu0 %1831
    %v1833 = vrcp.pop %v1823
    %v1834 = vrcp.pop %v1826
    %v1835 = vrcp.pop %v1829
    %v1836 = vrcp.pop %v1832
    %v1837 = vmul.f32 %v1814, %v1833
    %v1838 = vmul.f32 %v1816, %v1834
    %v1839 = vmul.f32 %v1818, %v1835
    %v1840 = vmul.f32 %v1820, %v1836
    %v1842 = vsel %vm1590, %v1837, 0
    %v1845 = vsel %vm1590, %v1838, 0
    %v1848 = vsel %vm1590, %v1839, 0
    %v1851 = vsel %vm1590, %v1840, 0
    %1853 = vmatprep.subr.mxu0 0.0
    %1854 = vmatpush1.msra.mxu0 0.0
    %1855 = vmatprep.subr.mxu0 0.0
    %1856 = vmatpush1.msra.mxu0 0.0
    %1857 = vmatprep.subr.mxu0 0.0
    %1858 = vmatpush1.msra.mxu0 0.0
    %1859 = vmatprep.subr.mxu0 0.0
    %1860 = vmatpush1.msra.mxu0 0.0
    %1861 = vmatprep.subr.mxu0 0.0
    %1862 = vmatpush1.msra.mxu0 0.0
    %1863 = vmatprep.subr.mxu0 0.0
    %1864 = vmatpush1.msra.mxu0 0.0
    %1865 = vmatprep.subr.mxu0 0.0
    %1866 = vmatpush1.msra.mxu0 0.0
    %1867 = vmatprep.subr.mxu0 0.0
    %1868 = vmatpush1.msra.mxu0 0.0
    %1869 = vmatprep.subr.mxu0 0.0
    %1870 = vmatpush1.msra.mxu0 0.0
    %1871 = vmatprep.subr.mxu0 0.0
    %1872 = vmatpush1.msra.mxu0 0.0
    %1873 = vmatprep.subr.mxu0 0.0
    %1874 = vmatpush1.msra.mxu0 0.0
    %1875 = vmatprep.subr.mxu0 0.0
    %1876 = vmatpush1.msra.mxu0 0.0
    %1877 = vmatprep.subr.mxu0 0.0
    %1878 = vmatpush1.msra.mxu0 %v1556
    %1879 = vmatprep.subr.mxu0 0.0
    %1880 = vmatpush1.msra.mxu0 %v1555
    %1881 = vmatprep.subr.mxu0 0.0
    %1882 = vmatpush1.msra.mxu0 %v1554
    %1883 = vmatprep.subr.mxu0 0.0
    %1884 = vmatpush1.msra.mxu0 %v1553
    %1885 = vmatprep.subr.mxu0 0.0
    %1886 = vmatpush2.msra.mxu0 0.0
    %1887 = vmatprep.subr.mxu0 0.0
    %1888 = vmatpush2.msra.mxu0 0.0
    %1889 = vmatprep.subr.mxu0 0.0
    %1890 = vmatpush2.msra.mxu0 0.0
    %1891 = vmatprep.subr.mxu0 0.0
    %1892 = vmatpush2.msra.mxu0 0.0
    %1893 = vmatprep.subr.mxu0 0.0
    %1894 = vmatpush2.msra.mxu0 0.0
    %1895 = vmatprep.subr.mxu0 0.0
    %1896 = vmatpush2.msra.mxu0 0.0
    %1897 = vmatprep.subr.mxu0 0.0
    %1898 = vmatpush2.msra.mxu0 0.0
    %1899 = vmatprep.subr.mxu0 0.0
    %1900 = vmatpush2.msra.mxu0 0.0
    %1901 = vmatprep.subr.mxu0 0.0
    %1902 = vmatpush2.msra.mxu0 0.0
    %1903 = vmatprep.subr.mxu0 0.0
    %1904 = vmatpush2.msra.mxu0 0.0
    %1905 = vmatprep.subr.mxu0 0.0
    %1906 = vmatpush2.msra.mxu0 0.0
    %1907 = vmatprep.subr.mxu0 0.0
    %1908 = vmatpush2.msra.mxu0 0.0
    %1909 = vmatprep.subr.mxu0 0.0
    %1910 = vmatpush2.msra.mxu0 0.0
    %1911 = vmatprep.subr.mxu0 0.0
    %1912 = vmatpush2.msra.mxu0 0.0
    %1913 = vmatprep.subr.mxu0 0.0
    %1914 = vmatpush2.msra.mxu0 0.0
    %1915 = vmatprep.subr.mxu0 0.0
    %1916 = vmatpush2.msra.mxu0 0.0
    %1917 = vmatprep.mubr.f32.mxu0 0.0
    %1918 = vmatmul.mubr.f32.gmra.mxu0 %v1842
    %v1919 = vpop.f32.mrf.mxu0
    %v1920 = vadd.f32 0.0, %v1919
    %v1921 = vpop.f32.mrf.mxu0
    %1922 = vmatprep.mubr.f32.mxu0 0.0
    %1923 = vmatmul.mubr.f32.gmra.mxu0 %v1845
    %v1924 = vpop.f32.mrf.mxu0
    %v1925 = vadd.f32 0.0, %v1924
    %v1926 = vpop.f32.mrf.mxu0
    %1927 = vmatprep.mubr.f32.mxu0 0.0
    %1928 = vmatmul.mubr.f32.gmra.mxu0 %v1848
    %v1929 = vpop.f32.mrf.mxu0
    %v1930 = vadd.f32 0.0, %v1929
    %v1931 = vpop.f32.mrf.mxu0
    %1932 = vmatprep.mubr.f32.mxu0 0.0
    %1933 = vmatmul.mubr.f32.gmra.mxu0 %v1851
    %v1934 = vpop.f32.mrf.mxu0
    %v1935 = vadd.f32 0.0, %v1934
    %v1936 = vpop.f32.mrf.mxu0
    %1937 = vdwg.mxu0
    %1938 = vrot.lane.b32.xlu0 %v793, 96
    %v1939 = vpop.permute.xlu0 %1938
    %1940 = vrot.lane.b32.xlu0 %v794, 96
    %v1941 = vpop.permute.xlu0 %1940
    %1942 = vrot.lane.b32.xlu0 %v795, 96
    %v1943 = vpop.permute.xlu0 %1942
    %1944 = vrot.lane.b32.xlu0 %v796, 96
    %v1945 = vpop.permute.xlu0 %1944
    %v1946 = vsel %vm1590, %v1939, 0
    %v1948 = vsel %vm1590, %v1941, 0
    %v1950 = vsel %vm1590, %v1943, 0
    %v1952 = vsel %vm1590, %v1945, 0
    %1954 = vmatprep.subr.mxu0 0.0
    %1955 = vmatpush1.xpose.msra.mxu0 0.0
    %1956 = vmatprep.subr.mxu0 0.0
    %1957 = vmatpush1.xpose.msra.mxu0 0.0
    %1958 = vmatprep.subr.mxu0 0.0
    %1959 = vmatpush1.xpose.msra.mxu0 0.0
    %1960 = vmatprep.subr.mxu0 0.0
    %1961 = vmatpush1.xpose.msra.mxu0 0.0
    %1962 = vmatprep.subr.mxu0 0.0
    %1963 = vmatpush1.xpose.msra.mxu0 0.0
    %1964 = vmatprep.subr.mxu0 0.0
    %1965 = vmatpush1.xpose.msra.mxu0 0.0
    %1966 = vmatprep.subr.mxu0 0.0
    %1967 = vmatpush1.xpose.msra.mxu0 0.0
    %1968 = vmatprep.subr.mxu0 0.0
    %1969 = vmatpush1.xpose.msra.mxu0 0.0
    %1970 = vmatprep.subr.mxu0 0.0
    %1971 = vmatpush1.xpose.msra.mxu0 0.0
    %1972 = vmatprep.subr.mxu0 0.0
    %1973 = vmatpush1.xpose.msra.mxu0 0.0
    %1974 = vmatprep.subr.mxu0 0.0
    %1975 = vmatpush1.xpose.msra.mxu0 0.0
    %1976 = vmatprep.subr.mxu0 0.0
    %1977 = vmatpush1.xpose.msra.mxu0 0.0
    %1978 = vmatprep.subr.mxu0 0.0
    %1979 = vmatpush1.xpose.msra.mxu0 %v1952
    %1980 = vmatprep.subr.mxu0 0.0
    %1981 = vmatpush1.xpose.msra.mxu0 %v1950
    %1982 = vmatprep.subr.mxu0 0.0
    %1983 = vmatpush1.xpose.msra.mxu0 %v1948
    %1984 = vmatprep.subr.mxu0 0.0
    %1985 = vmatpush1.xpose.msra.mxu0 %v1946
    %1986 = vmatprep.subr.mxu0 0.0
    %1987 = vmatpush2.xpose.msra.mxu0 0.0
    %1988 = vmatprep.subr.mxu0 0.0
    %1989 = vmatpush2.xpose.msra.mxu0 0.0
    %1990 = vmatprep.subr.mxu0 0.0
    %1991 = vmatpush2.xpose.msra.mxu0 0.0
    %1992 = vmatprep.subr.mxu0 0.0
    %1993 = vmatpush2.xpose.msra.mxu0 0.0
    %1994 = vmatprep.subr.mxu0 0.0
    %1995 = vmatpush2.xpose.msra.mxu0 0.0
    %1996 = vmatprep.subr.mxu0 0.0
    %1997 = vmatpush2.xpose.msra.mxu0 0.0
    %1998 = vmatprep.subr.mxu0 0.0
    %1999 = vmatpush2.xpose.msra.mxu0 0.0
    %2000 = vmatprep.subr.mxu0 0.0
    %2001 = vmatpush2.xpose.msra.mxu0 0.0
    %2002 = vmatprep.subr.mxu0 0.0
    %2003 = vmatpush2.xpose.msra.mxu0 0.0
    %2004 = vmatprep.subr.mxu0 0.0
    %2005 = vmatpush2.xpose.msra.mxu0 0.0
    %2006 = vmatprep.subr.mxu0 0.0
    %2007 = vmatpush2.xpose.msra.mxu0 0.0
    %2008 = vmatprep.subr.mxu0 0.0
    %2009 = vmatpush2.xpose.msra.mxu0 0.0
    %2010 = vmatprep.subr.mxu0 0.0
    %2011 = vmatpush2.xpose.msra.mxu0 0.0
    %2012 = vmatprep.subr.mxu0 0.0
    %2013 = vmatpush2.xpose.msra.mxu0 0.0
    %2014 = vmatprep.subr.mxu0 0.0
    %2015 = vmatpush2.xpose.msra.mxu0 0.0
    %2016 = vmatprep.subr.mxu0 0.0
    %2017 = vmatpush2.xpose.msra.mxu0 0.0
    %2018 = vmatprep.mubr.f32.mxu0 0.0
    %2019 = vmatmul.mubr.f32.gmra.mxu0 %v1592
    %v2020 = vpop.f32.mrf.mxu0
    %v2021 = vadd.f32 0.0, %v2020
    %v2022 = vpop.f32.mrf.mxu0
    %2023 = vmatprep.mubr.f32.mxu0 0.0
    %2024 = vmatmul.mubr.f32.gmra.mxu0 %v1595
    %v2025 = vpop.f32.mrf.mxu0
    %v2026 = vadd.f32 0.0, %v2025
    %v2027 = vpop.f32.mrf.mxu0
    %2028 = vmatprep.mubr.f32.mxu0 0.0
    %2029 = vmatmul.mubr.f32.gmra.mxu0 %v1598
    %v2030 = vpop.f32.mrf.mxu0
    %v2031 = vadd.f32 0.0, %v2030
    %v2032 = vpop.f32.mrf.mxu0
    %2033 = vmatprep.mubr.f32.mxu0 0.0
    %2034 = vmatmul.mubr.f32.gmra.mxu0 %v1601
    %v2035 = vpop.f32.mrf.mxu0
    %v2036 = vadd.f32 0.0, %v2035
    %v2037 = vpop.f32.mrf.mxu0
    %2038 = vdwg.mxu0
    %2039 = vrot.lane.b32.xlu0 %v1173, 96
    %v2040 = vpop.permute.xlu0 %2039
    %2041 = vrot.lane.b32.xlu0 %v1174, 96
    %v2042 = vpop.permute.xlu0 %2041
    %2043 = vrot.lane.b32.xlu0 %v1175, 96
    %v2044 = vpop.permute.xlu0 %2043
    %2045 = vrot.lane.b32.xlu0 %v1176, 96
    %v2046 = vpop.permute.xlu0 %2045
    %v2047 = vsel %vm1590, %v2040, 0
    %v2049 = vsel %vm1590, %v2042, 0
    %v2051 = vsel %vm1590, %v2044, 0
    %v2053 = vsel %vm1590, %v2046, 0
    %2055 = vmatprep.subr.mxu0 0.0
    %2056 = vmatpush1.xpose.msra.mxu0 0.0
    %2057 = vmatprep.subr.mxu0 0.0
    %2058 = vmatpush1.xpose.msra.mxu0 0.0
    %2059 = vmatprep.subr.mxu0 0.0
    %2060 = vmatpush1.xpose.msra.mxu0 0.0
    %2061 = vmatprep.subr.mxu0 0.0
    %2062 = vmatpush1.xpose.msra.mxu0 0.0
    %2063 = vmatprep.subr.mxu0 0.0
    %2064 = vmatpush1.xpose.msra.mxu0 0.0
    %2065 = vmatprep.subr.mxu0 0.0
    %2066 = vmatpush1.xpose.msra.mxu0 0.0
    %2067 = vmatprep.subr.mxu0 0.0
    %2068 = vmatpush1.xpose.msra.mxu0 0.0
    %2069 = vmatprep.subr.mxu0 0.0
    %2070 = vmatpush1.xpose.msra.mxu0 0.0
    %2071 = vmatprep.subr.mxu0 0.0
    %2072 = vmatpush1.xpose.msra.mxu0 0.0
    %2073 = vmatprep.subr.mxu0 0.0
    %2074 = vmatpush1.xpose.msra.mxu0 0.0
    %2075 = vmatprep.subr.mxu0 0.0
    %2076 = vmatpush1.xpose.msra.mxu0 0.0
    %2077 = vmatprep.subr.mxu0 0.0
    %2078 = vmatpush1.xpose.msra.mxu0 0.0
    %2079 = vmatprep.subr.mxu0 0.0
    %2080 = vmatpush1.xpose.msra.mxu0 %v2053
    %2081 = vmatprep.subr.mxu0 0.0
    %2082 = vmatpush1.xpose.msra.mxu0 %v2051
    %2083 = vmatprep.subr.mxu0 0.0
    %2084 = vmatpush1.xpose.msra.mxu0 %v2049
    %2085 = vmatprep.subr.mxu0 0.0
    %2086 = vmatpush1.xpose.msra.mxu0 %v2047
    %2087 = vmatprep.subr.mxu0 0.0
    %2088 = vmatpush2.xpose.msra.mxu0 0.0
    %2089 = vmatprep.subr.mxu0 0.0
    %2090 = vmatpush2.xpose.msra.mxu0 0.0
    %2091 = vmatprep.subr.mxu0 0.0
    %2092 = vmatpush2.xpose.msra.mxu0 0.0
    %2093 = vmatprep.subr.mxu0 0.0
    %2094 = vmatpush2.xpose.msra.mxu0 0.0
    %2095 = vmatprep.subr.mxu0 0.0
    %2096 = vmatpush2.xpose.msra.mxu0 0.0
    %2097 = vmatprep.subr.mxu0 0.0
    %2098 = vmatpush2.xpose.msra.mxu0 0.0
    %2099 = vmatprep.subr.mxu0 0.0
    %2100 = vmatpush2.xpose.msra.mxu0 0.0
    %2101 = vmatprep.subr.mxu0 0.0
    %2102 = vmatpush2.xpose.msra.mxu0 0.0
    %2103 = vmatprep.subr.mxu0 0.0
    %2104 = vmatpush2.xpose.msra.mxu0 0.0
    %2105 = vmatprep.subr.mxu0 0.0
    %2106 = vmatpush2.xpose.msra.mxu0 0.0
    %2107 = vmatprep.subr.mxu0 0.0
    %2108 = vmatpush2.xpose.msra.mxu0 0.0
    %2109 = vmatprep.subr.mxu0 0.0
    %2110 = vmatpush2.xpose.msra.mxu0 0.0
    %2111 = vmatprep.subr.mxu0 0.0
    %2112 = vmatpush2.xpose.msra.mxu0 0.0
    %2113 = vmatprep.subr.mxu0 0.0
    %2114 = vmatpush2.xpose.msra.mxu0 0.0
    %2115 = vmatprep.subr.mxu0 0.0
    %2116 = vmatpush2.xpose.msra.mxu0 0.0
    %2117 = vmatprep.subr.mxu0 0.0
    %2118 = vmatpush2.xpose.msra.mxu0 0.0
    %2119 = vmatprep.mubr.f32.mxu0 0.0
    %2120 = vmatmul.mubr.f32.gmra.mxu0 %v1946
    %v2121 = vpop.f32.mrf.mxu0
    %v2122 = vadd.f32 %v2021, %v2121
    %v2123 = vpop.f32.mrf.mxu0
    %2124 = vmatprep.mubr.f32.mxu0 0.0
    %2125 = vmatmul.mubr.f32.gmra.mxu0 %v1948
    %v2126 = vpop.f32.mrf.mxu0
    %v2127 = vadd.f32 %v2026, %v2126
    %v2128 = vpop.f32.mrf.mxu0
    %2129 = vmatprep.mubr.f32.mxu0 0.0
    %2130 = vmatmul.mubr.f32.gmra.mxu0 %v1950
    %v2131 = vpop.f32.mrf.mxu0
    %v2132 = vadd.f32 %v2031, %v2131
    %v2133 = vpop.f32.mrf.mxu0
    %2134 = vmatprep.mubr.f32.mxu0 0.0
    %2135 = vmatmul.mubr.f32.gmra.mxu0 %v1952
    %v2136 = vpop.f32.mrf.mxu0
    %v2137 = vadd.f32 %v2036, %v2136
    %v2138 = vpop.f32.mrf.mxu0
    %2139 = vdwg.mxu0
    %v2140 = vsel %vm1590, %v2122, -inf
    %2141 = vmax.xlane.f32.xlu0 %v2140
    %v2142 = vpop.xlane.xlu0 %2141
    %v2143 = vsel %vm1590, %v2127, -inf
    %2144 = vmax.xlane.f32.xlu0 %v2143
    %v2145 = vpop.xlane.xlu0 %2144
    %v2146 = vsel %vm1590, %v2132, -inf
    %2147 = vmax.xlane.f32.xlu0 %v2146
    %v2148 = vpop.xlane.xlu0 %2147
    %v2149 = vsel %vm1590, %v2137, -inf
    %2150 = vmax.xlane.f32.xlu0 %v2149
    %v2151 = vpop.xlane.xlu0 %2150
    %v2152 = vsub.f32 %v2122, %v2142
    %v2153 = vsub.f32 %v2127, %v2145
    %v2154 = vsub.f32 %v2132, %v2148
    %v2155 = vsub.f32 %v2137, %v2151
    %v2156 = vmul.f32 %v2152, 1.442695
    %v2157 = vpow.pop %v2156
    %v2158 = vmul.f32 %v2153, 1.442695
    %v2159 = vpow.pop %v2158
    %v2160 = vmul.f32 %v2154, 1.442695
    %v2161 = vpow.pop %v2160
    %v2162 = vmul.f32 %v2155, 1.442695
    %v2163 = vpow.pop %v2162
    %v2164 = vsel %vm1590, %v2157, 0.0
    %2165 = vadd.xlane.f32.xlu0 %v2164
    %v2166 = vpop.xlane.xlu0 %2165
    %v2167 = vsel %vm1590, %v2159, 0.0
    %2168 = vadd.xlane.f32.xlu0 %v2167
    %v2169 = vpop.xlane.xlu0 %2168
    %v2170 = vsel %vm1590, %v2161, 0.0
    %2171 = vadd.xlane.f32.xlu0 %v2170
    %v2172 = vpop.xlane.xlu0 %2171
    %v2173 = vsel %vm1590, %v2163, 0.0
    %2174 = vadd.xlane.f32.xlu0 %v2173
    %v2175 = vpop.xlane.xlu0 %2174
    %v2176 = vrcp.pop %v2166
    %v2177 = vrcp.pop %v2169
    %v2178 = vrcp.pop %v2172
    %v2179 = vrcp.pop %v2175
    %v2180 = vmul.f32 %v2157, %v2176
    %v2181 = vmul.f32 %v2159, %v2177
    %v2182 = vmul.f32 %v2161, %v2178
    %v2183 = vmul.f32 %v2163, %v2179
    %2188 = vrot.lane.b32.xlu0 %v1553, 96
    %v2189 = vpop.permute.xlu0 %2188
    %2190 = vrot.lane.b32.xlu0 %v1554, 96
    %v2191 = vpop.permute.xlu0 %2190
    %2192 = vrot.lane.b32.xlu0 %v1555, 96
    %v2193 = vpop.permute.xlu0 %2192
    %2194 = vrot.lane.b32.xlu0 %v1556, 96
    %v2195 = vpop.permute.xlu0 %2194
    %v2201 = vsel %vm1590, %v2180, 0
    %v2204 = vsel %vm1590, %v2181, 0
    %v2207 = vsel %vm1590, %v2182, 0
    %v2210 = vsel %vm1590, %v2183, 0
    %2212 = vmatprep.subr.mxu0 0.0
    %2213 = vmatpush1.msra.mxu0 0.0
    %2214 = vmatprep.subr.mxu0 0.0
    %2215 = vmatpush1.msra.mxu0 0.0
    %2216 = vmatprep.subr.mxu0 0.0
    %2217 = vmatpush1.msra.mxu0 0.0
    %2218 = vmatprep.subr.mxu0 0.0
    %2219 = vmatpush1.msra.mxu0 0.0
    %2220 = vmatprep.subr.mxu0 0.0
    %2221 = vmatpush1.msra.mxu0 0.0
    %2222 = vmatprep.subr.mxu0 0.0
    %2223 = vmatpush1.msra.mxu0 0.0
    %2224 = vmatprep.subr.mxu0 0.0
    %2225 = vmatpush1.msra.mxu0 0.0
    %2226 = vmatprep.subr.mxu0 0.0
    %2227 = vmatpush1.msra.mxu0 0.0
    %2228 = vmatprep.subr.mxu0 0.0
    %2229 = vmatpush1.msra.mxu0 0.0
    %2230 = vmatprep.subr.mxu0 0.0
    %2231 = vmatpush1.msra.mxu0 0.0
    %2232 = vmatprep.subr.mxu0 0.0
    %2233 = vmatpush1.msra.mxu0 0.0
    %2234 = vmatprep.subr.mxu0 0.0
    %2235 = vmatpush1.msra.mxu0 0.0
    %2236 = vmatprep.subr.mxu0 0.0
    %2237 = vmatpush1.msra.mxu0 %v2195
    %2238 = vmatprep.subr.mxu0 0.0
    %2239 = vmatpush1.msra.mxu0 %v2193
    %2240 = vmatprep.subr.mxu0 0.0
    %2241 = vmatpush1.msra.mxu0 %v2191
    %2242 = vmatprep.subr.mxu0 0.0
    %2243 = vmatpush1.msra.mxu0 %v2189
    %2244 = vmatprep.subr.mxu0 0.0
    %2245 = vmatpush2.msra.mxu0 0.0
    %2246 = vmatprep.subr.mxu0 0.0
    %2247 = vmatpush2.msra.mxu0 0.0
    %2248 = vmatprep.subr.mxu0 0.0
    %2249 = vmatpush2.msra.mxu0 0.0
    %2250 = vmatprep.subr.mxu0 0.0
    %2251 = vmatpush2.msra.mxu0 0.0
    %2252 = vmatprep.subr.mxu0 0.0
    %2253 = vmatpush2.msra.mxu0 0.0
    %2254 = vmatprep.subr.mxu0 0.0
    %2255 = vmatpush2.msra.mxu0 0.0
    %2256 = vmatprep.subr.mxu0 0.0
    %2257 = vmatpush2.msra.mxu0 0.0
    %2258 = vmatprep.subr.mxu0 0.0
    %2259 = vmatpush2.msra.mxu0 0.0
    %2260 = vmatprep.subr.mxu0 0.0
    %2261 = vmatpush2.msra.mxu0 0.0
    %2262 = vmatprep.subr.mxu0 0.0
    %2263 = vmatpush2.msra.mxu0 0.0
    %2264 = vmatprep.subr.mxu0 0.0
    %2265 = vmatpush2.msra.mxu0 0.0
    %2266 = vmatprep.subr.mxu0 0.0
    %2267 = vmatpush2.msra.mxu0 0.0
    %2268 = vmatprep.subr.mxu0 0.0
    %2269 = vmatpush2.msra.mxu0 0.0
    %2270 = vmatprep.subr.mxu0 0.0
    %2271 = vmatpush2.msra.mxu0 0.0
    %2272 = vmatprep.subr.mxu0 0.0
    %2273 = vmatpush2.msra.mxu0 0.0
    %2274 = vmatprep.subr.mxu0 0.0
    %2275 = vmatpush2.msra.mxu0 0.0
    %2276 = vmatprep.mubr.f32.mxu0 0.0
    %2277 = vmatmul.mubr.f32.gmra.mxu0 %v2201
    %v2278 = vpop.f32.mrf.mxu0
    %v2279 = vadd.f32 0.0, %v2278
    %v2280 = vpop.f32.mrf.mxu0
    %2281 = vmatprep.mubr.f32.mxu0 0.0
    %2282 = vmatmul.mubr.f32.gmra.mxu0 %v2204
    %v2283 = vpop.f32.mrf.mxu0
    %v2284 = vadd.f32 0.0, %v2283
    %v2285 = vpop.f32.mrf.mxu0
    %2286 = vmatprep.mubr.f32.mxu0 0.0
    %2287 = vmatmul.mubr.f32.gmra.mxu0 %v2207
    %v2288 = vpop.f32.mrf.mxu0
    %v2289 = vadd.f32 0.0, %v2288
    %v2290 = vpop.f32.mrf.mxu0
    %2291 = vmatprep.mubr.f32.mxu0 0.0
    %2292 = vmatmul.mubr.f32.gmra.mxu0 %v2210
    %v2293 = vpop.f32.mrf.mxu0
    %v2294 = vadd.f32 0.0, %v2293
    %v2295 = vpop.f32.mrf.mxu0
    %2296 = vdwg.mxu0
    %v2298 = vsel %vm1590, %v2279, 0
    %v2301 = vsel %vm1590, %v2284, 0
    %v2304 = vsel %vm1590, %v2289, 0
    %v2307 = vsel %vm1590, %v2294, 0
    %2309 = vmatprep.subr.mxu0 0.0
    %2310 = vmatpush1.msra.mxu0 0.0
    %2311 = vmatprep.subr.mxu0 0.0
    %2312 = vmatpush1.msra.mxu0 0.0
    %2313 = vmatprep.subr.mxu0 0.0
    %2314 = vmatpush1.msra.mxu0 0.0
    %2315 = vmatprep.subr.mxu0 0.0
    %2316 = vmatpush1.msra.mxu0 0.0
    %2317 = vmatprep.subr.mxu0 0.0
    %2318 = vmatpush1.msra.mxu0 0.0
    %2319 = vmatprep.subr.mxu0 0.0
    %2320 = vmatpush1.msra.mxu0 0.0
    %2321 = vmatprep.subr.mxu0 0.0
    %2322 = vmatpush1.msra.mxu0 0.0
    %2323 = vmatprep.subr.mxu0 0.0
    %2324 = vmatpush1.msra.mxu0 0.0
    %2325 = vmatprep.subr.mxu0 0.0
    %2326 = vmatpush1.msra.mxu0 0.0
    %2327 = vmatprep.subr.mxu0 0.0
    %2328 = vmatpush1.msra.mxu0 0.0
    %2329 = vmatprep.subr.mxu0 0.0
    %2330 = vmatpush1.msra.mxu0 0.0
    %2331 = vmatprep.subr.mxu0 0.0
    %2332 = vmatpush1.msra.mxu0 0.0
    %2333 = vmatprep.subr.mxu0 0.0
    %2334 = vmatpush1.msra.mxu0 %v1576
    %2335 = vmatprep.subr.mxu0 0.0
    %2336 = vmatpush1.msra.mxu0 %v1575
    %2337 = vmatprep.subr.mxu0 0.0
    %2338 = vmatpush1.msra.mxu0 %v1574
    %2339 = vmatprep.subr.mxu0 0.0
    %2340 = vmatpush1.msra.mxu0 %v1573
    %2341 = vmatprep.subr.mxu0 0.0
    %2342 = vmatpush2.msra.mxu0 0.0
    %2343 = vmatprep.subr.mxu0 0.0
    %2344 = vmatpush2.msra.mxu0 0.0
    %2345 = vmatprep.subr.mxu0 0.0
    %2346 = vmatpush2.msra.mxu0 0.0
    %2347 = vmatprep.subr.mxu0 0.0
    %2348 = vmatpush2.msra.mxu0 0.0
    %2349 = vmatprep.subr.mxu0 0.0
    %2350 = vmatpush2.msra.mxu0 0.0
    %2351 = vmatprep.subr.mxu0 0.0
    %2352 = vmatpush2.msra.mxu0 0.0
    %2353 = vmatprep.subr.mxu0 0.0
    %2354 = vmatpush2.msra.mxu0 0.0
    %2355 = vmatprep.subr.mxu0 0.0
    %2356 = vmatpush2.msra.mxu0 0.0
    %2357 = vmatprep.subr.mxu0 0.0
    %2358 = vmatpush2.msra.mxu0 0.0
    %2359 = vmatprep.subr.mxu0 0.0
    %2360 = vmatpush2.msra.mxu0 0.0
    %2361 = vmatprep.subr.mxu0 0.0
    %2362 = vmatpush2.msra.mxu0 0.0
    %2363 = vmatprep.subr.mxu0 0.0
    %2364 = vmatpush2.msra.mxu0 0.0
    %2365 = vmatprep.subr.mxu0 0.0
    %2366 = vmatpush2.msra.mxu0 0.0
    %2367 = vmatprep.subr.mxu0 0.0
    %2368 = vmatpush2.msra.mxu0 0.0
    %2369 = vmatprep.subr.mxu0 0.0
    %2370 = vmatpush2.msra.mxu0 0.0
    %2371 = vmatprep.subr.mxu0 0.0
    %2372 = vmatpush2.msra.mxu0 0.0
    %2373 = vmatprep.mubr.f32.mxu0 0.0
    %2374 = vmatmul.mubr.f32.gmra.mxu0 %v2298
    %v2375 = vpop.f32.mrf.mxu0
    %v2376 = vadd.f32 0.0, %v2375
    %v2377 = vpop.f32.mrf.mxu0
    %2378 = vmatprep.mubr.f32.mxu0 0.0
    %2379 = vmatmul.mubr.f32.gmra.mxu0 %v2301
    %v2380 = vpop.f32.mrf.mxu0
    %v2381 = vadd.f32 0.0, %v2380
    %v2382 = vpop.f32.mrf.mxu0
    %2383 = vmatprep.mubr.f32.mxu0 0.0
    %2384 = vmatmul.mubr.f32.gmra.mxu0 %v2304
    %v2385 = vpop.f32.mrf.mxu0
    %v2386 = vadd.f32 0.0, %v2385
    %v2387 = vpop.f32.mrf.mxu0
    %2388 = vmatprep.mubr.f32.mxu0 0.0
    %2389 = vmatmul.mubr.f32.gmra.mxu0 %v2307
    %v2390 = vpop.f32.mrf.mxu0
    %v2391 = vadd.f32 0.0, %v2390
    %v2392 = vpop.f32.mrf.mxu0
    %2393 = vdwg.mxu0
    %v2395 = vsel %vm1590, %v1920, 0
    %v2398 = vsel %vm1590, %v1925, 0
    %v2401 = vsel %vm1590, %v1930, 0
    %v2404 = vsel %vm1590, %v1935, 0
    %2406 = vmatprep.subr.mxu0 0.0
    %2407 = vmatpush1.msra.mxu0 0.0
    %2408 = vmatprep.subr.mxu0 0.0
    %2409 = vmatpush1.msra.mxu0 0.0
    %2410 = vmatprep.subr.mxu0 0.0
    %2411 = vmatpush1.msra.mxu0 0.0
    %2412 = vmatprep.subr.mxu0 0.0
    %2413 = vmatpush1.msra.mxu0 0.0
    %2414 = vmatprep.subr.mxu0 0.0
    %2415 = vmatpush1.msra.mxu0 0.0
    %2416 = vmatprep.subr.mxu0 0.0
    %2417 = vmatpush1.msra.mxu0 0.0
    %2418 = vmatprep.subr.mxu0 0.0
    %2419 = vmatpush1.msra.mxu0 0.0
    %2420 = vmatprep.subr.mxu0 0.0
    %2421 = vmatpush1.msra.mxu0 0.0
    %2422 = vmatprep.subr.mxu0 0.0
    %2423 = vmatpush1.msra.mxu0 0.0
    %2424 = vmatprep.subr.mxu0 0.0
    %2425 = vmatpush1.msra.mxu0 0.0
    %2426 = vmatprep.subr.mxu0 0.0
    %2427 = vmatpush1.msra.mxu0 0.0
    %2428 = vmatprep.subr.mxu0 0.0
    %2429 = vmatpush1.msra.mxu0 0.0
    %2430 = vmatprep.subr.mxu0 0.0
    %2431 = vmatpush1.msra.mxu0 %v1572
    %2432 = vmatprep.subr.mxu0 0.0
    %2433 = vmatpush1.msra.mxu0 %v1571
    %2434 = vmatprep.subr.mxu0 0.0
    %2435 = vmatpush1.msra.mxu0 %v1570
    %2436 = vmatprep.subr.mxu0 0.0
    %2437 = vmatpush1.msra.mxu0 %v1569
    %2438 = vmatprep.subr.mxu0 0.0
    %2439 = vmatpush2.msra.mxu0 0.0
    %2440 = vmatprep.subr.mxu0 0.0
    %2441 = vmatpush2.msra.mxu0 0.0
    %2442 = vmatprep.subr.mxu0 0.0
    %2443 = vmatpush2.msra.mxu0 0.0
    %2444 = vmatprep.subr.mxu0 0.0
    %2445 = vmatpush2.msra.mxu0 0.0
    %2446 = vmatprep.subr.mxu0 0.0
    %2447 = vmatpush2.msra.mxu0 0.0
    %2448 = vmatprep.subr.mxu0 0.0
    %2449 = vmatpush2.msra.mxu0 0.0
    %2450 = vmatprep.subr.mxu0 0.0
    %2451 = vmatpush2.msra.mxu0 0.0
    %2452 = vmatprep.subr.mxu0 0.0
    %2453 = vmatpush2.msra.mxu0 0.0
    %2454 = vmatprep.subr.mxu0 0.0
    %2455 = vmatpush2.msra.mxu0 0.0
    %2456 = vmatprep.subr.mxu0 0.0
    %2457 = vmatpush2.msra.mxu0 0.0
    %2458 = vmatprep.subr.mxu0 0.0
    %2459 = vmatpush2.msra.mxu0 0.0
    %2460 = vmatprep.subr.mxu0 0.0
    %2461 = vmatpush2.msra.mxu0 0.0
    %2462 = vmatprep.subr.mxu0 0.0
    %2463 = vmatpush2.msra.mxu0 0.0
    %2464 = vmatprep.subr.mxu0 0.0
    %2465 = vmatpush2.msra.mxu0 0.0
    %2466 = vmatprep.subr.mxu0 0.0
    %2467 = vmatpush2.msra.mxu0 0.0
    %2468 = vmatprep.subr.mxu0 0.0
    %2469 = vmatpush2.msra.mxu0 0.0
    %2470 = vmatprep.mubr.f32.mxu0 0.0
    %2471 = vmatmul.mubr.f32.gmra.mxu0 %v2395
    %v2472 = vpop.f32.mrf.mxu0
    %v2473 = vadd.f32 %v2376, %v2472
    %v2474 = vpop.f32.mrf.mxu0
    %2475 = vmatprep.mubr.f32.mxu0 0.0
    %2476 = vmatmul.mubr.f32.gmra.mxu0 %v2398
    %v2477 = vpop.f32.mrf.mxu0
    %v2478 = vadd.f32 %v2381, %v2477
    %v2479 = vpop.f32.mrf.mxu0
    %2480 = vmatprep.mubr.f32.mxu0 0.0
    %2481 = vmatmul.mubr.f32.gmra.mxu0 %v2401
    %v2482 = vpop.f32.mrf.mxu0
    %v2483 = vadd.f32 %v2386, %v2482
    %v2484 = vpop.f32.mrf.mxu0
    %2485 = vmatprep.mubr.f32.mxu0 0.0
    %2486 = vmatmul.mubr.f32.gmra.mxu0 %v2404
    %v2487 = vpop.f32.mrf.mxu0
    %v2488 = vadd.f32 %v2391, %v2487
    %v2489 = vpop.f32.mrf.mxu0
    %2490 = vdwg.mxu0
    %2491 = vrot.lane.b32.xlu0 %v793, 64
    %v2492 = vpop.permute.xlu0 %2491
    %2493 = vrot.lane.b32.xlu0 %v794, 64
    %v2494 = vpop.permute.xlu0 %2493
    %2495 = vrot.lane.b32.xlu0 %v795, 64
    %v2496 = vpop.permute.xlu0 %2495
    %2497 = vrot.lane.b32.xlu0 %v796, 64
    %v2498 = vpop.permute.xlu0 %2497
    %v2499 = vsel %vm1590, %v2492, 0
    %v2501 = vsel %vm1590, %v2494, 0
    %v2503 = vsel %vm1590, %v2496, 0
    %v2505 = vsel %vm1590, %v2498, 0
    %2507 = vmatprep.subr.mxu0 0.0
    %2508 = vmatpush1.xpose.msra.mxu0 0.0
    %2509 = vmatprep.subr.mxu0 0.0
    %2510 = vmatpush1.xpose.msra.mxu0 0.0
    %2511 = vmatprep.subr.mxu0 0.0
    %2512 = vmatpush1.xpose.msra.mxu0 0.0
    %2513 = vmatprep.subr.mxu0 0.0
    %2514 = vmatpush1.xpose.msra.mxu0 0.0
    %2515 = vmatprep.subr.mxu0 0.0
    %2516 = vmatpush1.xpose.msra.mxu0 0.0
    %2517 = vmatprep.subr.mxu0 0.0
    %2518 = vmatpush1.xpose.msra.mxu0 0.0
    %2519 = vmatprep.subr.mxu0 0.0
    %2520 = vmatpush1.xpose.msra.mxu0 0.0
    %2521 = vmatprep.subr.mxu0 0.0
    %2522 = vmatpush1.xpose.msra.mxu0 0.0
    %2523 = vmatprep.subr.mxu0 0.0
    %2524 = vmatpush1.xpose.msra.mxu0 0.0
    %2525 = vmatprep.subr.mxu0 0.0
    %2526 = vmatpush1.xpose.msra.mxu0 0.0
    %2527 = vmatprep.subr.mxu0 0.0
    %2528 = vmatpush1.xpose.msra.mxu0 0.0
    %2529 = vmatprep.subr.mxu0 0.0
    %2530 = vmatpush1.xpose.msra.mxu0 0.0
    %2531 = vmatprep.subr.mxu0 0.0
    %2532 = vmatpush1.xpose.msra.mxu0 %v2505
    %2533 = vmatprep.subr.mxu0 0.0
    %2534 = vmatpush1.xpose.msra.mxu0 %v2503
    %2535 = vmatprep.subr.mxu0 0.0
    %2536 = vmatpush1.xpose.msra.mxu0 %v2501
    %2537 = vmatprep.subr.mxu0 0.0
    %2538 = vmatpush1.xpose.msra.mxu0 %v2499
    %2539 = vmatprep.subr.mxu0 0.0
    %2540 = vmatpush2.xpose.msra.mxu0 0.0
    %2541 = vmatprep.subr.mxu0 0.0
    %2542 = vmatpush2.xpose.msra.mxu0 0.0
    %2543 = vmatprep.subr.mxu0 0.0
    %2544 = vmatpush2.xpose.msra.mxu0 0.0
    %2545 = vmatprep.subr.mxu0 0.0
    %2546 = vmatpush2.xpose.msra.mxu0 0.0
    %2547 = vmatprep.subr.mxu0 0.0
    %2548 = vmatpush2.xpose.msra.mxu0 0.0
    %2549 = vmatprep.subr.mxu0 0.0
    %2550 = vmatpush2.xpose.msra.mxu0 0.0
    %2551 = vmatprep.subr.mxu0 0.0
    %2552 = vmatpush2.xpose.msra.mxu0 0.0
    %2553 = vmatprep.subr.mxu0 0.0
    %2554 = vmatpush2.xpose.msra.mxu0 0.0
    %2555 = vmatprep.subr.mxu0 0.0
    %2556 = vmatpush2.xpose.msra.mxu0 0.0
    %2557 = vmatprep.subr.mxu0 0.0
    %2558 = vmatpush2.xpose.msra.mxu0 0.0
    %2559 = vmatprep.subr.mxu0 0.0
    %2560 = vmatpush2.xpose.msra.mxu0 0.0
    %2561 = vmatprep.subr.mxu0 0.0
    %2562 = vmatpush2.xpose.msra.mxu0 0.0
    %2563 = vmatprep.subr.mxu0 0.0
    %2564 = vmatpush2.xpose.msra.mxu0 0.0
    %2565 = vmatprep.subr.mxu0 0.0
    %2566 = vmatpush2.xpose.msra.mxu0 0.0
    %2567 = vmatprep.subr.mxu0 0.0
    %2568 = vmatpush2.xpose.msra.mxu0 0.0
    %2569 = vmatprep.subr.mxu0 0.0
    %2570 = vmatpush2.xpose.msra.mxu0 0.0
    %2571 = vmatprep.mubr.f32.mxu0 0.0
    %2572 = vmatmul.mubr.f32.gmra.mxu0 %v1592
    %v2573 = vpop.f32.mrf.mxu0
    %v2574 = vadd.f32 0.0, %v2573
    %v2575 = vpop.f32.mrf.mxu0
    %2576 = vmatprep.mubr.f32.mxu0 0.0
    %2577 = vmatmul.mubr.f32.gmra.mxu0 %v1595
    %v2578 = vpop.f32.mrf.mxu0
    %v2579 = vadd.f32 0.0, %v2578
    %v2580 = vpop.f32.mrf.mxu0
    %2581 = vmatprep.mubr.f32.mxu0 0.0
    %2582 = vmatmul.mubr.f32.gmra.mxu0 %v1598
    %v2583 = vpop.f32.mrf.mxu0
    %v2584 = vadd.f32 0.0, %v2583
    %v2585 = vpop.f32.mrf.mxu0
    %2586 = vmatprep.mubr.f32.mxu0 0.0
    %2587 = vmatmul.mubr.f32.gmra.mxu0 %v1601
    %v2588 = vpop.f32.mrf.mxu0
    %v2589 = vadd.f32 0.0, %v2588
    %v2590 = vpop.f32.mrf.mxu0
    %2591 = vdwg.mxu0
    %2592 = vrot.lane.b32.xlu0 %v1173, 64
    %v2593 = vpop.permute.xlu0 %2592
    %2594 = vrot.lane.b32.xlu0 %v1174, 64
    %v2595 = vpop.permute.xlu0 %2594
    %2596 = vrot.lane.b32.xlu0 %v1175, 64
    %v2597 = vpop.permute.xlu0 %2596
    %2598 = vrot.lane.b32.xlu0 %v1176, 64
    %v2599 = vpop.permute.xlu0 %2598
    %v2600 = vsel %vm1590, %v2593, 0
    %v2602 = vsel %vm1590, %v2595, 0
    %v2604 = vsel %vm1590, %v2597, 0
    %v2606 = vsel %vm1590, %v2599, 0
    %2608 = vmatprep.subr.mxu0 0.0
    %2609 = vmatpush1.xpose.msra.mxu0 0.0
    %2610 = vmatprep.subr.mxu0 0.0
    %2611 = vmatpush1.xpose.msra.mxu0 0.0
    %2612 = vmatprep.subr.mxu0 0.0
    %2613 = vmatpush1.xpose.msra.mxu0 0.0
    %2614 = vmatprep.subr.mxu0 0.0
    %2615 = vmatpush1.xpose.msra.mxu0 0.0
    %2616 = vmatprep.subr.mxu0 0.0
    %2617 = vmatpush1.xpose.msra.mxu0 0.0
    %2618 = vmatprep.subr.mxu0 0.0
    %2619 = vmatpush1.xpose.msra.mxu0 0.0
    %2620 = vmatprep.subr.mxu0 0.0
    %2621 = vmatpush1.xpose.msra.mxu0 0.0
    %2622 = vmatprep.subr.mxu0 0.0
    %2623 = vmatpush1.xpose.msra.mxu0 0.0
    %2624 = vmatprep.subr.mxu0 0.0
    %2625 = vmatpush1.xpose.msra.mxu0 0.0
    %2626 = vmatprep.subr.mxu0 0.0
    %2627 = vmatpush1.xpose.msra.mxu0 0.0
    %2628 = vmatprep.subr.mxu0 0.0
    %2629 = vmatpush1.xpose.msra.mxu0 0.0
    %2630 = vmatprep.subr.mxu0 0.0
    %2631 = vmatpush1.xpose.msra.mxu0 0.0
    %2632 = vmatprep.subr.mxu0 0.0
    %2633 = vmatpush1.xpose.msra.mxu0 %v2606
    %2634 = vmatprep.subr.mxu0 0.0
    %2635 = vmatpush1.xpose.msra.mxu0 %v2604
    %2636 = vmatprep.subr.mxu0 0.0
    %2637 = vmatpush1.xpose.msra.mxu0 %v2602
    %2638 = vmatprep.subr.mxu0 0.0
    %2639 = vmatpush1.xpose.msra.mxu0 %v2600
    %2640 = vmatprep.subr.mxu0 0.0
    %2641 = vmatpush2.xpose.msra.mxu0 0.0
    %2642 = vmatprep.subr.mxu0 0.0
    %2643 = vmatpush2.xpose.msra.mxu0 0.0
    %2644 = vmatprep.subr.mxu0 0.0
    %2645 = vmatpush2.xpose.msra.mxu0 0.0
    %2646 = vmatprep.subr.mxu0 0.0
    %2647 = vmatpush2.xpose.msra.mxu0 0.0
    %2648 = vmatprep.subr.mxu0 0.0
    %2649 = vmatpush2.xpose.msra.mxu0 0.0
    %2650 = vmatprep.subr.mxu0 0.0
    %2651 = vmatpush2.xpose.msra.mxu0 0.0
    %2652 = vmatprep.subr.mxu0 0.0
    %2653 = vmatpush2.xpose.msra.mxu0 0.0
    %2654 = vmatprep.subr.mxu0 0.0
    %2655 = vmatpush2.xpose.msra.mxu0 0.0
    %2656 = vmatprep.subr.mxu0 0.0
    %2657 = vmatpush2.xpose.msra.mxu0 0.0
    %2658 = vmatprep.subr.mxu0 0.0
    %2659 = vmatpush2.xpose.msra.mxu0 0.0
    %2660 = vmatprep.subr.mxu0 0.0
    %2661 = vmatpush2.xpose.msra.mxu0 0.0
    %2662 = vmatprep.subr.mxu0 0.0
    %2663 = vmatpush2.xpose.msra.mxu0 0.0
    %2664 = vmatprep.subr.mxu0 0.0
    %2665 = vmatpush2.xpose.msra.mxu0 0.0
    %2666 = vmatprep.subr.mxu0 0.0
    %2667 = vmatpush2.xpose.msra.mxu0 0.0
    %2668 = vmatprep.subr.mxu0 0.0
    %2669 = vmatpush2.xpose.msra.mxu0 0.0
    %2670 = vmatprep.subr.mxu0 0.0
    %2671 = vmatpush2.xpose.msra.mxu0 0.0
    %2672 = vmatprep.mubr.f32.mxu0 0.0
    %2673 = vmatmul.mubr.f32.gmra.mxu0 %v2499
    %v2674 = vpop.f32.mrf.mxu0
    %v2675 = vadd.f32 %v2574, %v2674
    %v2676 = vpop.f32.mrf.mxu0
    %2677 = vmatprep.mubr.f32.mxu0 0.0
    %2678 = vmatmul.mubr.f32.gmra.mxu0 %v2501
    %v2679 = vpop.f32.mrf.mxu0
    %v2680 = vadd.f32 %v2579, %v2679
    %v2681 = vpop.f32.mrf.mxu0
    %2682 = vmatprep.mubr.f32.mxu0 0.0
    %2683 = vmatmul.mubr.f32.gmra.mxu0 %v2503
    %v2684 = vpop.f32.mrf.mxu0
    %v2685 = vadd.f32 %v2584, %v2684
    %v2686 = vpop.f32.mrf.mxu0
    %2687 = vmatprep.mubr.f32.mxu0 0.0
    %2688 = vmatmul.mubr.f32.gmra.mxu0 %v2505
    %v2689 = vpop.f32.mrf.mxu0
    %v2690 = vadd.f32 %v2589, %v2689
    %v2691 = vpop.f32.mrf.mxu0
    %2692 = vdwg.mxu0
    %v2693 = vsel %vm1590, %v2675, -inf
    %2694 = vmax.xlane.f32.xlu0 %v2693
    %v2695 = vpop.xlane.xlu0 %2694
    %v2696 = vsel %vm1590, %v2680, -inf
    %2697 = vmax.xlane.f32.xlu0 %v2696
    %v2698 = vpop.xlane.xlu0 %2697
    %v2699 = vsel %vm1590, %v2685, -inf
    %2700 = vmax.xlane.f32.xlu0 %v2699
    %v2701 = vpop.xlane.xlu0 %2700
    %v2702 = vsel %vm1590, %v2690, -inf
    %2703 = vmax.xlane.f32.xlu0 %v2702
    %v2704 = vpop.xlane.xlu0 %2703
    %v2705 = vsub.f32 %v2675, %v2695
    %v2706 = vsub.f32 %v2680, %v2698
    %v2707 = vsub.f32 %v2685, %v2701
    %v2708 = vsub.f32 %v2690, %v2704
    %v2709 = vmul.f32 %v2705, 1.442695
    %v2710 = vpow.pop %v2709
    %v2711 = vmul.f32 %v2706, 1.442695
    %v2712 = vpow.pop %v2711
    %v2713 = vmul.f32 %v2707, 1.442695
    %v2714 = vpow.pop %v2713
    %v2715 = vmul.f32 %v2708, 1.442695
    %v2716 = vpow.pop %v2715
    %v2717 = vsel %vm1590, %v2710, 0.0
    %2718 = vadd.xlane.f32.xlu0 %v2717
    %v2719 = vpop.xlane.xlu0 %2718
    %v2720 = vsel %vm1590, %v2712, 0.0
    %2721 = vadd.xlane.f32.xlu0 %v2720
    %v2722 = vpop.xlane.xlu0 %2721
    %v2723 = vsel %vm1590, %v2714, 0.0
    %2724 = vadd.xlane.f32.xlu0 %v2723
    %v2725 = vpop.xlane.xlu0 %2724
    %v2726 = vsel %vm1590, %v2716, 0.0
    %2727 = vadd.xlane.f32.xlu0 %v2726
    %v2728 = vpop.xlane.xlu0 %2727
    %v2729 = vrcp.pop %v2719
    %v2730 = vrcp.pop %v2722
    %v2731 = vrcp.pop %v2725
    %v2732 = vrcp.pop %v2728
    %v2733 = vmul.f32 %v2710, %v2729
    %v2734 = vmul.f32 %v2712, %v2730
    %v2735 = vmul.f32 %v2714, %v2731
    %v2736 = vmul.f32 %v2716, %v2732
    %2737 = vrot.lane.b32.xlu0 %v1553, 64
    %v2738 = vpop.permute.xlu0 %2737
    %2739 = vrot.lane.b32.xlu0 %v1554, 64
    %v2740 = vpop.permute.xlu0 %2739
    %2741 = vrot.lane.b32.xlu0 %v1555, 64
    %v2742 = vpop.permute.xlu0 %2741
    %2743 = vrot.lane.b32.xlu0 %v1556, 64
    %v2744 = vpop.permute.xlu0 %2743
    %v2750 = vsel %vm1590, %v2733, 0
    %v2753 = vsel %vm1590, %v2734, 0
    %v2756 = vsel %vm1590, %v2735, 0
    %v2759 = vsel %vm1590, %v2736, 0
    %2761 = vmatprep.subr.mxu0 0.0
    %2762 = vmatpush1.msra.mxu0 0.0
    %2763 = vmatprep.subr.mxu0 0.0
    %2764 = vmatpush1.msra.mxu0 0.0
    %2765 = vmatprep.subr.mxu0 0.0
    %2766 = vmatpush1.msra.mxu0 0.0
    %2767 = vmatprep.subr.mxu0 0.0
    %2768 = vmatpush1.msra.mxu0 0.0
    %2769 = vmatprep.subr.mxu0 0.0
    %2770 = vmatpush1.msra.mxu0 0.0
    %2771 = vmatprep.subr.mxu0 0.0
    %2772 = vmatpush1.msra.mxu0 0.0
    %2773 = vmatprep.subr.mxu0 0.0
    %2774 = vmatpush1.msra.mxu0 0.0
    %2775 = vmatprep.subr.mxu0 0.0
    %2776 = vmatpush1.msra.mxu0 0.0
    %2777 = vmatprep.subr.mxu0 0.0
    %2778 = vmatpush1.msra.mxu0 0.0
    %2779 = vmatprep.subr.mxu0 0.0
    %2780 = vmatpush1.msra.mxu0 0.0
    %2781 = vmatprep.subr.mxu0 0.0
    %2782 = vmatpush1.msra.mxu0 0.0
    %2783 = vmatprep.subr.mxu0 0.0
    %2784 = vmatpush1.msra.mxu0 0.0
    %2785 = vmatprep.subr.mxu0 0.0
    %2786 = vmatpush1.msra.mxu0 %v2744
    %2787 = vmatprep.subr.mxu0 0.0
    %2788 = vmatpush1.msra.mxu0 %v2742
    %2789 = vmatprep.subr.mxu0 0.0
    %2790 = vmatpush1.msra.mxu0 %v2740
    %2791 = vmatprep.subr.mxu0 0.0
    %2792 = vmatpush1.msra.mxu0 %v2738
    %2793 = vmatprep.subr.mxu0 0.0
    %2794 = vmatpush2.msra.mxu0 0.0
    %2795 = vmatprep.subr.mxu0 0.0
    %2796 = vmatpush2.msra.mxu0 0.0
    %2797 = vmatprep.subr.mxu0 0.0
    %2798 = vmatpush2.msra.mxu0 0.0
    %2799 = vmatprep.subr.mxu0 0.0
    %2800 = vmatpush2.msra.mxu0 0.0
    %2801 = vmatprep.subr.mxu0 0.0
    %2802 = vmatpush2.msra.mxu0 0.0
    %2803 = vmatprep.subr.mxu0 0.0
    %2804 = vmatpush2.msra.mxu0 0.0
    %2805 = vmatprep.subr.mxu0 0.0
    %2806 = vmatpush2.msra.mxu0 0.0
    %2807 = vmatprep.subr.mxu0 0.0
    %2808 = vmatpush2.msra.mxu0 0.0
    %2809 = vmatprep.subr.mxu0 0.0
    %2810 = vmatpush2.msra.mxu0 0.0
    %2811 = vmatprep.subr.mxu0 0.0
    %2812 = vmatpush2.msra.mxu0 0.0
    %2813 = vmatprep.subr.mxu0 0.0
    %2814 = vmatpush2.msra.mxu0 0.0
    %2815 = vmatprep.subr.mxu0 0.0
    %2816 = vmatpush2.msra.mxu0 0.0
    %2817 = vmatprep.subr.mxu0 0.0
    %2818 = vmatpush2.msra.mxu0 0.0
    %2819 = vmatprep.subr.mxu0 0.0
    %2820 = vmatpush2.msra.mxu0 0.0
    %2821 = vmatprep.subr.mxu0 0.0
    %2822 = vmatpush2.msra.mxu0 0.0
    %2823 = vmatprep.subr.mxu0 0.0
    %2824 = vmatpush2.msra.mxu0 0.0
    %2825 = vmatprep.mubr.f32.mxu0 0.0
    %2826 = vmatmul.mubr.f32.gmra.mxu0 %v2750
    %v2827 = vpop.f32.mrf.mxu0
    %v2828 = vadd.f32 0.0, %v2827
    %v2829 = vpop.f32.mrf.mxu0
    %2830 = vmatprep.mubr.f32.mxu0 0.0
    %2831 = vmatmul.mubr.f32.gmra.mxu0 %v2753
    %v2832 = vpop.f32.mrf.mxu0
    %v2833 = vadd.f32 0.0, %v2832
    %v2834 = vpop.f32.mrf.mxu0
    %2835 = vmatprep.mubr.f32.mxu0 0.0
    %2836 = vmatmul.mubr.f32.gmra.mxu0 %v2756
    %v2837 = vpop.f32.mrf.mxu0
    %v2838 = vadd.f32 0.0, %v2837
    %v2839 = vpop.f32.mrf.mxu0
    %2840 = vmatprep.mubr.f32.mxu0 0.0
    %2841 = vmatmul.mubr.f32.gmra.mxu0 %v2759
    %v2842 = vpop.f32.mrf.mxu0
    %v2843 = vadd.f32 0.0, %v2842
    %v2844 = vpop.f32.mrf.mxu0
    %2845 = vdwg.mxu0
    %v2847 = vsel %vm1590, %v2828, 0
    %v2850 = vsel %vm1590, %v2833, 0
    %v2853 = vsel %vm1590, %v2838, 0
    %v2856 = vsel %vm1590, %v2843, 0
    %2858 = vmatprep.subr.mxu0 0.0
    %2859 = vmatpush1.msra.mxu0 0.0
    %2860 = vmatprep.subr.mxu0 0.0
    %2861 = vmatpush1.msra.mxu0 0.0
    %2862 = vmatprep.subr.mxu0 0.0
    %2863 = vmatpush1.msra.mxu0 0.0
    %2864 = vmatprep.subr.mxu0 0.0
    %2865 = vmatpush1.msra.mxu0 0.0
    %2866 = vmatprep.subr.mxu0 0.0
    %2867 = vmatpush1.msra.mxu0 0.0
    %2868 = vmatprep.subr.mxu0 0.0
    %2869 = vmatpush1.msra.mxu0 0.0
    %2870 = vmatprep.subr.mxu0 0.0
    %2871 = vmatpush1.msra.mxu0 0.0
    %2872 = vmatprep.subr.mxu0 0.0
    %2873 = vmatpush1.msra.mxu0 0.0
    %2874 = vmatprep.subr.mxu0 0.0
    %2875 = vmatpush1.msra.mxu0 0.0
    %2876 = vmatprep.subr.mxu0 0.0
    %2877 = vmatpush1.msra.mxu0 0.0
    %2878 = vmatprep.subr.mxu0 0.0
    %2879 = vmatpush1.msra.mxu0 0.0
    %2880 = vmatprep.subr.mxu0 0.0
    %2881 = vmatpush1.msra.mxu0 0.0
    %2882 = vmatprep.subr.mxu0 0.0
    %2883 = vmatpush1.msra.mxu0 %v1580
    %2884 = vmatprep.subr.mxu0 0.0
    %2885 = vmatpush1.msra.mxu0 %v1579
    %2886 = vmatprep.subr.mxu0 0.0
    %2887 = vmatpush1.msra.mxu0 %v1578
    %2888 = vmatprep.subr.mxu0 0.0
    %2889 = vmatpush1.msra.mxu0 %v1577
    %2890 = vmatprep.subr.mxu0 0.0
    %2891 = vmatpush2.msra.mxu0 0.0
    %2892 = vmatprep.subr.mxu0 0.0
    %2893 = vmatpush2.msra.mxu0 0.0
    %2894 = vmatprep.subr.mxu0 0.0
    %2895 = vmatpush2.msra.mxu0 0.0
    %2896 = vmatprep.subr.mxu0 0.0
    %2897 = vmatpush2.msra.mxu0 0.0
    %2898 = vmatprep.subr.mxu0 0.0
    %2899 = vmatpush2.msra.mxu0 0.0
    %2900 = vmatprep.subr.mxu0 0.0
    %2901 = vmatpush2.msra.mxu0 0.0
    %2902 = vmatprep.subr.mxu0 0.0
    %2903 = vmatpush2.msra.mxu0 0.0
    %2904 = vmatprep.subr.mxu0 0.0
    %2905 = vmatpush2.msra.mxu0 0.0
    %2906 = vmatprep.subr.mxu0 0.0
    %2907 = vmatpush2.msra.mxu0 0.0
    %2908 = vmatprep.subr.mxu0 0.0
    %2909 = vmatpush2.msra.mxu0 0.0
    %2910 = vmatprep.subr.mxu0 0.0
    %2911 = vmatpush2.msra.mxu0 0.0
    %2912 = vmatprep.subr.mxu0 0.0
    %2913 = vmatpush2.msra.mxu0 0.0
    %2914 = vmatprep.subr.mxu0 0.0
    %2915 = vmatpush2.msra.mxu0 0.0
    %2916 = vmatprep.subr.mxu0 0.0
    %2917 = vmatpush2.msra.mxu0 0.0
    %2918 = vmatprep.subr.mxu0 0.0
    %2919 = vmatpush2.msra.mxu0 0.0
    %2920 = vmatprep.subr.mxu0 0.0
    %2921 = vmatpush2.msra.mxu0 0.0
    %2922 = vmatprep.mubr.f32.mxu0 0.0
    %2923 = vmatmul.mubr.f32.gmra.mxu0 %v2847
    %v2924 = vpop.f32.mrf.mxu0
    %v2925 = vadd.f32 0.0, %v2924
    %v2926 = vpop.f32.mrf.mxu0
    %2927 = vmatprep.mubr.f32.mxu0 0.0
    %2928 = vmatmul.mubr.f32.gmra.mxu0 %v2850
    %v2929 = vpop.f32.mrf.mxu0
    %v2930 = vadd.f32 0.0, %v2929
    %v2931 = vpop.f32.mrf.mxu0
    %2932 = vmatprep.mubr.f32.mxu0 0.0
    %2933 = vmatmul.mubr.f32.gmra.mxu0 %v2853
    %v2934 = vpop.f32.mrf.mxu0
    %v2935 = vadd.f32 0.0, %v2934
    %v2936 = vpop.f32.mrf.mxu0
    %2937 = vmatprep.mubr.f32.mxu0 0.0
    %2938 = vmatmul.mubr.f32.gmra.mxu0 %v2856
    %v2939 = vpop.f32.mrf.mxu0
    %v2940 = vadd.f32 0.0, %v2939
    %v2941 = vpop.f32.mrf.mxu0
    %2942 = vdwg.mxu0
    %v2943 = vadd.f32 %v2473, %v2925
    %v2944 = vadd.f32 %v2478, %v2930
    %v2945 = vadd.f32 %v2483, %v2935
    %v2946 = vadd.f32 %v2488, %v2940
    %2947 = vrot.lane.b32.xlu0 %v793, 32
    %v2948 = vpop.permute.xlu0 %2947
    %2949 = vrot.lane.b32.xlu0 %v794, 32
    %v2950 = vpop.permute.xlu0 %2949
    %2951 = vrot.lane.b32.xlu0 %v795, 32
    %v2952 = vpop.permute.xlu0 %2951
    %2953 = vrot.lane.b32.xlu0 %v796, 32
    %v2954 = vpop.permute.xlu0 %2953
    %v2955 = vsel %vm1590, %v2948, 0
    %v2957 = vsel %vm1590, %v2950, 0
    %v2959 = vsel %vm1590, %v2952, 0
    %v2961 = vsel %vm1590, %v2954, 0
    %2963 = vmatprep.subr.mxu0 0.0
    %2964 = vmatpush1.xpose.msra.mxu0 0.0
    %2965 = vmatprep.subr.mxu0 0.0
    %2966 = vmatpush1.xpose.msra.mxu0 0.0
    %2967 = vmatprep.subr.mxu0 0.0
    %2968 = vmatpush1.xpose.msra.mxu0 0.0
    %2969 = vmatprep.subr.mxu0 0.0
    %2970 = vmatpush1.xpose.msra.mxu0 0.0
    %2971 = vmatprep.subr.mxu0 0.0
    %2972 = vmatpush1.xpose.msra.mxu0 0.0
    %2973 = vmatprep.subr.mxu0 0.0
    %2974 = vmatpush1.xpose.msra.mxu0 0.0
    %2975 = vmatprep.subr.mxu0 0.0
    %2976 = vmatpush1.xpose.msra.mxu0 0.0
    %2977 = vmatprep.subr.mxu0 0.0
    %2978 = vmatpush1.xpose.msra.mxu0 0.0
    %2979 = vmatprep.subr.mxu0 0.0
    %2980 = vmatpush1.xpose.msra.mxu0 0.0
    %2981 = vmatprep.subr.mxu0 0.0
    %2982 = vmatpush1.xpose.msra.mxu0 0.0
    %2983 = vmatprep.subr.mxu0 0.0
    %2984 = vmatpush1.xpose.msra.mxu0 0.0
    %2985 = vmatprep.subr.mxu0 0.0
    %2986 = vmatpush1.xpose.msra.mxu0 0.0
    %2987 = vmatprep.subr.mxu0 0.0
    %2988 = vmatpush1.xpose.msra.mxu0 %v2961
    %2989 = vmatprep.subr.mxu0 0.0
    %2990 = vmatpush1.xpose.msra.mxu0 %v2959
    %2991 = vmatprep.subr.mxu0 0.0
    %2992 = vmatpush1.xpose.msra.mxu0 %v2957
    %2993 = vmatprep.subr.mxu0 0.0
    %2994 = vmatpush1.xpose.msra.mxu0 %v2955
    %2995 = vmatprep.subr.mxu0 0.0
    %2996 = vmatpush2.xpose.msra.mxu0 0.0
    %2997 = vmatprep.subr.mxu0 0.0
    %2998 = vmatpush2.xpose.msra.mxu0 0.0
    %2999 = vmatprep.subr.mxu0 0.0
    %3000 = vmatpush2.xpose.msra.mxu0 0.0
    %3001 = vmatprep.subr.mxu0 0.0
    %3002 = vmatpush2.xpose.msra.mxu0 0.0
    %3003 = vmatprep.subr.mxu0 0.0
    %3004 = vmatpush2.xpose.msra.mxu0 0.0
    %3005 = vmatprep.subr.mxu0 0.0
    %3006 = vmatpush2.xpose.msra.mxu0 0.0
    %3007 = vmatprep.subr.mxu0 0.0
    %3008 = vmatpush2.xpose.msra.mxu0 0.0
    %3009 = vmatprep.subr.mxu0 0.0
    %3010 = vmatpush2.xpose.msra.mxu0 0.0
    %3011 = vmatprep.subr.mxu0 0.0
    %3012 = vmatpush2.xpose.msra.mxu0 0.0
    %3013 = vmatprep.subr.mxu0 0.0
    %3014 = vmatpush2.xpose.msra.mxu0 0.0
    %3015 = vmatprep.subr.mxu0 0.0
    %3016 = vmatpush2.xpose.msra.mxu0 0.0
    %3017 = vmatprep.subr.mxu0 0.0
    %3018 = vmatpush2.xpose.msra.mxu0 0.0
    %3019 = vmatprep.subr.mxu0 0.0
    %3020 = vmatpush2.xpose.msra.mxu0 0.0
    %3021 = vmatprep.subr.mxu0 0.0
    %3022 = vmatpush2.xpose.msra.mxu0 0.0
    %3023 = vmatprep.subr.mxu0 0.0
    %3024 = vmatpush2.xpose.msra.mxu0 0.0
    %3025 = vmatprep.subr.mxu0 0.0
    %3026 = vmatpush2.xpose.msra.mxu0 0.0
    %3027 = vmatprep.mubr.f32.mxu0 0.0
    %3028 = vmatmul.mubr.f32.gmra.mxu0 %v1592
    %v3029 = vpop.f32.mrf.mxu0
    %v3030 = vadd.f32 0.0, %v3029
    %v3031 = vpop.f32.mrf.mxu0
    %3032 = vmatprep.mubr.f32.mxu0 0.0
    %3033 = vmatmul.mubr.f32.gmra.mxu0 %v1595
    %v3034 = vpop.f32.mrf.mxu0
    %v3035 = vadd.f32 0.0, %v3034
    %v3036 = vpop.f32.mrf.mxu0
    %3037 = vmatprep.mubr.f32.mxu0 0.0
    %3038 = vmatmul.mubr.f32.gmra.mxu0 %v1598
    %v3039 = vpop.f32.mrf.mxu0
    %v3040 = vadd.f32 0.0, %v3039
    %v3041 = vpop.f32.mrf.mxu0
    %3042 = vmatprep.mubr.f32.mxu0 0.0
    %3043 = vmatmul.mubr.f32.gmra.mxu0 %v1601
    %v3044 = vpop.f32.mrf.mxu0
    %v3045 = vadd.f32 0.0, %v3044
    %v3046 = vpop.f32.mrf.mxu0
    %3047 = vdwg.mxu0
    %3048 = vrot.lane.b32.xlu0 %v1173, 32
    %v3049 = vpop.permute.xlu0 %3048
    %3050 = vrot.lane.b32.xlu0 %v1174, 32
    %v3051 = vpop.permute.xlu0 %3050
    %3052 = vrot.lane.b32.xlu0 %v1175, 32
    %v3053 = vpop.permute.xlu0 %3052
    %3054 = vrot.lane.b32.xlu0 %v1176, 32
    %v3055 = vpop.permute.xlu0 %3054
    %v3056 = vsel %vm1590, %v3049, 0
    %v3058 = vsel %vm1590, %v3051, 0
    %v3060 = vsel %vm1590, %v3053, 0
    %v3062 = vsel %vm1590, %v3055, 0
    %3064 = vmatprep.subr.mxu0 0.0
    %3065 = vmatpush1.xpose.msra.mxu0 0.0
    %3066 = vmatprep.subr.mxu0 0.0
    %3067 = vmatpush1.xpose.msra.mxu0 0.0
    %3068 = vmatprep.subr.mxu0 0.0
    %3069 = vmatpush1.xpose.msra.mxu0 0.0
    %3070 = vmatprep.subr.mxu0 0.0
    %3071 = vmatpush1.xpose.msra.mxu0 0.0
    %3072 = vmatprep.subr.mxu0 0.0
    %3073 = vmatpush1.xpose.msra.mxu0 0.0
    %3074 = vmatprep.subr.mxu0 0.0
    %3075 = vmatpush1.xpose.msra.mxu0 0.0
    %3076 = vmatprep.subr.mxu0 0.0
    %3077 = vmatpush1.xpose.msra.mxu0 0.0
    %3078 = vmatprep.subr.mxu0 0.0
    %3079 = vmatpush1.xpose.msra.mxu0 0.0
    %3080 = vmatprep.subr.mxu0 0.0
    %3081 = vmatpush1.xpose.msra.mxu0 0.0
    %3082 = vmatprep.subr.mxu0 0.0
    %3083 = vmatpush1.xpose.msra.mxu0 0.0
    %3084 = vmatprep.subr.mxu0 0.0
    %3085 = vmatpush1.xpose.msra.mxu0 0.0
    %3086 = vmatprep.subr.mxu0 0.0
    %3087 = vmatpush1.xpose.msra.mxu0 0.0
    %3088 = vmatprep.subr.mxu0 0.0
    %3089 = vmatpush1.xpose.msra.mxu0 %v3062
    %3090 = vmatprep.subr.mxu0 0.0
    %3091 = vmatpush1.xpose.msra.mxu0 %v3060
    %3092 = vmatprep.subr.mxu0 0.0
    %3093 = vmatpush1.xpose.msra.mxu0 %v3058
    %3094 = vmatprep.subr.mxu0 0.0
    %3095 = vmatpush1.xpose.msra.mxu0 %v3056
    %3096 = vmatprep.subr.mxu0 0.0
    %3097 = vmatpush2.xpose.msra.mxu0 0.0
    %3098 = vmatprep.subr.mxu0 0.0
    %3099 = vmatpush2.xpose.msra.mxu0 0.0
    %3100 = vmatprep.subr.mxu0 0.0
    %3101 = vmatpush2.xpose.msra.mxu0 0.0
    %3102 = vmatprep.subr.mxu0 0.0
    %3103 = vmatpush2.xpose.msra.mxu0 0.0
    %3104 = vmatprep.subr.mxu0 0.0
    %3105 = vmatpush2.xpose.msra.mxu0 0.0
    %3106 = vmatprep.subr.mxu0 0.0
    %3107 = vmatpush2.xpose.msra.mxu0 0.0
    %3108 = vmatprep.subr.mxu0 0.0
    %3109 = vmatpush2.xpose.msra.mxu0 0.0
    %3110 = vmatprep.subr.mxu0 0.0
    %3111 = vmatpush2.xpose.msra.mxu0 0.0
    %3112 = vmatprep.subr.mxu0 0.0
    %3113 = vmatpush2.xpose.msra.mxu0 0.0
    %3114 = vmatprep.subr.mxu0 0.0
    %3115 = vmatpush2.xpose.msra.mxu0 0.0
    %3116 = vmatprep.subr.mxu0 0.0
    %3117 = vmatpush2.xpose.msra.mxu0 0.0
    %3118 = vmatprep.subr.mxu0 0.0
    %3119 = vmatpush2.xpose.msra.mxu0 0.0
    %3120 = vmatprep.subr.mxu0 0.0
    %3121 = vmatpush2.xpose.msra.mxu0 0.0
    %3122 = vmatprep.subr.mxu0 0.0
    %3123 = vmatpush2.xpose.msra.mxu0 0.0
    %3124 = vmatprep.subr.mxu0 0.0
    %3125 = vmatpush2.xpose.msra.mxu0 0.0
    %3126 = vmatprep.subr.mxu0 0.0
    %3127 = vmatpush2.xpose.msra.mxu0 0.0
    %3128 = vmatprep.mubr.f32.mxu0 0.0
    %3129 = vmatmul.mubr.f32.gmra.mxu0 %v2955
    %v3130 = vpop.f32.mrf.mxu0
    %v3131 = vadd.f32 %v3030, %v3130
    %v3132 = vpop.f32.mrf.mxu0
    %3133 = vmatprep.mubr.f32.mxu0 0.0
    %3134 = vmatmul.mubr.f32.gmra.mxu0 %v2957
    %v3135 = vpop.f32.mrf.mxu0
    %v3136 = vadd.f32 %v3035, %v3135
    %v3137 = vpop.f32.mrf.mxu0
    %3138 = vmatprep.mubr.f32.mxu0 0.0
    %3139 = vmatmul.mubr.f32.gmra.mxu0 %v2959
    %v3140 = vpop.f32.mrf.mxu0
    %v3141 = vadd.f32 %v3040, %v3140
    %v3142 = vpop.f32.mrf.mxu0
    %3143 = vmatprep.mubr.f32.mxu0 0.0
    %3144 = vmatmul.mubr.f32.gmra.mxu0 %v2961
    %v3145 = vpop.f32.mrf.mxu0
    %v3146 = vadd.f32 %v3045, %v3145
    %v3147 = vpop.f32.mrf.mxu0
    %3148 = vdwg.mxu0
    %v3149 = vsel %vm1590, %v3131, -inf
    %3150 = vmax.xlane.f32.xlu0 %v3149
    %v3151 = vpop.xlane.xlu0 %3150
    %v3152 = vsel %vm1590, %v3136, -inf
    %3153 = vmax.xlane.f32.xlu0 %v3152
    %v3154 = vpop.xlane.xlu0 %3153
    %v3155 = vsel %vm1590, %v3141, -inf
    %3156 = vmax.xlane.f32.xlu0 %v3155
    %v3157 = vpop.xlane.xlu0 %3156
    %v3158 = vsel %vm1590, %v3146, -inf
    %3159 = vmax.xlane.f32.xlu0 %v3158
    %v3160 = vpop.xlane.xlu0 %3159
    %v3161 = vsub.f32 %v3131, %v3151
    %v3162 = vsub.f32 %v3136, %v3154
    %v3163 = vsub.f32 %v3141, %v3157
    %v3164 = vsub.f32 %v3146, %v3160
    %v3165 = vmul.f32 %v3161, 1.442695
    %v3166 = vpow.pop %v3165
    %v3167 = vmul.f32 %v3162, 1.442695
    %v3168 = vpow.pop %v3167
    %v3169 = vmul.f32 %v3163, 1.442695
    %v3170 = vpow.pop %v3169
    %v3171 = vmul.f32 %v3164, 1.442695
    %v3172 = vpow.pop %v3171
    %v3173 = vsel %vm1590, %v3166, 0.0
    %3174 = vadd.xlane.f32.xlu0 %v3173
    %v3175 = vpop.xlane.xlu0 %3174
    %v3176 = vsel %vm1590, %v3168, 0.0
    %3177 = vadd.xlane.f32.xlu0 %v3176
    %v3178 = vpop.xlane.xlu0 %3177
    %v3179 = vsel %vm1590, %v3170, 0.0
    %3180 = vadd.xlane.f32.xlu0 %v3179
    %v3181 = vpop.xlane.xlu0 %3180
    %v3182 = vsel %vm1590, %v3172, 0.0
    %3183 = vadd.xlane.f32.xlu0 %v3182
    %v3184 = vpop.xlane.xlu0 %3183
    %v3185 = vrcp.pop %v3175
    %v3186 = vrcp.pop %v3178
    %v3187 = vrcp.pop %v3181
    %v3188 = vrcp.pop %v3184
    %v3189 = vmul.f32 %v3166, %v3185
    %v3190 = vmul.f32 %v3168, %v3186
    %v3191 = vmul.f32 %v3170, %v3187
    %v3192 = vmul.f32 %v3172, %v3188
    %3193 = vrot.lane.b32.xlu0 %v1553, 32
    %v3194 = vpop.permute.xlu0 %3193
    %3195 = vrot.lane.b32.xlu0 %v1554, 32
    %v3196 = vpop.permute.xlu0 %3195
    %3197 = vrot.lane.b32.xlu0 %v1555, 32
    %v3198 = vpop.permute.xlu0 %3197
    %3199 = vrot.lane.b32.xlu0 %v1556, 32
    %v3200 = vpop.permute.xlu0 %3199
    %v3206 = vsel %vm1590, %v3189, 0
    %v3209 = vsel %vm1590, %v3190, 0
    %v3212 = vsel %vm1590, %v3191, 0
    %v3215 = vsel %vm1590, %v3192, 0
    %3217 = vmatprep.subr.mxu0 0.0
    %3218 = vmatpush1.msra.mxu0 0.0
    %3219 = vmatprep.subr.mxu0 0.0
    %3220 = vmatpush1.msra.mxu0 0.0
    %3221 = vmatprep.subr.mxu0 0.0
    %3222 = vmatpush1.msra.mxu0 0.0
    %3223 = vmatprep.subr.mxu0 0.0
    %3224 = vmatpush1.msra.mxu0 0.0
    %3225 = vmatprep.subr.mxu0 0.0
    %3226 = vmatpush1.msra.mxu0 0.0
    %3227 = vmatprep.subr.mxu0 0.0
    %3228 = vmatpush1.msra.mxu0 0.0
    %3229 = vmatprep.subr.mxu0 0.0
    %3230 = vmatpush1.msra.mxu0 0.0
    %3231 = vmatprep.subr.mxu0 0.0
    %3232 = vmatpush1.msra.mxu0 0.0
    %3233 = vmatprep.subr.mxu0 0.0
    %3234 = vmatpush1.msra.mxu0 0.0
    %3235 = vmatprep.subr.mxu0 0.0
    %3236 = vmatpush1.msra.mxu0 0.0
    %3237 = vmatprep.subr.mxu0 0.0
    %3238 = vmatpush1.msra.mxu0 0.0
    %3239 = vmatprep.subr.mxu0 0.0
    %3240 = vmatpush1.msra.mxu0 0.0
    %3241 = vmatprep.subr.mxu0 0.0
    %3242 = vmatpush1.msra.mxu0 %v3200
    %3243 = vmatprep.subr.mxu0 0.0
    %3244 = vmatpush1.msra.mxu0 %v3198
    %3245 = vmatprep.subr.mxu0 0.0
    %3246 = vmatpush1.msra.mxu0 %v3196
    %3247 = vmatprep.subr.mxu0 0.0
    %3248 = vmatpush1.msra.mxu0 %v3194
    %3249 = vmatprep.subr.mxu0 0.0
    %3250 = vmatpush2.msra.mxu0 0.0
    %3251 = vmatprep.subr.mxu0 0.0
    %3252 = vmatpush2.msra.mxu0 0.0
    %3253 = vmatprep.subr.mxu0 0.0
    %3254 = vmatpush2.msra.mxu0 0.0
    %3255 = vmatprep.subr.mxu0 0.0
    %3256 = vmatpush2.msra.mxu0 0.0
    %3257 = vmatprep.subr.mxu0 0.0
    %3258 = vmatpush2.msra.mxu0 0.0
    %3259 = vmatprep.subr.mxu0 0.0
    %3260 = vmatpush2.msra.mxu0 0.0
    %3261 = vmatprep.subr.mxu0 0.0
    %3262 = vmatpush2.msra.mxu0 0.0
    %3263 = vmatprep.subr.mxu0 0.0
    %3264 = vmatpush2.msra.mxu0 0.0
    %3265 = vmatprep.subr.mxu0 0.0
    %3266 = vmatpush2.msra.mxu0 0.0
    %3267 = vmatprep.subr.mxu0 0.0
    %3268 = vmatpush2.msra.mxu0 0.0
    %3269 = vmatprep.subr.mxu0 0.0
    %3270 = vmatpush2.msra.mxu0 0.0
    %3271 = vmatprep.subr.mxu0 0.0
    %3272 = vmatpush2.msra.mxu0 0.0
    %3273 = vmatprep.subr.mxu0 0.0
    %3274 = vmatpush2.msra.mxu0 0.0
    %3275 = vmatprep.subr.mxu0 0.0
    %3276 = vmatpush2.msra.mxu0 0.0
    %3277 = vmatprep.subr.mxu0 0.0
    %3278 = vmatpush2.msra.mxu0 0.0
    %3279 = vmatprep.subr.mxu0 0.0
    %3280 = vmatpush2.msra.mxu0 0.0
    %3281 = vmatprep.mubr.f32.mxu0 0.0
    %3282 = vmatmul.mubr.f32.gmra.mxu0 %v3206
    %v3283 = vpop.f32.mrf.mxu0
    %v3284 = vadd.f32 0.0, %v3283
    %v3285 = vpop.f32.mrf.mxu0
    %3286 = vmatprep.mubr.f32.mxu0 0.0
    %3287 = vmatmul.mubr.f32.gmra.mxu0 %v3209
    %v3288 = vpop.f32.mrf.mxu0
    %v3289 = vadd.f32 0.0, %v3288
    %v3290 = vpop.f32.mrf.mxu0
    %3291 = vmatprep.mubr.f32.mxu0 0.0
    %3292 = vmatmul.mubr.f32.gmra.mxu0 %v3212
    %v3293 = vpop.f32.mrf.mxu0
    %v3294 = vadd.f32 0.0, %v3293
    %v3295 = vpop.f32.mrf.mxu0
    %3296 = vmatprep.mubr.f32.mxu0 0.0
    %3297 = vmatmul.mubr.f32.gmra.mxu0 %v3215
    %v3298 = vpop.f32.mrf.mxu0
    %v3299 = vadd.f32 0.0, %v3298
    %v3300 = vpop.f32.mrf.mxu0
    %3301 = vdwg.mxu0
    %v3303 = vsel %vm1590, %v3284, 0
    %v3306 = vsel %vm1590, %v3289, 0
    %v3309 = vsel %vm1590, %v3294, 0
    %v3312 = vsel %vm1590, %v3299, 0
    %3314 = vmatprep.subr.mxu0 0.0
    %3315 = vmatpush1.msra.mxu0 0.0
    %3316 = vmatprep.subr.mxu0 0.0
    %3317 = vmatpush1.msra.mxu0 0.0
    %3318 = vmatprep.subr.mxu0 0.0
    %3319 = vmatpush1.msra.mxu0 0.0
    %3320 = vmatprep.subr.mxu0 0.0
    %3321 = vmatpush1.msra.mxu0 0.0
    %3322 = vmatprep.subr.mxu0 0.0
    %3323 = vmatpush1.msra.mxu0 0.0
    %3324 = vmatprep.subr.mxu0 0.0
    %3325 = vmatpush1.msra.mxu0 0.0
    %3326 = vmatprep.subr.mxu0 0.0
    %3327 = vmatpush1.msra.mxu0 0.0
    %3328 = vmatprep.subr.mxu0 0.0
    %3329 = vmatpush1.msra.mxu0 0.0
    %3330 = vmatprep.subr.mxu0 0.0
    %3331 = vmatpush1.msra.mxu0 0.0
    %3332 = vmatprep.subr.mxu0 0.0
    %3333 = vmatpush1.msra.mxu0 0.0
    %3334 = vmatprep.subr.mxu0 0.0
    %3335 = vmatpush1.msra.mxu0 0.0
    %3336 = vmatprep.subr.mxu0 0.0
    %3337 = vmatpush1.msra.mxu0 0.0
    %3338 = vmatprep.subr.mxu0 0.0
    %3339 = vmatpush1.msra.mxu0 %v1584
    %3340 = vmatprep.subr.mxu0 0.0
    %3341 = vmatpush1.msra.mxu0 %v1583
    %3342 = vmatprep.subr.mxu0 0.0
    %3343 = vmatpush1.msra.mxu0 %v1582
    %3344 = vmatprep.subr.mxu0 0.0
    %3345 = vmatpush1.msra.mxu0 %v1581
    %3346 = vmatprep.subr.mxu0 0.0
    %3347 = vmatpush2.msra.mxu0 0.0
    %3348 = vmatprep.subr.mxu0 0.0
    %3349 = vmatpush2.msra.mxu0 0.0
    %3350 = vmatprep.subr.mxu0 0.0
    %3351 = vmatpush2.msra.mxu0 0.0
    %3352 = vmatprep.subr.mxu0 0.0
    %3353 = vmatpush2.msra.mxu0 0.0
    %3354 = vmatprep.subr.mxu0 0.0
    %3355 = vmatpush2.msra.mxu0 0.0
    %3356 = vmatprep.subr.mxu0 0.0
    %3357 = vmatpush2.msra.mxu0 0.0
    %3358 = vmatprep.subr.mxu0 0.0
    %3359 = vmatpush2.msra.mxu0 0.0
    %3360 = vmatprep.subr.mxu0 0.0
    %3361 = vmatpush2.msra.mxu0 0.0
    %3362 = vmatprep.subr.mxu0 0.0
    %3363 = vmatpush2.msra.mxu0 0.0
    %3364 = vmatprep.subr.mxu0 0.0
    %3365 = vmatpush2.msra.mxu0 0.0
    %3366 = vmatprep.subr.mxu0 0.0
    %3367 = vmatpush2.msra.mxu0 0.0
    %3368 = vmatprep.subr.mxu0 0.0
    %3369 = vmatpush2.msra.mxu0 0.0
    %3370 = vmatprep.subr.mxu0 0.0
    %3371 = vmatpush2.msra.mxu0 0.0
    %3372 = vmatprep.subr.mxu0 0.0
    %3373 = vmatpush2.msra.mxu0 0.0
    %3374 = vmatprep.subr.mxu0 0.0
    %3375 = vmatpush2.msra.mxu0 0.0
    %3376 = vmatprep.subr.mxu0 0.0
    %3377 = vmatpush2.msra.mxu0 0.0
    %3378 = vmatprep.mubr.f32.mxu0 0.0
    %3379 = vmatmul.mubr.f32.gmra.mxu0 %v3303
    %v3380 = vpop.f32.mrf.mxu0
    %v3381 = vadd.f32 0.0, %v3380
    %v3382 = vpop.f32.mrf.mxu0
    %3383 = vmatprep.mubr.f32.mxu0 0.0
    %3384 = vmatmul.mubr.f32.gmra.mxu0 %v3306
    %v3385 = vpop.f32.mrf.mxu0
    %v3386 = vadd.f32 0.0, %v3385
    %v3387 = vpop.f32.mrf.mxu0
    %3388 = vmatprep.mubr.f32.mxu0 0.0
    %3389 = vmatmul.mubr.f32.gmra.mxu0 %v3309
    %v3390 = vpop.f32.mrf.mxu0
    %v3391 = vadd.f32 0.0, %v3390
    %v3392 = vpop.f32.mrf.mxu0
    %3393 = vmatprep.mubr.f32.mxu0 0.0
    %3394 = vmatmul.mubr.f32.gmra.mxu0 %v3312
    %v3395 = vpop.f32.mrf.mxu0
    %v3396 = vadd.f32 0.0, %v3395
    %v3397 = vpop.f32.mrf.mxu0
    %3398 = vdwg.mxu0
    %v3399 = vadd.f32 %v2943, %v3381
    %v3400 = vadd.f32 %v2944, %v3386
    %v3401 = vadd.f32 %v2945, %v3391
    %v3402 = vadd.f32 %v2946, %v3396
    %v3404 = vlaneseq
    %v3405 = vshrl.u32 %v3404, 7
    %v3406 = vsub.s32 0, %v3405
    %v3407 = vrot.slane %v1585, %v3406
    %v3409 = vadd.f32 %v3399, %v3407
    %v3410 = vadd.f32 %v3400, %v3407
    %v3411 = vadd.f32 %v3401, %v3407
    %v3412 = vadd.f32 %v3402, %v3407
    %3413 = vst [vmem:[#allocation17] sm:$0xff] %v3409
    %3414 = vst [vmem:[#allocation17 + $0x8] sm:$0xff] %v3410
    %3415 = vst [vmem:[#allocation17 + $0x10] sm:$0xff] %v3411
    %3416 = vst [vmem:[#allocation17 + $0x18] sm:$0xff] %v3412
    %v3418 = vsel %vm1590, %v797, 0
    %v3421 = vsel %vm1590, %v798, 0
    %v3424 = vsel %vm1590, %v799, 0
    %v3427 = vsel %vm1590, %v800, 0
    %3429 = vmatprep.subr.mxu0 0.0
    %3430 = vmatpush1.xpose.msra.mxu0 0.0
    %3431 = vmatprep.subr.mxu0 0.0
    %3432 = vmatpush1.xpose.msra.mxu0 0.0
    %3433 = vmatprep.subr.mxu0 0.0
    %3434 = vmatpush1.xpose.msra.mxu0 0.0
    %3435 = vmatprep.subr.mxu0 0.0
    %3436 = vmatpush1.xpose.msra.mxu0 0.0
    %3437 = vmatprep.subr.mxu0 0.0
    %3438 = vmatpush1.xpose.msra.mxu0 0.0
    %3439 = vmatprep.subr.mxu0 0.0
    %3440 = vmatpush1.xpose.msra.mxu0 0.0
    %3441 = vmatprep.subr.mxu0 0.0
    %3442 = vmatpush1.xpose.msra.mxu0 0.0
    %3443 = vmatprep.subr.mxu0 0.0
    %3444 = vmatpush1.xpose.msra.mxu0 0.0
    %3445 = vmatprep.subr.mxu0 0.0
    %3446 = vmatpush1.xpose.msra.mxu0 0.0
    %3447 = vmatprep.subr.mxu0 0.0
    %3448 = vmatpush1.xpose.msra.mxu0 0.0
    %3449 = vmatprep.subr.mxu0 0.0
    %3450 = vmatpush1.xpose.msra.mxu0 0.0
    %3451 = vmatprep.subr.mxu0 0.0
    %3452 = vmatpush1.xpose.msra.mxu0 0.0
    %3453 = vmatprep.subr.mxu0 0.0
    %3454 = vmatpush1.xpose.msra.mxu0 %v3427
    %3455 = vmatprep.subr.mxu0 0.0
    %3456 = vmatpush1.xpose.msra.mxu0 %v3424
    %3457 = vmatprep.subr.mxu0 0.0
    %3458 = vmatpush1.xpose.msra.mxu0 %v3421
    %3459 = vmatprep.subr.mxu0 0.0
    %3460 = vmatpush1.xpose.msra.mxu0 %v3418
    %3461 = vmatprep.subr.mxu0 0.0
    %3462 = vmatpush2.xpose.msra.mxu0 0.0
    %3463 = vmatprep.subr.mxu0 0.0
    %3464 = vmatpush2.xpose.msra.mxu0 0.0
    %3465 = vmatprep.subr.mxu0 0.0
    %3466 = vmatpush2.xpose.msra.mxu0 0.0
    %3467 = vmatprep.subr.mxu0 0.0
    %3468 = vmatpush2.xpose.msra.mxu0 0.0
    %3469 = vmatprep.subr.mxu0 0.0
    %3470 = vmatpush2.xpose.msra.mxu0 0.0
    %3471 = vmatprep.subr.mxu0 0.0
    %3472 = vmatpush2.xpose.msra.mxu0 0.0
    %3473 = vmatprep.subr.mxu0 0.0
    %3474 = vmatpush2.xpose.msra.mxu0 0.0
    %3475 = vmatprep.subr.mxu0 0.0
    %3476 = vmatpush2.xpose.msra.mxu0 0.0
    %3477 = vmatprep.subr.mxu0 0.0
    %3478 = vmatpush2.xpose.msra.mxu0 0.0
    %3479 = vmatprep.subr.mxu0 0.0
    %3480 = vmatpush2.xpose.msra.mxu0 0.0
    %3481 = vmatprep.subr.mxu0 0.0
    %3482 = vmatpush2.xpose.msra.mxu0 0.0
    %3483 = vmatprep.subr.mxu0 0.0
    %3484 = vmatpush2.xpose.msra.mxu0 0.0
    %3485 = vmatprep.subr.mxu0 0.0
    %3486 = vmatpush2.xpose.msra.mxu0 0.0
    %3487 = vmatprep.subr.mxu0 0.0
    %3488 = vmatpush2.xpose.msra.mxu0 0.0
    %3489 = vmatprep.subr.mxu0 0.0
    %3490 = vmatpush2.xpose.msra.mxu0 0.0
    %3491 = vmatprep.subr.mxu0 0.0
    %3492 = vmatpush2.xpose.msra.mxu0 0.0
    %3493 = vmatprep.mubr.f32.mxu0 0.0
    %3494 = vmatmul.mubr.f32.gmra.mxu0 %v1592
    %v3495 = vpop.f32.mrf.mxu0
    %v3496 = vadd.f32 0.0, %v3495
    %v3497 = vpop.f32.mrf.mxu0
    %3498 = vmatprep.mubr.f32.mxu0 0.0
    %3499 = vmatmul.mubr.f32.gmra.mxu0 %v1595
    %v3500 = vpop.f32.mrf.mxu0
    %v3501 = vadd.f32 0.0, %v3500
    %v3502 = vpop.f32.mrf.mxu0
    %3503 = vmatprep.mubr.f32.mxu0 0.0
    %3504 = vmatmul.mubr.f32.gmra.mxu0 %v1598
    %v3505 = vpop.f32.mrf.mxu0
    %v3506 = vadd.f32 0.0, %v3505
    %v3507 = vpop.f32.mrf.mxu0
    %3508 = vmatprep.mubr.f32.mxu0 0.0
    %3509 = vmatmul.mubr.f32.gmra.mxu0 %v1601
    %v3510 = vpop.f32.mrf.mxu0
    %v3511 = vadd.f32 0.0, %v3510
    %v3512 = vpop.f32.mrf.mxu0
    %3513 = vdwg.mxu0
    %v3515 = vsel %vm1590, %v1177, 0
    %v3518 = vsel %vm1590, %v1178, 0
    %v3521 = vsel %vm1590, %v1179, 0
    %v3524 = vsel %vm1590, %v1180, 0
    %3526 = vmatprep.subr.mxu0 0.0
    %3527 = vmatpush1.xpose.msra.mxu0 0.0
    %3528 = vmatprep.subr.mxu0 0.0
    %3529 = vmatpush1.xpose.msra.mxu0 0.0
    %3530 = vmatprep.subr.mxu0 0.0
    %3531 = vmatpush1.xpose.msra.mxu0 0.0
    %3532 = vmatprep.subr.mxu0 0.0
    %3533 = vmatpush1.xpose.msra.mxu0 0.0
    %3534 = vmatprep.subr.mxu0 0.0
    %3535 = vmatpush1.xpose.msra.mxu0 0.0
    %3536 = vmatprep.subr.mxu0 0.0
    %3537 = vmatpush1.xpose.msra.mxu0 0.0
    %3538 = vmatprep.subr.mxu0 0.0
    %3539 = vmatpush1.xpose.msra.mxu0 0.0
    %3540 = vmatprep.subr.mxu0 0.0
    %3541 = vmatpush1.xpose.msra.mxu0 0.0
    %3542 = vmatprep.subr.mxu0 0.0
    %3543 = vmatpush1.xpose.msra.mxu0 0.0
    %3544 = vmatprep.subr.mxu0 0.0
    %3545 = vmatpush1.xpose.msra.mxu0 0.0
    %3546 = vmatprep.subr.mxu0 0.0
    %3547 = vmatpush1.xpose.msra.mxu0 0.0
    %3548 = vmatprep.subr.mxu0 0.0
    %3549 = vmatpush1.xpose.msra.mxu0 0.0
    %3550 = vmatprep.subr.mxu0 0.0
    %3551 = vmatpush1.xpose.msra.mxu0 %v3524
    %3552 = vmatprep.subr.mxu0 0.0
    %3553 = vmatpush1.xpose.msra.mxu0 %v3521
    %3554 = vmatprep.subr.mxu0 0.0
    %3555 = vmatpush1.xpose.msra.mxu0 %v3518
    %3556 = vmatprep.subr.mxu0 0.0
    %3557 = vmatpush1.xpose.msra.mxu0 %v3515
    %3558 = vmatprep.subr.mxu0 0.0
    %3559 = vmatpush2.xpose.msra.mxu0 0.0
    %3560 = vmatprep.subr.mxu0 0.0
    %3561 = vmatpush2.xpose.msra.mxu0 0.0
    %3562 = vmatprep.subr.mxu0 0.0
    %3563 = vmatpush2.xpose.msra.mxu0 0.0
    %3564 = vmatprep.subr.mxu0 0.0
    %3565 = vmatpush2.xpose.msra.mxu0 0.0
    %3566 = vmatprep.subr.mxu0 0.0
    %3567 = vmatpush2.xpose.msra.mxu0 0.0
    %3568 = vmatprep.subr.mxu0 0.0
    %3569 = vmatpush2.xpose.msra.mxu0 0.0
    %3570 = vmatprep.subr.mxu0 0.0
    %3571 = vmatpush2.xpose.msra.mxu0 0.0
    %3572 = vmatprep.subr.mxu0 0.0
    %3573 = vmatpush2.xpose.msra.mxu0 0.0
    %3574 = vmatprep.subr.mxu0 0.0
    %3575 = vmatpush2.xpose.msra.mxu0 0.0
    %3576 = vmatprep.subr.mxu0 0.0
    %3577 = vmatpush2.xpose.msra.mxu0 0.0
    %3578 = vmatprep.subr.mxu0 0.0
    %3579 = vmatpush2.xpose.msra.mxu0 0.0
    %3580 = vmatprep.subr.mxu0 0.0
    %3581 = vmatpush2.xpose.msra.mxu0 0.0
    %3582 = vmatprep.subr.mxu0 0.0
    %3583 = vmatpush2.xpose.msra.mxu0 0.0
    %3584 = vmatprep.subr.mxu0 0.0
    %3585 = vmatpush2.xpose.msra.mxu0 0.0
    %3586 = vmatprep.subr.mxu0 0.0
    %3587 = vmatpush2.xpose.msra.mxu0 0.0
    %3588 = vmatprep.subr.mxu0 0.0
    %3589 = vmatpush2.xpose.msra.mxu0 0.0
    %3590 = vmatprep.mubr.f32.mxu0 0.0
    %3591 = vmatmul.mubr.f32.gmra.mxu0 %v3418
    %v3592 = vpop.f32.mrf.mxu0
    %v3593 = vadd.f32 %v3496, %v3592
    %v3594 = vpop.f32.mrf.mxu0
    %3595 = vmatprep.mubr.f32.mxu0 0.0
    %3596 = vmatmul.mubr.f32.gmra.mxu0 %v3421
    %v3597 = vpop.f32.mrf.mxu0
    %v3598 = vadd.f32 %v3501, %v3597
    %v3599 = vpop.f32.mrf.mxu0
    %3600 = vmatprep.mubr.f32.mxu0 0.0
    %3601 = vmatmul.mubr.f32.gmra.mxu0 %v3424
    %v3602 = vpop.f32.mrf.mxu0
    %v3603 = vadd.f32 %v3506, %v3602
    %v3604 = vpop.f32.mrf.mxu0
    %3605 = vmatprep.mubr.f32.mxu0 0.0
    %3606 = vmatmul.mubr.f32.gmra.mxu0 %v3427
    %v3607 = vpop.f32.mrf.mxu0
    %v3608 = vadd.f32 %v3511, %v3607
    %v3609 = vpop.f32.mrf.mxu0
    %3610 = vdwg.mxu0
    %v3611 = vsel %vm1590, %v3593, -inf
    %3612 = vmax.xlane.f32.xlu0 %v3611
    %v3613 = vpop.xlane.xlu0 %3612
    %v3614 = vsel %vm1590, %v3598, -inf
    %3615 = vmax.xlane.f32.xlu0 %v3614
    %v3616 = vpop.xlane.xlu0 %3615
    %v3617 = vsel %vm1590, %v3603, -inf
    %3618 = vmax.xlane.f32.xlu0 %v3617
    %v3619 = vpop.xlane.xlu0 %3618
    %v3620 = vsel %vm1590, %v3608, -inf
    %3621 = vmax.xlane.f32.xlu0 %v3620
    %v3622 = vpop.xlane.xlu0 %3621
    %v3623 = vsub.f32 %v3593, %v3613
    %v3624 = vsub.f32 %v3598, %v3616
    %v3625 = vsub.f32 %v3603, %v3619
    %v3626 = vsub.f32 %v3608, %v3622
    %v3627 = vmul.f32 %v3623, 1.442695
    %v3628 = vpow.pop %v3627
    %v3629 = vmul.f32 %v3624, 1.442695
    %v3630 = vpow.pop %v3629
    %v3631 = vmul.f32 %v3625, 1.442695
    %v3632 = vpow.pop %v3631
    %v3633 = vmul.f32 %v3626, 1.442695
    %v3634 = vpow.pop %v3633
    %v3635 = vsel %vm1590, %v3628, 0.0
    %3636 = vadd.xlane.f32.xlu0 %v3635
    %v3637 = vpop.xlane.xlu0 %3636
    %v3638 = vsel %vm1590, %v3630, 0.0
    %3639 = vadd.xlane.f32.xlu0 %v3638
    %v3640 = vpop.xlane.xlu0 %3639
    %v3641 = vsel %vm1590, %v3632, 0.0
    %3642 = vadd.xlane.f32.xlu0 %v3641
    %v3643 = vpop.xlane.xlu0 %3642
    %v3644 = vsel %vm1590, %v3634, 0.0
    %3645 = vadd.xlane.f32.xlu0 %v3644
    %v3646 = vpop.xlane.xlu0 %3645
    %v3647 = vrcp.pop %v3637
    %v3648 = vrcp.pop %v3640
    %v3649 = vrcp.pop %v3643
    %v3650 = vrcp.pop %v3646
    %v3651 = vmul.f32 %v3628, %v3647
    %v3652 = vmul.f32 %v3630, %v3648
    %v3653 = vmul.f32 %v3632, %v3649
    %v3654 = vmul.f32 %v3634, %v3650
    %v3656 = vsel %vm1590, %v3651, 0
    %v3659 = vsel %vm1590, %v3652, 0
    %v3662 = vsel %vm1590, %v3653, 0
    %v3665 = vsel %vm1590, %v3654, 0
    %3667 = vmatprep.subr.mxu0 0.0
    %3668 = vmatpush1.msra.mxu0 0.0
    %3669 = vmatprep.subr.mxu0 0.0
    %3670 = vmatpush1.msra.mxu0 0.0
    %3671 = vmatprep.subr.mxu0 0.0
    %3672 = vmatpush1.msra.mxu0 0.0
    %3673 = vmatprep.subr.mxu0 0.0
    %3674 = vmatpush1.msra.mxu0 0.0
    %3675 = vmatprep.subr.mxu0 0.0
    %3676 = vmatpush1.msra.mxu0 0.0
    %3677 = vmatprep.subr.mxu0 0.0
    %3678 = vmatpush1.msra.mxu0 0.0
    %3679 = vmatprep.subr.mxu0 0.0
    %3680 = vmatpush1.msra.mxu0 0.0
    %3681 = vmatprep.subr.mxu0 0.0
    %3682 = vmatpush1.msra.mxu0 0.0
    %3683 = vmatprep.subr.mxu0 0.0
    %3684 = vmatpush1.msra.mxu0 0.0
    %3685 = vmatprep.subr.mxu0 0.0
    %3686 = vmatpush1.msra.mxu0 0.0
    %3687 = vmatprep.subr.mxu0 0.0
    %3688 = vmatpush1.msra.mxu0 0.0
    %3689 = vmatprep.subr.mxu0 0.0
    %3690 = vmatpush1.msra.mxu0 0.0
    %3691 = vmatprep.subr.mxu0 0.0
    %3692 = vmatpush1.msra.mxu0 %v1560
    %3693 = vmatprep.subr.mxu0 0.0
    %3694 = vmatpush1.msra.mxu0 %v1559
    %3695 = vmatprep.subr.mxu0 0.0
    %3696 = vmatpush1.msra.mxu0 %v1558
    %3697 = vmatprep.subr.mxu0 0.0
    %3698 = vmatpush1.msra.mxu0 %v1557
    %3699 = vmatprep.subr.mxu0 0.0
    %3700 = vmatpush2.msra.mxu0 0.0
    %3701 = vmatprep.subr.mxu0 0.0
    %3702 = vmatpush2.msra.mxu0 0.0
    %3703 = vmatprep.subr.mxu0 0.0
    %3704 = vmatpush2.msra.mxu0 0.0
    %3705 = vmatprep.subr.mxu0 0.0
    %3706 = vmatpush2.msra.mxu0 0.0
    %3707 = vmatprep.subr.mxu0 0.0
    %3708 = vmatpush2.msra.mxu0 0.0
    %3709 = vmatprep.subr.mxu0 0.0
    %3710 = vmatpush2.msra.mxu0 0.0
    %3711 = vmatprep.subr.mxu0 0.0
    %3712 = vmatpush2.msra.mxu0 0.0
    %3713 = vmatprep.subr.mxu0 0.0
    %3714 = vmatpush2.msra.mxu0 0.0
    %3715 = vmatprep.subr.mxu0 0.0
    %3716 = vmatpush2.msra.mxu0 0.0
    %3717 = vmatprep.subr.mxu0 0.0
    %3718 = vmatpush2.msra.mxu0 0.0
    %3719 = vmatprep.subr.mxu0 0.0
    %3720 = vmatpush2.msra.mxu0 0.0
    %3721 = vmatprep.subr.mxu0 0.0
    %3722 = vmatpush2.msra.mxu0 0.0
    %3723 = vmatprep.subr.mxu0 0.0
    %3724 = vmatpush2.msra.mxu0 0.0
    %3725 = vmatprep.subr.mxu0 0.0
    %3726 = vmatpush2.msra.mxu0 0.0
    %3727 = vmatprep.subr.mxu0 0.0
    %3728 = vmatpush2.msra.mxu0 0.0
    %3729 = vmatprep.subr.mxu0 0.0
    %3730 = vmatpush2.msra.mxu0 0.0
    %3731 = vmatprep.mubr.f32.mxu0 0.0
    %3732 = vmatmul.mubr.f32.gmra.mxu0 %v3656
    %v3733 = vpop.f32.mrf.mxu0
    %v3734 = vadd.f32 0.0, %v3733
    %v3735 = vpop.f32.mrf.mxu0
    %3736 = vmatprep.mubr.f32.mxu0 0.0
    %3737 = vmatmul.mubr.f32.gmra.mxu0 %v3659
    %v3738 = vpop.f32.mrf.mxu0
    %v3739 = vadd.f32 0.0, %v3738
    %v3740 = vpop.f32.mrf.mxu0
    %3741 = vmatprep.mubr.f32.mxu0 0.0
    %3742 = vmatmul.mubr.f32.gmra.mxu0 %v3662
    %v3743 = vpop.f32.mrf.mxu0
    %v3744 = vadd.f32 0.0, %v3743
    %v3745 = vpop.f32.mrf.mxu0
    %3746 = vmatprep.mubr.f32.mxu0 0.0
    %3747 = vmatmul.mubr.f32.gmra.mxu0 %v3665
    %v3748 = vpop.f32.mrf.mxu0
    %v3749 = vadd.f32 0.0, %v3748
    %v3750 = vpop.f32.mrf.mxu0
    %3751 = vdwg.mxu0
    %3752 = vrot.lane.b32.xlu0 %v797, 96
    %v3753 = vpop.permute.xlu0 %3752
    %3754 = vrot.lane.b32.xlu0 %v798, 96
    %v3755 = vpop.permute.xlu0 %3754
    %3756 = vrot.lane.b32.xlu0 %v799, 96
    %v3757 = vpop.permute.xlu0 %3756
    %3758 = vrot.lane.b32.xlu0 %v800, 96
    %v3759 = vpop.permute.xlu0 %3758
    %v3760 = vsel %vm1590, %v3753, 0
    %v3762 = vsel %vm1590, %v3755, 0
    %v3764 = vsel %vm1590, %v3757, 0
    %v3766 = vsel %vm1590, %v3759, 0
    %3768 = vmatprep.subr.mxu0 0.0
    %3769 = vmatpush1.xpose.msra.mxu0 0.0
    %3770 = vmatprep.subr.mxu0 0.0
    %3771 = vmatpush1.xpose.msra.mxu0 0.0
    %3772 = vmatprep.subr.mxu0 0.0
    %3773 = vmatpush1.xpose.msra.mxu0 0.0
    %3774 = vmatprep.subr.mxu0 0.0
    %3775 = vmatpush1.xpose.msra.mxu0 0.0
    %3776 = vmatprep.subr.mxu0 0.0
    %3777 = vmatpush1.xpose.msra.mxu0 0.0
    %3778 = vmatprep.subr.mxu0 0.0
    %3779 = vmatpush1.xpose.msra.mxu0 0.0
    %3780 = vmatprep.subr.mxu0 0.0
    %3781 = vmatpush1.xpose.msra.mxu0 0.0
    %3782 = vmatprep.subr.mxu0 0.0
    %3783 = vmatpush1.xpose.msra.mxu0 0.0
    %3784 = vmatprep.subr.mxu0 0.0
    %3785 = vmatpush1.xpose.msra.mxu0 0.0
    %3786 = vmatprep.subr.mxu0 0.0
    %3787 = vmatpush1.xpose.msra.mxu0 0.0
    %3788 = vmatprep.subr.mxu0 0.0
    %3789 = vmatpush1.xpose.msra.mxu0 0.0
    %3790 = vmatprep.subr.mxu0 0.0
    %3791 = vmatpush1.xpose.msra.mxu0 0.0
    %3792 = vmatprep.subr.mxu0 0.0
    %3793 = vmatpush1.xpose.msra.mxu0 %v3766
    %3794 = vmatprep.subr.mxu0 0.0
    %3795 = vmatpush1.xpose.msra.mxu0 %v3764
    %3796 = vmatprep.subr.mxu0 0.0
    %3797 = vmatpush1.xpose.msra.mxu0 %v3762
    %3798 = vmatprep.subr.mxu0 0.0
    %3799 = vmatpush1.xpose.msra.mxu0 %v3760
    %3800 = vmatprep.subr.mxu0 0.0
    %3801 = vmatpush2.xpose.msra.mxu0 0.0
    %3802 = vmatprep.subr.mxu0 0.0
    %3803 = vmatpush2.xpose.msra.mxu0 0.0
    %3804 = vmatprep.subr.mxu0 0.0
    %3805 = vmatpush2.xpose.msra.mxu0 0.0
    %3806 = vmatprep.subr.mxu0 0.0
    %3807 = vmatpush2.xpose.msra.mxu0 0.0
    %3808 = vmatprep.subr.mxu0 0.0
    %3809 = vmatpush2.xpose.msra.mxu0 0.0
    %3810 = vmatprep.subr.mxu0 0.0
    %3811 = vmatpush2.xpose.msra.mxu0 0.0
    %3812 = vmatprep.subr.mxu0 0.0
    %3813 = vmatpush2.xpose.msra.mxu0 0.0
    %3814 = vmatprep.subr.mxu0 0.0
    %3815 = vmatpush2.xpose.msra.mxu0 0.0
    %3816 = vmatprep.subr.mxu0 0.0
    %3817 = vmatpush2.xpose.msra.mxu0 0.0
    %3818 = vmatprep.subr.mxu0 0.0
    %3819 = vmatpush2.xpose.msra.mxu0 0.0
    %3820 = vmatprep.subr.mxu0 0.0
    %3821 = vmatpush2.xpose.msra.mxu0 0.0
    %3822 = vmatprep.subr.mxu0 0.0
    %3823 = vmatpush2.xpose.msra.mxu0 0.0
    %3824 = vmatprep.subr.mxu0 0.0
    %3825 = vmatpush2.xpose.msra.mxu0 0.0
    %3826 = vmatprep.subr.mxu0 0.0
    %3827 = vmatpush2.xpose.msra.mxu0 0.0
    %3828 = vmatprep.subr.mxu0 0.0
    %3829 = vmatpush2.xpose.msra.mxu0 0.0
    %3830 = vmatprep.subr.mxu0 0.0
    %3831 = vmatpush2.xpose.msra.mxu0 0.0
    %3832 = vmatprep.mubr.f32.mxu0 0.0
    %3833 = vmatmul.mubr.f32.gmra.mxu0 %v1592
    %v3834 = vpop.f32.mrf.mxu0
    %v3835 = vadd.f32 0.0, %v3834
    %v3836 = vpop.f32.mrf.mxu0
    %3837 = vmatprep.mubr.f32.mxu0 0.0
    %3838 = vmatmul.mubr.f32.gmra.mxu0 %v1595
    %v3839 = vpop.f32.mrf.mxu0
    %v3840 = vadd.f32 0.0, %v3839
    %v3841 = vpop.f32.mrf.mxu0
    %3842 = vmatprep.mubr.f32.mxu0 0.0
    %3843 = vmatmul.mubr.f32.gmra.mxu0 %v1598
    %v3844 = vpop.f32.mrf.mxu0
    %v3845 = vadd.f32 0.0, %v3844
    %v3846 = vpop.f32.mrf.mxu0
    %3847 = vmatprep.mubr.f32.mxu0 0.0
    %3848 = vmatmul.mubr.f32.gmra.mxu0 %v1601
    %v3849 = vpop.f32.mrf.mxu0
    %v3850 = vadd.f32 0.0, %v3849
    %v3851 = vpop.f32.mrf.mxu0
    %3852 = vdwg.mxu0
    %3853 = vrot.lane.b32.xlu0 %v1177, 96
    %v3854 = vpop.permute.xlu0 %3853
    %3855 = vrot.lane.b32.xlu0 %v1178, 96
    %v3856 = vpop.permute.xlu0 %3855
    %3857 = vrot.lane.b32.xlu0 %v1179, 96
    %v3858 = vpop.permute.xlu0 %3857
    %3859 = vrot.lane.b32.xlu0 %v1180, 96
    %v3860 = vpop.permute.xlu0 %3859
    %v3861 = vsel %vm1590, %v3854, 0
    %v3863 = vsel %vm1590, %v3856, 0
    %v3865 = vsel %vm1590, %v3858, 0
    %v3867 = vsel %vm1590, %v3860, 0
    %3869 = vmatprep.subr.mxu0 0.0
    %3870 = vmatpush1.xpose.msra.mxu0 0.0
    %3871 = vmatprep.subr.mxu0 0.0
    %3872 = vmatpush1.xpose.msra.mxu0 0.0
    %3873 = vmatprep.subr.mxu0 0.0
    %3874 = vmatpush1.xpose.msra.mxu0 0.0
    %3875 = vmatprep.subr.mxu0 0.0
    %3876 = vmatpush1.xpose.msra.mxu0 0.0
    %3877 = vmatprep.subr.mxu0 0.0
    %3878 = vmatpush1.xpose.msra.mxu0 0.0
    %3879 = vmatprep.subr.mxu0 0.0
    %3880 = vmatpush1.xpose.msra.mxu0 0.0
    %3881 = vmatprep.subr.mxu0 0.0
    %3882 = vmatpush1.xpose.msra.mxu0 0.0
    %3883 = vmatprep.subr.mxu0 0.0
    %3884 = vmatpush1.xpose.msra.mxu0 0.0
    %3885 = vmatprep.subr.mxu0 0.0
    %3886 = vmatpush1.xpose.msra.mxu0 0.0
    %3887 = vmatprep.subr.mxu0 0.0
    %3888 = vmatpush1.xpose.msra.mxu0 0.0
    %3889 = vmatprep.subr.mxu0 0.0
    %3890 = vmatpush1.xpose.msra.mxu0 0.0
    %3891 = vmatprep.subr.mxu0 0.0
    %3892 = vmatpush1.xpose.msra.mxu0 0.0
    %3893 = vmatprep.subr.mxu0 0.0
    %3894 = vmatpush1.xpose.msra.mxu0 %v3867
    %3895 = vmatprep.subr.mxu0 0.0
    %3896 = vmatpush1.xpose.msra.mxu0 %v3865
    %3897 = vmatprep.subr.mxu0 0.0
    %3898 = vmatpush1.xpose.msra.mxu0 %v3863
    %3899 = vmatprep.subr.mxu0 0.0
    %3900 = vmatpush1.xpose.msra.mxu0 %v3861
    %3901 = vmatprep.subr.mxu0 0.0
    %3902 = vmatpush2.xpose.msra.mxu0 0.0
    %3903 = vmatprep.subr.mxu0 0.0
    %3904 = vmatpush2.xpose.msra.mxu0 0.0
    %3905 = vmatprep.subr.mxu0 0.0
    %3906 = vmatpush2.xpose.msra.mxu0 0.0
    %3907 = vmatprep.subr.mxu0 0.0
    %3908 = vmatpush2.xpose.msra.mxu0 0.0
    %3909 = vmatprep.subr.mxu0 0.0
    %3910 = vmatpush2.xpose.msra.mxu0 0.0
    %3911 = vmatprep.subr.mxu0 0.0
    %3912 = vmatpush2.xpose.msra.mxu0 0.0
    %3913 = vmatprep.subr.mxu0 0.0
    %3914 = vmatpush2.xpose.msra.mxu0 0.0
    %3915 = vmatprep.subr.mxu0 0.0
    %3916 = vmatpush2.xpose.msra.mxu0 0.0
    %3917 = vmatprep.subr.mxu0 0.0
    %3918 = vmatpush2.xpose.msra.mxu0 0.0
    %3919 = vmatprep.subr.mxu0 0.0
    %3920 = vmatpush2.xpose.msra.mxu0 0.0
    %3921 = vmatprep.subr.mxu0 0.0
    %3922 = vmatpush2.xpose.msra.mxu0 0.0
    %3923 = vmatprep.subr.mxu0 0.0
    %3924 = vmatpush2.xpose.msra.mxu0 0.0
    %3925 = vmatprep.subr.mxu0 0.0
    %3926 = vmatpush2.xpose.msra.mxu0 0.0
    %3927 = vmatprep.subr.mxu0 0.0
    %3928 = vmatpush2.xpose.msra.mxu0 0.0
    %3929 = vmatprep.subr.mxu0 0.0
    %3930 = vmatpush2.xpose.msra.mxu0 0.0
    %3931 = vmatprep.subr.mxu0 0.0
    %3932 = vmatpush2.xpose.msra.mxu0 0.0
    %3933 = vmatprep.mubr.f32.mxu0 0.0
    %3934 = vmatmul.mubr.f32.gmra.mxu0 %v3760
    %v3935 = vpop.f32.mrf.mxu0
    %v3936 = vadd.f32 %v3835, %v3935
    %v3937 = vpop.f32.mrf.mxu0
    %3938 = vmatprep.mubr.f32.mxu0 0.0
    %3939 = vmatmul.mubr.f32.gmra.mxu0 %v3762
    %v3940 = vpop.f32.mrf.mxu0
    %v3941 = vadd.f32 %v3840, %v3940
    %v3942 = vpop.f32.mrf.mxu0
    %3943 = vmatprep.mubr.f32.mxu0 0.0
    %3944 = vmatmul.mubr.f32.gmra.mxu0 %v3764
    %v3945 = vpop.f32.mrf.mxu0
    %v3946 = vadd.f32 %v3845, %v3945
    %v3947 = vpop.f32.mrf.mxu0
    %3948 = vmatprep.mubr.f32.mxu0 0.0
    %3949 = vmatmul.mubr.f32.gmra.mxu0 %v3766
    %v3950 = vpop.f32.mrf.mxu0
    %v3951 = vadd.f32 %v3850, %v3950
    %v3952 = vpop.f32.mrf.mxu0
    %3953 = vdwg.mxu0
    %v3954 = vsel %vm1590, %v3936, -inf
    %3955 = vmax.xlane.f32.xlu0 %v3954
    %v3956 = vpop.xlane.xlu0 %3955
    %v3957 = vsel %vm1590, %v3941, -inf
    %3958 = vmax.xlane.f32.xlu0 %v3957
    %v3959 = vpop.xlane.xlu0 %3958
    %v3960 = vsel %vm1590, %v3946, -inf
    %3961 = vmax.xlane.f32.xlu0 %v3960
    %v3962 = vpop.xlane.xlu0 %3961
    %v3963 = vsel %vm1590, %v3951, -inf
    %3964 = vmax.xlane.f32.xlu0 %v3963
    %v3965 = vpop.xlane.xlu0 %3964
    %v3966 = vsub.f32 %v3936, %v3956
    %v3967 = vsub.f32 %v3941, %v3959
    %v3968 = vsub.f32 %v3946, %v3962
    %v3969 = vsub.f32 %v3951, %v3965
    %v3970 = vmul.f32 %v3966, 1.442695
    %v3971 = vpow.pop %v3970
    %v3972 = vmul.f32 %v3967, 1.442695
    %v3973 = vpow.pop %v3972
    %v3974 = vmul.f32 %v3968, 1.442695
    %v3975 = vpow.pop %v3974
    %v3976 = vmul.f32 %v3969, 1.442695
    %v3977 = vpow.pop %v3976
    %v3978 = vsel %vm1590, %v3971, 0.0
    %3979 = vadd.xlane.f32.xlu0 %v3978
    %v3980 = vpop.xlane.xlu0 %3979
    %v3981 = vsel %vm1590, %v3973, 0.0
    %3982 = vadd.xlane.f32.xlu0 %v3981
    %v3983 = vpop.xlane.xlu0 %3982
    %v3984 = vsel %vm1590, %v3975, 0.0
    %3985 = vadd.xlane.f32.xlu0 %v3984
    %v3986 = vpop.xlane.xlu0 %3985
    %v3987 = vsel %vm1590, %v3977, 0.0
    %3988 = vadd.xlane.f32.xlu0 %v3987
    %v3989 = vpop.xlane.xlu0 %3988
    %v3990 = vrcp.pop %v3980
    %v3991 = vrcp.pop %v3983
    %v3992 = vrcp.pop %v3986
    %v3993 = vrcp.pop %v3989
    %v3994 = vmul.f32 %v3971, %v3990
    %v3995 = vmul.f32 %v3973, %v3991
    %v3996 = vmul.f32 %v3975, %v3992
    %v3997 = vmul.f32 %v3977, %v3993
    %4002 = vrot.lane.b32.xlu0 %v1557, 96
    %v4003 = vpop.permute.xlu0 %4002
    %4004 = vrot.lane.b32.xlu0 %v1558, 96
    %v4005 = vpop.permute.xlu0 %4004
    %4006 = vrot.lane.b32.xlu0 %v1559, 96
    %v4007 = vpop.permute.xlu0 %4006
    %4008 = vrot.lane.b32.xlu0 %v1560, 96
    %v4009 = vpop.permute.xlu0 %4008
    %v4015 = vsel %vm1590, %v3994, 0
    %v4018 = vsel %vm1590, %v3995, 0
    %v4021 = vsel %vm1590, %v3996, 0
    %v4024 = vsel %vm1590, %v3997, 0
    %4026 = vmatprep.subr.mxu0 0.0
    %4027 = vmatpush1.msra.mxu0 0.0
    %4028 = vmatprep.subr.mxu0 0.0
    %4029 = vmatpush1.msra.mxu0 0.0
    %4030 = vmatprep.subr.mxu0 0.0
    %4031 = vmatpush1.msra.mxu0 0.0
    %4032 = vmatprep.subr.mxu0 0.0
    %4033 = vmatpush1.msra.mxu0 0.0
    %4034 = vmatprep.subr.mxu0 0.0
    %4035 = vmatpush1.msra.mxu0 0.0
    %4036 = vmatprep.subr.mxu0 0.0
    %4037 = vmatpush1.msra.mxu0 0.0
    %4038 = vmatprep.subr.mxu0 0.0
    %4039 = vmatpush1.msra.mxu0 0.0
    %4040 = vmatprep.subr.mxu0 0.0
    %4041 = vmatpush1.msra.mxu0 0.0
    %4042 = vmatprep.subr.mxu0 0.0
    %4043 = vmatpush1.msra.mxu0 0.0
    %4044 = vmatprep.subr.mxu0 0.0
    %4045 = vmatpush1.msra.mxu0 0.0
    %4046 = vmatprep.subr.mxu0 0.0
    %4047 = vmatpush1.msra.mxu0 0.0
    %4048 = vmatprep.subr.mxu0 0.0
    %4049 = vmatpush1.msra.mxu0 0.0
    %4050 = vmatprep.subr.mxu0 0.0
    %4051 = vmatpush1.msra.mxu0 %v4009
    %4052 = vmatprep.subr.mxu0 0.0
    %4053 = vmatpush1.msra.mxu0 %v4007
    %4054 = vmatprep.subr.mxu0 0.0
    %4055 = vmatpush1.msra.mxu0 %v4005
    %4056 = vmatprep.subr.mxu0 0.0
    %4057 = vmatpush1.msra.mxu0 %v4003
    %4058 = vmatprep.subr.mxu0 0.0
    %4059 = vmatpush2.msra.mxu0 0.0
    %4060 = vmatprep.subr.mxu0 0.0
    %4061 = vmatpush2.msra.mxu0 0.0
    %4062 = vmatprep.subr.mxu0 0.0
    %4063 = vmatpush2.msra.mxu0 0.0
    %4064 = vmatprep.subr.mxu0 0.0
    %4065 = vmatpush2.msra.mxu0 0.0
    %4066 = vmatprep.subr.mxu0 0.0
    %4067 = vmatpush2.msra.mxu0 0.0
    %4068 = vmatprep.subr.mxu0 0.0
    %4069 = vmatpush2.msra.mxu0 0.0
    %4070 = vmatprep.subr.mxu0 0.0
    %4071 = vmatpush2.msra.mxu0 0.0
    %4072 = vmatprep.subr.mxu0 0.0
    %4073 = vmatpush2.msra.mxu0 0.0
    %4074 = vmatprep.subr.mxu0 0.0
    %4075 = vmatpush2.msra.mxu0 0.0
    %4076 = vmatprep.subr.mxu0 0.0
    %4077 = vmatpush2.msra.mxu0 0.0
    %4078 = vmatprep.subr.mxu0 0.0
    %4079 = vmatpush2.msra.mxu0 0.0
    %4080 = vmatprep.subr.mxu0 0.0
    %4081 = vmatpush2.msra.mxu0 0.0
    %4082 = vmatprep.subr.mxu0 0.0
    %4083 = vmatpush2.msra.mxu0 0.0
    %4084 = vmatprep.subr.mxu0 0.0
    %4085 = vmatpush2.msra.mxu0 0.0
    %4086 = vmatprep.subr.mxu0 0.0
    %4087 = vmatpush2.msra.mxu0 0.0
    %4088 = vmatprep.subr.mxu0 0.0
    %4089 = vmatpush2.msra.mxu0 0.0
    %4090 = vmatprep.mubr.f32.mxu0 0.0
    %4091 = vmatmul.mubr.f32.gmra.mxu0 %v4015
    %v4092 = vpop.f32.mrf.mxu0
    %v4093 = vadd.f32 0.0, %v4092
    %v4094 = vpop.f32.mrf.mxu0
    %4095 = vmatprep.mubr.f32.mxu0 0.0
    %4096 = vmatmul.mubr.f32.gmra.mxu0 %v4018
    %v4097 = vpop.f32.mrf.mxu0
    %v4098 = vadd.f32 0.0, %v4097
    %v4099 = vpop.f32.mrf.mxu0
    %4100 = vmatprep.mubr.f32.mxu0 0.0
    %4101 = vmatmul.mubr.f32.gmra.mxu0 %v4021
    %v4102 = vpop.f32.mrf.mxu0
    %v4103 = vadd.f32 0.0, %v4102
    %v4104 = vpop.f32.mrf.mxu0
    %4105 = vmatprep.mubr.f32.mxu0 0.0
    %4106 = vmatmul.mubr.f32.gmra.mxu0 %v4024
    %v4107 = vpop.f32.mrf.mxu0
    %v4108 = vadd.f32 0.0, %v4107
    %v4109 = vpop.f32.mrf.mxu0
    %4110 = vdwg.mxu0
    %v4112 = vsel %vm1590, %v4093, 0
    %v4115 = vsel %vm1590, %v4098, 0
    %v4118 = vsel %vm1590, %v4103, 0
    %v4121 = vsel %vm1590, %v4108, 0
    %4123 = vmatprep.subr.mxu0 0.0
    %4124 = vmatpush1.msra.mxu0 0.0
    %4125 = vmatprep.subr.mxu0 0.0
    %4126 = vmatpush1.msra.mxu0 0.0
    %4127 = vmatprep.subr.mxu0 0.0
    %4128 = vmatpush1.msra.mxu0 0.0
    %4129 = vmatprep.subr.mxu0 0.0
    %4130 = vmatpush1.msra.mxu0 0.0
    %4131 = vmatprep.subr.mxu0 0.0
    %4132 = vmatpush1.msra.mxu0 0.0
    %4133 = vmatprep.subr.mxu0 0.0
    %4134 = vmatpush1.msra.mxu0 0.0
    %4135 = vmatprep.subr.mxu0 0.0
    %4136 = vmatpush1.msra.mxu0 0.0
    %4137 = vmatprep.subr.mxu0 0.0
    %4138 = vmatpush1.msra.mxu0 0.0
    %4139 = vmatprep.subr.mxu0 0.0
    %4140 = vmatpush1.msra.mxu0 0.0
    %4141 = vmatprep.subr.mxu0 0.0
    %4142 = vmatpush1.msra.mxu0 0.0
    %4143 = vmatprep.subr.mxu0 0.0
    %4144 = vmatpush1.msra.mxu0 0.0
    %4145 = vmatprep.subr.mxu0 0.0
    %4146 = vmatpush1.msra.mxu0 0.0
    %4147 = vmatprep.subr.mxu0 0.0
    %4148 = vmatpush1.msra.mxu0 %v1576
    %4149 = vmatprep.subr.mxu0 0.0
    %4150 = vmatpush1.msra.mxu0 %v1575
    %4151 = vmatprep.subr.mxu0 0.0
    %4152 = vmatpush1.msra.mxu0 %v1574
    %4153 = vmatprep.subr.mxu0 0.0
    %4154 = vmatpush1.msra.mxu0 %v1573
    %4155 = vmatprep.subr.mxu0 0.0
    %4156 = vmatpush2.msra.mxu0 0.0
    %4157 = vmatprep.subr.mxu0 0.0
    %4158 = vmatpush2.msra.mxu0 0.0
    %4159 = vmatprep.subr.mxu0 0.0
    %4160 = vmatpush2.msra.mxu0 0.0
    %4161 = vmatprep.subr.mxu0 0.0
    %4162 = vmatpush2.msra.mxu0 0.0
    %4163 = vmatprep.subr.mxu0 0.0
    %4164 = vmatpush2.msra.mxu0 0.0
    %4165 = vmatprep.subr.mxu0 0.0
    %4166 = vmatpush2.msra.mxu0 0.0
    %4167 = vmatprep.subr.mxu0 0.0
    %4168 = vmatpush2.msra.mxu0 0.0
    %4169 = vmatprep.subr.mxu0 0.0
    %4170 = vmatpush2.msra.mxu0 0.0
    %4171 = vmatprep.subr.mxu0 0.0
    %4172 = vmatpush2.msra.mxu0 0.0
    %4173 = vmatprep.subr.mxu0 0.0
    %4174 = vmatpush2.msra.mxu0 0.0
    %4175 = vmatprep.subr.mxu0 0.0
    %4176 = vmatpush2.msra.mxu0 0.0
    %4177 = vmatprep.subr.mxu0 0.0
    %4178 = vmatpush2.msra.mxu0 0.0
    %4179 = vmatprep.subr.mxu0 0.0
    %4180 = vmatpush2.msra.mxu0 0.0
    %4181 = vmatprep.subr.mxu0 0.0
    %4182 = vmatpush2.msra.mxu0 0.0
    %4183 = vmatprep.subr.mxu0 0.0
    %4184 = vmatpush2.msra.mxu0 0.0
    %4185 = vmatprep.subr.mxu0 0.0
    %4186 = vmatpush2.msra.mxu0 0.0
    %4187 = vmatprep.mubr.f32.mxu0 0.0
    %4188 = vmatmul.mubr.f32.gmra.mxu0 %v4112
    %v4189 = vpop.f32.mrf.mxu0
    %v4190 = vadd.f32 0.0, %v4189
    %v4191 = vpop.f32.mrf.mxu0
    %4192 = vmatprep.mubr.f32.mxu0 0.0
    %4193 = vmatmul.mubr.f32.gmra.mxu0 %v4115
    %v4194 = vpop.f32.mrf.mxu0
    %v4195 = vadd.f32 0.0, %v4194
    %v4196 = vpop.f32.mrf.mxu0
    %4197 = vmatprep.mubr.f32.mxu0 0.0
    %4198 = vmatmul.mubr.f32.gmra.mxu0 %v4118
    %v4199 = vpop.f32.mrf.mxu0
    %v4200 = vadd.f32 0.0, %v4199
    %v4201 = vpop.f32.mrf.mxu0
    %4202 = vmatprep.mubr.f32.mxu0 0.0
    %4203 = vmatmul.mubr.f32.gmra.mxu0 %v4121
    %v4204 = vpop.f32.mrf.mxu0
    %v4205 = vadd.f32 0.0, %v4204
    %v4206 = vpop.f32.mrf.mxu0
    %4207 = vdwg.mxu0
    %v4209 = vsel %vm1590, %v3734, 0
    %v4212 = vsel %vm1590, %v3739, 0
    %v4215 = vsel %vm1590, %v3744, 0
    %v4218 = vsel %vm1590, %v3749, 0
    %4220 = vmatprep.subr.mxu0 0.0
    %4221 = vmatpush1.msra.mxu0 0.0
    %4222 = vmatprep.subr.mxu0 0.0
    %4223 = vmatpush1.msra.mxu0 0.0
    %4224 = vmatprep.subr.mxu0 0.0
    %4225 = vmatpush1.msra.mxu0 0.0
    %4226 = vmatprep.subr.mxu0 0.0
    %4227 = vmatpush1.msra.mxu0 0.0
    %4228 = vmatprep.subr.mxu0 0.0
    %4229 = vmatpush1.msra.mxu0 0.0
    %4230 = vmatprep.subr.mxu0 0.0
    %4231 = vmatpush1.msra.mxu0 0.0
    %4232 = vmatprep.subr.mxu0 0.0
    %4233 = vmatpush1.msra.mxu0 0.0
    %4234 = vmatprep.subr.mxu0 0.0
    %4235 = vmatpush1.msra.mxu0 0.0
    %4236 = vmatprep.subr.mxu0 0.0
    %4237 = vmatpush1.msra.mxu0 0.0
    %4238 = vmatprep.subr.mxu0 0.0
    %4239 = vmatpush1.msra.mxu0 0.0
    %4240 = vmatprep.subr.mxu0 0.0
    %4241 = vmatpush1.msra.mxu0 0.0
    %4242 = vmatprep.subr.mxu0 0.0
    %4243 = vmatpush1.msra.mxu0 0.0
    %4244 = vmatprep.subr.mxu0 0.0
    %4245 = vmatpush1.msra.mxu0 %v1572
    %4246 = vmatprep.subr.mxu0 0.0
    %4247 = vmatpush1.msra.mxu0 %v1571
    %4248 = vmatprep.subr.mxu0 0.0
    %4249 = vmatpush1.msra.mxu0 %v1570
    %4250 = vmatprep.subr.mxu0 0.0
    %4251 = vmatpush1.msra.mxu0 %v1569
    %4252 = vmatprep.subr.mxu0 0.0
    %4253 = vmatpush2.msra.mxu0 0.0
    %4254 = vmatprep.subr.mxu0 0.0
    %4255 = vmatpush2.msra.mxu0 0.0
    %4256 = vmatprep.subr.mxu0 0.0
    %4257 = vmatpush2.msra.mxu0 0.0
    %4258 = vmatprep.subr.mxu0 0.0
    %4259 = vmatpush2.msra.mxu0 0.0
    %4260 = vmatprep.subr.mxu0 0.0
    %4261 = vmatpush2.msra.mxu0 0.0
    %4262 = vmatprep.subr.mxu0 0.0
    %4263 = vmatpush2.msra.mxu0 0.0
    %4264 = vmatprep.subr.mxu0 0.0
    %4265 = vmatpush2.msra.mxu0 0.0
    %4266 = vmatprep.subr.mxu0 0.0
    %4267 = vmatpush2.msra.mxu0 0.0
    %4268 = vmatprep.subr.mxu0 0.0
    %4269 = vmatpush2.msra.mxu0 0.0
    %4270 = vmatprep.subr.mxu0 0.0
    %4271 = vmatpush2.msra.mxu0 0.0
    %4272 = vmatprep.subr.mxu0 0.0
    %4273 = vmatpush2.msra.mxu0 0.0
    %4274 = vmatprep.subr.mxu0 0.0
    %4275 = vmatpush2.msra.mxu0 0.0
    %4276 = vmatprep.subr.mxu0 0.0
    %4277 = vmatpush2.msra.mxu0 0.0
    %4278 = vmatprep.subr.mxu0 0.0
    %4279 = vmatpush2.msra.mxu0 0.0
    %4280 = vmatprep.subr.mxu0 0.0
    %4281 = vmatpush2.msra.mxu0 0.0
    %4282 = vmatprep.subr.mxu0 0.0
    %4283 = vmatpush2.msra.mxu0 0.0
    %4284 = vmatprep.mubr.f32.mxu0 0.0
    %4285 = vmatmul.mubr.f32.gmra.mxu0 %v4209
    %v4286 = vpop.f32.mrf.mxu0
    %v4287 = vadd.f32 %v4190, %v4286
    %v4288 = vpop.f32.mrf.mxu0
    %4289 = vmatprep.mubr.f32.mxu0 0.0
    %4290 = vmatmul.mubr.f32.gmra.mxu0 %v4212
    %v4291 = vpop.f32.mrf.mxu0
    %v4292 = vadd.f32 %v4195, %v4291
    %v4293 = vpop.f32.mrf.mxu0
    %4294 = vmatprep.mubr.f32.mxu0 0.0
    %4295 = vmatmul.mubr.f32.gmra.mxu0 %v4215
    %v4296 = vpop.f32.mrf.mxu0
    %v4297 = vadd.f32 %v4200, %v4296
    %v4298 = vpop.f32.mrf.mxu0
    %4299 = vmatprep.mubr.f32.mxu0 0.0
    %4300 = vmatmul.mubr.f32.gmra.mxu0 %v4218
    %v4301 = vpop.f32.mrf.mxu0
    %v4302 = vadd.f32 %v4205, %v4301
    %v4303 = vpop.f32.mrf.mxu0
    %4304 = vdwg.mxu0
    %4305 = vrot.lane.b32.xlu0 %v797, 64
    %v4306 = vpop.permute.xlu0 %4305
    %4307 = vrot.lane.b32.xlu0 %v798, 64
    %v4308 = vpop.permute.xlu0 %4307
    %4309 = vrot.lane.b32.xlu0 %v799, 64
    %v4310 = vpop.permute.xlu0 %4309
    %4311 = vrot.lane.b32.xlu0 %v800, 64
    %v4312 = vpop.permute.xlu0 %4311
    %v4313 = vsel %vm1590, %v4306, 0
    %v4315 = vsel %vm1590, %v4308, 0
    %v4317 = vsel %vm1590, %v4310, 0
    %v4319 = vsel %vm1590, %v4312, 0
    %4321 = vmatprep.subr.mxu0 0.0
    %4322 = vmatpush1.xpose.msra.mxu0 0.0
    %4323 = vmatprep.subr.mxu0 0.0
    %4324 = vmatpush1.xpose.msra.mxu0 0.0
    %4325 = vmatprep.subr.mxu0 0.0
    %4326 = vmatpush1.xpose.msra.mxu0 0.0
    %4327 = vmatprep.subr.mxu0 0.0
    %4328 = vmatpush1.xpose.msra.mxu0 0.0
    %4329 = vmatprep.subr.mxu0 0.0
    %4330 = vmatpush1.xpose.msra.mxu0 0.0
    %4331 = vmatprep.subr.mxu0 0.0
    %4332 = vmatpush1.xpose.msra.mxu0 0.0
    %4333 = vmatprep.subr.mxu0 0.0
    %4334 = vmatpush1.xpose.msra.mxu0 0.0
    %4335 = vmatprep.subr.mxu0 0.0
    %4336 = vmatpush1.xpose.msra.mxu0 0.0
    %4337 = vmatprep.subr.mxu0 0.0
    %4338 = vmatpush1.xpose.msra.mxu0 0.0
    %4339 = vmatprep.subr.mxu0 0.0
    %4340 = vmatpush1.xpose.msra.mxu0 0.0
    %4341 = vmatprep.subr.mxu0 0.0
    %4342 = vmatpush1.xpose.msra.mxu0 0.0
    %4343 = vmatprep.subr.mxu0 0.0
    %4344 = vmatpush1.xpose.msra.mxu0 0.0
    %4345 = vmatprep.subr.mxu0 0.0
    %4346 = vmatpush1.xpose.msra.mxu0 %v4319
    %4347 = vmatprep.subr.mxu0 0.0
    %4348 = vmatpush1.xpose.msra.mxu0 %v4317
    %4349 = vmatprep.subr.mxu0 0.0
    %4350 = vmatpush1.xpose.msra.mxu0 %v4315
    %4351 = vmatprep.subr.mxu0 0.0
    %4352 = vmatpush1.xpose.msra.mxu0 %v4313
    %4353 = vmatprep.subr.mxu0 0.0
    %4354 = vmatpush2.xpose.msra.mxu0 0.0
    %4355 = vmatprep.subr.mxu0 0.0
    %4356 = vmatpush2.xpose.msra.mxu0 0.0
    %4357 = vmatprep.subr.mxu0 0.0
    %4358 = vmatpush2.xpose.msra.mxu0 0.0
    %4359 = vmatprep.subr.mxu0 0.0
    %4360 = vmatpush2.xpose.msra.mxu0 0.0
    %4361 = vmatprep.subr.mxu0 0.0
    %4362 = vmatpush2.xpose.msra.mxu0 0.0
    %4363 = vmatprep.subr.mxu0 0.0
    %4364 = vmatpush2.xpose.msra.mxu0 0.0
    %4365 = vmatprep.subr.mxu0 0.0
    %4366 = vmatpush2.xpose.msra.mxu0 0.0
    %4367 = vmatprep.subr.mxu0 0.0
    %4368 = vmatpush2.xpose.msra.mxu0 0.0
    %4369 = vmatprep.subr.mxu0 0.0
    %4370 = vmatpush2.xpose.msra.mxu0 0.0
    %4371 = vmatprep.subr.mxu0 0.0
    %4372 = vmatpush2.xpose.msra.mxu0 0.0
    %4373 = vmatprep.subr.mxu0 0.0
    %4374 = vmatpush2.xpose.msra.mxu0 0.0
    %4375 = vmatprep.subr.mxu0 0.0
    %4376 = vmatpush2.xpose.msra.mxu0 0.0
    %4377 = vmatprep.subr.mxu0 0.0
    %4378 = vmatpush2.xpose.msra.mxu0 0.0
    %4379 = vmatprep.subr.mxu0 0.0
    %4380 = vmatpush2.xpose.msra.mxu0 0.0
    %4381 = vmatprep.subr.mxu0 0.0
    %4382 = vmatpush2.xpose.msra.mxu0 0.0
    %4383 = vmatprep.subr.mxu0 0.0
    %4384 = vmatpush2.xpose.msra.mxu0 0.0
    %4385 = vmatprep.mubr.f32.mxu0 0.0
    %4386 = vmatmul.mubr.f32.gmra.mxu0 %v1592
    %v4387 = vpop.f32.mrf.mxu0
    %v4388 = vadd.f32 0.0, %v4387
    %v4389 = vpop.f32.mrf.mxu0
    %4390 = vmatprep.mubr.f32.mxu0 0.0
    %4391 = vmatmul.mubr.f32.gmra.mxu0 %v1595
    %v4392 = vpop.f32.mrf.mxu0
    %v4393 = vadd.f32 0.0, %v4392
    %v4394 = vpop.f32.mrf.mxu0
    %4395 = vmatprep.mubr.f32.mxu0 0.0
    %4396 = vmatmul.mubr.f32.gmra.mxu0 %v1598
    %v4397 = vpop.f32.mrf.mxu0
    %v4398 = vadd.f32 0.0, %v4397
    %v4399 = vpop.f32.mrf.mxu0
    %4400 = vmatprep.mubr.f32.mxu0 0.0
    %4401 = vmatmul.mubr.f32.gmra.mxu0 %v1601
    %v4402 = vpop.f32.mrf.mxu0
    %v4403 = vadd.f32 0.0, %v4402
    %v4404 = vpop.f32.mrf.mxu0
    %4405 = vdwg.mxu0
    %4406 = vrot.lane.b32.xlu0 %v1177, 64
    %v4407 = vpop.permute.xlu0 %4406
    %4408 = vrot.lane.b32.xlu0 %v1178, 64
    %v4409 = vpop.permute.xlu0 %4408
    %4410 = vrot.lane.b32.xlu0 %v1179, 64
    %v4411 = vpop.permute.xlu0 %4410
    %4412 = vrot.lane.b32.xlu0 %v1180, 64
    %v4413 = vpop.permute.xlu0 %4412
    %v4414 = vsel %vm1590, %v4407, 0
    %v4416 = vsel %vm1590, %v4409, 0
    %v4418 = vsel %vm1590, %v4411, 0
    %v4420 = vsel %vm1590, %v4413, 0
    %4422 = vmatprep.subr.mxu0 0.0
    %4423 = vmatpush1.xpose.msra.mxu0 0.0
    %4424 = vmatprep.subr.mxu0 0.0
    %4425 = vmatpush1.xpose.msra.mxu0 0.0
    %4426 = vmatprep.subr.mxu0 0.0
    %4427 = vmatpush1.xpose.msra.mxu0 0.0
    %4428 = vmatprep.subr.mxu0 0.0
    %4429 = vmatpush1.xpose.msra.mxu0 0.0
    %4430 = vmatprep.subr.mxu0 0.0
    %4431 = vmatpush1.xpose.msra.mxu0 0.0
    %4432 = vmatprep.subr.mxu0 0.0
    %4433 = vmatpush1.xpose.msra.mxu0 0.0
    %4434 = vmatprep.subr.mxu0 0.0
    %4435 = vmatpush1.xpose.msra.mxu0 0.0
    %4436 = vmatprep.subr.mxu0 0.0
    %4437 = vmatpush1.xpose.msra.mxu0 0.0
    %4438 = vmatprep.subr.mxu0 0.0
    %4439 = vmatpush1.xpose.msra.mxu0 0.0
    %4440 = vmatprep.subr.mxu0 0.0
    %4441 = vmatpush1.xpose.msra.mxu0 0.0
    %4442 = vmatprep.subr.mxu0 0.0
    %4443 = vmatpush1.xpose.msra.mxu0 0.0
    %4444 = vmatprep.subr.mxu0 0.0
    %4445 = vmatpush1.xpose.msra.mxu0 0.0
    %4446 = vmatprep.subr.mxu0 0.0
    %4447 = vmatpush1.xpose.msra.mxu0 %v4420
    %4448 = vmatprep.subr.mxu0 0.0
    %4449 = vmatpush1.xpose.msra.mxu0 %v4418
    %4450 = vmatprep.subr.mxu0 0.0
    %4451 = vmatpush1.xpose.msra.mxu0 %v4416
    %4452 = vmatprep.subr.mxu0 0.0
    %4453 = vmatpush1.xpose.msra.mxu0 %v4414
    %4454 = vmatprep.subr.mxu0 0.0
    %4455 = vmatpush2.xpose.msra.mxu0 0.0
    %4456 = vmatprep.subr.mxu0 0.0
    %4457 = vmatpush2.xpose.msra.mxu0 0.0
    %4458 = vmatprep.subr.mxu0 0.0
    %4459 = vmatpush2.xpose.msra.mxu0 0.0
    %4460 = vmatprep.subr.mxu0 0.0
    %4461 = vmatpush2.xpose.msra.mxu0 0.0
    %4462 = vmatprep.subr.mxu0 0.0
    %4463 = vmatpush2.xpose.msra.mxu0 0.0
    %4464 = vmatprep.subr.mxu0 0.0
    %4465 = vmatpush2.xpose.msra.mxu0 0.0
    %4466 = vmatprep.subr.mxu0 0.0
    %4467 = vmatpush2.xpose.msra.mxu0 0.0
    %4468 = vmatprep.subr.mxu0 0.0
    %4469 = vmatpush2.xpose.msra.mxu0 0.0
    %4470 = vmatprep.subr.mxu0 0.0
    %4471 = vmatpush2.xpose.msra.mxu0 0.0
    %4472 = vmatprep.subr.mxu0 0.0
    %4473 = vmatpush2.xpose.msra.mxu0 0.0
    %4474 = vmatprep.subr.mxu0 0.0
    %4475 = vmatpush2.xpose.msra.mxu0 0.0
    %4476 = vmatprep.subr.mxu0 0.0
    %4477 = vmatpush2.xpose.msra.mxu0 0.0
    %4478 = vmatprep.subr.mxu0 0.0
    %4479 = vmatpush2.xpose.msra.mxu0 0.0
    %4480 = vmatprep.subr.mxu0 0.0
    %4481 = vmatpush2.xpose.msra.mxu0 0.0
    %4482 = vmatprep.subr.mxu0 0.0
    %4483 = vmatpush2.xpose.msra.mxu0 0.0
    %4484 = vmatprep.subr.mxu0 0.0
    %4485 = vmatpush2.xpose.msra.mxu0 0.0
    %4486 = vmatprep.mubr.f32.mxu0 0.0
    %4487 = vmatmul.mubr.f32.gmra.mxu0 %v4313
    %v4488 = vpop.f32.mrf.mxu0
    %v4489 = vadd.f32 %v4388, %v4488
    %v4490 = vpop.f32.mrf.mxu0
    %4491 = vmatprep.mubr.f32.mxu0 0.0
    %4492 = vmatmul.mubr.f32.gmra.mxu0 %v4315
    %v4493 = vpop.f32.mrf.mxu0
    %v4494 = vadd.f32 %v4393, %v4493
    %v4495 = vpop.f32.mrf.mxu0
    %4496 = vmatprep.mubr.f32.mxu0 0.0
    %4497 = vmatmul.mubr.f32.gmra.mxu0 %v4317
    %v4498 = vpop.f32.mrf.mxu0
    %v4499 = vadd.f32 %v4398, %v4498
    %v4500 = vpop.f32.mrf.mxu0
    %4501 = vmatprep.mubr.f32.mxu0 0.0
    %4502 = vmatmul.mubr.f32.gmra.mxu0 %v4319
    %v4503 = vpop.f32.mrf.mxu0
    %v4504 = vadd.f32 %v4403, %v4503
    %v4505 = vpop.f32.mrf.mxu0
    %4506 = vdwg.mxu0
    %v4507 = vsel %vm1590, %v4489, -inf
    %4508 = vmax.xlane.f32.xlu0 %v4507
    %v4509 = vpop.xlane.xlu0 %4508
    %v4510 = vsel %vm1590, %v4494, -inf
    %4511 = vmax.xlane.f32.xlu0 %v4510
    %v4512 = vpop.xlane.xlu0 %4511
    %v4513 = vsel %vm1590, %v4499, -inf
    %4514 = vmax.xlane.f32.xlu0 %v4513
    %v4515 = vpop.xlane.xlu0 %4514
    %v4516 = vsel %vm1590, %v4504, -inf
    %4517 = vmax.xlane.f32.xlu0 %v4516
    %v4518 = vpop.xlane.xlu0 %4517
    %v4519 = vsub.f32 %v4489, %v4509
    %v4520 = vsub.f32 %v4494, %v4512
    %v4521 = vsub.f32 %v4499, %v4515
    %v4522 = vsub.f32 %v4504, %v4518
    %v4523 = vmul.f32 %v4519, 1.442695
    %v4524 = vpow.pop %v4523
    %v4525 = vmul.f32 %v4520, 1.442695
    %v4526 = vpow.pop %v4525
    %v4527 = vmul.f32 %v4521, 1.442695
    %v4528 = vpow.pop %v4527
    %v4529 = vmul.f32 %v4522, 1.442695
    %v4530 = vpow.pop %v4529
    %v4531 = vsel %vm1590, %v4524, 0.0
    %4532 = vadd.xlane.f32.xlu0 %v4531
    %v4533 = vpop.xlane.xlu0 %4532
    %v4534 = vsel %vm1590, %v4526, 0.0
    %4535 = vadd.xlane.f32.xlu0 %v4534
    %v4536 = vpop.xlane.xlu0 %4535
    %v4537 = vsel %vm1590, %v4528, 0.0
    %4538 = vadd.xlane.f32.xlu0 %v4537
    %v4539 = vpop.xlane.xlu0 %4538
    %v4540 = vsel %vm1590, %v4530, 0.0
    %4541 = vadd.xlane.f32.xlu0 %v4540
    %v4542 = vpop.xlane.xlu0 %4541
    %v4543 = vrcp.pop %v4533
    %v4544 = vrcp.pop %v4536
    %v4545 = vrcp.pop %v4539
    %v4546 = vrcp.pop %v4542
    %v4547 = vmul.f32 %v4524, %v4543
    %v4548 = vmul.f32 %v4526, %v4544
    %v4549 = vmul.f32 %v4528, %v4545
    %v4550 = vmul.f32 %v4530, %v4546
    %4551 = vrot.lane.b32.xlu0 %v1557, 64
    %v4552 = vpop.permute.xlu0 %4551
    %4553 = vrot.lane.b32.xlu0 %v1558, 64
    %v4554 = vpop.permute.xlu0 %4553
    %4555 = vrot.lane.b32.xlu0 %v1559, 64
    %v4556 = vpop.permute.xlu0 %4555
    %4557 = vrot.lane.b32.xlu0 %v1560, 64
    %v4558 = vpop.permute.xlu0 %4557
    %v4564 = vsel %vm1590, %v4547, 0
    %v4567 = vsel %vm1590, %v4548, 0
    %v4570 = vsel %vm1590, %v4549, 0
    %v4573 = vsel %vm1590, %v4550, 0
    %4575 = vmatprep.subr.mxu0 0.0
    %4576 = vmatpush1.msra.mxu0 0.0
    %4577 = vmatprep.subr.mxu0 0.0
    %4578 = vmatpush1.msra.mxu0 0.0
    %4579 = vmatprep.subr.mxu0 0.0
    %4580 = vmatpush1.msra.mxu0 0.0
    %4581 = vmatprep.subr.mxu0 0.0
    %4582 = vmatpush1.msra.mxu0 0.0
    %4583 = vmatprep.subr.mxu0 0.0
    %4584 = vmatpush1.msra.mxu0 0.0
    %4585 = vmatprep.subr.mxu0 0.0
    %4586 = vmatpush1.msra.mxu0 0.0
    %4587 = vmatprep.subr.mxu0 0.0
    %4588 = vmatpush1.msra.mxu0 0.0
    %4589 = vmatprep.subr.mxu0 0.0
    %4590 = vmatpush1.msra.mxu0 0.0
    %4591 = vmatprep.subr.mxu0 0.0
    %4592 = vmatpush1.msra.mxu0 0.0
    %4593 = vmatprep.subr.mxu0 0.0
    %4594 = vmatpush1.msra.mxu0 0.0
    %4595 = vmatprep.subr.mxu0 0.0
    %4596 = vmatpush1.msra.mxu0 0.0
    %4597 = vmatprep.subr.mxu0 0.0
    %4598 = vmatpush1.msra.mxu0 0.0
    %4599 = vmatprep.subr.mxu0 0.0
    %4600 = vmatpush1.msra.mxu0 %v4558
    %4601 = vmatprep.subr.mxu0 0.0
    %4602 = vmatpush1.msra.mxu0 %v4556
    %4603 = vmatprep.subr.mxu0 0.0
    %4604 = vmatpush1.msra.mxu0 %v4554
    %4605 = vmatprep.subr.mxu0 0.0
    %4606 = vmatpush1.msra.mxu0 %v4552
    %4607 = vmatprep.subr.mxu0 0.0
    %4608 = vmatpush2.msra.mxu0 0.0
    %4609 = vmatprep.subr.mxu0 0.0
    %4610 = vmatpush2.msra.mxu0 0.0
    %4611 = vmatprep.subr.mxu0 0.0
    %4612 = vmatpush2.msra.mxu0 0.0
    %4613 = vmatprep.subr.mxu0 0.0
    %4614 = vmatpush2.msra.mxu0 0.0
    %4615 = vmatprep.subr.mxu0 0.0
    %4616 = vmatpush2.msra.mxu0 0.0
    %4617 = vmatprep.subr.mxu0 0.0
    %4618 = vmatpush2.msra.mxu0 0.0
    %4619 = vmatprep.subr.mxu0 0.0
    %4620 = vmatpush2.msra.mxu0 0.0
    %4621 = vmatprep.subr.mxu0 0.0
    %4622 = vmatpush2.msra.mxu0 0.0
    %4623 = vmatprep.subr.mxu0 0.0
    %4624 = vmatpush2.msra.mxu0 0.0
    %4625 = vmatprep.subr.mxu0 0.0
    %4626 = vmatpush2.msra.mxu0 0.0
    %4627 = vmatprep.subr.mxu0 0.0
    %4628 = vmatpush2.msra.mxu0 0.0
    %4629 = vmatprep.subr.mxu0 0.0
    %4630 = vmatpush2.msra.mxu0 0.0
    %4631 = vmatprep.subr.mxu0 0.0
    %4632 = vmatpush2.msra.mxu0 0.0
    %4633 = vmatprep.subr.mxu0 0.0
    %4634 = vmatpush2.msra.mxu0 0.0
    %4635 = vmatprep.subr.mxu0 0.0
    %4636 = vmatpush2.msra.mxu0 0.0
    %4637 = vmatprep.subr.mxu0 0.0
    %4638 = vmatpush2.msra.mxu0 0.0
    %4639 = vmatprep.mubr.f32.mxu0 0.0
    %4640 = vmatmul.mubr.f32.gmra.mxu0 %v4564
    %v4641 = vpop.f32.mrf.mxu0
    %v4642 = vadd.f32 0.0, %v4641
    %v4643 = vpop.f32.mrf.mxu0
    %4644 = vmatprep.mubr.f32.mxu0 0.0
    %4645 = vmatmul.mubr.f32.gmra.mxu0 %v4567
    %v4646 = vpop.f32.mrf.mxu0
    %v4647 = vadd.f32 0.0, %v4646
    %v4648 = vpop.f32.mrf.mxu0
    %4649 = vmatprep.mubr.f32.mxu0 0.0
    %4650 = vmatmul.mubr.f32.gmra.mxu0 %v4570
    %v4651 = vpop.f32.mrf.mxu0
    %v4652 = vadd.f32 0.0, %v4651
    %v4653 = vpop.f32.mrf.mxu0
    %4654 = vmatprep.mubr.f32.mxu0 0.0
    %4655 = vmatmul.mubr.f32.gmra.mxu0 %v4573
    %v4656 = vpop.f32.mrf.mxu0
    %v4657 = vadd.f32 0.0, %v4656
    %v4658 = vpop.f32.mrf.mxu0
    %4659 = vdwg.mxu0
    %v4661 = vsel %vm1590, %v4642, 0
    %v4664 = vsel %vm1590, %v4647, 0
    %v4667 = vsel %vm1590, %v4652, 0
    %v4670 = vsel %vm1590, %v4657, 0
    %4672 = vmatprep.subr.mxu0 0.0
    %4673 = vmatpush1.msra.mxu0 0.0
    %4674 = vmatprep.subr.mxu0 0.0
    %4675 = vmatpush1.msra.mxu0 0.0
    %4676 = vmatprep.subr.mxu0 0.0
    %4677 = vmatpush1.msra.mxu0 0.0
    %4678 = vmatprep.subr.mxu0 0.0
    %4679 = vmatpush1.msra.mxu0 0.0
    %4680 = vmatprep.subr.mxu0 0.0
    %4681 = vmatpush1.msra.mxu0 0.0
    %4682 = vmatprep.subr.mxu0 0.0
    %4683 = vmatpush1.msra.mxu0 0.0
    %4684 = vmatprep.subr.mxu0 0.0
    %4685 = vmatpush1.msra.mxu0 0.0
    %4686 = vmatprep.subr.mxu0 0.0
    %4687 = vmatpush1.msra.mxu0 0.0
    %4688 = vmatprep.subr.mxu0 0.0
    %4689 = vmatpush1.msra.mxu0 0.0
    %4690 = vmatprep.subr.mxu0 0.0
    %4691 = vmatpush1.msra.mxu0 0.0
    %4692 = vmatprep.subr.mxu0 0.0
    %4693 = vmatpush1.msra.mxu0 0.0
    %4694 = vmatprep.subr.mxu0 0.0
    %4695 = vmatpush1.msra.mxu0 0.0
    %4696 = vmatprep.subr.mxu0 0.0
    %4697 = vmatpush1.msra.mxu0 %v1580
    %4698 = vmatprep.subr.mxu0 0.0
    %4699 = vmatpush1.msra.mxu0 %v1579
    %4700 = vmatprep.subr.mxu0 0.0
    %4701 = vmatpush1.msra.mxu0 %v1578
    %4702 = vmatprep.subr.mxu0 0.0
    %4703 = vmatpush1.msra.mxu0 %v1577
    %4704 = vmatprep.subr.mxu0 0.0
    %4705 = vmatpush2.msra.mxu0 0.0
    %4706 = vmatprep.subr.mxu0 0.0
    %4707 = vmatpush2.msra.mxu0 0.0
    %4708 = vmatprep.subr.mxu0 0.0
    %4709 = vmatpush2.msra.mxu0 0.0
    %4710 = vmatprep.subr.mxu0 0.0
    %4711 = vmatpush2.msra.mxu0 0.0
    %4712 = vmatprep.subr.mxu0 0.0
    %4713 = vmatpush2.msra.mxu0 0.0
    %4714 = vmatprep.subr.mxu0 0.0
    %4715 = vmatpush2.msra.mxu0 0.0
    %4716 = vmatprep.subr.mxu0 0.0
    %4717 = vmatpush2.msra.mxu0 0.0
    %4718 = vmatprep.subr.mxu0 0.0
    %4719 = vmatpush2.msra.mxu0 0.0
    %4720 = vmatprep.subr.mxu0 0.0
    %4721 = vmatpush2.msra.mxu0 0.0
    %4722 = vmatprep.subr.mxu0 0.0
    %4723 = vmatpush2.msra.mxu0 0.0
    %4724 = vmatprep.subr.mxu0 0.0
    %4725 = vmatpush2.msra.mxu0 0.0
    %4726 = vmatprep.subr.mxu0 0.0
    %4727 = vmatpush2.msra.mxu0 0.0
    %4728 = vmatprep.subr.mxu0 0.0
    %4729 = vmatpush2.msra.mxu0 0.0
    %4730 = vmatprep.subr.mxu0 0.0
    %4731 = vmatpush2.msra.mxu0 0.0
    %4732 = vmatprep.subr.mxu0 0.0
    %4733 = vmatpush2.msra.mxu0 0.0
    %4734 = vmatprep.subr.mxu0 0.0
    %4735 = vmatpush2.msra.mxu0 0.0
    %4736 = vmatprep.mubr.f32.mxu0 0.0
    %4737 = vmatmul.mubr.f32.gmra.mxu0 %v4661
    %v4738 = vpop.f32.mrf.mxu0
    %v4739 = vadd.f32 0.0, %v4738
    %v4740 = vpop.f32.mrf.mxu0
    %4741 = vmatprep.mubr.f32.mxu0 0.0
    %4742 = vmatmul.mubr.f32.gmra.mxu0 %v4664
    %v4743 = vpop.f32.mrf.mxu0
    %v4744 = vadd.f32 0.0, %v4743
    %v4745 = vpop.f32.mrf.mxu0
    %4746 = vmatprep.mubr.f32.mxu0 0.0
    %4747 = vmatmul.mubr.f32.gmra.mxu0 %v4667
    %v4748 = vpop.f32.mrf.mxu0
    %v4749 = vadd.f32 0.0, %v4748
    %v4750 = vpop.f32.mrf.mxu0
    %4751 = vmatprep.mubr.f32.mxu0 0.0
    %4752 = vmatmul.mubr.f32.gmra.mxu0 %v4670
    %v4753 = vpop.f32.mrf.mxu0
    %v4754 = vadd.f32 0.0, %v4753
    %v4755 = vpop.f32.mrf.mxu0
    %4756 = vdwg.mxu0
    %v4757 = vadd.f32 %v4287, %v4739
    %v4758 = vadd.f32 %v4292, %v4744
    %v4759 = vadd.f32 %v4297, %v4749
    %v4760 = vadd.f32 %v4302, %v4754
    %4761 = vrot.lane.b32.xlu0 %v797, 32
    %v4762 = vpop.permute.xlu0 %4761
    %4763 = vrot.lane.b32.xlu0 %v798, 32
    %v4764 = vpop.permute.xlu0 %4763
    %4765 = vrot.lane.b32.xlu0 %v799, 32
    %v4766 = vpop.permute.xlu0 %4765
    %4767 = vrot.lane.b32.xlu0 %v800, 32
    %v4768 = vpop.permute.xlu0 %4767
    %v4769 = vsel %vm1590, %v4762, 0
    %v4771 = vsel %vm1590, %v4764, 0
    %v4773 = vsel %vm1590, %v4766, 0
    %v4775 = vsel %vm1590, %v4768, 0
    %4777 = vmatprep.subr.mxu0 0.0
    %4778 = vmatpush1.xpose.msra.mxu0 0.0
    %4779 = vmatprep.subr.mxu0 0.0
    %4780 = vmatpush1.xpose.msra.mxu0 0.0
    %4781 = vmatprep.subr.mxu0 0.0
    %4782 = vmatpush1.xpose.msra.mxu0 0.0
    %4783 = vmatprep.subr.mxu0 0.0
    %4784 = vmatpush1.xpose.msra.mxu0 0.0
    %4785 = vmatprep.subr.mxu0 0.0
    %4786 = vmatpush1.xpose.msra.mxu0 0.0
    %4787 = vmatprep.subr.mxu0 0.0
    %4788 = vmatpush1.xpose.msra.mxu0 0.0
    %4789 = vmatprep.subr.mxu0 0.0
    %4790 = vmatpush1.xpose.msra.mxu0 0.0
    %4791 = vmatprep.subr.mxu0 0.0
    %4792 = vmatpush1.xpose.msra.mxu0 0.0
    %4793 = vmatprep.subr.mxu0 0.0
    %4794 = vmatpush1.xpose.msra.mxu0 0.0
    %4795 = vmatprep.subr.mxu0 0.0
    %4796 = vmatpush1.xpose.msra.mxu0 0.0
    %4797 = vmatprep.subr.mxu0 0.0
    %4798 = vmatpush1.xpose.msra.mxu0 0.0
    %4799 = vmatprep.subr.mxu0 0.0
    %4800 = vmatpush1.xpose.msra.mxu0 0.0
    %4801 = vmatprep.subr.mxu0 0.0
    %4802 = vmatpush1.xpose.msra.mxu0 %v4775
    %4803 = vmatprep.subr.mxu0 0.0
    %4804 = vmatpush1.xpose.msra.mxu0 %v4773
    %4805 = vmatprep.subr.mxu0 0.0
    %4806 = vmatpush1.xpose.msra.mxu0 %v4771
    %4807 = vmatprep.subr.mxu0 0.0
    %4808 = vmatpush1.xpose.msra.mxu0 %v4769
    %4809 = vmatprep.subr.mxu0 0.0
    %4810 = vmatpush2.xpose.msra.mxu0 0.0
    %4811 = vmatprep.subr.mxu0 0.0
    %4812 = vmatpush2.xpose.msra.mxu0 0.0
    %4813 = vmatprep.subr.mxu0 0.0
    %4814 = vmatpush2.xpose.msra.mxu0 0.0
    %4815 = vmatprep.subr.mxu0 0.0
    %4816 = vmatpush2.xpose.msra.mxu0 0.0
    %4817 = vmatprep.subr.mxu0 0.0
    %4818 = vmatpush2.xpose.msra.mxu0 0.0
    %4819 = vmatprep.subr.mxu0 0.0
    %4820 = vmatpush2.xpose.msra.mxu0 0.0
    %4821 = vmatprep.subr.mxu0 0.0
    %4822 = vmatpush2.xpose.msra.mxu0 0.0
    %4823 = vmatprep.subr.mxu0 0.0
    %4824 = vmatpush2.xpose.msra.mxu0 0.0
    %4825 = vmatprep.subr.mxu0 0.0
    %4826 = vmatpush2.xpose.msra.mxu0 0.0
    %4827 = vmatprep.subr.mxu0 0.0
    %4828 = vmatpush2.xpose.msra.mxu0 0.0
    %4829 = vmatprep.subr.mxu0 0.0
    %4830 = vmatpush2.xpose.msra.mxu0 0.0
    %4831 = vmatprep.subr.mxu0 0.0
    %4832 = vmatpush2.xpose.msra.mxu0 0.0
    %4833 = vmatprep.subr.mxu0 0.0
    %4834 = vmatpush2.xpose.msra.mxu0 0.0
    %4835 = vmatprep.subr.mxu0 0.0
    %4836 = vmatpush2.xpose.msra.mxu0 0.0
    %4837 = vmatprep.subr.mxu0 0.0
    %4838 = vmatpush2.xpose.msra.mxu0 0.0
    %4839 = vmatprep.subr.mxu0 0.0
    %4840 = vmatpush2.xpose.msra.mxu0 0.0
    %4841 = vmatprep.mubr.f32.mxu0 0.0
    %4842 = vmatmul.mubr.f32.gmra.mxu0 %v1592
    %v4843 = vpop.f32.mrf.mxu0
    %v4844 = vadd.f32 0.0, %v4843
    %v4845 = vpop.f32.mrf.mxu0
    %4846 = vmatprep.mubr.f32.mxu0 0.0
    %4847 = vmatmul.mubr.f32.gmra.mxu0 %v1595
    %v4848 = vpop.f32.mrf.mxu0
    %v4849 = vadd.f32 0.0, %v4848
    %v4850 = vpop.f32.mrf.mxu0
    %4851 = vmatprep.mubr.f32.mxu0 0.0
    %4852 = vmatmul.mubr.f32.gmra.mxu0 %v1598
    %v4853 = vpop.f32.mrf.mxu0
    %v4854 = vadd.f32 0.0, %v4853
    %v4855 = vpop.f32.mrf.mxu0
    %4856 = vmatprep.mubr.f32.mxu0 0.0
    %4857 = vmatmul.mubr.f32.gmra.mxu0 %v1601
    %v4858 = vpop.f32.mrf.mxu0
    %v4859 = vadd.f32 0.0, %v4858
    %v4860 = vpop.f32.mrf.mxu0
    %4861 = vdwg.mxu0
    %4862 = vrot.lane.b32.xlu0 %v1177, 32
    %v4863 = vpop.permute.xlu0 %4862
    %4864 = vrot.lane.b32.xlu0 %v1178, 32
    %v4865 = vpop.permute.xlu0 %4864
    %4866 = vrot.lane.b32.xlu0 %v1179, 32
    %v4867 = vpop.permute.xlu0 %4866
    %4868 = vrot.lane.b32.xlu0 %v1180, 32
    %v4869 = vpop.permute.xlu0 %4868
    %v4870 = vsel %vm1590, %v4863, 0
    %v4872 = vsel %vm1590, %v4865, 0
    %v4874 = vsel %vm1590, %v4867, 0
    %v4876 = vsel %vm1590, %v4869, 0
    %4878 = vmatprep.subr.mxu0 0.0
    %4879 = vmatpush1.xpose.msra.mxu0 0.0
    %4880 = vmatprep.subr.mxu0 0.0
    %4881 = vmatpush1.xpose.msra.mxu0 0.0
    %4882 = vmatprep.subr.mxu0 0.0
    %4883 = vmatpush1.xpose.msra.mxu0 0.0
    %4884 = vmatprep.subr.mxu0 0.0
    %4885 = vmatpush1.xpose.msra.mxu0 0.0
    %4886 = vmatprep.subr.mxu0 0.0
    %4887 = vmatpush1.xpose.msra.mxu0 0.0
    %4888 = vmatprep.subr.mxu0 0.0
    %4889 = vmatpush1.xpose.msra.mxu0 0.0
    %4890 = vmatprep.subr.mxu0 0.0
    %4891 = vmatpush1.xpose.msra.mxu0 0.0
    %4892 = vmatprep.subr.mxu0 0.0
    %4893 = vmatpush1.xpose.msra.mxu0 0.0
    %4894 = vmatprep.subr.mxu0 0.0
    %4895 = vmatpush1.xpose.msra.mxu0 0.0
    %4896 = vmatprep.subr.mxu0 0.0
    %4897 = vmatpush1.xpose.msra.mxu0 0.0
    %4898 = vmatprep.subr.mxu0 0.0
    %4899 = vmatpush1.xpose.msra.mxu0 0.0
    %4900 = vmatprep.subr.mxu0 0.0
    %4901 = vmatpush1.xpose.msra.mxu0 0.0
    %4902 = vmatprep.subr.mxu0 0.0
    %4903 = vmatpush1.xpose.msra.mxu0 %v4876
    %4904 = vmatprep.subr.mxu0 0.0
    %4905 = vmatpush1.xpose.msra.mxu0 %v4874
    %4906 = vmatprep.subr.mxu0 0.0
    %4907 = vmatpush1.xpose.msra.mxu0 %v4872
    %4908 = vmatprep.subr.mxu0 0.0
    %4909 = vmatpush1.xpose.msra.mxu0 %v4870
    %4910 = vmatprep.subr.mxu0 0.0
    %4911 = vmatpush2.xpose.msra.mxu0 0.0
    %4912 = vmatprep.subr.mxu0 0.0
    %4913 = vmatpush2.xpose.msra.mxu0 0.0
    %4914 = vmatprep.subr.mxu0 0.0
    %4915 = vmatpush2.xpose.msra.mxu0 0.0
    %4916 = vmatprep.subr.mxu0 0.0
    %4917 = vmatpush2.xpose.msra.mxu0 0.0
    %4918 = vmatprep.subr.mxu0 0.0
    %4919 = vmatpush2.xpose.msra.mxu0 0.0
    %4920 = vmatprep.subr.mxu0 0.0
    %4921 = vmatpush2.xpose.msra.mxu0 0.0
    %4922 = vmatprep.subr.mxu0 0.0
    %4923 = vmatpush2.xpose.msra.mxu0 0.0
    %4924 = vmatprep.subr.mxu0 0.0
    %4925 = vmatpush2.xpose.msra.mxu0 0.0
    %4926 = vmatprep.subr.mxu0 0.0
    %4927 = vmatpush2.xpose.msra.mxu0 0.0
    %4928 = vmatprep.subr.mxu0 0.0
    %4929 = vmatpush2.xpose.msra.mxu0 0.0
    %4930 = vmatprep.subr.mxu0 0.0
    %4931 = vmatpush2.xpose.msra.mxu0 0.0
    %4932 = vmatprep.subr.mxu0 0.0
    %4933 = vmatpush2.xpose.msra.mxu0 0.0
    %4934 = vmatprep.subr.mxu0 0.0
    %4935 = vmatpush2.xpose.msra.mxu0 0.0
    %4936 = vmatprep.subr.mxu0 0.0
    %4937 = vmatpush2.xpose.msra.mxu0 0.0
    %4938 = vmatprep.subr.mxu0 0.0
    %4939 = vmatpush2.xpose.msra.mxu0 0.0
    %4940 = vmatprep.subr.mxu0 0.0
    %4941 = vmatpush2.xpose.msra.mxu0 0.0
    %4942 = vmatprep.mubr.f32.mxu0 0.0
    %4943 = vmatmul.mubr.f32.gmra.mxu0 %v4769
    %v4944 = vpop.f32.mrf.mxu0
    %v4945 = vadd.f32 %v4844, %v4944
    %v4946 = vpop.f32.mrf.mxu0
    %4947 = vmatprep.mubr.f32.mxu0 0.0
    %4948 = vmatmul.mubr.f32.gmra.mxu0 %v4771
    %v4949 = vpop.f32.mrf.mxu0
    %v4950 = vadd.f32 %v4849, %v4949
    %v4951 = vpop.f32.mrf.mxu0
    %4952 = vmatprep.mubr.f32.mxu0 0.0
    %4953 = vmatmul.mubr.f32.gmra.mxu0 %v4773
    %v4954 = vpop.f32.mrf.mxu0
    %v4955 = vadd.f32 %v4854, %v4954
    %v4956 = vpop.f32.mrf.mxu0
    %4957 = vmatprep.mubr.f32.mxu0 0.0
    %4958 = vmatmul.mubr.f32.gmra.mxu0 %v4775
    %v4959 = vpop.f32.mrf.mxu0
    %v4960 = vadd.f32 %v4859, %v4959
    %v4961 = vpop.f32.mrf.mxu0
    %4962 = vdwg.mxu0
    %v4963 = vsel %vm1590, %v4945, -inf
    %4964 = vmax.xlane.f32.xlu0 %v4963
    %v4965 = vpop.xlane.xlu0 %4964
    %v4966 = vsel %vm1590, %v4950, -inf
    %4967 = vmax.xlane.f32.xlu0 %v4966
    %v4968 = vpop.xlane.xlu0 %4967
    %v4969 = vsel %vm1590, %v4955, -inf
    %4970 = vmax.xlane.f32.xlu0 %v4969
    %v4971 = vpop.xlane.xlu0 %4970
    %v4972 = vsel %vm1590, %v4960, -inf
    %4973 = vmax.xlane.f32.xlu0 %v4972
    %v4974 = vpop.xlane.xlu0 %4973
    %v4975 = vsub.f32 %v4945, %v4965
    %v4976 = vsub.f32 %v4950, %v4968
    %v4977 = vsub.f32 %v4955, %v4971
    %v4978 = vsub.f32 %v4960, %v4974
    %v4979 = vmul.f32 %v4975, 1.442695
    %v4980 = vpow.pop %v4979
    %v4981 = vmul.f32 %v4976, 1.442695
    %v4982 = vpow.pop %v4981
    %v4983 = vmul.f32 %v4977, 1.442695
    %v4984 = vpow.pop %v4983
    %v4985 = vmul.f32 %v4978, 1.442695
    %v4986 = vpow.pop %v4985
    %v4987 = vsel %vm1590, %v4980, 0.0
    %4988 = vadd.xlane.f32.xlu0 %v4987
    %v4989 = vpop.xlane.xlu0 %4988
    %v4990 = vsel %vm1590, %v4982, 0.0
    %4991 = vadd.xlane.f32.xlu0 %v4990
    %v4992 = vpop.xlane.xlu0 %4991
    %v4993 = vsel %vm1590, %v4984, 0.0
    %4994 = vadd.xlane.f32.xlu0 %v4993
    %v4995 = vpop.xlane.xlu0 %4994
    %v4996 = vsel %vm1590, %v4986, 0.0
    %4997 = vadd.xlane.f32.xlu0 %v4996
    %v4998 = vpop.xlane.xlu0 %4997
    %v4999 = vrcp.pop %v4989
    %v5000 = vrcp.pop %v4992
    %v5001 = vrcp.pop %v4995
    %v5002 = vrcp.pop %v4998
    %v5003 = vmul.f32 %v4980, %v4999
    %v5004 = vmul.f32 %v4982, %v5000
    %v5005 = vmul.f32 %v4984, %v5001
    %v5006 = vmul.f32 %v4986, %v5002
    %5007 = vrot.lane.b32.xlu0 %v1557, 32
    %v5008 = vpop.permute.xlu0 %5007
    %5009 = vrot.lane.b32.xlu0 %v1558, 32
    %v5010 = vpop.permute.xlu0 %5009
    %5011 = vrot.lane.b32.xlu0 %v1559, 32
    %v5012 = vpop.permute.xlu0 %5011
    %5013 = vrot.lane.b32.xlu0 %v1560, 32
    %v5014 = vpop.permute.xlu0 %5013
    %v5020 = vsel %vm1590, %v5003, 0
    %v5023 = vsel %vm1590, %v5004, 0
    %v5026 = vsel %vm1590, %v5005, 0
    %v5029 = vsel %vm1590, %v5006, 0
    %5031 = vmatprep.subr.mxu0 0.0
    %5032 = vmatpush1.msra.mxu0 0.0
    %5033 = vmatprep.subr.mxu0 0.0
    %5034 = vmatpush1.msra.mxu0 0.0
    %5035 = vmatprep.subr.mxu0 0.0
    %5036 = vmatpush1.msra.mxu0 0.0
    %5037 = vmatprep.subr.mxu0 0.0
    %5038 = vmatpush1.msra.mxu0 0.0
    %5039 = vmatprep.subr.mxu0 0.0
    %5040 = vmatpush1.msra.mxu0 0.0
    %5041 = vmatprep.subr.mxu0 0.0
    %5042 = vmatpush1.msra.mxu0 0.0
    %5043 = vmatprep.subr.mxu0 0.0
    %5044 = vmatpush1.msra.mxu0 0.0
    %5045 = vmatprep.subr.mxu0 0.0
    %5046 = vmatpush1.msra.mxu0 0.0
    %5047 = vmatprep.subr.mxu0 0.0
    %5048 = vmatpush1.msra.mxu0 0.0
    %5049 = vmatprep.subr.mxu0 0.0
    %5050 = vmatpush1.msra.mxu0 0.0
    %5051 = vmatprep.subr.mxu0 0.0
    %5052 = vmatpush1.msra.mxu0 0.0
    %5053 = vmatprep.subr.mxu0 0.0
    %5054 = vmatpush1.msra.mxu0 0.0
    %5055 = vmatprep.subr.mxu0 0.0
    %5056 = vmatpush1.msra.mxu0 %v5014
    %5057 = vmatprep.subr.mxu0 0.0
    %5058 = vmatpush1.msra.mxu0 %v5012
    %5059 = vmatprep.subr.mxu0 0.0
    %5060 = vmatpush1.msra.mxu0 %v5010
    %5061 = vmatprep.subr.mxu0 0.0
    %5062 = vmatpush1.msra.mxu0 %v5008
    %5063 = vmatprep.subr.mxu0 0.0
    %5064 = vmatpush2.msra.mxu0 0.0
    %5065 = vmatprep.subr.mxu0 0.0
    %5066 = vmatpush2.msra.mxu0 0.0
    %5067 = vmatprep.subr.mxu0 0.0
    %5068 = vmatpush2.msra.mxu0 0.0
    %5069 = vmatprep.subr.mxu0 0.0
    %5070 = vmatpush2.msra.mxu0 0.0
    %5071 = vmatprep.subr.mxu0 0.0
    %5072 = vmatpush2.msra.mxu0 0.0
    %5073 = vmatprep.subr.mxu0 0.0
    %5074 = vmatpush2.msra.mxu0 0.0
    %5075 = vmatprep.subr.mxu0 0.0
    %5076 = vmatpush2.msra.mxu0 0.0
    %5077 = vmatprep.subr.mxu0 0.0
    %5078 = vmatpush2.msra.mxu0 0.0
    %5079 = vmatprep.subr.mxu0 0.0
    %5080 = vmatpush2.msra.mxu0 0.0
    %5081 = vmatprep.subr.mxu0 0.0
    %5082 = vmatpush2.msra.mxu0 0.0
    %5083 = vmatprep.subr.mxu0 0.0
    %5084 = vmatpush2.msra.mxu0 0.0
    %5085 = vmatprep.subr.mxu0 0.0
    %5086 = vmatpush2.msra.mxu0 0.0
    %5087 = vmatprep.subr.mxu0 0.0
    %5088 = vmatpush2.msra.mxu0 0.0
    %5089 = vmatprep.subr.mxu0 0.0
    %5090 = vmatpush2.msra.mxu0 0.0
    %5091 = vmatprep.subr.mxu0 0.0
    %5092 = vmatpush2.msra.mxu0 0.0
    %5093 = vmatprep.subr.mxu0 0.0
    %5094 = vmatpush2.msra.mxu0 0.0
    %5095 = vmatprep.mubr.f32.mxu0 0.0
    %5096 = vmatmul.mubr.f32.gmra.mxu0 %v5020
    %v5097 = vpop.f32.mrf.mxu0
    %v5098 = vadd.f32 0.0, %v5097
    %v5099 = vpop.f32.mrf.mxu0
    %5100 = vmatprep.mubr.f32.mxu0 0.0
    %5101 = vmatmul.mubr.f32.gmra.mxu0 %v5023
    %v5102 = vpop.f32.mrf.mxu0
    %v5103 = vadd.f32 0.0, %v5102
    %v5104 = vpop.f32.mrf.mxu0
    %5105 = vmatprep.mubr.f32.mxu0 0.0
    %5106 = vmatmul.mubr.f32.gmra.mxu0 %v5026
    %v5107 = vpop.f32.mrf.mxu0
    %v5108 = vadd.f32 0.0, %v5107
    %v5109 = vpop.f32.mrf.mxu0
    %5110 = vmatprep.mubr.f32.mxu0 0.0
    %5111 = vmatmul.mubr.f32.gmra.mxu0 %v5029
    %v5112 = vpop.f32.mrf.mxu0
    %v5113 = vadd.f32 0.0, %v5112
    %v5114 = vpop.f32.mrf.mxu0
    %5115 = vdwg.mxu0
    %v5117 = vsel %vm1590, %v5098, 0
    %v5120 = vsel %vm1590, %v5103, 0
    %v5123 = vsel %vm1590, %v5108, 0
    %v5126 = vsel %vm1590, %v5113, 0
    %5128 = vmatprep.subr.mxu0 0.0
    %5129 = vmatpush1.msra.mxu0 0.0
    %5130 = vmatprep.subr.mxu0 0.0
    %5131 = vmatpush1.msra.mxu0 0.0
    %5132 = vmatprep.subr.mxu0 0.0
    %5133 = vmatpush1.msra.mxu0 0.0
    %5134 = vmatprep.subr.mxu0 0.0
    %5135 = vmatpush1.msra.mxu0 0.0
    %5136 = vmatprep.subr.mxu0 0.0
    %5137 = vmatpush1.msra.mxu0 0.0
    %5138 = vmatprep.subr.mxu0 0.0
    %5139 = vmatpush1.msra.mxu0 0.0
    %5140 = vmatprep.subr.mxu0 0.0
    %5141 = vmatpush1.msra.mxu0 0.0
    %5142 = vmatprep.subr.mxu0 0.0
    %5143 = vmatpush1.msra.mxu0 0.0
    %5144 = vmatprep.subr.mxu0 0.0
    %5145 = vmatpush1.msra.mxu0 0.0
    %5146 = vmatprep.subr.mxu0 0.0
    %5147 = vmatpush1.msra.mxu0 0.0
    %5148 = vmatprep.subr.mxu0 0.0
    %5149 = vmatpush1.msra.mxu0 0.0
    %5150 = vmatprep.subr.mxu0 0.0
    %5151 = vmatpush1.msra.mxu0 0.0
    %5152 = vmatprep.subr.mxu0 0.0
    %5153 = vmatpush1.msra.mxu0 %v1584
    %5154 = vmatprep.subr.mxu0 0.0
    %5155 = vmatpush1.msra.mxu0 %v1583
    %5156 = vmatprep.subr.mxu0 0.0
    %5157 = vmatpush1.msra.mxu0 %v1582
    %5158 = vmatprep.subr.mxu0 0.0
    %5159 = vmatpush1.msra.mxu0 %v1581
    %5160 = vmatprep.subr.mxu0 0.0
    %5161 = vmatpush2.msra.mxu0 0.0
    %5162 = vmatprep.subr.mxu0 0.0
    %5163 = vmatpush2.msra.mxu0 0.0
    %5164 = vmatprep.subr.mxu0 0.0
    %5165 = vmatpush2.msra.mxu0 0.0
    %5166 = vmatprep.subr.mxu0 0.0
    %5167 = vmatpush2.msra.mxu0 0.0
    %5168 = vmatprep.subr.mxu0 0.0
    %5169 = vmatpush2.msra.mxu0 0.0
    %5170 = vmatprep.subr.mxu0 0.0
    %5171 = vmatpush2.msra.mxu0 0.0
    %5172 = vmatprep.subr.mxu0 0.0
    %5173 = vmatpush2.msra.mxu0 0.0
    %5174 = vmatprep.subr.mxu0 0.0
    %5175 = vmatpush2.msra.mxu0 0.0
    %5176 = vmatprep.subr.mxu0 0.0
    %5177 = vmatpush2.msra.mxu0 0.0
    %5178 = vmatprep.subr.mxu0 0.0
    %5179 = vmatpush2.msra.mxu0 0.0
    %5180 = vmatprep.subr.mxu0 0.0
    %5181 = vmatpush2.msra.mxu0 0.0
    %5182 = vmatprep.subr.mxu0 0.0
    %5183 = vmatpush2.msra.mxu0 0.0
    %5184 = vmatprep.subr.mxu0 0.0
    %5185 = vmatpush2.msra.mxu0 0.0
    %5186 = vmatprep.subr.mxu0 0.0
    %5187 = vmatpush2.msra.mxu0 0.0
    %5188 = vmatprep.subr.mxu0 0.0
    %5189 = vmatpush2.msra.mxu0 0.0
    %5190 = vmatprep.subr.mxu0 0.0
    %5191 = vmatpush2.msra.mxu0 0.0
    %5192 = vmatprep.mubr.f32.mxu0 0.0
    %5193 = vmatmul.mubr.f32.gmra.mxu0 %v5117
    %v5194 = vpop.f32.mrf.mxu0
    %v5195 = vadd.f32 0.0, %v5194
    %v5196 = vpop.f32.mrf.mxu0
    %5197 = vmatprep.mubr.f32.mxu0 0.0
    %5198 = vmatmul.mubr.f32.gmra.mxu0 %v5120
    %v5199 = vpop.f32.mrf.mxu0
    %v5200 = vadd.f32 0.0, %v5199
    %v5201 = vpop.f32.mrf.mxu0
    %5202 = vmatprep.mubr.f32.mxu0 0.0
    %5203 = vmatmul.mubr.f32.gmra.mxu0 %v5123
    %v5204 = vpop.f32.mrf.mxu0
    %v5205 = vadd.f32 0.0, %v5204
    %v5206 = vpop.f32.mrf.mxu0
    %5207 = vmatprep.mubr.f32.mxu0 0.0
    %5208 = vmatmul.mubr.f32.gmra.mxu0 %v5126
    %v5209 = vpop.f32.mrf.mxu0
    %v5210 = vadd.f32 0.0, %v5209
    %v5211 = vpop.f32.mrf.mxu0
    %5212 = vdwg.mxu0
    %v5213 = vadd.f32 %v4757, %v5195
    %v5214 = vadd.f32 %v4758, %v5200
    %v5215 = vadd.f32 %v4759, %v5205
    %v5216 = vadd.f32 %v4760, %v5210
    %v5217 = vadd.f32 %v5213, %v3407
    %v5218 = vadd.f32 %v5214, %v3407
    %v5219 = vadd.f32 %v5215, %v3407
    %v5220 = vadd.f32 %v5216, %v3407
    %5221 = vst [vmem:[#allocation17 + $0x20] sm:$0xff] %v5217
    %5222 = vst [vmem:[#allocation17 + $0x28] sm:$0xff] %v5218
    %5223 = vst [vmem:[#allocation17 + $0x30] sm:$0xff] %v5219
    %5224 = vst [vmem:[#allocation17 + $0x38] sm:$0xff] %v5220
    %v5226 = vsel %vm1590, %v801, 0
    %v5229 = vsel %vm1590, %v802, 0
    %v5232 = vsel %vm1590, %v803, 0
    %v5235 = vsel %vm1590, %v804, 0
    %5237 = vmatprep.subr.mxu0 0.0
    %5238 = vmatpush1.xpose.msra.mxu0 0.0
    %5239 = vmatprep.subr.mxu0 0.0
    %5240 = vmatpush1.xpose.msra.mxu0 0.0
    %5241 = vmatprep.subr.mxu0 0.0
    %5242 = vmatpush1.xpose.msra.mxu0 0.0
    %5243 = vmatprep.subr.mxu0 0.0
    %5244 = vmatpush1.xpose.msra.mxu0 0.0
    %5245 = vmatprep.subr.mxu0 0.0
    %5246 = vmatpush1.xpose.msra.mxu0 0.0
    %5247 = vmatprep.subr.mxu0 0.0
    %5248 = vmatpush1.xpose.msra.mxu0 0.0
    %5249 = vmatprep.subr.mxu0 0.0
    %5250 = vmatpush1.xpose.msra.mxu0 0.0
    %5251 = vmatprep.subr.mxu0 0.0
    %5252 = vmatpush1.xpose.msra.mxu0 0.0
    %5253 = vmatprep.subr.mxu0 0.0
    %5254 = vmatpush1.xpose.msra.mxu0 0.0
    %5255 = vmatprep.subr.mxu0 0.0
    %5256 = vmatpush1.xpose.msra.mxu0 0.0
    %5257 = vmatprep.subr.mxu0 0.0
    %5258 = vmatpush1.xpose.msra.mxu0 0.0
    %5259 = vmatprep.subr.mxu0 0.0
    %5260 = vmatpush1.xpose.msra.mxu0 0.0
    %5261 = vmatprep.subr.mxu0 0.0
    %5262 = vmatpush1.xpose.msra.mxu0 %v5235
    %5263 = vmatprep.subr.mxu0 0.0
    %5264 = vmatpush1.xpose.msra.mxu0 %v5232
    %5265 = vmatprep.subr.mxu0 0.0
    %5266 = vmatpush1.xpose.msra.mxu0 %v5229
    %5267 = vmatprep.subr.mxu0 0.0
    %5268 = vmatpush1.xpose.msra.mxu0 %v5226
    %5269 = vmatprep.subr.mxu0 0.0
    %5270 = vmatpush2.xpose.msra.mxu0 0.0
    %5271 = vmatprep.subr.mxu0 0.0
    %5272 = vmatpush2.xpose.msra.mxu0 0.0
    %5273 = vmatprep.subr.mxu0 0.0
    %5274 = vmatpush2.xpose.msra.mxu0 0.0
    %5275 = vmatprep.subr.mxu0 0.0
    %5276 = vmatpush2.xpose.msra.mxu0 0.0
    %5277 = vmatprep.subr.mxu0 0.0
    %5278 = vmatpush2.xpose.msra.mxu0 0.0
    %5279 = vmatprep.subr.mxu0 0.0
    %5280 = vmatpush2.xpose.msra.mxu0 0.0
    %5281 = vmatprep.subr.mxu0 0.0
    %5282 = vmatpush2.xpose.msra.mxu0 0.0
    %5283 = vmatprep.subr.mxu0 0.0
    %5284 = vmatpush2.xpose.msra.mxu0 0.0
    %5285 = vmatprep.subr.mxu0 0.0
    %5286 = vmatpush2.xpose.msra.mxu0 0.0
    %5287 = vmatprep.subr.mxu0 0.0
    %5288 = vmatpush2.xpose.msra.mxu0 0.0
    %5289 = vmatprep.subr.mxu0 0.0
    %5290 = vmatpush2.xpose.msra.mxu0 0.0
    %5291 = vmatprep.subr.mxu0 0.0
    %5292 = vmatpush2.xpose.msra.mxu0 0.0
    %5293 = vmatprep.subr.mxu0 0.0
    %5294 = vmatpush2.xpose.msra.mxu0 0.0
    %5295 = vmatprep.subr.mxu0 0.0
    %5296 = vmatpush2.xpose.msra.mxu0 0.0
    %5297 = vmatprep.subr.mxu0 0.0
    %5298 = vmatpush2.xpose.msra.mxu0 0.0
    %5299 = vmatprep.subr.mxu0 0.0
    %5300 = vmatpush2.xpose.msra.mxu0 0.0
    %5301 = vmatprep.mubr.f32.mxu0 0.0
    %5302 = vmatmul.mubr.f32.gmra.mxu0 %v1592
    %v5303 = vpop.f32.mrf.mxu0
    %v5304 = vadd.f32 0.0, %v5303
    %v5305 = vpop.f32.mrf.mxu0
    %5306 = vmatprep.mubr.f32.mxu0 0.0
    %5307 = vmatmul.mubr.f32.gmra.mxu0 %v1595
    %v5308 = vpop.f32.mrf.mxu0
    %v5309 = vadd.f32 0.0, %v5308
    %v5310 = vpop.f32.mrf.mxu0
    %5311 = vmatprep.mubr.f32.mxu0 0.0
    %5312 = vmatmul.mubr.f32.gmra.mxu0 %v1598
    %v5313 = vpop.f32.mrf.mxu0
    %v5314 = vadd.f32 0.0, %v5313
    %v5315 = vpop.f32.mrf.mxu0
    %5316 = vmatprep.mubr.f32.mxu0 0.0
    %5317 = vmatmul.mubr.f32.gmra.mxu0 %v1601
    %v5318 = vpop.f32.mrf.mxu0
    %v5319 = vadd.f32 0.0, %v5318
    %v5320 = vpop.f32.mrf.mxu0
    %5321 = vdwg.mxu0
    %v5323 = vsel %vm1590, %v1181, 0
    %v5326 = vsel %vm1590, %v1182, 0
    %v5329 = vsel %vm1590, %v1183, 0
    %v5332 = vsel %vm1590, %v1184, 0
    %5334 = vmatprep.subr.mxu0 0.0
    %5335 = vmatpush1.xpose.msra.mxu0 0.0
    %5336 = vmatprep.subr.mxu0 0.0
    %5337 = vmatpush1.xpose.msra.mxu0 0.0
    %5338 = vmatprep.subr.mxu0 0.0
    %5339 = vmatpush1.xpose.msra.mxu0 0.0
    %5340 = vmatprep.subr.mxu0 0.0
    %5341 = vmatpush1.xpose.msra.mxu0 0.0
    %5342 = vmatprep.subr.mxu0 0.0
    %5343 = vmatpush1.xpose.msra.mxu0 0.0
    %5344 = vmatprep.subr.mxu0 0.0
    %5345 = vmatpush1.xpose.msra.mxu0 0.0
    %5346 = vmatprep.subr.mxu0 0.0
    %5347 = vmatpush1.xpose.msra.mxu0 0.0
    %5348 = vmatprep.subr.mxu0 0.0
    %5349 = vmatpush1.xpose.msra.mxu0 0.0
    %5350 = vmatprep.subr.mxu0 0.0
    %5351 = vmatpush1.xpose.msra.mxu0 0.0
    %5352 = vmatprep.subr.mxu0 0.0
    %5353 = vmatpush1.xpose.msra.mxu0 0.0
    %5354 = vmatprep.subr.mxu0 0.0
    %5355 = vmatpush1.xpose.msra.mxu0 0.0
    %5356 = vmatprep.subr.mxu0 0.0
    %5357 = vmatpush1.xpose.msra.mxu0 0.0
    %5358 = vmatprep.subr.mxu0 0.0
    %5359 = vmatpush1.xpose.msra.mxu0 %v5332
    %5360 = vmatprep.subr.mxu0 0.0
    %5361 = vmatpush1.xpose.msra.mxu0 %v5329
    %5362 = vmatprep.subr.mxu0 0.0
    %5363 = vmatpush1.xpose.msra.mxu0 %v5326
    %5364 = vmatprep.subr.mxu0 0.0
    %5365 = vmatpush1.xpose.msra.mxu0 %v5323
    %5366 = vmatprep.subr.mxu0 0.0
    %5367 = vmatpush2.xpose.msra.mxu0 0.0
    %5368 = vmatprep.subr.mxu0 0.0
    %5369 = vmatpush2.xpose.msra.mxu0 0.0
    %5370 = vmatprep.subr.mxu0 0.0
    %5371 = vmatpush2.xpose.msra.mxu0 0.0
    %5372 = vmatprep.subr.mxu0 0.0
    %5373 = vmatpush2.xpose.msra.mxu0 0.0
    %5374 = vmatprep.subr.mxu0 0.0
    %5375 = vmatpush2.xpose.msra.mxu0 0.0
    %5376 = vmatprep.subr.mxu0 0.0
    %5377 = vmatpush2.xpose.msra.mxu0 0.0
    %5378 = vmatprep.subr.mxu0 0.0
    %5379 = vmatpush2.xpose.msra.mxu0 0.0
    %5380 = vmatprep.subr.mxu0 0.0
    %5381 = vmatpush2.xpose.msra.mxu0 0.0
    %5382 = vmatprep.subr.mxu0 0.0
    %5383 = vmatpush2.xpose.msra.mxu0 0.0
    %5384 = vmatprep.subr.mxu0 0.0
    %5385 = vmatpush2.xpose.msra.mxu0 0.0
    %5386 = vmatprep.subr.mxu0 0.0
    %5387 = vmatpush2.xpose.msra.mxu0 0.0
    %5388 = vmatprep.subr.mxu0 0.0
    %5389 = vmatpush2.xpose.msra.mxu0 0.0
    %5390 = vmatprep.subr.mxu0 0.0
    %5391 = vmatpush2.xpose.msra.mxu0 0.0
    %5392 = vmatprep.subr.mxu0 0.0
    %5393 = vmatpush2.xpose.msra.mxu0 0.0
    %5394 = vmatprep.subr.mxu0 0.0
    %5395 = vmatpush2.xpose.msra.mxu0 0.0
    %5396 = vmatprep.subr.mxu0 0.0
    %5397 = vmatpush2.xpose.msra.mxu0 0.0
    %5398 = vmatprep.mubr.f32.mxu0 0.0
    %5399 = vmatmul.mubr.f32.gmra.mxu0 %v5226
    %v5400 = vpop.f32.mrf.mxu0
    %v5401 = vadd.f32 %v5304, %v5400
    %v5402 = vpop.f32.mrf.mxu0
    %5403 = vmatprep.mubr.f32.mxu0 0.0
    %5404 = vmatmul.mubr.f32.gmra.mxu0 %v5229
    %v5405 = vpop.f32.mrf.mxu0
    %v5406 = vadd.f32 %v5309, %v5405
    %v5407 = vpop.f32.mrf.mxu0
    %5408 = vmatprep.mubr.f32.mxu0 0.0
    %5409 = vmatmul.mubr.f32.gmra.mxu0 %v5232
    %v5410 = vpop.f32.mrf.mxu0
    %v5411 = vadd.f32 %v5314, %v5410
    %v5412 = vpop.f32.mrf.mxu0
    %5413 = vmatprep.mubr.f32.mxu0 0.0
    %5414 = vmatmul.mubr.f32.gmra.mxu0 %v5235
    %v5415 = vpop.f32.mrf.mxu0
    %v5416 = vadd.f32 %v5319, %v5415
    %v5417 = vpop.f32.mrf.mxu0
    %5418 = vdwg.mxu0
    %v5419 = vsel %vm1590, %v5401, -inf
    %5420 = vmax.xlane.f32.xlu0 %v5419
    %v5421 = vpop.xlane.xlu0 %5420
    %v5422 = vsel %vm1590, %v5406, -inf
    %5423 = vmax.xlane.f32.xlu0 %v5422
    %v5424 = vpop.xlane.xlu0 %5423
    %v5425 = vsel %vm1590, %v5411, -inf
    %5426 = vmax.xlane.f32.xlu0 %v5425
    %v5427 = vpop.xlane.xlu0 %5426
    %v5428 = vsel %vm1590, %v5416, -inf
    %5429 = vmax.xlane.f32.xlu0 %v5428
    %v5430 = vpop.xlane.xlu0 %5429
    %v5431 = vsub.f32 %v5401, %v5421
    %v5432 = vsub.f32 %v5406, %v5424
    %v5433 = vsub.f32 %v5411, %v5427
    %v5434 = vsub.f32 %v5416, %v5430
    %v5435 = vmul.f32 %v5431, 1.442695
    %v5436 = vpow.pop %v5435
    %v5437 = vmul.f32 %v5432, 1.442695
    %v5438 = vpow.pop %v5437
    %v5439 = vmul.f32 %v5433, 1.442695
    %v5440 = vpow.pop %v5439
    %v5441 = vmul.f32 %v5434, 1.442695
    %v5442 = vpow.pop %v5441
    %v5443 = vsel %vm1590, %v5436, 0.0
    %5444 = vadd.xlane.f32.xlu0 %v5443
    %v5445 = vpop.xlane.xlu0 %5444
    %v5446 = vsel %vm1590, %v5438, 0.0
    %5447 = vadd.xlane.f32.xlu0 %v5446
    %v5448 = vpop.xlane.xlu0 %5447
    %v5449 = vsel %vm1590, %v5440, 0.0
    %5450 = vadd.xlane.f32.xlu0 %v5449
    %v5451 = vpop.xlane.xlu0 %5450
    %v5452 = vsel %vm1590, %v5442, 0.0
    %5453 = vadd.xlane.f32.xlu0 %v5452
    %v5454 = vpop.xlane.xlu0 %5453
    %v5455 = vrcp.pop %v5445
    %v5456 = vrcp.pop %v5448
    %v5457 = vrcp.pop %v5451
    %v5458 = vrcp.pop %v5454
    %v5459 = vmul.f32 %v5436, %v5455
    %v5460 = vmul.f32 %v5438, %v5456
    %v5461 = vmul.f32 %v5440, %v5457
    %v5462 = vmul.f32 %v5442, %v5458
    %v5464 = vsel %vm1590, %v5459, 0
    %v5467 = vsel %vm1590, %v5460, 0
    %v5470 = vsel %vm1590, %v5461, 0
    %v5473 = vsel %vm1590, %v5462, 0
    %5475 = vmatprep.subr.mxu0 0.0
    %5476 = vmatpush1.msra.mxu0 0.0
    %5477 = vmatprep.subr.mxu0 0.0
    %5478 = vmatpush1.msra.mxu0 0.0
    %5479 = vmatprep.subr.mxu0 0.0
    %5480 = vmatpush1.msra.mxu0 0.0
    %5481 = vmatprep.subr.mxu0 0.0
    %5482 = vmatpush1.msra.mxu0 0.0
    %5483 = vmatprep.subr.mxu0 0.0
    %5484 = vmatpush1.msra.mxu0 0.0
    %5485 = vmatprep.subr.mxu0 0.0
    %5486 = vmatpush1.msra.mxu0 0.0
    %5487 = vmatprep.subr.mxu0 0.0
    %5488 = vmatpush1.msra.mxu0 0.0
    %5489 = vmatprep.subr.mxu0 0.0
    %5490 = vmatpush1.msra.mxu0 0.0
    %5491 = vmatprep.subr.mxu0 0.0
    %5492 = vmatpush1.msra.mxu0 0.0
    %5493 = vmatprep.subr.mxu0 0.0
    %5494 = vmatpush1.msra.mxu0 0.0
    %5495 = vmatprep.subr.mxu0 0.0
    %5496 = vmatpush1.msra.mxu0 0.0
    %5497 = vmatprep.subr.mxu0 0.0
    %5498 = vmatpush1.msra.mxu0 0.0
    %5499 = vmatprep.subr.mxu0 0.0
    %5500 = vmatpush1.msra.mxu0 %v1564
    %5501 = vmatprep.subr.mxu0 0.0
    %5502 = vmatpush1.msra.mxu0 %v1563
    %5503 = vmatprep.subr.mxu0 0.0
    %5504 = vmatpush1.msra.mxu0 %v1562
    %5505 = vmatprep.subr.mxu0 0.0
    %5506 = vmatpush1.msra.mxu0 %v1561
    %5507 = vmatprep.subr.mxu0 0.0
    %5508 = vmatpush2.msra.mxu0 0.0
    %5509 = vmatprep.subr.mxu0 0.0
    %5510 = vmatpush2.msra.mxu0 0.0
    %5511 = vmatprep.subr.mxu0 0.0
    %5512 = vmatpush2.msra.mxu0 0.0
    %5513 = vmatprep.subr.mxu0 0.0
    %5514 = vmatpush2.msra.mxu0 0.0
    %5515 = vmatprep.subr.mxu0 0.0
    %5516 = vmatpush2.msra.mxu0 0.0
    %5517 = vmatprep.subr.mxu0 0.0
    %5518 = vmatpush2.msra.mxu0 0.0
    %5519 = vmatprep.subr.mxu0 0.0
    %5520 = vmatpush2.msra.mxu0 0.0
    %5521 = vmatprep.subr.mxu0 0.0
    %5522 = vmatpush2.msra.mxu0 0.0
    %5523 = vmatprep.subr.mxu0 0.0
    %5524 = vmatpush2.msra.mxu0 0.0
    %5525 = vmatprep.subr.mxu0 0.0
    %5526 = vmatpush2.msra.mxu0 0.0
    %5527 = vmatprep.subr.mxu0 0.0
    %5528 = vmatpush2.msra.mxu0 0.0
    %5529 = vmatprep.subr.mxu0 0.0
    %5530 = vmatpush2.msra.mxu0 0.0
    %5531 = vmatprep.subr.mxu0 0.0
    %5532 = vmatpush2.msra.mxu0 0.0
    %5533 = vmatprep.subr.mxu0 0.0
    %5534 = vmatpush2.msra.mxu0 0.0
    %5535 = vmatprep.subr.mxu0 0.0
    %5536 = vmatpush2.msra.mxu0 0.0
    %5537 = vmatprep.subr.mxu0 0.0
    %5538 = vmatpush2.msra.mxu0 0.0
    %5539 = vmatprep.mubr.f32.mxu0 0.0
    %5540 = vmatmul.mubr.f32.gmra.mxu0 %v5464
    %v5541 = vpop.f32.mrf.mxu0
    %v5542 = vadd.f32 0.0, %v5541
    %v5543 = vpop.f32.mrf.mxu0
    %5544 = vmatprep.mubr.f32.mxu0 0.0
    %5545 = vmatmul.mubr.f32.gmra.mxu0 %v5467
    %v5546 = vpop.f32.mrf.mxu0
    %v5547 = vadd.f32 0.0, %v5546
    %v5548 = vpop.f32.mrf.mxu0
    %5549 = vmatprep.mubr.f32.mxu0 0.0
    %5550 = vmatmul.mubr.f32.gmra.mxu0 %v5470
    %v5551 = vpop.f32.mrf.mxu0
    %v5552 = vadd.f32 0.0, %v5551
    %v5553 = vpop.f32.mrf.mxu0
    %5554 = vmatprep.mubr.f32.mxu0 0.0
    %5555 = vmatmul.mubr.f32.gmra.mxu0 %v5473
    %v5556 = vpop.f32.mrf.mxu0
    %v5557 = vadd.f32 0.0, %v5556
    %v5558 = vpop.f32.mrf.mxu0
    %5559 = vdwg.mxu0
    %5560 = vrot.lane.b32.xlu0 %v801, 96
    %v5561 = vpop.permute.xlu0 %5560
    %5562 = vrot.lane.b32.xlu0 %v802, 96
    %v5563 = vpop.permute.xlu0 %5562
    %5564 = vrot.lane.b32.xlu0 %v803, 96
    %v5565 = vpop.permute.xlu0 %5564
    %5566 = vrot.lane.b32.xlu0 %v804, 96
    %v5567 = vpop.permute.xlu0 %5566
    %v5568 = vsel %vm1590, %v5561, 0
    %v5570 = vsel %vm1590, %v5563, 0
    %v5572 = vsel %vm1590, %v5565, 0
    %v5574 = vsel %vm1590, %v5567, 0
    %5576 = vmatprep.subr.mxu0 0.0
    %5577 = vmatpush1.xpose.msra.mxu0 0.0
    %5578 = vmatprep.subr.mxu0 0.0
    %5579 = vmatpush1.xpose.msra.mxu0 0.0
    %5580 = vmatprep.subr.mxu0 0.0
    %5581 = vmatpush1.xpose.msra.mxu0 0.0
    %5582 = vmatprep.subr.mxu0 0.0
    %5583 = vmatpush1.xpose.msra.mxu0 0.0
    %5584 = vmatprep.subr.mxu0 0.0
    %5585 = vmatpush1.xpose.msra.mxu0 0.0
    %5586 = vmatprep.subr.mxu0 0.0
    %5587 = vmatpush1.xpose.msra.mxu0 0.0
    %5588 = vmatprep.subr.mxu0 0.0
    %5589 = vmatpush1.xpose.msra.mxu0 0.0
    %5590 = vmatprep.subr.mxu0 0.0
    %5591 = vmatpush1.xpose.msra.mxu0 0.0
    %5592 = vmatprep.subr.mxu0 0.0
    %5593 = vmatpush1.xpose.msra.mxu0 0.0
    %5594 = vmatprep.subr.mxu0 0.0
    %5595 = vmatpush1.xpose.msra.mxu0 0.0
    %5596 = vmatprep.subr.mxu0 0.0
    %5597 = vmatpush1.xpose.msra.mxu0 0.0
    %5598 = vmatprep.subr.mxu0 0.0
    %5599 = vmatpush1.xpose.msra.mxu0 0.0
    %5600 = vmatprep.subr.mxu0 0.0
    %5601 = vmatpush1.xpose.msra.mxu0 %v5574
    %5602 = vmatprep.subr.mxu0 0.0
    %5603 = vmatpush1.xpose.msra.mxu0 %v5572
    %5604 = vmatprep.subr.mxu0 0.0
    %5605 = vmatpush1.xpose.msra.mxu0 %v5570
    %5606 = vmatprep.subr.mxu0 0.0
    %5607 = vmatpush1.xpose.msra.mxu0 %v5568
    %5608 = vmatprep.subr.mxu0 0.0
    %5609 = vmatpush2.xpose.msra.mxu0 0.0
    %5610 = vmatprep.subr.mxu0 0.0
    %5611 = vmatpush2.xpose.msra.mxu0 0.0
    %5612 = vmatprep.subr.mxu0 0.0
    %5613 = vmatpush2.xpose.msra.mxu0 0.0
    %5614 = vmatprep.subr.mxu0 0.0
    %5615 = vmatpush2.xpose.msra.mxu0 0.0
    %5616 = vmatprep.subr.mxu0 0.0
    %5617 = vmatpush2.xpose.msra.mxu0 0.0
    %5618 = vmatprep.subr.mxu0 0.0
    %5619 = vmatpush2.xpose.msra.mxu0 0.0
    %5620 = vmatprep.subr.mxu0 0.0
    %5621 = vmatpush2.xpose.msra.mxu0 0.0
    %5622 = vmatprep.subr.mxu0 0.0
    %5623 = vmatpush2.xpose.msra.mxu0 0.0
    %5624 = vmatprep.subr.mxu0 0.0
    %5625 = vmatpush2.xpose.msra.mxu0 0.0
    %5626 = vmatprep.subr.mxu0 0.0
    %5627 = vmatpush2.xpose.msra.mxu0 0.0
    %5628 = vmatprep.subr.mxu0 0.0
    %5629 = vmatpush2.xpose.msra.mxu0 0.0
    %5630 = vmatprep.subr.mxu0 0.0
    %5631 = vmatpush2.xpose.msra.mxu0 0.0
    %5632 = vmatprep.subr.mxu0 0.0
    %5633 = vmatpush2.xpose.msra.mxu0 0.0
    %5634 = vmatprep.subr.mxu0 0.0
    %5635 = vmatpush2.xpose.msra.mxu0 0.0
    %5636 = vmatprep.subr.mxu0 0.0
    %5637 = vmatpush2.xpose.msra.mxu0 0.0
    %5638 = vmatprep.subr.mxu0 0.0
    %5639 = vmatpush2.xpose.msra.mxu0 0.0
    %5640 = vmatprep.mubr.f32.mxu0 0.0
    %5641 = vmatmul.mubr.f32.gmra.mxu0 %v1592
    %v5642 = vpop.f32.mrf.mxu0
    %v5643 = vadd.f32 0.0, %v5642
    %v5644 = vpop.f32.mrf.mxu0
    %5645 = vmatprep.mubr.f32.mxu0 0.0
    %5646 = vmatmul.mubr.f32.gmra.mxu0 %v1595
    %v5647 = vpop.f32.mrf.mxu0
    %v5648 = vadd.f32 0.0, %v5647
    %v5649 = vpop.f32.mrf.mxu0
    %5650 = vmatprep.mubr.f32.mxu0 0.0
    %5651 = vmatmul.mubr.f32.gmra.mxu0 %v1598
    %v5652 = vpop.f32.mrf.mxu0
    %v5653 = vadd.f32 0.0, %v5652
    %v5654 = vpop.f32.mrf.mxu0
    %5655 = vmatprep.mubr.f32.mxu0 0.0
    %5656 = vmatmul.mubr.f32.gmra.mxu0 %v1601
    %v5657 = vpop.f32.mrf.mxu0
    %v5658 = vadd.f32 0.0, %v5657
    %v5659 = vpop.f32.mrf.mxu0
    %5660 = vdwg.mxu0
    %5661 = vrot.lane.b32.xlu0 %v1181, 96
    %v5662 = vpop.permute.xlu0 %5661
    %5663 = vrot.lane.b32.xlu0 %v1182, 96
    %v5664 = vpop.permute.xlu0 %5663
    %5665 = vrot.lane.b32.xlu0 %v1183, 96
    %v5666 = vpop.permute.xlu0 %5665
    %5667 = vrot.lane.b32.xlu0 %v1184, 96
    %v5668 = vpop.permute.xlu0 %5667
    %v5669 = vsel %vm1590, %v5662, 0
    %v5671 = vsel %vm1590, %v5664, 0
    %v5673 = vsel %vm1590, %v5666, 0
    %v5675 = vsel %vm1590, %v5668, 0
    %5677 = vmatprep.subr.mxu0 0.0
    %5678 = vmatpush1.xpose.msra.mxu0 0.0
    %5679 = vmatprep.subr.mxu0 0.0
    %5680 = vmatpush1.xpose.msra.mxu0 0.0
    %5681 = vmatprep.subr.mxu0 0.0
    %5682 = vmatpush1.xpose.msra.mxu0 0.0
    %5683 = vmatprep.subr.mxu0 0.0
    %5684 = vmatpush1.xpose.msra.mxu0 0.0
    %5685 = vmatprep.subr.mxu0 0.0
    %5686 = vmatpush1.xpose.msra.mxu0 0.0
    %5687 = vmatprep.subr.mxu0 0.0
    %5688 = vmatpush1.xpose.msra.mxu0 0.0
    %5689 = vmatprep.subr.mxu0 0.0
    %5690 = vmatpush1.xpose.msra.mxu0 0.0
    %5691 = vmatprep.subr.mxu0 0.0
    %5692 = vmatpush1.xpose.msra.mxu0 0.0
    %5693 = vmatprep.subr.mxu0 0.0
    %5694 = vmatpush1.xpose.msra.mxu0 0.0
    %5695 = vmatprep.subr.mxu0 0.0
    %5696 = vmatpush1.xpose.msra.mxu0 0.0
    %5697 = vmatprep.subr.mxu0 0.0
    %5698 = vmatpush1.xpose.msra.mxu0 0.0
    %5699 = vmatprep.subr.mxu0 0.0
    %5700 = vmatpush1.xpose.msra.mxu0 0.0
    %5701 = vmatprep.subr.mxu0 0.0
    %5702 = vmatpush1.xpose.msra.mxu0 %v5675
    %5703 = vmatprep.subr.mxu0 0.0
    %5704 = vmatpush1.xpose.msra.mxu0 %v5673
    %5705 = vmatprep.subr.mxu0 0.0
    %5706 = vmatpush1.xpose.msra.mxu0 %v5671
    %5707 = vmatprep.subr.mxu0 0.0
    %5708 = vmatpush1.xpose.msra.mxu0 %v5669
    %5709 = vmatprep.subr.mxu0 0.0
    %5710 = vmatpush2.xpose.msra.mxu0 0.0
    %5711 = vmatprep.subr.mxu0 0.0
    %5712 = vmatpush2.xpose.msra.mxu0 0.0
    %5713 = vmatprep.subr.mxu0 0.0
    %5714 = vmatpush2.xpose.msra.mxu0 0.0
    %5715 = vmatprep.subr.mxu0 0.0
    %5716 = vmatpush2.xpose.msra.mxu0 0.0
    %5717 = vmatprep.subr.mxu0 0.0
    %5718 = vmatpush2.xpose.msra.mxu0 0.0
    %5719 = vmatprep.subr.mxu0 0.0
    %5720 = vmatpush2.xpose.msra.mxu0 0.0
    %5721 = vmatprep.subr.mxu0 0.0
    %5722 = vmatpush2.xpose.msra.mxu0 0.0
    %5723 = vmatprep.subr.mxu0 0.0
    %5724 = vmatpush2.xpose.msra.mxu0 0.0
    %5725 = vmatprep.subr.mxu0 0.0
    %5726 = vmatpush2.xpose.msra.mxu0 0.0
    %5727 = vmatprep.subr.mxu0 0.0
    %5728 = vmatpush2.xpose.msra.mxu0 0.0
    %5729 = vmatprep.subr.mxu0 0.0
    %5730 = vmatpush2.xpose.msra.mxu0 0.0
    %5731 = vmatprep.subr.mxu0 0.0
    %5732 = vmatpush2.xpose.msra.mxu0 0.0
    %5733 = vmatprep.subr.mxu0 0.0
    %5734 = vmatpush2.xpose.msra.mxu0 0.0
    %5735 = vmatprep.subr.mxu0 0.0
    %5736 = vmatpush2.xpose.msra.mxu0 0.0
    %5737 = vmatprep.subr.mxu0 0.0
    %5738 = vmatpush2.xpose.msra.mxu0 0.0
    %5739 = vmatprep.subr.mxu0 0.0
    %5740 = vmatpush2.xpose.msra.mxu0 0.0
    %5741 = vmatprep.mubr.f32.mxu0 0.0
    %5742 = vmatmul.mubr.f32.gmra.mxu0 %v5568
    %v5743 = vpop.f32.mrf.mxu0
    %v5744 = vadd.f32 %v5643, %v5743
    %v5745 = vpop.f32.mrf.mxu0
    %5746 = vmatprep.mubr.f32.mxu0 0.0
    %5747 = vmatmul.mubr.f32.gmra.mxu0 %v5570
    %v5748 = vpop.f32.mrf.mxu0
    %v5749 = vadd.f32 %v5648, %v5748
    %v5750 = vpop.f32.mrf.mxu0
    %5751 = vmatprep.mubr.f32.mxu0 0.0
    %5752 = vmatmul.mubr.f32.gmra.mxu0 %v5572
    %v5753 = vpop.f32.mrf.mxu0
    %v5754 = vadd.f32 %v5653, %v5753
    %v5755 = vpop.f32.mrf.mxu0
    %5756 = vmatprep.mubr.f32.mxu0 0.0
    %5757 = vmatmul.mubr.f32.gmra.mxu0 %v5574
    %v5758 = vpop.f32.mrf.mxu0
    %v5759 = vadd.f32 %v5658, %v5758
    %v5760 = vpop.f32.mrf.mxu0
    %5761 = vdwg.mxu0
    %v5762 = vsel %vm1590, %v5744, -inf
    %5763 = vmax.xlane.f32.xlu0 %v5762
    %v5764 = vpop.xlane.xlu0 %5763
    %v5765 = vsel %vm1590, %v5749, -inf
    %5766 = vmax.xlane.f32.xlu0 %v5765
    %v5767 = vpop.xlane.xlu0 %5766
    %v5768 = vsel %vm1590, %v5754, -inf
    %5769 = vmax.xlane.f32.xlu0 %v5768
    %v5770 = vpop.xlane.xlu0 %5769
    %v5771 = vsel %vm1590, %v5759, -inf
    %5772 = vmax.xlane.f32.xlu0 %v5771
    %v5773 = vpop.xlane.xlu0 %5772
    %v5774 = vsub.f32 %v5744, %v5764
    %v5775 = vsub.f32 %v5749, %v5767
    %v5776 = vsub.f32 %v5754, %v5770
    %v5777 = vsub.f32 %v5759, %v5773
    %v5778 = vmul.f32 %v5774, 1.442695
    %v5779 = vpow.pop %v5778
    %v5780 = vmul.f32 %v5775, 1.442695
    %v5781 = vpow.pop %v5780
    %v5782 = vmul.f32 %v5776, 1.442695
    %v5783 = vpow.pop %v5782
    %v5784 = vmul.f32 %v5777, 1.442695
    %v5785 = vpow.pop %v5784
    %v5786 = vsel %vm1590, %v5779, 0.0
    %5787 = vadd.xlane.f32.xlu0 %v5786
    %v5788 = vpop.xlane.xlu0 %5787
    %v5789 = vsel %vm1590, %v5781, 0.0
    %5790 = vadd.xlane.f32.xlu0 %v5789
    %v5791 = vpop.xlane.xlu0 %5790
    %v5792 = vsel %vm1590, %v5783, 0.0
    %5793 = vadd.xlane.f32.xlu0 %v5792
    %v5794 = vpop.xlane.xlu0 %5793
    %v5795 = vsel %vm1590, %v5785, 0.0
    %5796 = vadd.xlane.f32.xlu0 %v5795
    %v5797 = vpop.xlane.xlu0 %5796
    %v5798 = vrcp.pop %v5788
    %v5799 = vrcp.pop %v5791
    %v5800 = vrcp.pop %v5794
    %v5801 = vrcp.pop %v5797
    %v5802 = vmul.f32 %v5779, %v5798
    %v5803 = vmul.f32 %v5781, %v5799
    %v5804 = vmul.f32 %v5783, %v5800
    %v5805 = vmul.f32 %v5785, %v5801
    %5810 = vrot.lane.b32.xlu0 %v1561, 96
    %v5811 = vpop.permute.xlu0 %5810
    %5812 = vrot.lane.b32.xlu0 %v1562, 96
    %v5813 = vpop.permute.xlu0 %5812
    %5814 = vrot.lane.b32.xlu0 %v1563, 96
    %v5815 = vpop.permute.xlu0 %5814
    %5816 = vrot.lane.b32.xlu0 %v1564, 96
    %v5817 = vpop.permute.xlu0 %5816
    %v5823 = vsel %vm1590, %v5802, 0
    %v5826 = vsel %vm1590, %v5803, 0
    %v5829 = vsel %vm1590, %v5804, 0
    %v5832 = vsel %vm1590, %v5805, 0
    %5834 = vmatprep.subr.mxu0 0.0
    %5835 = vmatpush1.msra.mxu0 0.0
    %5836 = vmatprep.subr.mxu0 0.0
    %5837 = vmatpush1.msra.mxu0 0.0
    %5838 = vmatprep.subr.mxu0 0.0
    %5839 = vmatpush1.msra.mxu0 0.0
    %5840 = vmatprep.subr.mxu0 0.0
    %5841 = vmatpush1.msra.mxu0 0.0
    %5842 = vmatprep.subr.mxu0 0.0
    %5843 = vmatpush1.msra.mxu0 0.0
    %5844 = vmatprep.subr.mxu0 0.0
    %5845 = vmatpush1.msra.mxu0 0.0
    %5846 = vmatprep.subr.mxu0 0.0
    %5847 = vmatpush1.msra.mxu0 0.0
    %5848 = vmatprep.subr.mxu0 0.0
    %5849 = vmatpush1.msra.mxu0 0.0
    %5850 = vmatprep.subr.mxu0 0.0
    %5851 = vmatpush1.msra.mxu0 0.0
    %5852 = vmatprep.subr.mxu0 0.0
    %5853 = vmatpush1.msra.mxu0 0.0
    %5854 = vmatprep.subr.mxu0 0.0
    %5855 = vmatpush1.msra.mxu0 0.0
    %5856 = vmatprep.subr.mxu0 0.0
    %5857 = vmatpush1.msra.mxu0 0.0
    %5858 = vmatprep.subr.mxu0 0.0
    %5859 = vmatpush1.msra.mxu0 %v5817
    %5860 = vmatprep.subr.mxu0 0.0
    %5861 = vmatpush1.msra.mxu0 %v5815
    %5862 = vmatprep.subr.mxu0 0.0
    %5863 = vmatpush1.msra.mxu0 %v5813
    %5864 = vmatprep.subr.mxu0 0.0
    %5865 = vmatpush1.msra.mxu0 %v5811
    %5866 = vmatprep.subr.mxu0 0.0
    %5867 = vmatpush2.msra.mxu0 0.0
    %5868 = vmatprep.subr.mxu0 0.0
    %5869 = vmatpush2.msra.mxu0 0.0
    %5870 = vmatprep.subr.mxu0 0.0
    %5871 = vmatpush2.msra.mxu0 0.0
    %5872 = vmatprep.subr.mxu0 0.0
    %5873 = vmatpush2.msra.mxu0 0.0
    %5874 = vmatprep.subr.mxu0 0.0
    %5875 = vmatpush2.msra.mxu0 0.0
    %5876 = vmatprep.subr.mxu0 0.0
    %5877 = vmatpush2.msra.mxu0 0.0
    %5878 = vmatprep.subr.mxu0 0.0
    %5879 = vmatpush2.msra.mxu0 0.0
    %5880 = vmatprep.subr.mxu0 0.0
    %5881 = vmatpush2.msra.mxu0 0.0
    %5882 = vmatprep.subr.mxu0 0.0
    %5883 = vmatpush2.msra.mxu0 0.0
    %5884 = vmatprep.subr.mxu0 0.0
    %5885 = vmatpush2.msra.mxu0 0.0
    %5886 = vmatprep.subr.mxu0 0.0
    %5887 = vmatpush2.msra.mxu0 0.0
    %5888 = vmatprep.subr.mxu0 0.0
    %5889 = vmatpush2.msra.mxu0 0.0
    %5890 = vmatprep.subr.mxu0 0.0
    %5891 = vmatpush2.msra.mxu0 0.0
    %5892 = vmatprep.subr.mxu0 0.0
    %5893 = vmatpush2.msra.mxu0 0.0
    %5894 = vmatprep.subr.mxu0 0.0
    %5895 = vmatpush2.msra.mxu0 0.0
    %5896 = vmatprep.subr.mxu0 0.0
    %5897 = vmatpush2.msra.mxu0 0.0
    %5898 = vmatprep.mubr.f32.mxu0 0.0
    %5899 = vmatmul.mubr.f32.gmra.mxu0 %v5823
    %v5900 = vpop.f32.mrf.mxu0
    %v5901 = vadd.f32 0.0, %v5900
    %v5902 = vpop.f32.mrf.mxu0
    %5903 = vmatprep.mubr.f32.mxu0 0.0
    %5904 = vmatmul.mubr.f32.gmra.mxu0 %v5826
    %v5905 = vpop.f32.mrf.mxu0
    %v5906 = vadd.f32 0.0, %v5905
    %v5907 = vpop.f32.mrf.mxu0
    %5908 = vmatprep.mubr.f32.mxu0 0.0
    %5909 = vmatmul.mubr.f32.gmra.mxu0 %v5829
    %v5910 = vpop.f32.mrf.mxu0
    %v5911 = vadd.f32 0.0, %v5910
    %v5912 = vpop.f32.mrf.mxu0
    %5913 = vmatprep.mubr.f32.mxu0 0.0
    %5914 = vmatmul.mubr.f32.gmra.mxu0 %v5832
    %v5915 = vpop.f32.mrf.mxu0
    %v5916 = vadd.f32 0.0, %v5915
    %v5917 = vpop.f32.mrf.mxu0
    %5918 = vdwg.mxu0
    %v5920 = vsel %vm1590, %v5901, 0
    %v5923 = vsel %vm1590, %v5906, 0
    %v5926 = vsel %vm1590, %v5911, 0
    %v5929 = vsel %vm1590, %v5916, 0
    %5931 = vmatprep.subr.mxu0 0.0
    %5932 = vmatpush1.msra.mxu0 0.0
    %5933 = vmatprep.subr.mxu0 0.0
    %5934 = vmatpush1.msra.mxu0 0.0
    %5935 = vmatprep.subr.mxu0 0.0
    %5936 = vmatpush1.msra.mxu0 0.0
    %5937 = vmatprep.subr.mxu0 0.0
    %5938 = vmatpush1.msra.mxu0 0.0
    %5939 = vmatprep.subr.mxu0 0.0
    %5940 = vmatpush1.msra.mxu0 0.0
    %5941 = vmatprep.subr.mxu0 0.0
    %5942 = vmatpush1.msra.mxu0 0.0
    %5943 = vmatprep.subr.mxu0 0.0
    %5944 = vmatpush1.msra.mxu0 0.0
    %5945 = vmatprep.subr.mxu0 0.0
    %5946 = vmatpush1.msra.mxu0 0.0
    %5947 = vmatprep.subr.mxu0 0.0
    %5948 = vmatpush1.msra.mxu0 0.0
    %5949 = vmatprep.subr.mxu0 0.0
    %5950 = vmatpush1.msra.mxu0 0.0
    %5951 = vmatprep.subr.mxu0 0.0
    %5952 = vmatpush1.msra.mxu0 0.0
    %5953 = vmatprep.subr.mxu0 0.0
    %5954 = vmatpush1.msra.mxu0 0.0
    %5955 = vmatprep.subr.mxu0 0.0
    %5956 = vmatpush1.msra.mxu0 %v1576
    %5957 = vmatprep.subr.mxu0 0.0
    %5958 = vmatpush1.msra.mxu0 %v1575
    %5959 = vmatprep.subr.mxu0 0.0
    %5960 = vmatpush1.msra.mxu0 %v1574
    %5961 = vmatprep.subr.mxu0 0.0
    %5962 = vmatpush1.msra.mxu0 %v1573
    %5963 = vmatprep.subr.mxu0 0.0
    %5964 = vmatpush2.msra.mxu0 0.0
    %5965 = vmatprep.subr.mxu0 0.0
    %5966 = vmatpush2.msra.mxu0 0.0
    %5967 = vmatprep.subr.mxu0 0.0
    %5968 = vmatpush2.msra.mxu0 0.0
    %5969 = vmatprep.subr.mxu0 0.0
    %5970 = vmatpush2.msra.mxu0 0.0
    %5971 = vmatprep.subr.mxu0 0.0
    %5972 = vmatpush2.msra.mxu0 0.0
    %5973 = vmatprep.subr.mxu0 0.0
    %5974 = vmatpush2.msra.mxu0 0.0
    %5975 = vmatprep.subr.mxu0 0.0
    %5976 = vmatpush2.msra.mxu0 0.0
    %5977 = vmatprep.subr.mxu0 0.0
    %5978 = vmatpush2.msra.mxu0 0.0
    %5979 = vmatprep.subr.mxu0 0.0
    %5980 = vmatpush2.msra.mxu0 0.0
    %5981 = vmatprep.subr.mxu0 0.0
    %5982 = vmatpush2.msra.mxu0 0.0
    %5983 = vmatprep.subr.mxu0 0.0
    %5984 = vmatpush2.msra.mxu0 0.0
    %5985 = vmatprep.subr.mxu0 0.0
    %5986 = vmatpush2.msra.mxu0 0.0
    %5987 = vmatprep.subr.mxu0 0.0
    %5988 = vmatpush2.msra.mxu0 0.0
    %5989 = vmatprep.subr.mxu0 0.0
    %5990 = vmatpush2.msra.mxu0 0.0
    %5991 = vmatprep.subr.mxu0 0.0
    %5992 = vmatpush2.msra.mxu0 0.0
    %5993 = vmatprep.subr.mxu0 0.0
    %5994 = vmatpush2.msra.mxu0 0.0
    %5995 = vmatprep.mubr.f32.mxu0 0.0
    %5996 = vmatmul.mubr.f32.gmra.mxu0 %v5920
    %v5997 = vpop.f32.mrf.mxu0
    %v5998 = vadd.f32 0.0, %v5997
    %v5999 = vpop.f32.mrf.mxu0
    %6000 = vmatprep.mubr.f32.mxu0 0.0
    %6001 = vmatmul.mubr.f32.gmra.mxu0 %v5923
    %v6002 = vpop.f32.mrf.mxu0
    %v6003 = vadd.f32 0.0, %v6002
    %v6004 = vpop.f32.mrf.mxu0
    %6005 = vmatprep.mubr.f32.mxu0 0.0
    %6006 = vmatmul.mubr.f32.gmra.mxu0 %v5926
    %v6007 = vpop.f32.mrf.mxu0
    %v6008 = vadd.f32 0.0, %v6007
    %v6009 = vpop.f32.mrf.mxu0
    %6010 = vmatprep.mubr.f32.mxu0 0.0
    %6011 = vmatmul.mubr.f32.gmra.mxu0 %v5929
    %v6012 = vpop.f32.mrf.mxu0
    %v6013 = vadd.f32 0.0, %v6012
    %v6014 = vpop.f32.mrf.mxu0
    %6015 = vdwg.mxu0
    %v6017 = vsel %vm1590, %v5542, 0
    %v6020 = vsel %vm1590, %v5547, 0
    %v6023 = vsel %vm1590, %v5552, 0
    %v6026 = vsel %vm1590, %v5557, 0
    %6028 = vmatprep.subr.mxu0 0.0
    %6029 = vmatpush1.msra.mxu0 0.0
    %6030 = vmatprep.subr.mxu0 0.0
    %6031 = vmatpush1.msra.mxu0 0.0
    %6032 = vmatprep.subr.mxu0 0.0
    %6033 = vmatpush1.msra.mxu0 0.0
    %6034 = vmatprep.subr.mxu0 0.0
    %6035 = vmatpush1.msra.mxu0 0.0
    %6036 = vmatprep.subr.mxu0 0.0
    %6037 = vmatpush1.msra.mxu0 0.0
    %6038 = vmatprep.subr.mxu0 0.0
    %6039 = vmatpush1.msra.mxu0 0.0
    %6040 = vmatprep.subr.mxu0 0.0
    %6041 = vmatpush1.msra.mxu0 0.0
    %6042 = vmatprep.subr.mxu0 0.0
    %6043 = vmatpush1.msra.mxu0 0.0
    %6044 = vmatprep.subr.mxu0 0.0
    %6045 = vmatpush1.msra.mxu0 0.0
    %6046 = vmatprep.subr.mxu0 0.0
    %6047 = vmatpush1.msra.mxu0 0.0
    %6048 = vmatprep.subr.mxu0 0.0
    %6049 = vmatpush1.msra.mxu0 0.0
    %6050 = vmatprep.subr.mxu0 0.0
    %6051 = vmatpush1.msra.mxu0 0.0
    %6052 = vmatprep.subr.mxu0 0.0
    %6053 = vmatpush1.msra.mxu0 %v1572
    %6054 = vmatprep.subr.mxu0 0.0
    %6055 = vmatpush1.msra.mxu0 %v1571
    %6056 = vmatprep.subr.mxu0 0.0
    %6057 = vmatpush1.msra.mxu0 %v1570
    %6058 = vmatprep.subr.mxu0 0.0
    %6059 = vmatpush1.msra.mxu0 %v1569
    %6060 = vmatprep.subr.mxu0 0.0
    %6061 = vmatpush2.msra.mxu0 0.0
    %6062 = vmatprep.subr.mxu0 0.0
    %6063 = vmatpush2.msra.mxu0 0.0
    %6064 = vmatprep.subr.mxu0 0.0
    %6065 = vmatpush2.msra.mxu0 0.0
    %6066 = vmatprep.subr.mxu0 0.0
    %6067 = vmatpush2.msra.mxu0 0.0
    %6068 = vmatprep.subr.mxu0 0.0
    %6069 = vmatpush2.msra.mxu0 0.0
    %6070 = vmatprep.subr.mxu0 0.0
    %6071 = vmatpush2.msra.mxu0 0.0
    %6072 = vmatprep.subr.mxu0 0.0
    %6073 = vmatpush2.msra.mxu0 0.0
    %6074 = vmatprep.subr.mxu0 0.0
    %6075 = vmatpush2.msra.mxu0 0.0
    %6076 = vmatprep.subr.mxu0 0.0
    %6077 = vmatpush2.msra.mxu0 0.0
    %6078 = vmatprep.subr.mxu0 0.0
    %6079 = vmatpush2.msra.mxu0 0.0
    %6080 = vmatprep.subr.mxu0 0.0
    %6081 = vmatpush2.msra.mxu0 0.0
    %6082 = vmatprep.subr.mxu0 0.0
    %6083 = vmatpush2.msra.mxu0 0.0
    %6084 = vmatprep.subr.mxu0 0.0
    %6085 = vmatpush2.msra.mxu0 0.0
    %6086 = vmatprep.subr.mxu0 0.0
    %6087 = vmatpush2.msra.mxu0 0.0
    %6088 = vmatprep.subr.mxu0 0.0
    %6089 = vmatpush2.msra.mxu0 0.0
    %6090 = vmatprep.subr.mxu0 0.0
    %6091 = vmatpush2.msra.mxu0 0.0
    %6092 = vmatprep.mubr.f32.mxu0 0.0
    %6093 = vmatmul.mubr.f32.gmra.mxu0 %v6017
    %v6094 = vpop.f32.mrf.mxu0
    %v6095 = vadd.f32 %v5998, %v6094
    %v6096 = vpop.f32.mrf.mxu0
    %6097 = vmatprep.mubr.f32.mxu0 0.0
    %6098 = vmatmul.mubr.f32.gmra.mxu0 %v6020
    %v6099 = vpop.f32.mrf.mxu0
    %v6100 = vadd.f32 %v6003, %v6099
    %v6101 = vpop.f32.mrf.mxu0
    %6102 = vmatprep.mubr.f32.mxu0 0.0
    %6103 = vmatmul.mubr.f32.gmra.mxu0 %v6023
    %v6104 = vpop.f32.mrf.mxu0
    %v6105 = vadd.f32 %v6008, %v6104
    %v6106 = vpop.f32.mrf.mxu0
    %6107 = vmatprep.mubr.f32.mxu0 0.0
    %6108 = vmatmul.mubr.f32.gmra.mxu0 %v6026
    %v6109 = vpop.f32.mrf.mxu0
    %v6110 = vadd.f32 %v6013, %v6109
    %v6111 = vpop.f32.mrf.mxu0
    %6112 = vdwg.mxu0
    %6113 = vrot.lane.b32.xlu0 %v801, 64
    %v6114 = vpop.permute.xlu0 %6113
    %6115 = vrot.lane.b32.xlu0 %v802, 64
    %v6116 = vpop.permute.xlu0 %6115
    %6117 = vrot.lane.b32.xlu0 %v803, 64
    %v6118 = vpop.permute.xlu0 %6117
    %6119 = vrot.lane.b32.xlu0 %v804, 64
    %v6120 = vpop.permute.xlu0 %6119
    %v6121 = vsel %vm1590, %v6114, 0
    %v6123 = vsel %vm1590, %v6116, 0
    %v6125 = vsel %vm1590, %v6118, 0
    %v6127 = vsel %vm1590, %v6120, 0
    %6129 = vmatprep.subr.mxu0 0.0
    %6130 = vmatpush1.xpose.msra.mxu0 0.0
    %6131 = vmatprep.subr.mxu0 0.0
    %6132 = vmatpush1.xpose.msra.mxu0 0.0
    %6133 = vmatprep.subr.mxu0 0.0
    %6134 = vmatpush1.xpose.msra.mxu0 0.0
    %6135 = vmatprep.subr.mxu0 0.0
    %6136 = vmatpush1.xpose.msra.mxu0 0.0
    %6137 = vmatprep.subr.mxu0 0.0
    %6138 = vmatpush1.xpose.msra.mxu0 0.0
    %6139 = vmatprep.subr.mxu0 0.0
    %6140 = vmatpush1.xpose.msra.mxu0 0.0
    %6141 = vmatprep.subr.mxu0 0.0
    %6142 = vmatpush1.xpose.msra.mxu0 0.0
    %6143 = vmatprep.subr.mxu0 0.0
    %6144 = vmatpush1.xpose.msra.mxu0 0.0
    %6145 = vmatprep.subr.mxu0 0.0
    %6146 = vmatpush1.xpose.msra.mxu0 0.0
    %6147 = vmatprep.subr.mxu0 0.0
    %6148 = vmatpush1.xpose.msra.mxu0 0.0
    %6149 = vmatprep.subr.mxu0 0.0
    %6150 = vmatpush1.xpose.msra.mxu0 0.0
    %6151 = vmatprep.subr.mxu0 0.0
    %6152 = vmatpush1.xpose.msra.mxu0 0.0
    %6153 = vmatprep.subr.mxu0 0.0
    %6154 = vmatpush1.xpose.msra.mxu0 %v6127
    %6155 = vmatprep.subr.mxu0 0.0
    %6156 = vmatpush1.xpose.msra.mxu0 %v6125
    %6157 = vmatprep.subr.mxu0 0.0
    %6158 = vmatpush1.xpose.msra.mxu0 %v6123
    %6159 = vmatprep.subr.mxu0 0.0
    %6160 = vmatpush1.xpose.msra.mxu0 %v6121
    %6161 = vmatprep.subr.mxu0 0.0
    %6162 = vmatpush2.xpose.msra.mxu0 0.0
    %6163 = vmatprep.subr.mxu0 0.0
    %6164 = vmatpush2.xpose.msra.mxu0 0.0
    %6165 = vmatprep.subr.mxu0 0.0
    %6166 = vmatpush2.xpose.msra.mxu0 0.0
    %6167 = vmatprep.subr.mxu0 0.0
    %6168 = vmatpush2.xpose.msra.mxu0 0.0
    %6169 = vmatprep.subr.mxu0 0.0
    %6170 = vmatpush2.xpose.msra.mxu0 0.0
    %6171 = vmatprep.subr.mxu0 0.0
    %6172 = vmatpush2.xpose.msra.mxu0 0.0
    %6173 = vmatprep.subr.mxu0 0.0
    %6174 = vmatpush2.xpose.msra.mxu0 0.0
    %6175 = vmatprep.subr.mxu0 0.0
    %6176 = vmatpush2.xpose.msra.mxu0 0.0
    %6177 = vmatprep.subr.mxu0 0.0
    %6178 = vmatpush2.xpose.msra.mxu0 0.0
    %6179 = vmatprep.subr.mxu0 0.0
    %6180 = vmatpush2.xpose.msra.mxu0 0.0
    %6181 = vmatprep.subr.mxu0 0.0
    %6182 = vmatpush2.xpose.msra.mxu0 0.0
    %6183 = vmatprep.subr.mxu0 0.0
    %6184 = vmatpush2.xpose.msra.mxu0 0.0
    %6185 = vmatprep.subr.mxu0 0.0
    %6186 = vmatpush2.xpose.msra.mxu0 0.0
    %6187 = vmatprep.subr.mxu0 0.0
    %6188 = vmatpush2.xpose.msra.mxu0 0.0
    %6189 = vmatprep.subr.mxu0 0.0
    %6190 = vmatpush2.xpose.msra.mxu0 0.0
    %6191 = vmatprep.subr.mxu0 0.0
    %6192 = vmatpush2.xpose.msra.mxu0 0.0
    %6193 = vmatprep.mubr.f32.mxu0 0.0
    %6194 = vmatmul.mubr.f32.gmra.mxu0 %v1592
    %v6195 = vpop.f32.mrf.mxu0
    %v6196 = vadd.f32 0.0, %v6195
    %v6197 = vpop.f32.mrf.mxu0
    %6198 = vmatprep.mubr.f32.mxu0 0.0
    %6199 = vmatmul.mubr.f32.gmra.mxu0 %v1595
    %v6200 = vpop.f32.mrf.mxu0
    %v6201 = vadd.f32 0.0, %v6200
    %v6202 = vpop.f32.mrf.mxu0
    %6203 = vmatprep.mubr.f32.mxu0 0.0
    %6204 = vmatmul.mubr.f32.gmra.mxu0 %v1598
    %v6205 = vpop.f32.mrf.mxu0
    %v6206 = vadd.f32 0.0, %v6205
    %v6207 = vpop.f32.mrf.mxu0
    %6208 = vmatprep.mubr.f32.mxu0 0.0
    %6209 = vmatmul.mubr.f32.gmra.mxu0 %v1601
    %v6210 = vpop.f32.mrf.mxu0
    %v6211 = vadd.f32 0.0, %v6210
    %v6212 = vpop.f32.mrf.mxu0
    %6213 = vdwg.mxu0
    %6214 = vrot.lane.b32.xlu0 %v1181, 64
    %v6215 = vpop.permute.xlu0 %6214
    %6216 = vrot.lane.b32.xlu0 %v1182, 64
    %v6217 = vpop.permute.xlu0 %6216
    %6218 = vrot.lane.b32.xlu0 %v1183, 64
    %v6219 = vpop.permute.xlu0 %6218
    %6220 = vrot.lane.b32.xlu0 %v1184, 64
    %v6221 = vpop.permute.xlu0 %6220
    %v6222 = vsel %vm1590, %v6215, 0
    %v6224 = vsel %vm1590, %v6217, 0
    %v6226 = vsel %vm1590, %v6219, 0
    %v6228 = vsel %vm1590, %v6221, 0
    %6230 = vmatprep.subr.mxu0 0.0
    %6231 = vmatpush1.xpose.msra.mxu0 0.0
    %6232 = vmatprep.subr.mxu0 0.0
    %6233 = vmatpush1.xpose.msra.mxu0 0.0
    %6234 = vmatprep.subr.mxu0 0.0
    %6235 = vmatpush1.xpose.msra.mxu0 0.0
    %6236 = vmatprep.subr.mxu0 0.0
    %6237 = vmatpush1.xpose.msra.mxu0 0.0
    %6238 = vmatprep.subr.mxu0 0.0
    %6239 = vmatpush1.xpose.msra.mxu0 0.0
    %6240 = vmatprep.subr.mxu0 0.0
    %6241 = vmatpush1.xpose.msra.mxu0 0.0
    %6242 = vmatprep.subr.mxu0 0.0
    %6243 = vmatpush1.xpose.msra.mxu0 0.0
    %6244 = vmatprep.subr.mxu0 0.0
    %6245 = vmatpush1.xpose.msra.mxu0 0.0
    %6246 = vmatprep.subr.mxu0 0.0
    %6247 = vmatpush1.xpose.msra.mxu0 0.0
    %6248 = vmatprep.subr.mxu0 0.0
    %6249 = vmatpush1.xpose.msra.mxu0 0.0
    %6250 = vmatprep.subr.mxu0 0.0
    %6251 = vmatpush1.xpose.msra.mxu0 0.0
    %6252 = vmatprep.subr.mxu0 0.0
    %6253 = vmatpush1.xpose.msra.mxu0 0.0
    %6254 = vmatprep.subr.mxu0 0.0
    %6255 = vmatpush1.xpose.msra.mxu0 %v6228
    %6256 = vmatprep.subr.mxu0 0.0
    %6257 = vmatpush1.xpose.msra.mxu0 %v6226
    %6258 = vmatprep.subr.mxu0 0.0
    %6259 = vmatpush1.xpose.msra.mxu0 %v6224
    %6260 = vmatprep.subr.mxu0 0.0
    %6261 = vmatpush1.xpose.msra.mxu0 %v6222
    %6262 = vmatprep.subr.mxu0 0.0
    %6263 = vmatpush2.xpose.msra.mxu0 0.0
    %6264 = vmatprep.subr.mxu0 0.0
    %6265 = vmatpush2.xpose.msra.mxu0 0.0
    %6266 = vmatprep.subr.mxu0 0.0
    %6267 = vmatpush2.xpose.msra.mxu0 0.0
    %6268 = vmatprep.subr.mxu0 0.0
    %6269 = vmatpush2.xpose.msra.mxu0 0.0
    %6270 = vmatprep.subr.mxu0 0.0
    %6271 = vmatpush2.xpose.msra.mxu0 0.0
    %6272 = vmatprep.subr.mxu0 0.0
    %6273 = vmatpush2.xpose.msra.mxu0 0.0
    %6274 = vmatprep.subr.mxu0 0.0
    %6275 = vmatpush2.xpose.msra.mxu0 0.0
    %6276 = vmatprep.subr.mxu0 0.0
    %6277 = vmatpush2.xpose.msra.mxu0 0.0
    %6278 = vmatprep.subr.mxu0 0.0
    %6279 = vmatpush2.xpose.msra.mxu0 0.0
    %6280 = vmatprep.subr.mxu0 0.0
    %6281 = vmatpush2.xpose.msra.mxu0 0.0
    %6282 = vmatprep.subr.mxu0 0.0
    %6283 = vmatpush2.xpose.msra.mxu0 0.0
    %6284 = vmatprep.subr.mxu0 0.0
    %6285 = vmatpush2.xpose.msra.mxu0 0.0
    %6286 = vmatprep.subr.mxu0 0.0
    %6287 = vmatpush2.xpose.msra.mxu0 0.0
    %6288 = vmatprep.subr.mxu0 0.0
    %6289 = vmatpush2.xpose.msra.mxu0 0.0
    %6290 = vmatprep.subr.mxu0 0.0
    %6291 = vmatpush2.xpose.msra.mxu0 0.0
    %6292 = vmatprep.subr.mxu0 0.0
    %6293 = vmatpush2.xpose.msra.mxu0 0.0
    %6294 = vmatprep.mubr.f32.mxu0 0.0
    %6295 = vmatmul.mubr.f32.gmra.mxu0 %v6121
    %v6296 = vpop.f32.mrf.mxu0
    %v6297 = vadd.f32 %v6196, %v6296
    %v6298 = vpop.f32.mrf.mxu0
    %6299 = vmatprep.mubr.f32.mxu0 0.0
    %6300 = vmatmul.mubr.f32.gmra.mxu0 %v6123
    %v6301 = vpop.f32.mrf.mxu0
    %v6302 = vadd.f32 %v6201, %v6301
    %v6303 = vpop.f32.mrf.mxu0
    %6304 = vmatprep.mubr.f32.mxu0 0.0
    %6305 = vmatmul.mubr.f32.gmra.mxu0 %v6125
    %v6306 = vpop.f32.mrf.mxu0
    %v6307 = vadd.f32 %v6206, %v6306
    %v6308 = vpop.f32.mrf.mxu0
    %6309 = vmatprep.mubr.f32.mxu0 0.0
    %6310 = vmatmul.mubr.f32.gmra.mxu0 %v6127
    %v6311 = vpop.f32.mrf.mxu0
    %v6312 = vadd.f32 %v6211, %v6311
    %v6313 = vpop.f32.mrf.mxu0
    %6314 = vdwg.mxu0
    %v6315 = vsel %vm1590, %v6297, -inf
    %6316 = vmax.xlane.f32.xlu0 %v6315
    %v6317 = vpop.xlane.xlu0 %6316
    %v6318 = vsel %vm1590, %v6302, -inf
    %6319 = vmax.xlane.f32.xlu0 %v6318
    %v6320 = vpop.xlane.xlu0 %6319
    %v6321 = vsel %vm1590, %v6307, -inf
    %6322 = vmax.xlane.f32.xlu0 %v6321
    %v6323 = vpop.xlane.xlu0 %6322
    %v6324 = vsel %vm1590, %v6312, -inf
    %6325 = vmax.xlane.f32.xlu0 %v6324
    %v6326 = vpop.xlane.xlu0 %6325
    %v6327 = vsub.f32 %v6297, %v6317
    %v6328 = vsub.f32 %v6302, %v6320
    %v6329 = vsub.f32 %v6307, %v6323
    %v6330 = vsub.f32 %v6312, %v6326
    %v6331 = vmul.f32 %v6327, 1.442695
    %v6332 = vpow.pop %v6331
    %v6333 = vmul.f32 %v6328, 1.442695
    %v6334 = vpow.pop %v6333
    %v6335 = vmul.f32 %v6329, 1.442695
    %v6336 = vpow.pop %v6335
    %v6337 = vmul.f32 %v6330, 1.442695
    %v6338 = vpow.pop %v6337
    %v6339 = vsel %vm1590, %v6332, 0.0
    %6340 = vadd.xlane.f32.xlu0 %v6339
    %v6341 = vpop.xlane.xlu0 %6340
    %v6342 = vsel %vm1590, %v6334, 0.0
    %6343 = vadd.xlane.f32.xlu0 %v6342
    %v6344 = vpop.xlane.xlu0 %6343
    %v6345 = vsel %vm1590, %v6336, 0.0
    %6346 = vadd.xlane.f32.xlu0 %v6345
    %v6347 = vpop.xlane.xlu0 %6346
    %v6348 = vsel %vm1590, %v6338, 0.0
    %6349 = vadd.xlane.f32.xlu0 %v6348
    %v6350 = vpop.xlane.xlu0 %6349
    %v6351 = vrcp.pop %v6341
    %v6352 = vrcp.pop %v6344
    %v6353 = vrcp.pop %v6347
    %v6354 = vrcp.pop %v6350
    %v6355 = vmul.f32 %v6332, %v6351
    %v6356 = vmul.f32 %v6334, %v6352
    %v6357 = vmul.f32 %v6336, %v6353
    %v6358 = vmul.f32 %v6338, %v6354
    %6359 = vrot.lane.b32.xlu0 %v1561, 64
    %v6360 = vpop.permute.xlu0 %6359
    %6361 = vrot.lane.b32.xlu0 %v1562, 64
    %v6362 = vpop.permute.xlu0 %6361
    %6363 = vrot.lane.b32.xlu0 %v1563, 64
    %v6364 = vpop.permute.xlu0 %6363
    %6365 = vrot.lane.b32.xlu0 %v1564, 64
    %v6366 = vpop.permute.xlu0 %6365
    %v6372 = vsel %vm1590, %v6355, 0
    %v6375 = vsel %vm1590, %v6356, 0
    %v6378 = vsel %vm1590, %v6357, 0
    %v6381 = vsel %vm1590, %v6358, 0
    %6383 = vmatprep.subr.mxu0 0.0
    %6384 = vmatpush1.msra.mxu0 0.0
    %6385 = vmatprep.subr.mxu0 0.0
    %6386 = vmatpush1.msra.mxu0 0.0
    %6387 = vmatprep.subr.mxu0 0.0
    %6388 = vmatpush1.msra.mxu0 0.0
    %6389 = vmatprep.subr.mxu0 0.0
    %6390 = vmatpush1.msra.mxu0 0.0
    %6391 = vmatprep.subr.mxu0 0.0
    %6392 = vmatpush1.msra.mxu0 0.0
    %6393 = vmatprep.subr.mxu0 0.0
    %6394 = vmatpush1.msra.mxu0 0.0
    %6395 = vmatprep.subr.mxu0 0.0
    %6396 = vmatpush1.msra.mxu0 0.0
    %6397 = vmatprep.subr.mxu0 0.0
    %6398 = vmatpush1.msra.mxu0 0.0
    %6399 = vmatprep.subr.mxu0 0.0
    %6400 = vmatpush1.msra.mxu0 0.0
    %6401 = vmatprep.subr.mxu0 0.0
    %6402 = vmatpush1.msra.mxu0 0.0
    %6403 = vmatprep.subr.mxu0 0.0
    %6404 = vmatpush1.msra.mxu0 0.0
    %6405 = vmatprep.subr.mxu0 0.0
    %6406 = vmatpush1.msra.mxu0 0.0
    %6407 = vmatprep.subr.mxu0 0.0
    %6408 = vmatpush1.msra.mxu0 %v6366
    %6409 = vmatprep.subr.mxu0 0.0
    %6410 = vmatpush1.msra.mxu0 %v6364
    %6411 = vmatprep.subr.mxu0 0.0
    %6412 = vmatpush1.msra.mxu0 %v6362
    %6413 = vmatprep.subr.mxu0 0.0
    %6414 = vmatpush1.msra.mxu0 %v6360
    %6415 = vmatprep.subr.mxu0 0.0
    %6416 = vmatpush2.msra.mxu0 0.0
    %6417 = vmatprep.subr.mxu0 0.0
    %6418 = vmatpush2.msra.mxu0 0.0
    %6419 = vmatprep.subr.mxu0 0.0
    %6420 = vmatpush2.msra.mxu0 0.0
    %6421 = vmatprep.subr.mxu0 0.0
    %6422 = vmatpush2.msra.mxu0 0.0
    %6423 = vmatprep.subr.mxu0 0.0
    %6424 = vmatpush2.msra.mxu0 0.0
    %6425 = vmatprep.subr.mxu0 0.0
    %6426 = vmatpush2.msra.mxu0 0.0
    %6427 = vmatprep.subr.mxu0 0.0
    %6428 = vmatpush2.msra.mxu0 0.0
    %6429 = vmatprep.subr.mxu0 0.0
    %6430 = vmatpush2.msra.mxu0 0.0
    %6431 = vmatprep.subr.mxu0 0.0
    %6432 = vmatpush2.msra.mxu0 0.0
    %6433 = vmatprep.subr.mxu0 0.0
    %6434 = vmatpush2.msra.mxu0 0.0
    %6435 = vmatprep.subr.mxu0 0.0
    %6436 = vmatpush2.msra.mxu0 0.0
    %6437 = vmatprep.subr.mxu0 0.0
    %6438 = vmatpush2.msra.mxu0 0.0
    %6439 = vmatprep.subr.mxu0 0.0
    %6440 = vmatpush2.msra.mxu0 0.0
    %6441 = vmatprep.subr.mxu0 0.0
    %6442 = vmatpush2.msra.mxu0 0.0
    %6443 = vmatprep.subr.mxu0 0.0
    %6444 = vmatpush2.msra.mxu0 0.0
    %6445 = vmatprep.subr.mxu0 0.0
    %6446 = vmatpush2.msra.mxu0 0.0
    %6447 = vmatprep.mubr.f32.mxu0 0.0
    %6448 = vmatmul.mubr.f32.gmra.mxu0 %v6372
    %v6449 = vpop.f32.mrf.mxu0
    %v6450 = vadd.f32 0.0, %v6449
    %v6451 = vpop.f32.mrf.mxu0
    %6452 = vmatprep.mubr.f32.mxu0 0.0
    %6453 = vmatmul.mubr.f32.gmra.mxu0 %v6375
    %v6454 = vpop.f32.mrf.mxu0
    %v6455 = vadd.f32 0.0, %v6454
    %v6456 = vpop.f32.mrf.mxu0
    %6457 = vmatprep.mubr.f32.mxu0 0.0
    %6458 = vmatmul.mubr.f32.gmra.mxu0 %v6378
    %v6459 = vpop.f32.mrf.mxu0
    %v6460 = vadd.f32 0.0, %v6459
    %v6461 = vpop.f32.mrf.mxu0
    %6462 = vmatprep.mubr.f32.mxu0 0.0
    %6463 = vmatmul.mubr.f32.gmra.mxu0 %v6381
    %v6464 = vpop.f32.mrf.mxu0
    %v6465 = vadd.f32 0.0, %v6464
    %v6466 = vpop.f32.mrf.mxu0
    %6467 = vdwg.mxu0
    %v6469 = vsel %vm1590, %v6450, 0
    %v6472 = vsel %vm1590, %v6455, 0
    %v6475 = vsel %vm1590, %v6460, 0
    %v6478 = vsel %vm1590, %v6465, 0
    %6480 = vmatprep.subr.mxu0 0.0
    %6481 = vmatpush1.msra.mxu0 0.0
    %6482 = vmatprep.subr.mxu0 0.0
    %6483 = vmatpush1.msra.mxu0 0.0
    %6484 = vmatprep.subr.mxu0 0.0
    %6485 = vmatpush1.msra.mxu0 0.0
    %6486 = vmatprep.subr.mxu0 0.0
    %6487 = vmatpush1.msra.mxu0 0.0
    %6488 = vmatprep.subr.mxu0 0.0
    %6489 = vmatpush1.msra.mxu0 0.0
    %6490 = vmatprep.subr.mxu0 0.0
    %6491 = vmatpush1.msra.mxu0 0.0
    %6492 = vmatprep.subr.mxu0 0.0
    %6493 = vmatpush1.msra.mxu0 0.0
    %6494 = vmatprep.subr.mxu0 0.0
    %6495 = vmatpush1.msra.mxu0 0.0
    %6496 = vmatprep.subr.mxu0 0.0
    %6497 = vmatpush1.msra.mxu0 0.0
    %6498 = vmatprep.subr.mxu0 0.0
    %6499 = vmatpush1.msra.mxu0 0.0
    %6500 = vmatprep.subr.mxu0 0.0
    %6501 = vmatpush1.msra.mxu0 0.0
    %6502 = vmatprep.subr.mxu0 0.0
    %6503 = vmatpush1.msra.mxu0 0.0
    %6504 = vmatprep.subr.mxu0 0.0
    %6505 = vmatpush1.msra.mxu0 %v1580
    %6506 = vmatprep.subr.mxu0 0.0
    %6507 = vmatpush1.msra.mxu0 %v1579
    %6508 = vmatprep.subr.mxu0 0.0
    %6509 = vmatpush1.msra.mxu0 %v1578
    %6510 = vmatprep.subr.mxu0 0.0
    %6511 = vmatpush1.msra.mxu0 %v1577
    %6512 = vmatprep.subr.mxu0 0.0
    %6513 = vmatpush2.msra.mxu0 0.0
    %6514 = vmatprep.subr.mxu0 0.0
    %6515 = vmatpush2.msra.mxu0 0.0
    %6516 = vmatprep.subr.mxu0 0.0
    %6517 = vmatpush2.msra.mxu0 0.0
    %6518 = vmatprep.subr.mxu0 0.0
    %6519 = vmatpush2.msra.mxu0 0.0
    %6520 = vmatprep.subr.mxu0 0.0
    %6521 = vmatpush2.msra.mxu0 0.0
    %6522 = vmatprep.subr.mxu0 0.0
    %6523 = vmatpush2.msra.mxu0 0.0
    %6524 = vmatprep.subr.mxu0 0.0
    %6525 = vmatpush2.msra.mxu0 0.0
    %6526 = vmatprep.subr.mxu0 0.0
    %6527 = vmatpush2.msra.mxu0 0.0
    %6528 = vmatprep.subr.mxu0 0.0
    %6529 = vmatpush2.msra.mxu0 0.0
    %6530 = vmatprep.subr.mxu0 0.0
    %6531 = vmatpush2.msra.mxu0 0.0
    %6532 = vmatprep.subr.mxu0 0.0
    %6533 = vmatpush2.msra.mxu0 0.0
    %6534 = vmatprep.subr.mxu0 0.0
    %6535 = vmatpush2.msra.mxu0 0.0
    %6536 = vmatprep.subr.mxu0 0.0
    %6537 = vmatpush2.msra.mxu0 0.0
    %6538 = vmatprep.subr.mxu0 0.0
    %6539 = vmatpush2.msra.mxu0 0.0
    %6540 = vmatprep.subr.mxu0 0.0
    %6541 = vmatpush2.msra.mxu0 0.0
    %6542 = vmatprep.subr.mxu0 0.0
    %6543 = vmatpush2.msra.mxu0 0.0
    %6544 = vmatprep.mubr.f32.mxu0 0.0
    %6545 = vmatmul.mubr.f32.gmra.mxu0 %v6469
    %v6546 = vpop.f32.mrf.mxu0
    %v6547 = vadd.f32 0.0, %v6546
    %v6548 = vpop.f32.mrf.mxu0
    %6549 = vmatprep.mubr.f32.mxu0 0.0
    %6550 = vmatmul.mubr.f32.gmra.mxu0 %v6472
    %v6551 = vpop.f32.mrf.mxu0
    %v6552 = vadd.f32 0.0, %v6551
    %v6553 = vpop.f32.mrf.mxu0
    %6554 = vmatprep.mubr.f32.mxu0 0.0
    %6555 = vmatmul.mubr.f32.gmra.mxu0 %v6475
    %v6556 = vpop.f32.mrf.mxu0
    %v6557 = vadd.f32 0.0, %v6556
    %v6558 = vpop.f32.mrf.mxu0
    %6559 = vmatprep.mubr.f32.mxu0 0.0
    %6560 = vmatmul.mubr.f32.gmra.mxu0 %v6478
    %v6561 = vpop.f32.mrf.mxu0
    %v6562 = vadd.f32 0.0, %v6561
    %v6563 = vpop.f32.mrf.mxu0
    %6564 = vdwg.mxu0
    %v6565 = vadd.f32 %v6095, %v6547
    %v6566 = vadd.f32 %v6100, %v6552
    %v6567 = vadd.f32 %v6105, %v6557
    %v6568 = vadd.f32 %v6110, %v6562
    %6569 = vrot.lane.b32.xlu0 %v801, 32
    %v6570 = vpop.permute.xlu0 %6569
    %6571 = vrot.lane.b32.xlu0 %v802, 32
    %v6572 = vpop.permute.xlu0 %6571
    %6573 = vrot.lane.b32.xlu0 %v803, 32
    %v6574 = vpop.permute.xlu0 %6573
    %6575 = vrot.lane.b32.xlu0 %v804, 32
    %v6576 = vpop.permute.xlu0 %6575
    %v6577 = vsel %vm1590, %v6570, 0
    %v6579 = vsel %vm1590, %v6572, 0
    %v6581 = vsel %vm1590, %v6574, 0
    %v6583 = vsel %vm1590, %v6576, 0
    %6585 = vmatprep.subr.mxu0 0.0
    %6586 = vmatpush1.xpose.msra.mxu0 0.0
    %6587 = vmatprep.subr.mxu0 0.0
    %6588 = vmatpush1.xpose.msra.mxu0 0.0
    %6589 = vmatprep.subr.mxu0 0.0
    %6590 = vmatpush1.xpose.msra.mxu0 0.0
    %6591 = vmatprep.subr.mxu0 0.0
    %6592 = vmatpush1.xpose.msra.mxu0 0.0
    %6593 = vmatprep.subr.mxu0 0.0
    %6594 = vmatpush1.xpose.msra.mxu0 0.0
    %6595 = vmatprep.subr.mxu0 0.0
    %6596 = vmatpush1.xpose.msra.mxu0 0.0
    %6597 = vmatprep.subr.mxu0 0.0
    %6598 = vmatpush1.xpose.msra.mxu0 0.0
    %6599 = vmatprep.subr.mxu0 0.0
    %6600 = vmatpush1.xpose.msra.mxu0 0.0
    %6601 = vmatprep.subr.mxu0 0.0
    %6602 = vmatpush1.xpose.msra.mxu0 0.0
    %6603 = vmatprep.subr.mxu0 0.0
    %6604 = vmatpush1.xpose.msra.mxu0 0.0
    %6605 = vmatprep.subr.mxu0 0.0
    %6606 = vmatpush1.xpose.msra.mxu0 0.0
    %6607 = vmatprep.subr.mxu0 0.0
    %6608 = vmatpush1.xpose.msra.mxu0 0.0
    %6609 = vmatprep.subr.mxu0 0.0
    %6610 = vmatpush1.xpose.msra.mxu0 %v6583
    %6611 = vmatprep.subr.mxu0 0.0
    %6612 = vmatpush1.xpose.msra.mxu0 %v6581
    %6613 = vmatprep.subr.mxu0 0.0
    %6614 = vmatpush1.xpose.msra.mxu0 %v6579
    %6615 = vmatprep.subr.mxu0 0.0
    %6616 = vmatpush1.xpose.msra.mxu0 %v6577
    %6617 = vmatprep.subr.mxu0 0.0
    %6618 = vmatpush2.xpose.msra.mxu0 0.0
    %6619 = vmatprep.subr.mxu0 0.0
    %6620 = vmatpush2.xpose.msra.mxu0 0.0
    %6621 = vmatprep.subr.mxu0 0.0
    %6622 = vmatpush2.xpose.msra.mxu0 0.0
    %6623 = vmatprep.subr.mxu0 0.0
    %6624 = vmatpush2.xpose.msra.mxu0 0.0
    %6625 = vmatprep.subr.mxu0 0.0
    %6626 = vmatpush2.xpose.msra.mxu0 0.0
    %6627 = vmatprep.subr.mxu0 0.0
    %6628 = vmatpush2.xpose.msra.mxu0 0.0
    %6629 = vmatprep.subr.mxu0 0.0
    %6630 = vmatpush2.xpose.msra.mxu0 0.0
    %6631 = vmatprep.subr.mxu0 0.0
    %6632 = vmatpush2.xpose.msra.mxu0 0.0
    %6633 = vmatprep.subr.mxu0 0.0
    %6634 = vmatpush2.xpose.msra.mxu0 0.0
    %6635 = vmatprep.subr.mxu0 0.0
    %6636 = vmatpush2.xpose.msra.mxu0 0.0
    %6637 = vmatprep.subr.mxu0 0.0
    %6638 = vmatpush2.xpose.msra.mxu0 0.0
    %6639 = vmatprep.subr.mxu0 0.0
    %6640 = vmatpush2.xpose.msra.mxu0 0.0
    %6641 = vmatprep.subr.mxu0 0.0
    %6642 = vmatpush2.xpose.msra.mxu0 0.0
    %6643 = vmatprep.subr.mxu0 0.0
    %6644 = vmatpush2.xpose.msra.mxu0 0.0
    %6645 = vmatprep.subr.mxu0 0.0
    %6646 = vmatpush2.xpose.msra.mxu0 0.0
    %6647 = vmatprep.subr.mxu0 0.0
    %6648 = vmatpush2.xpose.msra.mxu0 0.0
    %6649 = vmatprep.mubr.f32.mxu0 0.0
    %6650 = vmatmul.mubr.f32.gmra.mxu0 %v1592
    %v6651 = vpop.f32.mrf.mxu0
    %v6652 = vadd.f32 0.0, %v6651
    %v6653 = vpop.f32.mrf.mxu0
    %6654 = vmatprep.mubr.f32.mxu0 0.0
    %6655 = vmatmul.mubr.f32.gmra.mxu0 %v1595
    %v6656 = vpop.f32.mrf.mxu0
    %v6657 = vadd.f32 0.0, %v6656
    %v6658 = vpop.f32.mrf.mxu0
    %6659 = vmatprep.mubr.f32.mxu0 0.0
    %6660 = vmatmul.mubr.f32.gmra.mxu0 %v1598
    %v6661 = vpop.f32.mrf.mxu0
    %v6662 = vadd.f32 0.0, %v6661
    %v6663 = vpop.f32.mrf.mxu0
    %6664 = vmatprep.mubr.f32.mxu0 0.0
    %6665 = vmatmul.mubr.f32.gmra.mxu0 %v1601
    %v6666 = vpop.f32.mrf.mxu0
    %v6667 = vadd.f32 0.0, %v6666
    %v6668 = vpop.f32.mrf.mxu0
    %6669 = vdwg.mxu0
    %6670 = vrot.lane.b32.xlu0 %v1181, 32
    %v6671 = vpop.permute.xlu0 %6670
    %6672 = vrot.lane.b32.xlu0 %v1182, 32
    %v6673 = vpop.permute.xlu0 %6672
    %6674 = vrot.lane.b32.xlu0 %v1183, 32
    %v6675 = vpop.permute.xlu0 %6674
    %6676 = vrot.lane.b32.xlu0 %v1184, 32
    %v6677 = vpop.permute.xlu0 %6676
    %v6678 = vsel %vm1590, %v6671, 0
    %v6680 = vsel %vm1590, %v6673, 0
    %v6682 = vsel %vm1590, %v6675, 0
    %v6684 = vsel %vm1590, %v6677, 0
    %6686 = vmatprep.subr.mxu0 0.0
    %6687 = vmatpush1.xpose.msra.mxu0 0.0
    %6688 = vmatprep.subr.mxu0 0.0
    %6689 = vmatpush1.xpose.msra.mxu0 0.0
    %6690 = vmatprep.subr.mxu0 0.0
    %6691 = vmatpush1.xpose.msra.mxu0 0.0
    %6692 = vmatprep.subr.mxu0 0.0
    %6693 = vmatpush1.xpose.msra.mxu0 0.0
    %6694 = vmatprep.subr.mxu0 0.0
    %6695 = vmatpush1.xpose.msra.mxu0 0.0
    %6696 = vmatprep.subr.mxu0 0.0
    %6697 = vmatpush1.xpose.msra.mxu0 0.0
    %6698 = vmatprep.subr.mxu0 0.0
    %6699 = vmatpush1.xpose.msra.mxu0 0.0
    %6700 = vmatprep.subr.mxu0 0.0
    %6701 = vmatpush1.xpose.msra.mxu0 0.0
    %6702 = vmatprep.subr.mxu0 0.0
    %6703 = vmatpush1.xpose.msra.mxu0 0.0
    %6704 = vmatprep.subr.mxu0 0.0
    %6705 = vmatpush1.xpose.msra.mxu0 0.0
    %6706 = vmatprep.subr.mxu0 0.0
    %6707 = vmatpush1.xpose.msra.mxu0 0.0
    %6708 = vmatprep.subr.mxu0 0.0
    %6709 = vmatpush1.xpose.msra.mxu0 0.0
    %6710 = vmatprep.subr.mxu0 0.0
    %6711 = vmatpush1.xpose.msra.mxu0 %v6684
    %6712 = vmatprep.subr.mxu0 0.0
    %6713 = vmatpush1.xpose.msra.mxu0 %v6682
    %6714 = vmatprep.subr.mxu0 0.0
    %6715 = vmatpush1.xpose.msra.mxu0 %v6680
    %6716 = vmatprep.subr.mxu0 0.0
    %6717 = vmatpush1.xpose.msra.mxu0 %v6678
    %6718 = vmatprep.subr.mxu0 0.0
    %6719 = vmatpush2.xpose.msra.mxu0 0.0
    %6720 = vmatprep.subr.mxu0 0.0
    %6721 = vmatpush2.xpose.msra.mxu0 0.0
    %6722 = vmatprep.subr.mxu0 0.0
    %6723 = vmatpush2.xpose.msra.mxu0 0.0
    %6724 = vmatprep.subr.mxu0 0.0
    %6725 = vmatpush2.xpose.msra.mxu0 0.0
    %6726 = vmatprep.subr.mxu0 0.0
    %6727 = vmatpush2.xpose.msra.mxu0 0.0
    %6728 = vmatprep.subr.mxu0 0.0
    %6729 = vmatpush2.xpose.msra.mxu0 0.0
    %6730 = vmatprep.subr.mxu0 0.0
    %6731 = vmatpush2.xpose.msra.mxu0 0.0
    %6732 = vmatprep.subr.mxu0 0.0
    %6733 = vmatpush2.xpose.msra.mxu0 0.0
    %6734 = vmatprep.subr.mxu0 0.0
    %6735 = vmatpush2.xpose.msra.mxu0 0.0
    %6736 = vmatprep.subr.mxu0 0.0
    %6737 = vmatpush2.xpose.msra.mxu0 0.0
    %6738 = vmatprep.subr.mxu0 0.0
    %6739 = vmatpush2.xpose.msra.mxu0 0.0
    %6740 = vmatprep.subr.mxu0 0.0
    %6741 = vmatpush2.xpose.msra.mxu0 0.0
    %6742 = vmatprep.subr.mxu0 0.0
    %6743 = vmatpush2.xpose.msra.mxu0 0.0
    %6744 = vmatprep.subr.mxu0 0.0
    %6745 = vmatpush2.xpose.msra.mxu0 0.0
    %6746 = vmatprep.subr.mxu0 0.0
    %6747 = vmatpush2.xpose.msra.mxu0 0.0
    %6748 = vmatprep.subr.mxu0 0.0
    %6749 = vmatpush2.xpose.msra.mxu0 0.0
    %6750 = vmatprep.mubr.f32.mxu0 0.0
    %6751 = vmatmul.mubr.f32.gmra.mxu0 %v6577
    %v6752 = vpop.f32.mrf.mxu0
    %v6753 = vadd.f32 %v6652, %v6752
    %v6754 = vpop.f32.mrf.mxu0
    %6755 = vmatprep.mubr.f32.mxu0 0.0
    %6756 = vmatmul.mubr.f32.gmra.mxu0 %v6579
    %v6757 = vpop.f32.mrf.mxu0
    %v6758 = vadd.f32 %v6657, %v6757
    %v6759 = vpop.f32.mrf.mxu0
    %6760 = vmatprep.mubr.f32.mxu0 0.0
    %6761 = vmatmul.mubr.f32.gmra.mxu0 %v6581
    %v6762 = vpop.f32.mrf.mxu0
    %v6763 = vadd.f32 %v6662, %v6762
    %v6764 = vpop.f32.mrf.mxu0
    %6765 = vmatprep.mubr.f32.mxu0 0.0
    %6766 = vmatmul.mubr.f32.gmra.mxu0 %v6583
    %v6767 = vpop.f32.mrf.mxu0
    %v6768 = vadd.f32 %v6667, %v6767
    %v6769 = vpop.f32.mrf.mxu0
    %6770 = vdwg.mxu0
    %v6771 = vsel %vm1590, %v6753, -inf
    %6772 = vmax.xlane.f32.xlu0 %v6771
    %v6773 = vpop.xlane.xlu0 %6772
    %v6774 = vsel %vm1590, %v6758, -inf
    %6775 = vmax.xlane.f32.xlu0 %v6774
    %v6776 = vpop.xlane.xlu0 %6775
    %v6777 = vsel %vm1590, %v6763, -inf
    %6778 = vmax.xlane.f32.xlu0 %v6777
    %v6779 = vpop.xlane.xlu0 %6778
    %v6780 = vsel %vm1590, %v6768, -inf
    %6781 = vmax.xlane.f32.xlu0 %v6780
    %v6782 = vpop.xlane.xlu0 %6781
    %v6783 = vsub.f32 %v6753, %v6773
    %v6784 = vsub.f32 %v6758, %v6776
    %v6785 = vsub.f32 %v6763, %v6779
    %v6786 = vsub.f32 %v6768, %v6782
    %v6787 = vmul.f32 %v6783, 1.442695
    %v6788 = vpow.pop %v6787
    %v6789 = vmul.f32 %v6784, 1.442695
    %v6790 = vpow.pop %v6789
    %v6791 = vmul.f32 %v6785, 1.442695
    %v6792 = vpow.pop %v6791
    %v6793 = vmul.f32 %v6786, 1.442695
    %v6794 = vpow.pop %v6793
    %v6795 = vsel %vm1590, %v6788, 0.0
    %6796 = vadd.xlane.f32.xlu0 %v6795
    %v6797 = vpop.xlane.xlu0 %6796
    %v6798 = vsel %vm1590, %v6790, 0.0
    %6799 = vadd.xlane.f32.xlu0 %v6798
    %v6800 = vpop.xlane.xlu0 %6799
    %v6801 = vsel %vm1590, %v6792, 0.0
    %6802 = vadd.xlane.f32.xlu0 %v6801
    %v6803 = vpop.xlane.xlu0 %6802
    %v6804 = vsel %vm1590, %v6794, 0.0
    %6805 = vadd.xlane.f32.xlu0 %v6804
    %v6806 = vpop.xlane.xlu0 %6805
    %v6807 = vrcp.pop %v6797
    %v6808 = vrcp.pop %v6800
    %v6809 = vrcp.pop %v6803
    %v6810 = vrcp.pop %v6806
    %v6811 = vmul.f32 %v6788, %v6807
    %v6812 = vmul.f32 %v6790, %v6808
    %v6813 = vmul.f32 %v6792, %v6809
    %v6814 = vmul.f32 %v6794, %v6810
    %6815 = vrot.lane.b32.xlu0 %v1561, 32
    %v6816 = vpop.permute.xlu0 %6815
    %6817 = vrot.lane.b32.xlu0 %v1562, 32
    %v6818 = vpop.permute.xlu0 %6817
    %6819 = vrot.lane.b32.xlu0 %v1563, 32
    %v6820 = vpop.permute.xlu0 %6819
    %6821 = vrot.lane.b32.xlu0 %v1564, 32
    %v6822 = vpop.permute.xlu0 %6821
    %v6828 = vsel %vm1590, %v6811, 0
    %v6831 = vsel %vm1590, %v6812, 0
    %v6834 = vsel %vm1590, %v6813, 0
    %v6837 = vsel %vm1590, %v6814, 0
    %6839 = vmatprep.subr.mxu0 0.0
    %6840 = vmatpush1.msra.mxu0 0.0
    %6841 = vmatprep.subr.mxu0 0.0
    %6842 = vmatpush1.msra.mxu0 0.0
    %6843 = vmatprep.subr.mxu0 0.0
    %6844 = vmatpush1.msra.mxu0 0.0
    %6845 = vmatprep.subr.mxu0 0.0
    %6846 = vmatpush1.msra.mxu0 0.0
    %6847 = vmatprep.subr.mxu0 0.0
    %6848 = vmatpush1.msra.mxu0 0.0
    %6849 = vmatprep.subr.mxu0 0.0
    %6850 = vmatpush1.msra.mxu0 0.0
    %6851 = vmatprep.subr.mxu0 0.0
    %6852 = vmatpush1.msra.mxu0 0.0
    %6853 = vmatprep.subr.mxu0 0.0
    %6854 = vmatpush1.msra.mxu0 0.0
    %6855 = vmatprep.subr.mxu0 0.0
    %6856 = vmatpush1.msra.mxu0 0.0
    %6857 = vmatprep.subr.mxu0 0.0
    %6858 = vmatpush1.msra.mxu0 0.0
    %6859 = vmatprep.subr.mxu0 0.0
    %6860 = vmatpush1.msra.mxu0 0.0
    %6861 = vmatprep.subr.mxu0 0.0
    %6862 = vmatpush1.msra.mxu0 0.0
    %6863 = vmatprep.subr.mxu0 0.0
    %6864 = vmatpush1.msra.mxu0 %v6822
    %6865 = vmatprep.subr.mxu0 0.0
    %6866 = vmatpush1.msra.mxu0 %v6820
    %6867 = vmatprep.subr.mxu0 0.0
    %6868 = vmatpush1.msra.mxu0 %v6818
    %6869 = vmatprep.subr.mxu0 0.0
    %6870 = vmatpush1.msra.mxu0 %v6816
    %6871 = vmatprep.subr.mxu0 0.0
    %6872 = vmatpush2.msra.mxu0 0.0
    %6873 = vmatprep.subr.mxu0 0.0
    %6874 = vmatpush2.msra.mxu0 0.0
    %6875 = vmatprep.subr.mxu0 0.0
    %6876 = vmatpush2.msra.mxu0 0.0
    %6877 = vmatprep.subr.mxu0 0.0
    %6878 = vmatpush2.msra.mxu0 0.0
    %6879 = vmatprep.subr.mxu0 0.0
    %6880 = vmatpush2.msra.mxu0 0.0
    %6881 = vmatprep.subr.mxu0 0.0
    %6882 = vmatpush2.msra.mxu0 0.0
    %6883 = vmatprep.subr.mxu0 0.0
    %6884 = vmatpush2.msra.mxu0 0.0
    %6885 = vmatprep.subr.mxu0 0.0
    %6886 = vmatpush2.msra.mxu0 0.0
    %6887 = vmatprep.subr.mxu0 0.0
    %6888 = vmatpush2.msra.mxu0 0.0
    %6889 = vmatprep.subr.mxu0 0.0
    %6890 = vmatpush2.msra.mxu0 0.0
    %6891 = vmatprep.subr.mxu0 0.0
    %6892 = vmatpush2.msra.mxu0 0.0
    %6893 = vmatprep.subr.mxu0 0.0
    %6894 = vmatpush2.msra.mxu0 0.0
    %6895 = vmatprep.subr.mxu0 0.0
    %6896 = vmatpush2.msra.mxu0 0.0
    %6897 = vmatprep.subr.mxu0 0.0
    %6898 = vmatpush2.msra.mxu0 0.0
    %6899 = vmatprep.subr.mxu0 0.0
    %6900 = vmatpush2.msra.mxu0 0.0
    %6901 = vmatprep.subr.mxu0 0.0
    %6902 = vmatpush2.msra.mxu0 0.0
    %6903 = vmatprep.mubr.f32.mxu0 0.0
    %6904 = vmatmul.mubr.f32.gmra.mxu0 %v6828
    %v6905 = vpop.f32.mrf.mxu0
    %v6906 = vadd.f32 0.0, %v6905
    %v6907 = vpop.f32.mrf.mxu0
    %6908 = vmatprep.mubr.f32.mxu0 0.0
    %6909 = vmatmul.mubr.f32.gmra.mxu0 %v6831
    %v6910 = vpop.f32.mrf.mxu0
    %v6911 = vadd.f32 0.0, %v6910
    %v6912 = vpop.f32.mrf.mxu0
    %6913 = vmatprep.mubr.f32.mxu0 0.0
    %6914 = vmatmul.mubr.f32.gmra.mxu0 %v6834
    %v6915 = vpop.f32.mrf.mxu0
    %v6916 = vadd.f32 0.0, %v6915
    %v6917 = vpop.f32.mrf.mxu0
    %6918 = vmatprep.mubr.f32.mxu0 0.0
    %6919 = vmatmul.mubr.f32.gmra.mxu0 %v6837
    %v6920 = vpop.f32.mrf.mxu0
    %v6921 = vadd.f32 0.0, %v6920
    %v6922 = vpop.f32.mrf.mxu0
    %6923 = vdwg.mxu0
    %v6925 = vsel %vm1590, %v6906, 0
    %v6928 = vsel %vm1590, %v6911, 0
    %v6931 = vsel %vm1590, %v6916, 0
    %v6934 = vsel %vm1590, %v6921, 0
    %6936 = vmatprep.subr.mxu0 0.0
    %6937 = vmatpush1.msra.mxu0 0.0
    %6938 = vmatprep.subr.mxu0 0.0
    %6939 = vmatpush1.msra.mxu0 0.0
    %6940 = vmatprep.subr.mxu0 0.0
    %6941 = vmatpush1.msra.mxu0 0.0
    %6942 = vmatprep.subr.mxu0 0.0
    %6943 = vmatpush1.msra.mxu0 0.0
    %6944 = vmatprep.subr.mxu0 0.0
    %6945 = vmatpush1.msra.mxu0 0.0
    %6946 = vmatprep.subr.mxu0 0.0
    %6947 = vmatpush1.msra.mxu0 0.0
    %6948 = vmatprep.subr.mxu0 0.0
    %6949 = vmatpush1.msra.mxu0 0.0
    %6950 = vmatprep.subr.mxu0 0.0
    %6951 = vmatpush1.msra.mxu0 0.0
    %6952 = vmatprep.subr.mxu0 0.0
    %6953 = vmatpush1.msra.mxu0 0.0
    %6954 = vmatprep.subr.mxu0 0.0
    %6955 = vmatpush1.msra.mxu0 0.0
    %6956 = vmatprep.subr.mxu0 0.0
    %6957 = vmatpush1.msra.mxu0 0.0
    %6958 = vmatprep.subr.mxu0 0.0
    %6959 = vmatpush1.msra.mxu0 0.0
    %6960 = vmatprep.subr.mxu0 0.0
    %6961 = vmatpush1.msra.mxu0 %v1584
    %6962 = vmatprep.subr.mxu0 0.0
    %6963 = vmatpush1.msra.mxu0 %v1583
    %6964 = vmatprep.subr.mxu0 0.0
    %6965 = vmatpush1.msra.mxu0 %v1582
    %6966 = vmatprep.subr.mxu0 0.0
    %6967 = vmatpush1.msra.mxu0 %v1581
    %6968 = vmatprep.subr.mxu0 0.0
    %6969 = vmatpush2.msra.mxu0 0.0
    %6970 = vmatprep.subr.mxu0 0.0
    %6971 = vmatpush2.msra.mxu0 0.0
    %6972 = vmatprep.subr.mxu0 0.0
    %6973 = vmatpush2.msra.mxu0 0.0
    %6974 = vmatprep.subr.mxu0 0.0
    %6975 = vmatpush2.msra.mxu0 0.0
    %6976 = vmatprep.subr.mxu0 0.0
    %6977 = vmatpush2.msra.mxu0 0.0
    %6978 = vmatprep.subr.mxu0 0.0
    %6979 = vmatpush2.msra.mxu0 0.0
    %6980 = vmatprep.subr.mxu0 0.0
    %6981 = vmatpush2.msra.mxu0 0.0
    %6982 = vmatprep.subr.mxu0 0.0
    %6983 = vmatpush2.msra.mxu0 0.0
    %6984 = vmatprep.subr.mxu0 0.0
    %6985 = vmatpush2.msra.mxu0 0.0
    %6986 = vmatprep.subr.mxu0 0.0
    %6987 = vmatpush2.msra.mxu0 0.0
    %6988 = vmatprep.subr.mxu0 0.0
    %6989 = vmatpush2.msra.mxu0 0.0
    %6990 = vmatprep.subr.mxu0 0.0
    %6991 = vmatpush2.msra.mxu0 0.0
    %6992 = vmatprep.subr.mxu0 0.0
    %6993 = vmatpush2.msra.mxu0 0.0
    %6994 = vmatprep.subr.mxu0 0.0
    %6995 = vmatpush2.msra.mxu0 0.0
    %6996 = vmatprep.subr.mxu0 0.0
    %6997 = vmatpush2.msra.mxu0 0.0
    %6998 = vmatprep.subr.mxu0 0.0
    %6999 = vmatpush2.msra.mxu0 0.0
    %7000 = vmatprep.mubr.f32.mxu0 0.0
    %7001 = vmatmul.mubr.f32.gmra.mxu0 %v6925
    %v7002 = vpop.f32.mrf.mxu0
    %v7003 = vadd.f32 0.0, %v7002
    %v7004 = vpop.f32.mrf.mxu0
    %7005 = vmatprep.mubr.f32.mxu0 0.0
    %7006 = vmatmul.mubr.f32.gmra.mxu0 %v6928
    %v7007 = vpop.f32.mrf.mxu0
    %v7008 = vadd.f32 0.0, %v7007
    %v7009 = vpop.f32.mrf.mxu0
    %7010 = vmatprep.mubr.f32.mxu0 0.0
    %7011 = vmatmul.mubr.f32.gmra.mxu0 %v6931
    %v7012 = vpop.f32.mrf.mxu0
    %v7013 = vadd.f32 0.0, %v7012
    %v7014 = vpop.f32.mrf.mxu0
    %7015 = vmatprep.mubr.f32.mxu0 0.0
    %7016 = vmatmul.mubr.f32.gmra.mxu0 %v6934
    %v7017 = vpop.f32.mrf.mxu0
    %v7018 = vadd.f32 0.0, %v7017
    %v7019 = vpop.f32.mrf.mxu0
    %7020 = vdwg.mxu0
    %v7021 = vadd.f32 %v6565, %v7003
    %v7022 = vadd.f32 %v6566, %v7008
    %v7023 = vadd.f32 %v6567, %v7013
    %v7024 = vadd.f32 %v6568, %v7018
    %v7025 = vadd.f32 %v7021, %v3407
    %v7026 = vadd.f32 %v7022, %v3407
    %v7027 = vadd.f32 %v7023, %v3407
    %v7028 = vadd.f32 %v7024, %v3407
    %7029 = vst [vmem:[#allocation17 + $0x40] sm:$0xff] %v7025
    %7030 = vst [vmem:[#allocation17 + $0x48] sm:$0xff] %v7026
    %7031 = vst [vmem:[#allocation17 + $0x50] sm:$0xff] %v7027
    %7032 = vst [vmem:[#allocation17 + $0x58] sm:$0xff] %v7028
    %v7034 = vsel %vm1590, %v805, 0
    %v7037 = vsel %vm1590, %v806, 0
    %v7040 = vsel %vm1590, %v807, 0
    %v7043 = vsel %vm1590, %v808, 0
    %7045 = vmatprep.subr.mxu0 0.0
    %7046 = vmatpush1.xpose.msra.mxu0 0.0
    %7047 = vmatprep.subr.mxu0 0.0
    %7048 = vmatpush1.xpose.msra.mxu0 0.0
    %7049 = vmatprep.subr.mxu0 0.0
    %7050 = vmatpush1.xpose.msra.mxu0 0.0
    %7051 = vmatprep.subr.mxu0 0.0
    %7052 = vmatpush1.xpose.msra.mxu0 0.0
    %7053 = vmatprep.subr.mxu0 0.0
    %7054 = vmatpush1.xpose.msra.mxu0 0.0
    %7055 = vmatprep.subr.mxu0 0.0
    %7056 = vmatpush1.xpose.msra.mxu0 0.0
    %7057 = vmatprep.subr.mxu0 0.0
    %7058 = vmatpush1.xpose.msra.mxu0 0.0
    %7059 = vmatprep.subr.mxu0 0.0
    %7060 = vmatpush1.xpose.msra.mxu0 0.0
    %7061 = vmatprep.subr.mxu0 0.0
    %7062 = vmatpush1.xpose.msra.mxu0 0.0
    %7063 = vmatprep.subr.mxu0 0.0
    %7064 = vmatpush1.xpose.msra.mxu0 0.0
    %7065 = vmatprep.subr.mxu0 0.0
    %7066 = vmatpush1.xpose.msra.mxu0 0.0
    %7067 = vmatprep.subr.mxu0 0.0
    %7068 = vmatpush1.xpose.msra.mxu0 0.0
    %7069 = vmatprep.subr.mxu0 0.0
    %7070 = vmatpush1.xpose.msra.mxu0 %v7043
    %7071 = vmatprep.subr.mxu0 0.0
    %7072 = vmatpush1.xpose.msra.mxu0 %v7040
    %7073 = vmatprep.subr.mxu0 0.0
    %7074 = vmatpush1.xpose.msra.mxu0 %v7037
    %7075 = vmatprep.subr.mxu0 0.0
    %7076 = vmatpush1.xpose.msra.mxu0 %v7034
    %7077 = vmatprep.subr.mxu0 0.0
    %7078 = vmatpush2.xpose.msra.mxu0 0.0
    %7079 = vmatprep.subr.mxu0 0.0
    %7080 = vmatpush2.xpose.msra.mxu0 0.0
    %7081 = vmatprep.subr.mxu0 0.0
    %7082 = vmatpush2.xpose.msra.mxu0 0.0
    %7083 = vmatprep.subr.mxu0 0.0
    %7084 = vmatpush2.xpose.msra.mxu0 0.0
    %7085 = vmatprep.subr.mxu0 0.0
    %7086 = vmatpush2.xpose.msra.mxu0 0.0
    %7087 = vmatprep.subr.mxu0 0.0
    %7088 = vmatpush2.xpose.msra.mxu0 0.0
    %7089 = vmatprep.subr.mxu0 0.0
    %7090 = vmatpush2.xpose.msra.mxu0 0.0
    %7091 = vmatprep.subr.mxu0 0.0
    %7092 = vmatpush2.xpose.msra.mxu0 0.0
    %7093 = vmatprep.subr.mxu0 0.0
    %7094 = vmatpush2.xpose.msra.mxu0 0.0
    %7095 = vmatprep.subr.mxu0 0.0
    %7096 = vmatpush2.xpose.msra.mxu0 0.0
    %7097 = vmatprep.subr.mxu0 0.0
    %7098 = vmatpush2.xpose.msra.mxu0 0.0
    %7099 = vmatprep.subr.mxu0 0.0
    %7100 = vmatpush2.xpose.msra.mxu0 0.0
    %7101 = vmatprep.subr.mxu0 0.0
    %7102 = vmatpush2.xpose.msra.mxu0 0.0
    %7103 = vmatprep.subr.mxu0 0.0
    %7104 = vmatpush2.xpose.msra.mxu0 0.0
    %7105 = vmatprep.subr.mxu0 0.0
    %7106 = vmatpush2.xpose.msra.mxu0 0.0
    %7107 = vmatprep.subr.mxu0 0.0
    %7108 = vmatpush2.xpose.msra.mxu0 0.0
    %7109 = vmatprep.mubr.f32.mxu0 0.0
    %7110 = vmatmul.mubr.f32.gmra.mxu0 %v1592
    %v7111 = vpop.f32.mrf.mxu0
    %v7112 = vadd.f32 0.0, %v7111
    %v7113 = vpop.f32.mrf.mxu0
    %7114 = vmatprep.mubr.f32.mxu0 0.0
    %7115 = vmatmul.mubr.f32.gmra.mxu0 %v1595
    %v7116 = vpop.f32.mrf.mxu0
    %v7117 = vadd.f32 0.0, %v7116
    %v7118 = vpop.f32.mrf.mxu0
    %7119 = vmatprep.mubr.f32.mxu0 0.0
    %7120 = vmatmul.mubr.f32.gmra.mxu0 %v1598
    %v7121 = vpop.f32.mrf.mxu0
    %v7122 = vadd.f32 0.0, %v7121
    %v7123 = vpop.f32.mrf.mxu0
    %7124 = vmatprep.mubr.f32.mxu0 0.0
    %7125 = vmatmul.mubr.f32.gmra.mxu0 %v1601
    %v7126 = vpop.f32.mrf.mxu0
    %v7127 = vadd.f32 0.0, %v7126
    %v7128 = vpop.f32.mrf.mxu0
    %7129 = vdwg.mxu0
    %v7131 = vsel %vm1590, %v1185, 0
    %v7134 = vsel %vm1590, %v1186, 0
    %v7137 = vsel %vm1590, %v1187, 0
    %v7140 = vsel %vm1590, %v1188, 0
    %7142 = vmatprep.subr.mxu0 0.0
    %7143 = vmatpush1.xpose.msra.mxu0 0.0
    %7144 = vmatprep.subr.mxu0 0.0
    %7145 = vmatpush1.xpose.msra.mxu0 0.0
    %7146 = vmatprep.subr.mxu0 0.0
    %7147 = vmatpush1.xpose.msra.mxu0 0.0
    %7148 = vmatprep.subr.mxu0 0.0
    %7149 = vmatpush1.xpose.msra.mxu0 0.0
    %7150 = vmatprep.subr.mxu0 0.0
    %7151 = vmatpush1.xpose.msra.mxu0 0.0
    %7152 = vmatprep.subr.mxu0 0.0
    %7153 = vmatpush1.xpose.msra.mxu0 0.0
    %7154 = vmatprep.subr.mxu0 0.0
    %7155 = vmatpush1.xpose.msra.mxu0 0.0
    %7156 = vmatprep.subr.mxu0 0.0
    %7157 = vmatpush1.xpose.msra.mxu0 0.0
    %7158 = vmatprep.subr.mxu0 0.0
    %7159 = vmatpush1.xpose.msra.mxu0 0.0
    %7160 = vmatprep.subr.mxu0 0.0
    %7161 = vmatpush1.xpose.msra.mxu0 0.0
    %7162 = vmatprep.subr.mxu0 0.0
    %7163 = vmatpush1.xpose.msra.mxu0 0.0
    %7164 = vmatprep.subr.mxu0 0.0
    %7165 = vmatpush1.xpose.msra.mxu0 0.0
    %7166 = vmatprep.subr.mxu0 0.0
    %7167 = vmatpush1.xpose.msra.mxu0 %v7140
    %7168 = vmatprep.subr.mxu0 0.0
    %7169 = vmatpush1.xpose.msra.mxu0 %v7137
    %7170 = vmatprep.subr.mxu0 0.0
    %7171 = vmatpush1.xpose.msra.mxu0 %v7134
    %7172 = vmatprep.subr.mxu0 0.0
    %7173 = vmatpush1.xpose.msra.mxu0 %v7131
    %7174 = vmatprep.subr.mxu0 0.0
    %7175 = vmatpush2.xpose.msra.mxu0 0.0
    %7176 = vmatprep.subr.mxu0 0.0
    %7177 = vmatpush2.xpose.msra.mxu0 0.0
    %7178 = vmatprep.subr.mxu0 0.0
    %7179 = vmatpush2.xpose.msra.mxu0 0.0
    %7180 = vmatprep.subr.mxu0 0.0
    %7181 = vmatpush2.xpose.msra.mxu0 0.0
    %7182 = vmatprep.subr.mxu0 0.0
    %7183 = vmatpush2.xpose.msra.mxu0 0.0
    %7184 = vmatprep.subr.mxu0 0.0
    %7185 = vmatpush2.xpose.msra.mxu0 0.0
    %7186 = vmatprep.subr.mxu0 0.0
    %7187 = vmatpush2.xpose.msra.mxu0 0.0
    %7188 = vmatprep.subr.mxu0 0.0
    %7189 = vmatpush2.xpose.msra.mxu0 0.0
    %7190 = vmatprep.subr.mxu0 0.0
    %7191 = vmatpush2.xpose.msra.mxu0 0.0
    %7192 = vmatprep.subr.mxu0 0.0
    %7193 = vmatpush2.xpose.msra.mxu0 0.0
    %7194 = vmatprep.subr.mxu0 0.0
    %7195 = vmatpush2.xpose.msra.mxu0 0.0
    %7196 = vmatprep.subr.mxu0 0.0
    %7197 = vmatpush2.xpose.msra.mxu0 0.0
    %7198 = vmatprep.subr.mxu0 0.0
    %7199 = vmatpush2.xpose.msra.mxu0 0.0
    %7200 = vmatprep.subr.mxu0 0.0
    %7201 = vmatpush2.xpose.msra.mxu0 0.0
    %7202 = vmatprep.subr.mxu0 0.0
    %7203 = vmatpush2.xpose.msra.mxu0 0.0
    %7204 = vmatprep.subr.mxu0 0.0
    %7205 = vmatpush2.xpose.msra.mxu0 0.0
    %7206 = vmatprep.mubr.f32.mxu0 0.0
    %7207 = vmatmul.mubr.f32.gmra.mxu0 %v7034
    %v7208 = vpop.f32.mrf.mxu0
    %v7209 = vadd.f32 %v7112, %v7208
    %v7210 = vpop.f32.mrf.mxu0
    %7211 = vmatprep.mubr.f32.mxu0 0.0
    %7212 = vmatmul.mubr.f32.gmra.mxu0 %v7037
    %v7213 = vpop.f32.mrf.mxu0
    %v7214 = vadd.f32 %v7117, %v7213
    %v7215 = vpop.f32.mrf.mxu0
    %7216 = vmatprep.mubr.f32.mxu0 0.0
    %7217 = vmatmul.mubr.f32.gmra.mxu0 %v7040
    %v7218 = vpop.f32.mrf.mxu0
    %v7219 = vadd.f32 %v7122, %v7218
    %v7220 = vpop.f32.mrf.mxu0
    %7221 = vmatprep.mubr.f32.mxu0 0.0
    %7222 = vmatmul.mubr.f32.gmra.mxu0 %v7043
    %v7223 = vpop.f32.mrf.mxu0
    %v7224 = vadd.f32 %v7127, %v7223
    %v7225 = vpop.f32.mrf.mxu0
    %7226 = vdwg.mxu0
    %v7227 = vsel %vm1590, %v7209, -inf
    %7228 = vmax.xlane.f32.xlu0 %v7227
    %v7229 = vpop.xlane.xlu0 %7228
    %v7230 = vsel %vm1590, %v7214, -inf
    %7231 = vmax.xlane.f32.xlu0 %v7230
    %v7232 = vpop.xlane.xlu0 %7231
    %v7233 = vsel %vm1590, %v7219, -inf
    %7234 = vmax.xlane.f32.xlu0 %v7233
    %v7235 = vpop.xlane.xlu0 %7234
    %v7236 = vsel %vm1590, %v7224, -inf
    %7237 = vmax.xlane.f32.xlu0 %v7236
    %v7238 = vpop.xlane.xlu0 %7237
    %v7239 = vsub.f32 %v7209, %v7229
    %v7240 = vsub.f32 %v7214, %v7232
    %v7241 = vsub.f32 %v7219, %v7235
    %v7242 = vsub.f32 %v7224, %v7238
    %v7243 = vmul.f32 %v7239, 1.442695
    %v7244 = vpow.pop %v7243
    %v7245 = vmul.f32 %v7240, 1.442695
    %v7246 = vpow.pop %v7245
    %v7247 = vmul.f32 %v7241, 1.442695
    %v7248 = vpow.pop %v7247
    %v7249 = vmul.f32 %v7242, 1.442695
    %v7250 = vpow.pop %v7249
    %v7251 = vsel %vm1590, %v7244, 0.0
    %7252 = vadd.xlane.f32.xlu0 %v7251
    %v7253 = vpop.xlane.xlu0 %7252
    %v7254 = vsel %vm1590, %v7246, 0.0
    %7255 = vadd.xlane.f32.xlu0 %v7254
    %v7256 = vpop.xlane.xlu0 %7255
    %v7257 = vsel %vm1590, %v7248, 0.0
    %7258 = vadd.xlane.f32.xlu0 %v7257
    %v7259 = vpop.xlane.xlu0 %7258
    %v7260 = vsel %vm1590, %v7250, 0.0
    %7261 = vadd.xlane.f32.xlu0 %v7260
    %v7262 = vpop.xlane.xlu0 %7261
    %v7263 = vrcp.pop %v7253
    %v7264 = vrcp.pop %v7256
    %v7265 = vrcp.pop %v7259
    %v7266 = vrcp.pop %v7262
    %v7267 = vmul.f32 %v7244, %v7263
    %v7268 = vmul.f32 %v7246, %v7264
    %v7269 = vmul.f32 %v7248, %v7265
    %v7270 = vmul.f32 %v7250, %v7266
    %v7272 = vsel %vm1590, %v7267, 0
    %v7275 = vsel %vm1590, %v7268, 0
    %v7278 = vsel %vm1590, %v7269, 0
    %v7281 = vsel %vm1590, %v7270, 0
    %7283 = vmatprep.subr.mxu0 0.0
    %7284 = vmatpush1.msra.mxu0 0.0
    %7285 = vmatprep.subr.mxu0 0.0
    %7286 = vmatpush1.msra.mxu0 0.0
    %7287 = vmatprep.subr.mxu0 0.0
    %7288 = vmatpush1.msra.mxu0 0.0
    %7289 = vmatprep.subr.mxu0 0.0
    %7290 = vmatpush1.msra.mxu0 0.0
    %7291 = vmatprep.subr.mxu0 0.0
    %7292 = vmatpush1.msra.mxu0 0.0
    %7293 = vmatprep.subr.mxu0 0.0
    %7294 = vmatpush1.msra.mxu0 0.0
    %7295 = vmatprep.subr.mxu0 0.0
    %7296 = vmatpush1.msra.mxu0 0.0
    %7297 = vmatprep.subr.mxu0 0.0
    %7298 = vmatpush1.msra.mxu0 0.0
    %7299 = vmatprep.subr.mxu0 0.0
    %7300 = vmatpush1.msra.mxu0 0.0
    %7301 = vmatprep.subr.mxu0 0.0
    %7302 = vmatpush1.msra.mxu0 0.0
    %7303 = vmatprep.subr.mxu0 0.0
    %7304 = vmatpush1.msra.mxu0 0.0
    %7305 = vmatprep.subr.mxu0 0.0
    %7306 = vmatpush1.msra.mxu0 0.0
    %7307 = vmatprep.subr.mxu0 0.0
    %7308 = vmatpush1.msra.mxu0 %v1568
    %7309 = vmatprep.subr.mxu0 0.0
    %7310 = vmatpush1.msra.mxu0 %v1567
    %7311 = vmatprep.subr.mxu0 0.0
    %7312 = vmatpush1.msra.mxu0 %v1566
    %7313 = vmatprep.subr.mxu0 0.0
    %7314 = vmatpush1.msra.mxu0 %v1565
    %7315 = vmatprep.subr.mxu0 0.0
    %7316 = vmatpush2.msra.mxu0 0.0
    %7317 = vmatprep.subr.mxu0 0.0
    %7318 = vmatpush2.msra.mxu0 0.0
    %7319 = vmatprep.subr.mxu0 0.0
    %7320 = vmatpush2.msra.mxu0 0.0
    %7321 = vmatprep.subr.mxu0 0.0
    %7322 = vmatpush2.msra.mxu0 0.0
    %7323 = vmatprep.subr.mxu0 0.0
    %7324 = vmatpush2.msra.mxu0 0.0
    %7325 = vmatprep.subr.mxu0 0.0
    %7326 = vmatpush2.msra.mxu0 0.0
    %7327 = vmatprep.subr.mxu0 0.0
    %7328 = vmatpush2.msra.mxu0 0.0
    %7329 = vmatprep.subr.mxu0 0.0
    %7330 = vmatpush2.msra.mxu0 0.0
    %7331 = vmatprep.subr.mxu0 0.0
    %7332 = vmatpush2.msra.mxu0 0.0
    %7333 = vmatprep.subr.mxu0 0.0
    %7334 = vmatpush2.msra.mxu0 0.0
    %7335 = vmatprep.subr.mxu0 0.0
    %7336 = vmatpush2.msra.mxu0 0.0
    %7337 = vmatprep.subr.mxu0 0.0
    %7338 = vmatpush2.msra.mxu0 0.0
    %7339 = vmatprep.subr.mxu0 0.0
    %7340 = vmatpush2.msra.mxu0 0.0
    %7341 = vmatprep.subr.mxu0 0.0
    %7342 = vmatpush2.msra.mxu0 0.0
    %7343 = vmatprep.subr.mxu0 0.0
    %7344 = vmatpush2.msra.mxu0 0.0
    %7345 = vmatprep.subr.mxu0 0.0
    %7346 = vmatpush2.msra.mxu0 0.0
    %7347 = vmatprep.mubr.f32.mxu0 0.0
    %7348 = vmatmul.mubr.f32.gmra.mxu0 %v7272
    %v7349 = vpop.f32.mrf.mxu0
    %v7350 = vadd.f32 0.0, %v7349
    %v7351 = vpop.f32.mrf.mxu0
    %7352 = vmatprep.mubr.f32.mxu0 0.0
    %7353 = vmatmul.mubr.f32.gmra.mxu0 %v7275
    %v7354 = vpop.f32.mrf.mxu0
    %v7355 = vadd.f32 0.0, %v7354
    %v7356 = vpop.f32.mrf.mxu0
    %7357 = vmatprep.mubr.f32.mxu0 0.0
    %7358 = vmatmul.mubr.f32.gmra.mxu0 %v7278
    %v7359 = vpop.f32.mrf.mxu0
    %v7360 = vadd.f32 0.0, %v7359
    %v7361 = vpop.f32.mrf.mxu0
    %7362 = vmatprep.mubr.f32.mxu0 0.0
    %7363 = vmatmul.mubr.f32.gmra.mxu0 %v7281
    %v7364 = vpop.f32.mrf.mxu0
    %v7365 = vadd.f32 0.0, %v7364
    %v7366 = vpop.f32.mrf.mxu0
    %7367 = vdwg.mxu0
    %7368 = vrot.lane.b32.xlu0 %v805, 96
    %v7369 = vpop.permute.xlu0 %7368
    %7370 = vrot.lane.b32.xlu0 %v806, 96
    %v7371 = vpop.permute.xlu0 %7370
    %7372 = vrot.lane.b32.xlu0 %v807, 96
    %v7373 = vpop.permute.xlu0 %7372
    %7374 = vrot.lane.b32.xlu0 %v808, 96
    %v7375 = vpop.permute.xlu0 %7374
    %v7376 = vsel %vm1590, %v7369, 0
    %v7378 = vsel %vm1590, %v7371, 0
    %v7380 = vsel %vm1590, %v7373, 0
    %v7382 = vsel %vm1590, %v7375, 0
    %7384 = vmatprep.subr.mxu0 0.0
    %7385 = vmatpush1.xpose.msra.mxu0 0.0
    %7386 = vmatprep.subr.mxu0 0.0
    %7387 = vmatpush1.xpose.msra.mxu0 0.0
    %7388 = vmatprep.subr.mxu0 0.0
    %7389 = vmatpush1.xpose.msra.mxu0 0.0
    %7390 = vmatprep.subr.mxu0 0.0
    %7391 = vmatpush1.xpose.msra.mxu0 0.0
    %7392 = vmatprep.subr.mxu0 0.0
    %7393 = vmatpush1.xpose.msra.mxu0 0.0
    %7394 = vmatprep.subr.mxu0 0.0
    %7395 = vmatpush1.xpose.msra.mxu0 0.0
    %7396 = vmatprep.subr.mxu0 0.0
    %7397 = vmatpush1.xpose.msra.mxu0 0.0
    %7398 = vmatprep.subr.mxu0 0.0
    %7399 = vmatpush1.xpose.msra.mxu0 0.0
    %7400 = vmatprep.subr.mxu0 0.0
    %7401 = vmatpush1.xpose.msra.mxu0 0.0
    %7402 = vmatprep.subr.mxu0 0.0
    %7403 = vmatpush1.xpose.msra.mxu0 0.0
    %7404 = vmatprep.subr.mxu0 0.0
    %7405 = vmatpush1.xpose.msra.mxu0 0.0
    %7406 = vmatprep.subr.mxu0 0.0
    %7407 = vmatpush1.xpose.msra.mxu0 0.0
    %7408 = vmatprep.subr.mxu0 0.0
    %7409 = vmatpush1.xpose.msra.mxu0 %v7382
    %7410 = vmatprep.subr.mxu0 0.0
    %7411 = vmatpush1.xpose.msra.mxu0 %v7380
    %7412 = vmatprep.subr.mxu0 0.0
    %7413 = vmatpush1.xpose.msra.mxu0 %v7378
    %7414 = vmatprep.subr.mxu0 0.0
    %7415 = vmatpush1.xpose.msra.mxu0 %v7376
    %7416 = vmatprep.subr.mxu0 0.0
    %7417 = vmatpush2.xpose.msra.mxu0 0.0
    %7418 = vmatprep.subr.mxu0 0.0
    %7419 = vmatpush2.xpose.msra.mxu0 0.0
    %7420 = vmatprep.subr.mxu0 0.0
    %7421 = vmatpush2.xpose.msra.mxu0 0.0
    %7422 = vmatprep.subr.mxu0 0.0
    %7423 = vmatpush2.xpose.msra.mxu0 0.0
    %7424 = vmatprep.subr.mxu0 0.0
    %7425 = vmatpush2.xpose.msra.mxu0 0.0
    %7426 = vmatprep.subr.mxu0 0.0
    %7427 = vmatpush2.xpose.msra.mxu0 0.0
    %7428 = vmatprep.subr.mxu0 0.0
    %7429 = vmatpush2.xpose.msra.mxu0 0.0
    %7430 = vmatprep.subr.mxu0 0.0
    %7431 = vmatpush2.xpose.msra.mxu0 0.0
    %7432 = vmatprep.subr.mxu0 0.0
    %7433 = vmatpush2.xpose.msra.mxu0 0.0
    %7434 = vmatprep.subr.mxu0 0.0
    %7435 = vmatpush2.xpose.msra.mxu0 0.0
    %7436 = vmatprep.subr.mxu0 0.0
    %7437 = vmatpush2.xpose.msra.mxu0 0.0
    %7438 = vmatprep.subr.mxu0 0.0
    %7439 = vmatpush2.xpose.msra.mxu0 0.0
    %7440 = vmatprep.subr.mxu0 0.0
    %7441 = vmatpush2.xpose.msra.mxu0 0.0
    %7442 = vmatprep.subr.mxu0 0.0
    %7443 = vmatpush2.xpose.msra.mxu0 0.0
    %7444 = vmatprep.subr.mxu0 0.0
    %7445 = vmatpush2.xpose.msra.mxu0 0.0
    %7446 = vmatprep.subr.mxu0 0.0
    %7447 = vmatpush2.xpose.msra.mxu0 0.0
    %7448 = vmatprep.mubr.f32.mxu0 0.0
    %7449 = vmatmul.mubr.f32.gmra.mxu0 %v1592
    %v7450 = vpop.f32.mrf.mxu0
    %v7451 = vadd.f32 0.0, %v7450
    %v7452 = vpop.f32.mrf.mxu0
    %7453 = vmatprep.mubr.f32.mxu0 0.0
    %7454 = vmatmul.mubr.f32.gmra.mxu0 %v1595
    %v7455 = vpop.f32.mrf.mxu0
    %v7456 = vadd.f32 0.0, %v7455
    %v7457 = vpop.f32.mrf.mxu0
    %7458 = vmatprep.mubr.f32.mxu0 0.0
    %7459 = vmatmul.mubr.f32.gmra.mxu0 %v1598
    %v7460 = vpop.f32.mrf.mxu0
    %v7461 = vadd.f32 0.0, %v7460
    %v7462 = vpop.f32.mrf.mxu0
    %7463 = vmatprep.mubr.f32.mxu0 0.0
    %7464 = vmatmul.mubr.f32.gmra.mxu0 %v1601
    %v7465 = vpop.f32.mrf.mxu0
    %v7466 = vadd.f32 0.0, %v7465
    %v7467 = vpop.f32.mrf.mxu0
    %7468 = vdwg.mxu0
    %7469 = vrot.lane.b32.xlu0 %v1185, 96
    %v7470 = vpop.permute.xlu0 %7469
    %7471 = vrot.lane.b32.xlu0 %v1186, 96
    %v7472 = vpop.permute.xlu0 %7471
    %7473 = vrot.lane.b32.xlu0 %v1187, 96
    %v7474 = vpop.permute.xlu0 %7473
    %7475 = vrot.lane.b32.xlu0 %v1188, 96
    %v7476 = vpop.permute.xlu0 %7475
    %v7477 = vsel %vm1590, %v7470, 0
    %v7479 = vsel %vm1590, %v7472, 0
    %v7481 = vsel %vm1590, %v7474, 0
    %v7483 = vsel %vm1590, %v7476, 0
    %7485 = vmatprep.subr.mxu0 0.0
    %7486 = vmatpush1.xpose.msra.mxu0 0.0
    %7487 = vmatprep.subr.mxu0 0.0
    %7488 = vmatpush1.xpose.msra.mxu0 0.0
    %7489 = vmatprep.subr.mxu0 0.0
    %7490 = vmatpush1.xpose.msra.mxu0 0.0
    %7491 = vmatprep.subr.mxu0 0.0
    %7492 = vmatpush1.xpose.msra.mxu0 0.0
    %7493 = vmatprep.subr.mxu0 0.0
    %7494 = vmatpush1.xpose.msra.mxu0 0.0
    %7495 = vmatprep.subr.mxu0 0.0
    %7496 = vmatpush1.xpose.msra.mxu0 0.0
    %7497 = vmatprep.subr.mxu0 0.0
    %7498 = vmatpush1.xpose.msra.mxu0 0.0
    %7499 = vmatprep.subr.mxu0 0.0
    %7500 = vmatpush1.xpose.msra.mxu0 0.0
    %7501 = vmatprep.subr.mxu0 0.0
    %7502 = vmatpush1.xpose.msra.mxu0 0.0
    %7503 = vmatprep.subr.mxu0 0.0
    %7504 = vmatpush1.xpose.msra.mxu0 0.0
    %7505 = vmatprep.subr.mxu0 0.0
    %7506 = vmatpush1.xpose.msra.mxu0 0.0
    %7507 = vmatprep.subr.mxu0 0.0
    %7508 = vmatpush1.xpose.msra.mxu0 0.0
    %7509 = vmatprep.subr.mxu0 0.0
    %7510 = vmatpush1.xpose.msra.mxu0 %v7483
    %7511 = vmatprep.subr.mxu0 0.0
    %7512 = vmatpush1.xpose.msra.mxu0 %v7481
    %7513 = vmatprep.subr.mxu0 0.0
    %7514 = vmatpush1.xpose.msra.mxu0 %v7479
    %7515 = vmatprep.subr.mxu0 0.0
    %7516 = vmatpush1.xpose.msra.mxu0 %v7477
    %7517 = vmatprep.subr.mxu0 0.0
    %7518 = vmatpush2.xpose.msra.mxu0 0.0
    %7519 = vmatprep.subr.mxu0 0.0
    %7520 = vmatpush2.xpose.msra.mxu0 0.0
    %7521 = vmatprep.subr.mxu0 0.0
    %7522 = vmatpush2.xpose.msra.mxu0 0.0
    %7523 = vmatprep.subr.mxu0 0.0
    %7524 = vmatpush2.xpose.msra.mxu0 0.0
    %7525 = vmatprep.subr.mxu0 0.0
    %7526 = vmatpush2.xpose.msra.mxu0 0.0
    %7527 = vmatprep.subr.mxu0 0.0
    %7528 = vmatpush2.xpose.msra.mxu0 0.0
    %7529 = vmatprep.subr.mxu0 0.0
    %7530 = vmatpush2.xpose.msra.mxu0 0.0
    %7531 = vmatprep.subr.mxu0 0.0
    %7532 = vmatpush2.xpose.msra.mxu0 0.0
    %7533 = vmatprep.subr.mxu0 0.0
    %7534 = vmatpush2.xpose.msra.mxu0 0.0
    %7535 = vmatprep.subr.mxu0 0.0
    %7536 = vmatpush2.xpose.msra.mxu0 0.0
    %7537 = vmatprep.subr.mxu0 0.0
    %7538 = vmatpush2.xpose.msra.mxu0 0.0
    %7539 = vmatprep.subr.mxu0 0.0
    %7540 = vmatpush2.xpose.msra.mxu0 0.0
    %7541 = vmatprep.subr.mxu0 0.0
    %7542 = vmatpush2.xpose.msra.mxu0 0.0
    %7543 = vmatprep.subr.mxu0 0.0
    %7544 = vmatpush2.xpose.msra.mxu0 0.0
    %7545 = vmatprep.subr.mxu0 0.0
    %7546 = vmatpush2.xpose.msra.mxu0 0.0
    %7547 = vmatprep.subr.mxu0 0.0
    %7548 = vmatpush2.xpose.msra.mxu0 0.0
    %7549 = vmatprep.mubr.f32.mxu0 0.0
    %7550 = vmatmul.mubr.f32.gmra.mxu0 %v7376
    %v7551 = vpop.f32.mrf.mxu0
    %v7552 = vadd.f32 %v7451, %v7551
    %v7553 = vpop.f32.mrf.mxu0
    %7554 = vmatprep.mubr.f32.mxu0 0.0
    %7555 = vmatmul.mubr.f32.gmra.mxu0 %v7378
    %v7556 = vpop.f32.mrf.mxu0
    %v7557 = vadd.f32 %v7456, %v7556
    %v7558 = vpop.f32.mrf.mxu0
    %7559 = vmatprep.mubr.f32.mxu0 0.0
    %7560 = vmatmul.mubr.f32.gmra.mxu0 %v7380
    %v7561 = vpop.f32.mrf.mxu0
    %v7562 = vadd.f32 %v7461, %v7561
    %v7563 = vpop.f32.mrf.mxu0
    %7564 = vmatprep.mubr.f32.mxu0 0.0
    %7565 = vmatmul.mubr.f32.gmra.mxu0 %v7382
    %v7566 = vpop.f32.mrf.mxu0
    %v7567 = vadd.f32 %v7466, %v7566
    %v7568 = vpop.f32.mrf.mxu0
    %7569 = vdwg.mxu0
    %v7570 = vsel %vm1590, %v7552, -inf
    %7571 = vmax.xlane.f32.xlu0 %v7570
    %v7572 = vpop.xlane.xlu0 %7571
    %v7573 = vsel %vm1590, %v7557, -inf
    %7574 = vmax.xlane.f32.xlu0 %v7573
    %v7575 = vpop.xlane.xlu0 %7574
    %v7576 = vsel %vm1590, %v7562, -inf
    %7577 = vmax.xlane.f32.xlu0 %v7576
    %v7578 = vpop.xlane.xlu0 %7577
    %v7579 = vsel %vm1590, %v7567, -inf
    %7580 = vmax.xlane.f32.xlu0 %v7579
    %v7581 = vpop.xlane.xlu0 %7580
    %v7582 = vsub.f32 %v7552, %v7572
    %v7583 = vsub.f32 %v7557, %v7575
    %v7584 = vsub.f32 %v7562, %v7578
    %v7585 = vsub.f32 %v7567, %v7581
    %v7586 = vmul.f32 %v7582, 1.442695
    %v7587 = vpow.pop %v7586
    %v7588 = vmul.f32 %v7583, 1.442695
    %v7589 = vpow.pop %v7588
    %v7590 = vmul.f32 %v7584, 1.442695
    %v7591 = vpow.pop %v7590
    %v7592 = vmul.f32 %v7585, 1.442695
    %v7593 = vpow.pop %v7592
    %v7594 = vsel %vm1590, %v7587, 0.0
    %7595 = vadd.xlane.f32.xlu0 %v7594
    %v7596 = vpop.xlane.xlu0 %7595
    %v7597 = vsel %vm1590, %v7589, 0.0
    %7598 = vadd.xlane.f32.xlu0 %v7597
    %v7599 = vpop.xlane.xlu0 %7598
    %v7600 = vsel %vm1590, %v7591, 0.0
    %7601 = vadd.xlane.f32.xlu0 %v7600
    %v7602 = vpop.xlane.xlu0 %7601
    %v7603 = vsel %vm1590, %v7593, 0.0
    %7604 = vadd.xlane.f32.xlu0 %v7603
    %v7605 = vpop.xlane.xlu0 %7604
    %v7606 = vrcp.pop %v7596
    %v7607 = vrcp.pop %v7599
    %v7608 = vrcp.pop %v7602
    %v7609 = vrcp.pop %v7605
    %v7610 = vmul.f32 %v7587, %v7606
    %v7611 = vmul.f32 %v7589, %v7607
    %v7612 = vmul.f32 %v7591, %v7608
    %v7613 = vmul.f32 %v7593, %v7609
    %7618 = vrot.lane.b32.xlu0 %v1565, 96
    %v7619 = vpop.permute.xlu0 %7618
    %7620 = vrot.lane.b32.xlu0 %v1566, 96
    %v7621 = vpop.permute.xlu0 %7620
    %7622 = vrot.lane.b32.xlu0 %v1567, 96
    %v7623 = vpop.permute.xlu0 %7622
    %7624 = vrot.lane.b32.xlu0 %v1568, 96
    %v7625 = vpop.permute.xlu0 %7624
    %v7631 = vsel %vm1590, %v7610, 0
    %v7634 = vsel %vm1590, %v7611, 0
    %v7637 = vsel %vm1590, %v7612, 0
    %v7640 = vsel %vm1590, %v7613, 0
    %7642 = vmatprep.subr.mxu0 0.0
    %7643 = vmatpush1.msra.mxu0 0.0
    %7644 = vmatprep.subr.mxu0 0.0
    %7645 = vmatpush1.msra.mxu0 0.0
    %7646 = vmatprep.subr.mxu0 0.0
    %7647 = vmatpush1.msra.mxu0 0.0
    %7648 = vmatprep.subr.mxu0 0.0
    %7649 = vmatpush1.msra.mxu0 0.0
    %7650 = vmatprep.subr.mxu0 0.0
    %7651 = vmatpush1.msra.mxu0 0.0
    %7652 = vmatprep.subr.mxu0 0.0
    %7653 = vmatpush1.msra.mxu0 0.0
    %7654 = vmatprep.subr.mxu0 0.0
    %7655 = vmatpush1.msra.mxu0 0.0
    %7656 = vmatprep.subr.mxu0 0.0
    %7657 = vmatpush1.msra.mxu0 0.0
    %7658 = vmatprep.subr.mxu0 0.0
    %7659 = vmatpush1.msra.mxu0 0.0
    %7660 = vmatprep.subr.mxu0 0.0
    %7661 = vmatpush1.msra.mxu0 0.0
    %7662 = vmatprep.subr.mxu0 0.0
    %7663 = vmatpush1.msra.mxu0 0.0
    %7664 = vmatprep.subr.mxu0 0.0
    %7665 = vmatpush1.msra.mxu0 0.0
    %7666 = vmatprep.subr.mxu0 0.0
    %7667 = vmatpush1.msra.mxu0 %v7625
    %7668 = vmatprep.subr.mxu0 0.0
    %7669 = vmatpush1.msra.mxu0 %v7623
    %7670 = vmatprep.subr.mxu0 0.0
    %7671 = vmatpush1.msra.mxu0 %v7621
    %7672 = vmatprep.subr.mxu0 0.0
    %7673 = vmatpush1.msra.mxu0 %v7619
    %7674 = vmatprep.subr.mxu0 0.0
    %7675 = vmatpush2.msra.mxu0 0.0
    %7676 = vmatprep.subr.mxu0 0.0
    %7677 = vmatpush2.msra.mxu0 0.0
    %7678 = vmatprep.subr.mxu0 0.0
    %7679 = vmatpush2.msra.mxu0 0.0
    %7680 = vmatprep.subr.mxu0 0.0
    %7681 = vmatpush2.msra.mxu0 0.0
    %7682 = vmatprep.subr.mxu0 0.0
    %7683 = vmatpush2.msra.mxu0 0.0
    %7684 = vmatprep.subr.mxu0 0.0
    %7685 = vmatpush2.msra.mxu0 0.0
    %7686 = vmatprep.subr.mxu0 0.0
    %7687 = vmatpush2.msra.mxu0 0.0
    %7688 = vmatprep.subr.mxu0 0.0
    %7689 = vmatpush2.msra.mxu0 0.0
    %7690 = vmatprep.subr.mxu0 0.0
    %7691 = vmatpush2.msra.mxu0 0.0
    %7692 = vmatprep.subr.mxu0 0.0
    %7693 = vmatpush2.msra.mxu0 0.0
    %7694 = vmatprep.subr.mxu0 0.0
    %7695 = vmatpush2.msra.mxu0 0.0
    %7696 = vmatprep.subr.mxu0 0.0
    %7697 = vmatpush2.msra.mxu0 0.0
    %7698 = vmatprep.subr.mxu0 0.0
    %7699 = vmatpush2.msra.mxu0 0.0
    %7700 = vmatprep.subr.mxu0 0.0
    %7701 = vmatpush2.msra.mxu0 0.0
    %7702 = vmatprep.subr.mxu0 0.0
    %7703 = vmatpush2.msra.mxu0 0.0
    %7704 = vmatprep.subr.mxu0 0.0
    %7705 = vmatpush2.msra.mxu0 0.0
    %7706 = vmatprep.mubr.f32.mxu0 0.0
    %7707 = vmatmul.mubr.f32.gmra.mxu0 %v7631
    %v7708 = vpop.f32.mrf.mxu0
    %v7709 = vadd.f32 0.0, %v7708
    %v7710 = vpop.f32.mrf.mxu0
    %7711 = vmatprep.mubr.f32.mxu0 0.0
    %7712 = vmatmul.mubr.f32.gmra.mxu0 %v7634
    %v7713 = vpop.f32.mrf.mxu0
    %v7714 = vadd.f32 0.0, %v7713
    %v7715 = vpop.f32.mrf.mxu0
    %7716 = vmatprep.mubr.f32.mxu0 0.0
    %7717 = vmatmul.mubr.f32.gmra.mxu0 %v7637
    %v7718 = vpop.f32.mrf.mxu0
    %v7719 = vadd.f32 0.0, %v7718
    %v7720 = vpop.f32.mrf.mxu0
    %7721 = vmatprep.mubr.f32.mxu0 0.0
    %7722 = vmatmul.mubr.f32.gmra.mxu0 %v7640
    %v7723 = vpop.f32.mrf.mxu0
    %v7724 = vadd.f32 0.0, %v7723
    %v7725 = vpop.f32.mrf.mxu0
    %7726 = vdwg.mxu0
    %v7728 = vsel %vm1590, %v7709, 0
    %v7731 = vsel %vm1590, %v7714, 0
    %v7734 = vsel %vm1590, %v7719, 0
    %v7737 = vsel %vm1590, %v7724, 0
    %7739 = vmatprep.subr.mxu0 0.0
    %7740 = vmatpush1.msra.mxu0 0.0
    %7741 = vmatprep.subr.mxu0 0.0
    %7742 = vmatpush1.msra.mxu0 0.0
    %7743 = vmatprep.subr.mxu0 0.0
    %7744 = vmatpush1.msra.mxu0 0.0
    %7745 = vmatprep.subr.mxu0 0.0
    %7746 = vmatpush1.msra.mxu0 0.0
    %7747 = vmatprep.subr.mxu0 0.0
    %7748 = vmatpush1.msra.mxu0 0.0
    %7749 = vmatprep.subr.mxu0 0.0
    %7750 = vmatpush1.msra.mxu0 0.0
    %7751 = vmatprep.subr.mxu0 0.0
    %7752 = vmatpush1.msra.mxu0 0.0
    %7753 = vmatprep.subr.mxu0 0.0
    %7754 = vmatpush1.msra.mxu0 0.0
    %7755 = vmatprep.subr.mxu0 0.0
    %7756 = vmatpush1.msra.mxu0 0.0
    %7757 = vmatprep.subr.mxu0 0.0
    %7758 = vmatpush1.msra.mxu0 0.0
    %7759 = vmatprep.subr.mxu0 0.0
    %7760 = vmatpush1.msra.mxu0 0.0
    %7761 = vmatprep.subr.mxu0 0.0
    %7762 = vmatpush1.msra.mxu0 0.0
    %7763 = vmatprep.subr.mxu0 0.0
    %7764 = vmatpush1.msra.mxu0 %v1576
    %7765 = vmatprep.subr.mxu0 0.0
    %7766 = vmatpush1.msra.mxu0 %v1575
    %7767 = vmatprep.subr.mxu0 0.0
    %7768 = vmatpush1.msra.mxu0 %v1574
    %7769 = vmatprep.subr.mxu0 0.0
    %7770 = vmatpush1.msra.mxu0 %v1573
    %7771 = vmatprep.subr.mxu0 0.0
    %7772 = vmatpush2.msra.mxu0 0.0
    %7773 = vmatprep.subr.mxu0 0.0
    %7774 = vmatpush2.msra.mxu0 0.0
    %7775 = vmatprep.subr.mxu0 0.0
    %7776 = vmatpush2.msra.mxu0 0.0
    %7777 = vmatprep.subr.mxu0 0.0
    %7778 = vmatpush2.msra.mxu0 0.0
    %7779 = vmatprep.subr.mxu0 0.0
    %7780 = vmatpush2.msra.mxu0 0.0
    %7781 = vmatprep.subr.mxu0 0.0
    %7782 = vmatpush2.msra.mxu0 0.0
    %7783 = vmatprep.subr.mxu0 0.0
    %7784 = vmatpush2.msra.mxu0 0.0
    %7785 = vmatprep.subr.mxu0 0.0
    %7786 = vmatpush2.msra.mxu0 0.0
    %7787 = vmatprep.subr.mxu0 0.0
    %7788 = vmatpush2.msra.mxu0 0.0
    %7789 = vmatprep.subr.mxu0 0.0
    %7790 = vmatpush2.msra.mxu0 0.0
    %7791 = vmatprep.subr.mxu0 0.0
    %7792 = vmatpush2.msra.mxu0 0.0
    %7793 = vmatprep.subr.mxu0 0.0
    %7794 = vmatpush2.msra.mxu0 0.0
    %7795 = vmatprep.subr.mxu0 0.0
    %7796 = vmatpush2.msra.mxu0 0.0
    %7797 = vmatprep.subr.mxu0 0.0
    %7798 = vmatpush2.msra.mxu0 0.0
    %7799 = vmatprep.subr.mxu0 0.0
    %7800 = vmatpush2.msra.mxu0 0.0
    %7801 = vmatprep.subr.mxu0 0.0
    %7802 = vmatpush2.msra.mxu0 0.0
    %7803 = vmatprep.mubr.f32.mxu0 0.0
    %7804 = vmatmul.mubr.f32.gmra.mxu0 %v7728
    %v7805 = vpop.f32.mrf.mxu0
    %v7806 = vadd.f32 0.0, %v7805
    %v7807 = vpop.f32.mrf.mxu0
    %7808 = vmatprep.mubr.f32.mxu0 0.0
    %7809 = vmatmul.mubr.f32.gmra.mxu0 %v7731
    %v7810 = vpop.f32.mrf.mxu0
    %v7811 = vadd.f32 0.0, %v7810
    %v7812 = vpop.f32.mrf.mxu0
    %7813 = vmatprep.mubr.f32.mxu0 0.0
    %7814 = vmatmul.mubr.f32.gmra.mxu0 %v7734
    %v7815 = vpop.f32.mrf.mxu0
    %v7816 = vadd.f32 0.0, %v7815
    %v7817 = vpop.f32.mrf.mxu0
    %7818 = vmatprep.mubr.f32.mxu0 0.0
    %7819 = vmatmul.mubr.f32.gmra.mxu0 %v7737
    %v7820 = vpop.f32.mrf.mxu0
    %v7821 = vadd.f32 0.0, %v7820
    %v7822 = vpop.f32.mrf.mxu0
    %7823 = vdwg.mxu0
    %v7825 = vsel %vm1590, %v7350, 0
    %v7828 = vsel %vm1590, %v7355, 0
    %v7831 = vsel %vm1590, %v7360, 0
    %v7834 = vsel %vm1590, %v7365, 0
    %7836 = vmatprep.subr.mxu0 0.0
    %7837 = vmatpush1.msra.mxu0 0.0
    %7838 = vmatprep.subr.mxu0 0.0
    %7839 = vmatpush1.msra.mxu0 0.0
    %7840 = vmatprep.subr.mxu0 0.0
    %7841 = vmatpush1.msra.mxu0 0.0
    %7842 = vmatprep.subr.mxu0 0.0
    %7843 = vmatpush1.msra.mxu0 0.0
    %7844 = vmatprep.subr.mxu0 0.0
    %7845 = vmatpush1.msra.mxu0 0.0
    %7846 = vmatprep.subr.mxu0 0.0
    %7847 = vmatpush1.msra.mxu0 0.0
    %7848 = vmatprep.subr.mxu0 0.0
    %7849 = vmatpush1.msra.mxu0 0.0
    %7850 = vmatprep.subr.mxu0 0.0
    %7851 = vmatpush1.msra.mxu0 0.0
    %7852 = vmatprep.subr.mxu0 0.0
    %7853 = vmatpush1.msra.mxu0 0.0
    %7854 = vmatprep.subr.mxu0 0.0
    %7855 = vmatpush1.msra.mxu0 0.0
    %7856 = vmatprep.subr.mxu0 0.0
    %7857 = vmatpush1.msra.mxu0 0.0
    %7858 = vmatprep.subr.mxu0 0.0
    %7859 = vmatpush1.msra.mxu0 0.0
    %7860 = vmatprep.subr.mxu0 0.0
    %7861 = vmatpush1.msra.mxu0 %v1572
    %7862 = vmatprep.subr.mxu0 0.0
    %7863 = vmatpush1.msra.mxu0 %v1571
    %7864 = vmatprep.subr.mxu0 0.0
    %7865 = vmatpush1.msra.mxu0 %v1570
    %7866 = vmatprep.subr.mxu0 0.0
    %7867 = vmatpush1.msra.mxu0 %v1569
    %7868 = vmatprep.subr.mxu0 0.0
    %7869 = vmatpush2.msra.mxu0 0.0
    %7870 = vmatprep.subr.mxu0 0.0
    %7871 = vmatpush2.msra.mxu0 0.0
    %7872 = vmatprep.subr.mxu0 0.0
    %7873 = vmatpush2.msra.mxu0 0.0
    %7874 = vmatprep.subr.mxu0 0.0
    %7875 = vmatpush2.msra.mxu0 0.0
    %7876 = vmatprep.subr.mxu0 0.0
    %7877 = vmatpush2.msra.mxu0 0.0
    %7878 = vmatprep.subr.mxu0 0.0
    %7879 = vmatpush2.msra.mxu0 0.0
    %7880 = vmatprep.subr.mxu0 0.0
    %7881 = vmatpush2.msra.mxu0 0.0
    %7882 = vmatprep.subr.mxu0 0.0
    %7883 = vmatpush2.msra.mxu0 0.0
    %7884 = vmatprep.subr.mxu0 0.0
    %7885 = vmatpush2.msra.mxu0 0.0
    %7886 = vmatprep.subr.mxu0 0.0
    %7887 = vmatpush2.msra.mxu0 0.0
    %7888 = vmatprep.subr.mxu0 0.0
    %7889 = vmatpush2.msra.mxu0 0.0
    %7890 = vmatprep.subr.mxu0 0.0
    %7891 = vmatpush2.msra.mxu0 0.0
    %7892 = vmatprep.subr.mxu0 0.0
    %7893 = vmatpush2.msra.mxu0 0.0
    %7894 = vmatprep.subr.mxu0 0.0
    %7895 = vmatpush2.msra.mxu0 0.0
    %7896 = vmatprep.subr.mxu0 0.0
    %7897 = vmatpush2.msra.mxu0 0.0
    %7898 = vmatprep.subr.mxu0 0.0
    %7899 = vmatpush2.msra.mxu0 0.0
    %7900 = vmatprep.mubr.f32.mxu0 0.0
    %7901 = vmatmul.mubr.f32.gmra.mxu0 %v7825
    %v7902 = vpop.f32.mrf.mxu0
    %v7903 = vadd.f32 %v7806, %v7902
    %v7904 = vpop.f32.mrf.mxu0
    %7905 = vmatprep.mubr.f32.mxu0 0.0
    %7906 = vmatmul.mubr.f32.gmra.mxu0 %v7828
    %v7907 = vpop.f32.mrf.mxu0
    %v7908 = vadd.f32 %v7811, %v7907
    %v7909 = vpop.f32.mrf.mxu0
    %7910 = vmatprep.mubr.f32.mxu0 0.0
    %7911 = vmatmul.mubr.f32.gmra.mxu0 %v7831
    %v7912 = vpop.f32.mrf.mxu0
    %v7913 = vadd.f32 %v7816, %v7912
    %v7914 = vpop.f32.mrf.mxu0
    %7915 = vmatprep.mubr.f32.mxu0 0.0
    %7916 = vmatmul.mubr.f32.gmra.mxu0 %v7834
    %v7917 = vpop.f32.mrf.mxu0
    %v7918 = vadd.f32 %v7821, %v7917
    %v7919 = vpop.f32.mrf.mxu0
    %7920 = vdwg.mxu0
    %7921 = vrot.lane.b32.xlu0 %v805, 64
    %v7922 = vpop.permute.xlu0 %7921
    %7923 = vrot.lane.b32.xlu0 %v806, 64
    %v7924 = vpop.permute.xlu0 %7923
    %7925 = vrot.lane.b32.xlu0 %v807, 64
    %v7926 = vpop.permute.xlu0 %7925
    %7927 = vrot.lane.b32.xlu0 %v808, 64
    %v7928 = vpop.permute.xlu0 %7927
    %v7929 = vsel %vm1590, %v7922, 0
    %v7931 = vsel %vm1590, %v7924, 0
    %v7933 = vsel %vm1590, %v7926, 0
    %v7935 = vsel %vm1590, %v7928, 0
    %7937 = vmatprep.subr.mxu0 0.0
    %7938 = vmatpush1.xpose.msra.mxu0 0.0
    %7939 = vmatprep.subr.mxu0 0.0
    %7940 = vmatpush1.xpose.msra.mxu0 0.0
    %7941 = vmatprep.subr.mxu0 0.0
    %7942 = vmatpush1.xpose.msra.mxu0 0.0
    %7943 = vmatprep.subr.mxu0 0.0
    %7944 = vmatpush1.xpose.msra.mxu0 0.0
    %7945 = vmatprep.subr.mxu0 0.0
    %7946 = vmatpush1.xpose.msra.mxu0 0.0
    %7947 = vmatprep.subr.mxu0 0.0
    %7948 = vmatpush1.xpose.msra.mxu0 0.0
    %7949 = vmatprep.subr.mxu0 0.0
    %7950 = vmatpush1.xpose.msra.mxu0 0.0
    %7951 = vmatprep.subr.mxu0 0.0
    %7952 = vmatpush1.xpose.msra.mxu0 0.0
    %7953 = vmatprep.subr.mxu0 0.0
    %7954 = vmatpush1.xpose.msra.mxu0 0.0
    %7955 = vmatprep.subr.mxu0 0.0
    %7956 = vmatpush1.xpose.msra.mxu0 0.0
    %7957 = vmatprep.subr.mxu0 0.0
    %7958 = vmatpush1.xpose.msra.mxu0 0.0
    %7959 = vmatprep.subr.mxu0 0.0
    %7960 = vmatpush1.xpose.msra.mxu0 0.0
    %7961 = vmatprep.subr.mxu0 0.0
    %7962 = vmatpush1.xpose.msra.mxu0 %v7935
    %7963 = vmatprep.subr.mxu0 0.0
    %7964 = vmatpush1.xpose.msra.mxu0 %v7933
    %7965 = vmatprep.subr.mxu0 0.0
    %7966 = vmatpush1.xpose.msra.mxu0 %v7931
    %7967 = vmatprep.subr.mxu0 0.0
    %7968 = vmatpush1.xpose.msra.mxu0 %v7929
    %7969 = vmatprep.subr.mxu0 0.0
    %7970 = vmatpush2.xpose.msra.mxu0 0.0
    %7971 = vmatprep.subr.mxu0 0.0
    %7972 = vmatpush2.xpose.msra.mxu0 0.0
    %7973 = vmatprep.subr.mxu0 0.0
    %7974 = vmatpush2.xpose.msra.mxu0 0.0
    %7975 = vmatprep.subr.mxu0 0.0
    %7976 = vmatpush2.xpose.msra.mxu0 0.0
    %7977 = vmatprep.subr.mxu0 0.0
    %7978 = vmatpush2.xpose.msra.mxu0 0.0
    %7979 = vmatprep.subr.mxu0 0.0
    %7980 = vmatpush2.xpose.msra.mxu0 0.0
    %7981 = vmatprep.subr.mxu0 0.0
    %7982 = vmatpush2.xpose.msra.mxu0 0.0
    %7983 = vmatprep.subr.mxu0 0.0
    %7984 = vmatpush2.xpose.msra.mxu0 0.0
    %7985 = vmatprep.subr.mxu0 0.0
    %7986 = vmatpush2.xpose.msra.mxu0 0.0
    %7987 = vmatprep.subr.mxu0 0.0
    %7988 = vmatpush2.xpose.msra.mxu0 0.0
    %7989 = vmatprep.subr.mxu0 0.0
    %7990 = vmatpush2.xpose.msra.mxu0 0.0
    %7991 = vmatprep.subr.mxu0 0.0
    %7992 = vmatpush2.xpose.msra.mxu0 0.0
    %7993 = vmatprep.subr.mxu0 0.0
    %7994 = vmatpush2.xpose.msra.mxu0 0.0
    %7995 = vmatprep.subr.mxu0 0.0
    %7996 = vmatpush2.xpose.msra.mxu0 0.0
    %7997 = vmatprep.subr.mxu0 0.0
    %7998 = vmatpush2.xpose.msra.mxu0 0.0
    %7999 = vmatprep.subr.mxu0 0.0
    %8000 = vmatpush2.xpose.msra.mxu0 0.0
    %8001 = vmatprep.mubr.f32.mxu0 0.0
    %8002 = vmatmul.mubr.f32.gmra.mxu0 %v1592
    %v8003 = vpop.f32.mrf.mxu0
    %v8004 = vadd.f32 0.0, %v8003
    %v8005 = vpop.f32.mrf.mxu0
    %8006 = vmatprep.mubr.f32.mxu0 0.0
    %8007 = vmatmul.mubr.f32.gmra.mxu0 %v1595
    %v8008 = vpop.f32.mrf.mxu0
    %v8009 = vadd.f32 0.0, %v8008
    %v8010 = vpop.f32.mrf.mxu0
    %8011 = vmatprep.mubr.f32.mxu0 0.0
    %8012 = vmatmul.mubr.f32.gmra.mxu0 %v1598
    %v8013 = vpop.f32.mrf.mxu0
    %v8014 = vadd.f32 0.0, %v8013
    %v8015 = vpop.f32.mrf.mxu0
    %8016 = vmatprep.mubr.f32.mxu0 0.0
    %8017 = vmatmul.mubr.f32.gmra.mxu0 %v1601
    %v8018 = vpop.f32.mrf.mxu0
    %v8019 = vadd.f32 0.0, %v8018
    %v8020 = vpop.f32.mrf.mxu0
    %8021 = vdwg.mxu0
    %8022 = vrot.lane.b32.xlu0 %v1185, 64
    %v8023 = vpop.permute.xlu0 %8022
    %8024 = vrot.lane.b32.xlu0 %v1186, 64
    %v8025 = vpop.permute.xlu0 %8024
    %8026 = vrot.lane.b32.xlu0 %v1187, 64
    %v8027 = vpop.permute.xlu0 %8026
    %8028 = vrot.lane.b32.xlu0 %v1188, 64
    %v8029 = vpop.permute.xlu0 %8028
    %v8030 = vsel %vm1590, %v8023, 0
    %v8032 = vsel %vm1590, %v8025, 0
    %v8034 = vsel %vm1590, %v8027, 0
    %v8036 = vsel %vm1590, %v8029, 0
    %8038 = vmatprep.subr.mxu0 0.0
    %8039 = vmatpush1.xpose.msra.mxu0 0.0
    %8040 = vmatprep.subr.mxu0 0.0
    %8041 = vmatpush1.xpose.msra.mxu0 0.0
    %8042 = vmatprep.subr.mxu0 0.0
    %8043 = vmatpush1.xpose.msra.mxu0 0.0
    %8044 = vmatprep.subr.mxu0 0.0
    %8045 = vmatpush1.xpose.msra.mxu0 0.0
    %8046 = vmatprep.subr.mxu0 0.0
    %8047 = vmatpush1.xpose.msra.mxu0 0.0
    %8048 = vmatprep.subr.mxu0 0.0
    %8049 = vmatpush1.xpose.msra.mxu0 0.0
    %8050 = vmatprep.subr.mxu0 0.0
    %8051 = vmatpush1.xpose.msra.mxu0 0.0
    %8052 = vmatprep.subr.mxu0 0.0
    %8053 = vmatpush1.xpose.msra.mxu0 0.0
    %8054 = vmatprep.subr.mxu0 0.0
    %8055 = vmatpush1.xpose.msra.mxu0 0.0
    %8056 = vmatprep.subr.mxu0 0.0
    %8057 = vmatpush1.xpose.msra.mxu0 0.0
    %8058 = vmatprep.subr.mxu0 0.0
    %8059 = vmatpush1.xpose.msra.mxu0 0.0
    %8060 = vmatprep.subr.mxu0 0.0
    %8061 = vmatpush1.xpose.msra.mxu0 0.0
    %8062 = vmatprep.subr.mxu0 0.0
    %8063 = vmatpush1.xpose.msra.mxu0 %v8036
    %8064 = vmatprep.subr.mxu0 0.0
    %8065 = vmatpush1.xpose.msra.mxu0 %v8034
    %8066 = vmatprep.subr.mxu0 0.0
    %8067 = vmatpush1.xpose.msra.mxu0 %v8032
    %8068 = vmatprep.subr.mxu0 0.0
    %8069 = vmatpush1.xpose.msra.mxu0 %v8030
    %8070 = vmatprep.subr.mxu0 0.0
    %8071 = vmatpush2.xpose.msra.mxu0 0.0
    %8072 = vmatprep.subr.mxu0 0.0
    %8073 = vmatpush2.xpose.msra.mxu0 0.0
    %8074 = vmatprep.subr.mxu0 0.0
    %8075 = vmatpush2.xpose.msra.mxu0 0.0
    %8076 = vmatprep.subr.mxu0 0.0
    %8077 = vmatpush2.xpose.msra.mxu0 0.0
    %8078 = vmatprep.subr.mxu0 0.0
    %8079 = vmatpush2.xpose.msra.mxu0 0.0
    %8080 = vmatprep.subr.mxu0 0.0
    %8081 = vmatpush2.xpose.msra.mxu0 0.0
    %8082 = vmatprep.subr.mxu0 0.0
    %8083 = vmatpush2.xpose.msra.mxu0 0.0
    %8084 = vmatprep.subr.mxu0 0.0
    %8085 = vmatpush2.xpose.msra.mxu0 0.0
    %8086 = vmatprep.subr.mxu0 0.0
    %8087 = vmatpush2.xpose.msra.mxu0 0.0
    %8088 = vmatprep.subr.mxu0 0.0
    %8089 = vmatpush2.xpose.msra.mxu0 0.0
    %8090 = vmatprep.subr.mxu0 0.0
    %8091 = vmatpush2.xpose.msra.mxu0 0.0
    %8092 = vmatprep.subr.mxu0 0.0
    %8093 = vmatpush2.xpose.msra.mxu0 0.0
    %8094 = vmatprep.subr.mxu0 0.0
    %8095 = vmatpush2.xpose.msra.mxu0 0.0
    %8096 = vmatprep.subr.mxu0 0.0
    %8097 = vmatpush2.xpose.msra.mxu0 0.0
    %8098 = vmatprep.subr.mxu0 0.0
    %8099 = vmatpush2.xpose.msra.mxu0 0.0
    %8100 = vmatprep.subr.mxu0 0.0
    %8101 = vmatpush2.xpose.msra.mxu0 0.0
    %8102 = vmatprep.mubr.f32.mxu0 0.0
    %8103 = vmatmul.mubr.f32.gmra.mxu0 %v7929
    %v8104 = vpop.f32.mrf.mxu0
    %v8105 = vadd.f32 %v8004, %v8104
    %v8106 = vpop.f32.mrf.mxu0
    %8107 = vmatprep.mubr.f32.mxu0 0.0
    %8108 = vmatmul.mubr.f32.gmra.mxu0 %v7931
    %v8109 = vpop.f32.mrf.mxu0
    %v8110 = vadd.f32 %v8009, %v8109
    %v8111 = vpop.f32.mrf.mxu0
    %8112 = vmatprep.mubr.f32.mxu0 0.0
    %8113 = vmatmul.mubr.f32.gmra.mxu0 %v7933
    %v8114 = vpop.f32.mrf.mxu0
    %v8115 = vadd.f32 %v8014, %v8114
    %v8116 = vpop.f32.mrf.mxu0
    %8117 = vmatprep.mubr.f32.mxu0 0.0
    %8118 = vmatmul.mubr.f32.gmra.mxu0 %v7935
    %v8119 = vpop.f32.mrf.mxu0
    %v8120 = vadd.f32 %v8019, %v8119
    %v8121 = vpop.f32.mrf.mxu0
    %8122 = vdwg.mxu0
    %v8123 = vsel %vm1590, %v8105, -inf
    %8124 = vmax.xlane.f32.xlu0 %v8123
    %v8125 = vpop.xlane.xlu0 %8124
    %v8126 = vsel %vm1590, %v8110, -inf
    %8127 = vmax.xlane.f32.xlu0 %v8126
    %v8128 = vpop.xlane.xlu0 %8127
    %v8129 = vsel %vm1590, %v8115, -inf
    %8130 = vmax.xlane.f32.xlu0 %v8129
    %v8131 = vpop.xlane.xlu0 %8130
    %v8132 = vsel %vm1590, %v8120, -inf
    %8133 = vmax.xlane.f32.xlu0 %v8132
    %v8134 = vpop.xlane.xlu0 %8133
    %v8135 = vsub.f32 %v8105, %v8125
    %v8136 = vsub.f32 %v8110, %v8128
    %v8137 = vsub.f32 %v8115, %v8131
    %v8138 = vsub.f32 %v8120, %v8134
    %v8139 = vmul.f32 %v8135, 1.442695
    %v8140 = vpow.pop %v8139
    %v8141 = vmul.f32 %v8136, 1.442695
    %v8142 = vpow.pop %v8141
    %v8143 = vmul.f32 %v8137, 1.442695
    %v8144 = vpow.pop %v8143
    %v8145 = vmul.f32 %v8138, 1.442695
    %v8146 = vpow.pop %v8145
    %v8147 = vsel %vm1590, %v8140, 0.0
    %8148 = vadd.xlane.f32.xlu0 %v8147
    %v8149 = vpop.xlane.xlu0 %8148
    %v8150 = vsel %vm1590, %v8142, 0.0
    %8151 = vadd.xlane.f32.xlu0 %v8150
    %v8152 = vpop.xlane.xlu0 %8151
    %v8153 = vsel %vm1590, %v8144, 0.0
    %8154 = vadd.xlane.f32.xlu0 %v8153
    %v8155 = vpop.xlane.xlu0 %8154
    %v8156 = vsel %vm1590, %v8146, 0.0
    %8157 = vadd.xlane.f32.xlu0 %v8156
    %v8158 = vpop.xlane.xlu0 %8157
    %v8159 = vrcp.pop %v8149
    %v8160 = vrcp.pop %v8152
    %v8161 = vrcp.pop %v8155
    %v8162 = vrcp.pop %v8158
    %v8163 = vmul.f32 %v8140, %v8159
    %v8164 = vmul.f32 %v8142, %v8160
    %v8165 = vmul.f32 %v8144, %v8161
    %v8166 = vmul.f32 %v8146, %v8162
    %8167 = vrot.lane.b32.xlu0 %v1565, 64
    %v8168 = vpop.permute.xlu0 %8167
    %8169 = vrot.lane.b32.xlu0 %v1566, 64
    %v8170 = vpop.permute.xlu0 %8169
    %8171 = vrot.lane.b32.xlu0 %v1567, 64
    %v8172 = vpop.permute.xlu0 %8171
    %8173 = vrot.lane.b32.xlu0 %v1568, 64
    %v8174 = vpop.permute.xlu0 %8173
    %v8180 = vsel %vm1590, %v8163, 0
    %v8183 = vsel %vm1590, %v8164, 0
    %v8186 = vsel %vm1590, %v8165, 0
    %v8189 = vsel %vm1590, %v8166, 0
    %8191 = vmatprep.subr.mxu0 0.0
    %8192 = vmatpush1.msra.mxu0 0.0
    %8193 = vmatprep.subr.mxu0 0.0
    %8194 = vmatpush1.msra.mxu0 0.0
    %8195 = vmatprep.subr.mxu0 0.0
    %8196 = vmatpush1.msra.mxu0 0.0
    %8197 = vmatprep.subr.mxu0 0.0
    %8198 = vmatpush1.msra.mxu0 0.0
    %8199 = vmatprep.subr.mxu0 0.0
    %8200 = vmatpush1.msra.mxu0 0.0
    %8201 = vmatprep.subr.mxu0 0.0
    %8202 = vmatpush1.msra.mxu0 0.0
    %8203 = vmatprep.subr.mxu0 0.0
    %8204 = vmatpush1.msra.mxu0 0.0
    %8205 = vmatprep.subr.mxu0 0.0
    %8206 = vmatpush1.msra.mxu0 0.0
    %8207 = vmatprep.subr.mxu0 0.0
    %8208 = vmatpush1.msra.mxu0 0.0
    %8209 = vmatprep.subr.mxu0 0.0
    %8210 = vmatpush1.msra.mxu0 0.0
    %8211 = vmatprep.subr.mxu0 0.0
    %8212 = vmatpush1.msra.mxu0 0.0
    %8213 = vmatprep.subr.mxu0 0.0
    %8214 = vmatpush1.msra.mxu0 0.0
    %8215 = vmatprep.subr.mxu0 0.0
    %8216 = vmatpush1.msra.mxu0 %v8174
    %8217 = vmatprep.subr.mxu0 0.0
    %8218 = vmatpush1.msra.mxu0 %v8172
    %8219 = vmatprep.subr.mxu0 0.0
    %8220 = vmatpush1.msra.mxu0 %v8170
    %8221 = vmatprep.subr.mxu0 0.0
    %8222 = vmatpush1.msra.mxu0 %v8168
    %8223 = vmatprep.subr.mxu0 0.0
    %8224 = vmatpush2.msra.mxu0 0.0
    %8225 = vmatprep.subr.mxu0 0.0
    %8226 = vmatpush2.msra.mxu0 0.0
    %8227 = vmatprep.subr.mxu0 0.0
    %8228 = vmatpush2.msra.mxu0 0.0
    %8229 = vmatprep.subr.mxu0 0.0
    %8230 = vmatpush2.msra.mxu0 0.0
    %8231 = vmatprep.subr.mxu0 0.0
    %8232 = vmatpush2.msra.mxu0 0.0
    %8233 = vmatprep.subr.mxu0 0.0
    %8234 = vmatpush2.msra.mxu0 0.0
    %8235 = vmatprep.subr.mxu0 0.0
    %8236 = vmatpush2.msra.mxu0 0.0
    %8237 = vmatprep.subr.mxu0 0.0
    %8238 = vmatpush2.msra.mxu0 0.0
    %8239 = vmatprep.subr.mxu0 0.0
    %8240 = vmatpush2.msra.mxu0 0.0
    %8241 = vmatprep.subr.mxu0 0.0
    %8242 = vmatpush2.msra.mxu0 0.0
    %8243 = vmatprep.subr.mxu0 0.0
    %8244 = vmatpush2.msra.mxu0 0.0
    %8245 = vmatprep.subr.mxu0 0.0
    %8246 = vmatpush2.msra.mxu0 0.0
    %8247 = vmatprep.subr.mxu0 0.0
    %8248 = vmatpush2.msra.mxu0 0.0
    %8249 = vmatprep.subr.mxu0 0.0
    %8250 = vmatpush2.msra.mxu0 0.0
    %8251 = vmatprep.subr.mxu0 0.0
    %8252 = vmatpush2.msra.mxu0 0.0
    %8253 = vmatprep.subr.mxu0 0.0
    %8254 = vmatpush2.msra.mxu0 0.0
    %8255 = vmatprep.mubr.f32.mxu0 0.0
    %8256 = vmatmul.mubr.f32.gmra.mxu0 %v8180
    %v8257 = vpop.f32.mrf.mxu0
    %v8258 = vadd.f32 0.0, %v8257
    %v8259 = vpop.f32.mrf.mxu0
    %8260 = vmatprep.mubr.f32.mxu0 0.0
    %8261 = vmatmul.mubr.f32.gmra.mxu0 %v8183
    %v8262 = vpop.f32.mrf.mxu0
    %v8263 = vadd.f32 0.0, %v8262
    %v8264 = vpop.f32.mrf.mxu0
    %8265 = vmatprep.mubr.f32.mxu0 0.0
    %8266 = vmatmul.mubr.f32.gmra.mxu0 %v8186
    %v8267 = vpop.f32.mrf.mxu0
    %v8268 = vadd.f32 0.0, %v8267
    %v8269 = vpop.f32.mrf.mxu0
    %8270 = vmatprep.mubr.f32.mxu0 0.0
    %8271 = vmatmul.mubr.f32.gmra.mxu0 %v8189
    %v8272 = vpop.f32.mrf.mxu0
    %v8273 = vadd.f32 0.0, %v8272
    %v8274 = vpop.f32.mrf.mxu0
    %8275 = vdwg.mxu0
    %v8277 = vsel %vm1590, %v8258, 0
    %v8280 = vsel %vm1590, %v8263, 0
    %v8283 = vsel %vm1590, %v8268, 0
    %v8286 = vsel %vm1590, %v8273, 0
    %8288 = vmatprep.subr.mxu0 0.0
    %8289 = vmatpush1.msra.mxu0 0.0
    %8290 = vmatprep.subr.mxu0 0.0
    %8291 = vmatpush1.msra.mxu0 0.0
    %8292 = vmatprep.subr.mxu0 0.0
    %8293 = vmatpush1.msra.mxu0 0.0
    %8294 = vmatprep.subr.mxu0 0.0
    %8295 = vmatpush1.msra.mxu0 0.0
    %8296 = vmatprep.subr.mxu0 0.0
    %8297 = vmatpush1.msra.mxu0 0.0
    %8298 = vmatprep.subr.mxu0 0.0
    %8299 = vmatpush1.msra.mxu0 0.0
    %8300 = vmatprep.subr.mxu0 0.0
    %8301 = vmatpush1.msra.mxu0 0.0
    %8302 = vmatprep.subr.mxu0 0.0
    %8303 = vmatpush1.msra.mxu0 0.0
    %8304 = vmatprep.subr.mxu0 0.0
    %8305 = vmatpush1.msra.mxu0 0.0
    %8306 = vmatprep.subr.mxu0 0.0
    %8307 = vmatpush1.msra.mxu0 0.0
    %8308 = vmatprep.subr.mxu0 0.0
    %8309 = vmatpush1.msra.mxu0 0.0
    %8310 = vmatprep.subr.mxu0 0.0
    %8311 = vmatpush1.msra.mxu0 0.0
    %8312 = vmatprep.subr.mxu0 0.0
    %8313 = vmatpush1.msra.mxu0 %v1580
    %8314 = vmatprep.subr.mxu0 0.0
    %8315 = vmatpush1.msra.mxu0 %v1579
    %8316 = vmatprep.subr.mxu0 0.0
    %8317 = vmatpush1.msra.mxu0 %v1578
    %8318 = vmatprep.subr.mxu0 0.0
    %8319 = vmatpush1.msra.mxu0 %v1577
    %8320 = vmatprep.subr.mxu0 0.0
    %8321 = vmatpush2.msra.mxu0 0.0
    %8322 = vmatprep.subr.mxu0 0.0
    %8323 = vmatpush2.msra.mxu0 0.0
    %8324 = vmatprep.subr.mxu0 0.0
    %8325 = vmatpush2.msra.mxu0 0.0
    %8326 = vmatprep.subr.mxu0 0.0
    %8327 = vmatpush2.msra.mxu0 0.0
    %8328 = vmatprep.subr.mxu0 0.0
    %8329 = vmatpush2.msra.mxu0 0.0
    %8330 = vmatprep.subr.mxu0 0.0
    %8331 = vmatpush2.msra.mxu0 0.0
    %8332 = vmatprep.subr.mxu0 0.0
    %8333 = vmatpush2.msra.mxu0 0.0
    %8334 = vmatprep.subr.mxu0 0.0
    %8335 = vmatpush2.msra.mxu0 0.0
    %8336 = vmatprep.subr.mxu0 0.0
    %8337 = vmatpush2.msra.mxu0 0.0
    %8338 = vmatprep.subr.mxu0 0.0
    %8339 = vmatpush2.msra.mxu0 0.0
    %8340 = vmatprep.subr.mxu0 0.0
    %8341 = vmatpush2.msra.mxu0 0.0
    %8342 = vmatprep.subr.mxu0 0.0
    %8343 = vmatpush2.msra.mxu0 0.0
    %8344 = vmatprep.subr.mxu0 0.0
    %8345 = vmatpush2.msra.mxu0 0.0
    %8346 = vmatprep.subr.mxu0 0.0
    %8347 = vmatpush2.msra.mxu0 0.0
    %8348 = vmatprep.subr.mxu0 0.0
    %8349 = vmatpush2.msra.mxu0 0.0
    %8350 = vmatprep.subr.mxu0 0.0
    %8351 = vmatpush2.msra.mxu0 0.0
    %8352 = vmatprep.mubr.f32.mxu0 0.0
    %8353 = vmatmul.mubr.f32.gmra.mxu0 %v8277
    %v8354 = vpop.f32.mrf.mxu0
    %v8355 = vadd.f32 0.0, %v8354
    %v8356 = vpop.f32.mrf.mxu0
    %8357 = vmatprep.mubr.f32.mxu0 0.0
    %8358 = vmatmul.mubr.f32.gmra.mxu0 %v8280
    %v8359 = vpop.f32.mrf.mxu0
    %v8360 = vadd.f32 0.0, %v8359
    %v8361 = vpop.f32.mrf.mxu0
    %8362 = vmatprep.mubr.f32.mxu0 0.0
    %8363 = vmatmul.mubr.f32.gmra.mxu0 %v8283
    %v8364 = vpop.f32.mrf.mxu0
    %v8365 = vadd.f32 0.0, %v8364
    %v8366 = vpop.f32.mrf.mxu0
    %8367 = vmatprep.mubr.f32.mxu0 0.0
    %8368 = vmatmul.mubr.f32.gmra.mxu0 %v8286
    %v8369 = vpop.f32.mrf.mxu0
    %v8370 = vadd.f32 0.0, %v8369
    %v8371 = vpop.f32.mrf.mxu0
    %8372 = vdwg.mxu0
    %v8373 = vadd.f32 %v7903, %v8355
    %v8374 = vadd.f32 %v7908, %v8360
    %v8375 = vadd.f32 %v7913, %v8365
    %v8376 = vadd.f32 %v7918, %v8370
    %8377 = vrot.lane.b32.xlu0 %v805, 32
    %v8378 = vpop.permute.xlu0 %8377
    %8379 = vrot.lane.b32.xlu0 %v806, 32
    %v8380 = vpop.permute.xlu0 %8379
    %8381 = vrot.lane.b32.xlu0 %v807, 32
    %v8382 = vpop.permute.xlu0 %8381
    %8383 = vrot.lane.b32.xlu0 %v808, 32
    %v8384 = vpop.permute.xlu0 %8383
    %v8385 = vsel %vm1590, %v8378, 0
    %v8387 = vsel %vm1590, %v8380, 0
    %v8389 = vsel %vm1590, %v8382, 0
    %v8391 = vsel %vm1590, %v8384, 0
    %8393 = vmatprep.subr.mxu0 0.0
    %8394 = vmatpush1.xpose.msra.mxu0 0.0
    %8395 = vmatprep.subr.mxu0 0.0
    %8396 = vmatpush1.xpose.msra.mxu0 0.0
    %8397 = vmatprep.subr.mxu0 0.0
    %8398 = vmatpush1.xpose.msra.mxu0 0.0
    %8399 = vmatprep.subr.mxu0 0.0
    %8400 = vmatpush1.xpose.msra.mxu0 0.0
    %8401 = vmatprep.subr.mxu0 0.0
    %8402 = vmatpush1.xpose.msra.mxu0 0.0
    %8403 = vmatprep.subr.mxu0 0.0
    %8404 = vmatpush1.xpose.msra.mxu0 0.0
    %8405 = vmatprep.subr.mxu0 0.0
    %8406 = vmatpush1.xpose.msra.mxu0 0.0
    %8407 = vmatprep.subr.mxu0 0.0
    %8408 = vmatpush1.xpose.msra.mxu0 0.0
    %8409 = vmatprep.subr.mxu0 0.0
    %8410 = vmatpush1.xpose.msra.mxu0 0.0
    %8411 = vmatprep.subr.mxu0 0.0
    %8412 = vmatpush1.xpose.msra.mxu0 0.0
    %8413 = vmatprep.subr.mxu0 0.0
    %8414 = vmatpush1.xpose.msra.mxu0 0.0
    %8415 = vmatprep.subr.mxu0 0.0
    %8416 = vmatpush1.xpose.msra.mxu0 0.0
    %8417 = vmatprep.subr.mxu0 0.0
    %8418 = vmatpush1.xpose.msra.mxu0 %v8391
    %8419 = vmatprep.subr.mxu0 0.0
    %8420 = vmatpush1.xpose.msra.mxu0 %v8389
    %8421 = vmatprep.subr.mxu0 0.0
    %8422 = vmatpush1.xpose.msra.mxu0 %v8387
    %8423 = vmatprep.subr.mxu0 0.0
    %8424 = vmatpush1.xpose.msra.mxu0 %v8385
    %8425 = vmatprep.subr.mxu0 0.0
    %8426 = vmatpush2.xpose.msra.mxu0 0.0
    %8427 = vmatprep.subr.mxu0 0.0
    %8428 = vmatpush2.xpose.msra.mxu0 0.0
    %8429 = vmatprep.subr.mxu0 0.0
    %8430 = vmatpush2.xpose.msra.mxu0 0.0
    %8431 = vmatprep.subr.mxu0 0.0
    %8432 = vmatpush2.xpose.msra.mxu0 0.0
    %8433 = vmatprep.subr.mxu0 0.0
    %8434 = vmatpush2.xpose.msra.mxu0 0.0
    %8435 = vmatprep.subr.mxu0 0.0
    %8436 = vmatpush2.xpose.msra.mxu0 0.0
    %8437 = vmatprep.subr.mxu0 0.0
    %8438 = vmatpush2.xpose.msra.mxu0 0.0
    %8439 = vmatprep.subr.mxu0 0.0
    %8440 = vmatpush2.xpose.msra.mxu0 0.0
    %8441 = vmatprep.subr.mxu0 0.0
    %8442 = vmatpush2.xpose.msra.mxu0 0.0
    %8443 = vmatprep.subr.mxu0 0.0
    %8444 = vmatpush2.xpose.msra.mxu0 0.0
    %8445 = vmatprep.subr.mxu0 0.0
    %8446 = vmatpush2.xpose.msra.mxu0 0.0
    %8447 = vmatprep.subr.mxu0 0.0
    %8448 = vmatpush2.xpose.msra.mxu0 0.0
    %8449 = vmatprep.subr.mxu0 0.0
    %8450 = vmatpush2.xpose.msra.mxu0 0.0
    %8451 = vmatprep.subr.mxu0 0.0
    %8452 = vmatpush2.xpose.msra.mxu0 0.0
    %8453 = vmatprep.subr.mxu0 0.0
    %8454 = vmatpush2.xpose.msra.mxu0 0.0
    %8455 = vmatprep.subr.mxu0 0.0
    %8456 = vmatpush2.xpose.msra.mxu0 0.0
    %8457 = vmatprep.mubr.f32.mxu0 0.0
    %8458 = vmatmul.mubr.f32.gmra.mxu0 %v1592
    %v8459 = vpop.f32.mrf.mxu0
    %v8460 = vadd.f32 0.0, %v8459
    %v8461 = vpop.f32.mrf.mxu0
    %8462 = vmatprep.mubr.f32.mxu0 0.0
    %8463 = vmatmul.mubr.f32.gmra.mxu0 %v1595
    %v8464 = vpop.f32.mrf.mxu0
    %v8465 = vadd.f32 0.0, %v8464
    %v8466 = vpop.f32.mrf.mxu0
    %8467 = vmatprep.mubr.f32.mxu0 0.0
    %8468 = vmatmul.mubr.f32.gmra.mxu0 %v1598
    %v8469 = vpop.f32.mrf.mxu0
    %v8470 = vadd.f32 0.0, %v8469
    %v8471 = vpop.f32.mrf.mxu0
    %8472 = vmatprep.mubr.f32.mxu0 0.0
    %8473 = vmatmul.mubr.f32.gmra.mxu0 %v1601
    %v8474 = vpop.f32.mrf.mxu0
    %v8475 = vadd.f32 0.0, %v8474
    %v8476 = vpop.f32.mrf.mxu0
    %8477 = vdwg.mxu0
    %8478 = vrot.lane.b32.xlu0 %v1185, 32
    %v8479 = vpop.permute.xlu0 %8478
    %8480 = vrot.lane.b32.xlu0 %v1186, 32
    %v8481 = vpop.permute.xlu0 %8480
    %8482 = vrot.lane.b32.xlu0 %v1187, 32
    %v8483 = vpop.permute.xlu0 %8482
    %8484 = vrot.lane.b32.xlu0 %v1188, 32
    %v8485 = vpop.permute.xlu0 %8484
    %v8486 = vsel %vm1590, %v8479, 0
    %v8488 = vsel %vm1590, %v8481, 0
    %v8490 = vsel %vm1590, %v8483, 0
    %v8492 = vsel %vm1590, %v8485, 0
    %8494 = vmatprep.subr.mxu0 0.0
    %8495 = vmatpush1.xpose.msra.mxu0 0.0
    %8496 = vmatprep.subr.mxu0 0.0
    %8497 = vmatpush1.xpose.msra.mxu0 0.0
    %8498 = vmatprep.subr.mxu0 0.0
    %8499 = vmatpush1.xpose.msra.mxu0 0.0
    %8500 = vmatprep.subr.mxu0 0.0
    %8501 = vmatpush1.xpose.msra.mxu0 0.0
    %8502 = vmatprep.subr.mxu0 0.0
    %8503 = vmatpush1.xpose.msra.mxu0 0.0
    %8504 = vmatprep.subr.mxu0 0.0
    %8505 = vmatpush1.xpose.msra.mxu0 0.0
    %8506 = vmatprep.subr.mxu0 0.0
    %8507 = vmatpush1.xpose.msra.mxu0 0.0
    %8508 = vmatprep.subr.mxu0 0.0
    %8509 = vmatpush1.xpose.msra.mxu0 0.0
    %8510 = vmatprep.subr.mxu0 0.0
    %8511 = vmatpush1.xpose.msra.mxu0 0.0
    %8512 = vmatprep.subr.mxu0 0.0
    %8513 = vmatpush1.xpose.msra.mxu0 0.0
    %8514 = vmatprep.subr.mxu0 0.0
    %8515 = vmatpush1.xpose.msra.mxu0 0.0
    %8516 = vmatprep.subr.mxu0 0.0
    %8517 = vmatpush1.xpose.msra.mxu0 0.0
    %8518 = vmatprep.subr.mxu0 0.0
    %8519 = vmatpush1.xpose.msra.mxu0 %v8492
    %8520 = vmatprep.subr.mxu0 0.0
    %8521 = vmatpush1.xpose.msra.mxu0 %v8490
    %8522 = vmatprep.subr.mxu0 0.0
    %8523 = vmatpush1.xpose.msra.mxu0 %v8488
    %8524 = vmatprep.subr.mxu0 0.0
    %8525 = vmatpush1.xpose.msra.mxu0 %v8486
    %8526 = vmatprep.subr.mxu0 0.0
    %8527 = vmatpush2.xpose.msra.mxu0 0.0
    %8528 = vmatprep.subr.mxu0 0.0
    %8529 = vmatpush2.xpose.msra.mxu0 0.0
    %8530 = vmatprep.subr.mxu0 0.0
    %8531 = vmatpush2.xpose.msra.mxu0 0.0
    %8532 = vmatprep.subr.mxu0 0.0
    %8533 = vmatpush2.xpose.msra.mxu0 0.0
    %8534 = vmatprep.subr.mxu0 0.0
    %8535 = vmatpush2.xpose.msra.mxu0 0.0
    %8536 = vmatprep.subr.mxu0 0.0
    %8537 = vmatpush2.xpose.msra.mxu0 0.0
    %8538 = vmatprep.subr.mxu0 0.0
    %8539 = vmatpush2.xpose.msra.mxu0 0.0
    %8540 = vmatprep.subr.mxu0 0.0
    %8541 = vmatpush2.xpose.msra.mxu0 0.0
    %8542 = vmatprep.subr.mxu0 0.0
    %8543 = vmatpush2.xpose.msra.mxu0 0.0
    %8544 = vmatprep.subr.mxu0 0.0
    %8545 = vmatpush2.xpose.msra.mxu0 0.0
    %8546 = vmatprep.subr.mxu0 0.0
    %8547 = vmatpush2.xpose.msra.mxu0 0.0
    %8548 = vmatprep.subr.mxu0 0.0
    %8549 = vmatpush2.xpose.msra.mxu0 0.0
    %8550 = vmatprep.subr.mxu0 0.0
    %8551 = vmatpush2.xpose.msra.mxu0 0.0
    %8552 = vmatprep.subr.mxu0 0.0
    %8553 = vmatpush2.xpose.msra.mxu0 0.0
    %8554 = vmatprep.subr.mxu0 0.0
    %8555 = vmatpush2.xpose.msra.mxu0 0.0
    %8556 = vmatprep.subr.mxu0 0.0
    %8557 = vmatpush2.xpose.msra.mxu0 0.0
    %8558 = vmatprep.mubr.f32.mxu0 0.0
    %8559 = vmatmul.mubr.f32.gmra.mxu0 %v8385
    %v8560 = vpop.f32.mrf.mxu0
    %v8561 = vadd.f32 %v8460, %v8560
    %v8562 = vpop.f32.mrf.mxu0
    %8563 = vmatprep.mubr.f32.mxu0 0.0
    %8564 = vmatmul.mubr.f32.gmra.mxu0 %v8387
    %v8565 = vpop.f32.mrf.mxu0
    %v8566 = vadd.f32 %v8465, %v8565
    %v8567 = vpop.f32.mrf.mxu0
    %8568 = vmatprep.mubr.f32.mxu0 0.0
    %8569 = vmatmul.mubr.f32.gmra.mxu0 %v8389
    %v8570 = vpop.f32.mrf.mxu0
    %v8571 = vadd.f32 %v8470, %v8570
    %v8572 = vpop.f32.mrf.mxu0
    %8573 = vmatprep.mubr.f32.mxu0 0.0
    %8574 = vmatmul.mubr.f32.gmra.mxu0 %v8391
    %v8575 = vpop.f32.mrf.mxu0
    %v8576 = vadd.f32 %v8475, %v8575
    %v8577 = vpop.f32.mrf.mxu0
    %8578 = vdwg.mxu0
    %v8579 = vsel %vm1590, %v8561, -inf
    %8580 = vmax.xlane.f32.xlu0 %v8579
    %v8581 = vpop.xlane.xlu0 %8580
    %v8582 = vsel %vm1590, %v8566, -inf
    %8583 = vmax.xlane.f32.xlu0 %v8582
    %v8584 = vpop.xlane.xlu0 %8583
    %v8585 = vsel %vm1590, %v8571, -inf
    %8586 = vmax.xlane.f32.xlu0 %v8585
    %v8587 = vpop.xlane.xlu0 %8586
    %v8588 = vsel %vm1590, %v8576, -inf
    %8589 = vmax.xlane.f32.xlu0 %v8588
    %v8590 = vpop.xlane.xlu0 %8589
    %v8591 = vsub.f32 %v8561, %v8581
    %v8592 = vsub.f32 %v8566, %v8584
    %v8593 = vsub.f32 %v8571, %v8587
    %v8594 = vsub.f32 %v8576, %v8590
    %v8595 = vmul.f32 %v8591, 1.442695
    %v8596 = vpow.pop %v8595
    %v8597 = vmul.f32 %v8592, 1.442695
    %v8598 = vpow.pop %v8597
    %v8599 = vmul.f32 %v8593, 1.442695
    %v8600 = vpow.pop %v8599
    %v8601 = vmul.f32 %v8594, 1.442695
    %v8602 = vpow.pop %v8601
    %v8603 = vsel %vm1590, %v8596, 0.0
    %8604 = vadd.xlane.f32.xlu0 %v8603
    %v8605 = vpop.xlane.xlu0 %8604
    %v8606 = vsel %vm1590, %v8598, 0.0
    %8607 = vadd.xlane.f32.xlu0 %v8606
    %v8608 = vpop.xlane.xlu0 %8607
    %v8609 = vsel %vm1590, %v8600, 0.0
    %8610 = vadd.xlane.f32.xlu0 %v8609
    %v8611 = vpop.xlane.xlu0 %8610
    %v8612 = vsel %vm1590, %v8602, 0.0
    %8613 = vadd.xlane.f32.xlu0 %v8612
    %v8614 = vpop.xlane.xlu0 %8613
    %v8615 = vrcp.pop %v8605
    %v8616 = vrcp.pop %v8608
    %v8617 = vrcp.pop %v8611
    %v8618 = vrcp.pop %v8614
    %v8619 = vmul.f32 %v8596, %v8615
    %v8620 = vmul.f32 %v8598, %v8616
    %v8621 = vmul.f32 %v8600, %v8617
    %v8622 = vmul.f32 %v8602, %v8618
    %8623 = vrot.lane.b32.xlu0 %v1565, 32
    %v8624 = vpop.permute.xlu0 %8623
    %8625 = vrot.lane.b32.xlu0 %v1566, 32
    %v8626 = vpop.permute.xlu0 %8625
    %8627 = vrot.lane.b32.xlu0 %v1567, 32
    %v8628 = vpop.permute.xlu0 %8627
    %8629 = vrot.lane.b32.xlu0 %v1568, 32
    %v8630 = vpop.permute.xlu0 %8629
    %v8636 = vsel %vm1590, %v8619, 0
    %v8639 = vsel %vm1590, %v8620, 0
    %v8642 = vsel %vm1590, %v8621, 0
    %v8645 = vsel %vm1590, %v8622, 0
    %8647 = vmatprep.subr.mxu0 0.0
    %8648 = vmatpush1.msra.mxu0 0.0
    %8649 = vmatprep.subr.mxu0 0.0
    %8650 = vmatpush1.msra.mxu0 0.0
    %8651 = vmatprep.subr.mxu0 0.0
    %8652 = vmatpush1.msra.mxu0 0.0
    %8653 = vmatprep.subr.mxu0 0.0
    %8654 = vmatpush1.msra.mxu0 0.0
    %8655 = vmatprep.subr.mxu0 0.0
    %8656 = vmatpush1.msra.mxu0 0.0
    %8657 = vmatprep.subr.mxu0 0.0
    %8658 = vmatpush1.msra.mxu0 0.0
    %8659 = vmatprep.subr.mxu0 0.0
    %8660 = vmatpush1.msra.mxu0 0.0
    %8661 = vmatprep.subr.mxu0 0.0
    %8662 = vmatpush1.msra.mxu0 0.0
    %8663 = vmatprep.subr.mxu0 0.0
    %8664 = vmatpush1.msra.mxu0 0.0
    %8665 = vmatprep.subr.mxu0 0.0
    %8666 = vmatpush1.msra.mxu0 0.0
    %8667 = vmatprep.subr.mxu0 0.0
    %8668 = vmatpush1.msra.mxu0 0.0
    %8669 = vmatprep.subr.mxu0 0.0
    %8670 = vmatpush1.msra.mxu0 0.0
    %8671 = vmatprep.subr.mxu0 0.0
    %8672 = vmatpush1.msra.mxu0 %v8630
    %8673 = vmatprep.subr.mxu0 0.0
    %8674 = vmatpush1.msra.mxu0 %v8628
    %8675 = vmatprep.subr.mxu0 0.0
    %8676 = vmatpush1.msra.mxu0 %v8626
    %8677 = vmatprep.subr.mxu0 0.0
    %8678 = vmatpush1.msra.mxu0 %v8624
    %8679 = vmatprep.subr.mxu0 0.0
    %8680 = vmatpush2.msra.mxu0 0.0
    %8681 = vmatprep.subr.mxu0 0.0
    %8682 = vmatpush2.msra.mxu0 0.0
    %8683 = vmatprep.subr.mxu0 0.0
    %8684 = vmatpush2.msra.mxu0 0.0
    %8685 = vmatprep.subr.mxu0 0.0
    %8686 = vmatpush2.msra.mxu0 0.0
    %8687 = vmatprep.subr.mxu0 0.0
    %8688 = vmatpush2.msra.mxu0 0.0
    %8689 = vmatprep.subr.mxu0 0.0
    %8690 = vmatpush2.msra.mxu0 0.0
    %8691 = vmatprep.subr.mxu0 0.0
    %8692 = vmatpush2.msra.mxu0 0.0
    %8693 = vmatprep.subr.mxu0 0.0
    %8694 = vmatpush2.msra.mxu0 0.0
    %8695 = vmatprep.subr.mxu0 0.0
    %8696 = vmatpush2.msra.mxu0 0.0
    %8697 = vmatprep.subr.mxu0 0.0
    %8698 = vmatpush2.msra.mxu0 0.0
    %8699 = vmatprep.subr.mxu0 0.0
    %8700 = vmatpush2.msra.mxu0 0.0
    %8701 = vmatprep.subr.mxu0 0.0
    %8702 = vmatpush2.msra.mxu0 0.0
    %8703 = vmatprep.subr.mxu0 0.0
    %8704 = vmatpush2.msra.mxu0 0.0
    %8705 = vmatprep.subr.mxu0 0.0
    %8706 = vmatpush2.msra.mxu0 0.0
    %8707 = vmatprep.subr.mxu0 0.0
    %8708 = vmatpush2.msra.mxu0 0.0
    %8709 = vmatprep.subr.mxu0 0.0
    %8710 = vmatpush2.msra.mxu0 0.0
    %8711 = vmatprep.mubr.f32.mxu0 0.0
    %8712 = vmatmul.mubr.f32.gmra.mxu0 %v8636
    %v8713 = vpop.f32.mrf.mxu0
    %v8714 = vadd.f32 0.0, %v8713
    %v8715 = vpop.f32.mrf.mxu0
    %8716 = vmatprep.mubr.f32.mxu0 0.0
    %8717 = vmatmul.mubr.f32.gmra.mxu0 %v8639
    %v8718 = vpop.f32.mrf.mxu0
    %v8719 = vadd.f32 0.0, %v8718
    %v8720 = vpop.f32.mrf.mxu0
    %8721 = vmatprep.mubr.f32.mxu0 0.0
    %8722 = vmatmul.mubr.f32.gmra.mxu0 %v8642
    %v8723 = vpop.f32.mrf.mxu0
    %v8724 = vadd.f32 0.0, %v8723
    %v8725 = vpop.f32.mrf.mxu0
    %8726 = vmatprep.mubr.f32.mxu0 0.0
    %8727 = vmatmul.mubr.f32.gmra.mxu0 %v8645
    %v8728 = vpop.f32.mrf.mxu0
    %v8729 = vadd.f32 0.0, %v8728
    %v8730 = vpop.f32.mrf.mxu0
    %8731 = vdwg.mxu0
    %v8733 = vsel %vm1590, %v8714, 0
    %v8736 = vsel %vm1590, %v8719, 0
    %v8739 = vsel %vm1590, %v8724, 0
    %v8742 = vsel %vm1590, %v8729, 0
    %8744 = vmatprep.subr.mxu0 0.0
    %8745 = vmatpush1.msra.mxu0 0.0
    %8746 = vmatprep.subr.mxu0 0.0
    %8747 = vmatpush1.msra.mxu0 0.0
    %8748 = vmatprep.subr.mxu0 0.0
    %8749 = vmatpush1.msra.mxu0 0.0
    %8750 = vmatprep.subr.mxu0 0.0
    %8751 = vmatpush1.msra.mxu0 0.0
    %8752 = vmatprep.subr.mxu0 0.0
    %8753 = vmatpush1.msra.mxu0 0.0
    %8754 = vmatprep.subr.mxu0 0.0
    %8755 = vmatpush1.msra.mxu0 0.0
    %8756 = vmatprep.subr.mxu0 0.0
    %8757 = vmatpush1.msra.mxu0 0.0
    %8758 = vmatprep.subr.mxu0 0.0
    %8759 = vmatpush1.msra.mxu0 0.0
    %8760 = vmatprep.subr.mxu0 0.0
    %8761 = vmatpush1.msra.mxu0 0.0
    %8762 = vmatprep.subr.mxu0 0.0
    %8763 = vmatpush1.msra.mxu0 0.0
    %8764 = vmatprep.subr.mxu0 0.0
    %8765 = vmatpush1.msra.mxu0 0.0
    %8766 = vmatprep.subr.mxu0 0.0
    %8767 = vmatpush1.msra.mxu0 0.0
    %8768 = vmatprep.subr.mxu0 0.0
    %8769 = vmatpush1.msra.mxu0 %v1584
    %8770 = vmatprep.subr.mxu0 0.0
    %8771 = vmatpush1.msra.mxu0 %v1583
    %8772 = vmatprep.subr.mxu0 0.0
    %8773 = vmatpush1.msra.mxu0 %v1582
    %8774 = vmatprep.subr.mxu0 0.0
    %8775 = vmatpush1.msra.mxu0 %v1581
    %8776 = vmatprep.subr.mxu0 0.0
    %8777 = vmatpush2.msra.mxu0 0.0
    %8778 = vmatprep.subr.mxu0 0.0
    %8779 = vmatpush2.msra.mxu0 0.0
    %8780 = vmatprep.subr.mxu0 0.0
    %8781 = vmatpush2.msra.mxu0 0.0
    %8782 = vmatprep.subr.mxu0 0.0
    %8783 = vmatpush2.msra.mxu0 0.0
    %8784 = vmatprep.subr.mxu0 0.0
    %8785 = vmatpush2.msra.mxu0 0.0
    %8786 = vmatprep.subr.mxu0 0.0
    %8787 = vmatpush2.msra.mxu0 0.0
    %8788 = vmatprep.subr.mxu0 0.0
    %8789 = vmatpush2.msra.mxu0 0.0
    %8790 = vmatprep.subr.mxu0 0.0
    %8791 = vmatpush2.msra.mxu0 0.0
    %8792 = vmatprep.subr.mxu0 0.0
    %8793 = vmatpush2.msra.mxu0 0.0
    %8794 = vmatprep.subr.mxu0 0.0
    %8795 = vmatpush2.msra.mxu0 0.0
    %8796 = vmatprep.subr.mxu0 0.0
    %8797 = vmatpush2.msra.mxu0 0.0
    %8798 = vmatprep.subr.mxu0 0.0
    %8799 = vmatpush2.msra.mxu0 0.0
    %8800 = vmatprep.subr.mxu0 0.0
    %8801 = vmatpush2.msra.mxu0 0.0
    %8802 = vmatprep.subr.mxu0 0.0
    %8803 = vmatpush2.msra.mxu0 0.0
    %8804 = vmatprep.subr.mxu0 0.0
    %8805 = vmatpush2.msra.mxu0 0.0
    %8806 = vmatprep.subr.mxu0 0.0
    %8807 = vmatpush2.msra.mxu0 0.0
    %8808 = vmatprep.mubr.f32.mxu0 0.0
    %8809 = vmatmul.mubr.f32.gmra.mxu0 %v8733
    %v8810 = vpop.f32.mrf.mxu0
    %v8811 = vadd.f32 0.0, %v8810
    %v8812 = vpop.f32.mrf.mxu0
    %8813 = vmatprep.mubr.f32.mxu0 0.0
    %8814 = vmatmul.mubr.f32.gmra.mxu0 %v8736
    %v8815 = vpop.f32.mrf.mxu0
    %v8816 = vadd.f32 0.0, %v8815
    %v8817 = vpop.f32.mrf.mxu0
    %8818 = vmatprep.mubr.f32.mxu0 0.0
    %8819 = vmatmul.mubr.f32.gmra.mxu0 %v8739
    %v8820 = vpop.f32.mrf.mxu0
    %v8821 = vadd.f32 0.0, %v8820
    %v8822 = vpop.f32.mrf.mxu0
    %8823 = vmatprep.mubr.f32.mxu0 0.0
    %8824 = vmatmul.mubr.f32.gmra.mxu0 %v8742
    %v8825 = vpop.f32.mrf.mxu0
    %v8826 = vadd.f32 0.0, %v8825
    %v8827 = vpop.f32.mrf.mxu0
    %8828 = vdwg.mxu0
    %v8829 = vadd.f32 %v8373, %v8811
    %v8830 = vadd.f32 %v8374, %v8816
    %v8831 = vadd.f32 %v8375, %v8821
    %v8832 = vadd.f32 %v8376, %v8826
    %v8833 = vadd.f32 %v8829, %v3407
    %v8834 = vadd.f32 %v8830, %v3407
    %v8835 = vadd.f32 %v8831, %v3407
    %v8836 = vadd.f32 %v8832, %v3407
    %8837 = vst [vmem:[#allocation17 + $0x60] sm:$0xff] %v8833
    %8838 = vst [vmem:[#allocation17 + $0x68] sm:$0xff] %v8834
    %8839 = vst [vmem:[#allocation17 + $0x70] sm:$0xff] %v8835
    %8840 = vst [vmem:[#allocation17 + $0x78] sm:$0xff] %v8836
    // Predicated region
    $region102: #{tpu_custom_call.1} parent=1 // pred_check
      _
    $region103: #{tpu_custom_call.1} parent=1 // pred_check_branch
      %8842 = sbr.rel (0) target = $region105
    $region104: #{tpu_custom_call.1} parent=1 // pred_region
      %s8844 = ssub.s32 2048, 2048
      %8845 = vsyncadd [#allocation4], %s8844
      %s8846 = sshll.u32 [#allocation17], 4
      %s8847 = int_to_ptr.vmem [resolvable:$true] %s8846
      %8852 = dma.vmem_to_hbm [thread:$0]  %s8847, 2048, %s16, [#allocation4], 128, 128, 8
    $region105: #{tpu_custom_call.1} parent=1 // pred_fallthru
      _
    // Predicated region
    $region106: #{tpu_custom_call.1} parent=1 // pred_check
      _
    $region107: #{tpu_custom_call.1} parent=1 // pred_check_branch
      %8854 = sbr.rel (0) target = $region109
    $region108: #{tpu_custom_call.1} parent=1 // pred_region
      %8855 = dma.done [#allocation4], 2048
    $region109: #{tpu_custom_call.1} parent=1 // pred_fallthru
      _
    %8856 = vsyncpa [#allocation3], 1
    %8857 = vsyncpa [#allocation6], 1
    %8858 = vsyncpa [#allocation9], 1
    %8859 = vsyncpa [#allocation12], 1
    %8860 = vsyncpa [#allocation15], 1
    %8861 = vsyncpa [#allocation4], 1

</llo_original>
